<compile_context>
chip_gen: v6e
topology: v6e:2x2x1
jax: 0.10.0
libtpu: 0.0.40
codegen_flags: <defaults>
</compile_context>

<pallas_src>
import jax
import jax.numpy as jnp
from jax.experimental import pallas as pl
from jax.experimental.pallas import tpu as pltpu

EPS = 1e-5


def basic_block_kernel(xpad_ref, w1_ref, g1_ref, b1_ref,
                       w2_ref, g2_ref, b2_ref,
                       ws_ref, gs_ref, bs_ref,
                       out_ref, patch1_ref, patch2_ref):
    N, Hp, Wp, Cin = xpad_ref.shape
    H, W = Hp - 2, Wp - 2
    P = w1_ref.shape[-1]
    NHW = N * H * W

    def bn(v, g, b):
        # training-mode BatchNorm over the batch*spatial rows, per channel
        mean = jnp.mean(v, axis=0, keepdims=True)
        var = jnp.mean((v - mean) * (v - mean), axis=0, keepdims=True)
        return (v - mean) * jax.lax.rsqrt(var + EPS) * g + b

    # ---- conv1 (3x3, stride 1, pad 1): im2col built ONCE into a VMEM scratch,
    #      then a single matmul with K = 9*Cin. ----
    for kh in range(3):
        for kw in range(3):
            t = kh * 3 + kw
            patch1_ref[:, :, :, t * Cin:(t + 1) * Cin] = \
                xpad_ref[:, kh:kh + H, kw:kw + W, :]
    patch1 = patch1_ref[...].reshape(NHW, 9 * Cin)

    acc1 = jnp.dot(patch1, w1_ref[...], preferred_element_type=jnp.float32)
    out1 = jnp.maximum(bn(acc1, g1_ref[...], b1_ref[...]), 0.0)        # (NHW, P)

    # ---- shortcut: 1x1 conv reuses the centre tap (kh=kw=1) of patch1 ----
    x_center = patch1[:, 4 * Cin:5 * Cin]
    sc = bn(jnp.dot(x_center, ws_ref[...], preferred_element_type=jnp.float32),
            gs_ref[...], bs_ref[...])

    # ---- conv2 (3x3, stride 1, pad 1): im2col of out1; the zero halo is
    #      handled by zero-initialising the patch scratch and writing only the
    #      valid sub-rectangle per tap (no padded-buffer roundtrip). ----
    out1_v = out1.reshape(N, H, W, P)
    patch2_ref[...] = jnp.zeros(patch2_ref.shape, patch2_ref.dtype)
    for kh in range(3):
        for kw in range(3):
            t = kh * 3 + kw
            dh, dw = kh - 1, kw - 1
            oh0, oh1 = max(0, -dh), H - max(0, dh)
            ow0, ow1 = max(0, -dw), W - max(0, dw)
            patch2_ref[:, oh0:oh1, ow0:ow1, t * P:(t + 1) * P] = \
                out1_v[:, oh0 + dh:oh1 + dh, ow0 + dw:ow1 + dw, :]
    patch2 = patch2_ref[...].reshape(NHW, 9 * P)

    acc2 = jnp.dot(patch2, w2_ref[...], preferred_element_type=jnp.float32)
    out2 = bn(acc2, g2_ref[...], b2_ref[...])

    out = jnp.maximum(out2 + sc, 0.0)                                  # (NHW, P)

    # Lane-dense output slab: out_ref is (N*H, W*P) (= 128 lanes here).  Fill
    # one W-column (P lanes at offset w*P) per step so the HBM writeback is a
    # dense full-lane row per (n, h) instead of a P-wide masked store.
    out3 = out.reshape(N * H, W, P)
    for w in range(W):
        out_ref[:, w * P:(w + 1) * P] = out3[:, w, :].astype(out_ref.dtype)


def basic_block(x_nhwc, params):
    N, H, W, Cin = x_nhwc.shape
    P = params["w1"].shape[-1]
    # glue / layout plumbing: halo pad + tap-stacked weights
    xpad = jnp.pad(x_nhwc, ((0, 0), (1, 1), (1, 1), (0, 0)))
    w1 = params["w1"].reshape(9 * Cin, P)    # (3,3,Cin,P) -> K index (kh*3+kw)*Cin + c
    w2 = params["w2"].reshape(9 * P, P)
    ws = params["ws"].reshape(Cin, P)        # 1x1 conv

    def full(shape):
        n = len(shape)
        return pl.BlockSpec(shape, lambda i, n=n: (0,) * n)

    out2d = pl.pallas_call(
        basic_block_kernel,
        out_shape=jax.ShapeDtypeStruct((N * H, W * P), jnp.float32),
        grid=(1,),
        in_specs=[
            full(xpad.shape),
            full(w1.shape), full(params["g1"].shape), full(params["b1"].shape),
            full(w2.shape), full(params["g2"].shape), full(params["b2"].shape),
            full(ws.shape), full(params["gs"].shape), full(params["bs"].shape),
        ],
        out_specs=full((N * H, W * P)),
        scratch_shapes=[
            pltpu.VMEM((N, H, W, 9 * Cin), jnp.float32),   # conv1 im2col patches
            pltpu.VMEM((N, H, W, 9 * P), jnp.float32),     # conv2 im2col patches
        ],
        compiler_params=pltpu.CompilerParams(dimension_semantics=("arbitrary",)),
    )(xpad, w1, params["g1"], params["b1"],
      w2, params["g2"], params["b2"],
      ws, params["gs"], params["bs"])
    return out2d.reshape(N, H, W, P)


def init_params(key, in_planes, planes):
    ks = jax.random.split(key, 9)
    return {
        "w1": 0.1 * jax.random.normal(ks[0], (3, 3, in_planes, planes), jnp.float32),
        "w2": 0.1 * jax.random.normal(ks[1], (3, 3, planes, planes), jnp.float32),
        "ws": 0.1 * jax.random.normal(ks[2], (1, 1, in_planes, planes), jnp.float32),
        "g1": 1.0 + 0.1 * jax.random.normal(ks[3], (1, planes), jnp.float32),
        "b1": 0.1 * jax.random.normal(ks[4], (1, planes), jnp.float32),
        "g2": 1.0 + 0.1 * jax.random.normal(ks[5], (1, planes), jnp.float32),
        "b2": 0.1 * jax.random.normal(ks[6], (1, planes), jnp.float32),
        "gs": 1.0 + 0.1 * jax.random.normal(ks[7], (1, planes), jnp.float32),
        "bs": 0.1 * jax.random.normal(ks[8], (1, planes), jnp.float32),
    }


def reference(x, p):
    """Pure-JAX reference (NHWC) for correctness checking."""
    def conv3x3(inp, w):
        return jax.lax.conv_general_dilated(
            inp, w, (1, 1), "SAME",
            dimension_numbers=("NHWC", "HWIO", "NHWC"))

    def bn(y, g, b):
        m = jnp.mean(y, axis=(0, 1, 2))
        v = jnp.var(y, axis=(0, 1, 2))
        return (y - m) * jax.lax.rsqrt(v + EPS) * g.reshape(-1) + b.reshape(-1)

    o = jax.nn.relu(bn(conv3x3(x, p["w1"]), p["g1"], p["b1"]))
    o = bn(conv3x3(o, p["w2"]), p["g2"], p["b2"])
    sc = bn(jnp.einsum("nhwc,cp->nhwp", x, p["ws"][0, 0]), p["gs"], p["bs"])
    return jax.nn.relu(o + sc)


if __name__ == "__main__":
    key = jax.random.PRNGKey(0)
    N, Cin, H, W = 2, 4, 16, 16      # PyTorch-equivalent input: NCHW (2, 4, 16, 16)
    planes = 8                        # in_planes != planes -> shortcut conv active
    kx, kp = jax.random.split(key)

    x_nchw = jax.random.normal(kx, (N, Cin, H, W), jnp.float32)
    x_nhwc = jnp.transpose(x_nchw, (0, 2, 3, 1))
    params = init_params(kp, Cin, planes)

    out = basic_block(x_nhwc, params)
    out = jax.block_until_ready(out)

    ref = reference(x_nhwc, params)
    assert out.shape == (N, H, W, planes)
    assert jnp.allclose(out, ref, atol=1e-4, rtol=1e-4), float(jnp.max(jnp.abs(out - ref)))
    print("KERNEL_OK")
</pallas_src>

<mosaic_0001>
module attributes {stable_mosaic.version = 11 : i64} {
  func.func @basic_block_kernel(%arg0: i32, %arg1: memref<2x18x18x4xf32, #tpu.memory_space<vmem>>, %arg2: memref<36x8xf32, #tpu.memory_space<vmem>>, %arg3: memref<1x8xf32, #tpu.memory_space<vmem>>, %arg4: memref<1x8xf32, #tpu.memory_space<vmem>>, %arg5: memref<72x8xf32, #tpu.memory_space<vmem>>, %arg6: memref<1x8xf32, #tpu.memory_space<vmem>>, %arg7: memref<1x8xf32, #tpu.memory_space<vmem>>, %arg8: memref<4x8xf32, #tpu.memory_space<vmem>>, %arg9: memref<1x8xf32, #tpu.memory_space<vmem>>, %arg10: memref<1x8xf32, #tpu.memory_space<vmem>>, %arg11: memref<32x128xf32, #tpu.memory_space<vmem>>, %arg12: memref<2x16x16x36xf32, #tpu.memory_space<vmem>>, %arg13: memref<2x16x16x72xf32, #tpu.memory_space<vmem>>) attributes {dimension_semantics = [#tpu.dimension_semantics<arbitrary>], iteration_bounds = array<i64: 1>, scalar_prefetch = 0 : i64, scratch_operands = 2 : i64, tpu.core_type = #tpu.core_type<tc>, window_params = [{pipeline_mode = #tpu.pipeline_mode<synchronous>, transform_indices = @transform_0, window_bounds = array<i64: 2, 18, 18, 4>}, {pipeline_mode = #tpu.pipeline_mode<synchronous>, transform_indices = @transform_1, window_bounds = array<i64: 36, 8>}, {pipeline_mode = #tpu.pipeline_mode<synchronous>, transform_indices = @transform_2, window_bounds = array<i64: 1, 8>}, {pipeline_mode = #tpu.pipeline_mode<synchronous>, transform_indices = @transform_3, window_bounds = array<i64: 1, 8>}, {pipeline_mode = #tpu.pipeline_mode<synchronous>, transform_indices = @transform_4, window_bounds = array<i64: 72, 8>}, {pipeline_mode = #tpu.pipeline_mode<synchronous>, transform_indices = @transform_5, window_bounds = array<i64: 1, 8>}, {pipeline_mode = #tpu.pipeline_mode<synchronous>, transform_indices = @transform_6, window_bounds = array<i64: 1, 8>}, {pipeline_mode = #tpu.pipeline_mode<synchronous>, transform_indices = @transform_7, window_bounds = array<i64: 4, 8>}, {pipeline_mode = #tpu.pipeline_mode<synchronous>, transform_indices = @transform_8, window_bounds = array<i64: 1, 8>}, {pipeline_mode = #tpu.pipeline_mode<synchronous>, transform_indices = @transform_9, window_bounds = array<i64: 1, 8>}, {pipeline_mode = #tpu.pipeline_mode<synchronous>, transform_indices = @transform_10, window_bounds = array<i64: 32, 128>}]} {
    %c0 = arith.constant 0 : index
    %c0_0 = arith.constant 0 : index
    %c0_1 = arith.constant 0 : index
    %c0_2 = arith.constant 0 : index
    %0 = vector.load %arg1[%c0, %c0_0, %c0_1, %c0_2] : memref<2x18x18x4xf32, #tpu.memory_space<vmem>>, vector<2x16x16x4xf32>
    %c0_3 = arith.constant 0 : index
    %c0_4 = arith.constant 0 : index
    %c0_5 = arith.constant 0 : index
    %c0_6 = arith.constant 0 : index
    %1 = vector.load %arg12[%c0_3, %c0_4, %c0_5, %c0_6] : memref<2x16x16x36xf32, #tpu.memory_space<vmem>>, vector<2x16x16x4xf32>
    tpu.vector_store %arg12[%c0_3, %c0_4, %c0_5, %c0_6], %0 {strides = array<i32>} : memref<2x16x16x36xf32, #tpu.memory_space<vmem>>, vector<2x16x16x4xf32>,
    %c0_7 = arith.constant 0 : index
    %c0_8 = arith.constant 0 : index
    %c1 = arith.constant 1 : index
    %c0_9 = arith.constant 0 : index
    %2 = vector.load %arg1[%c0_7, %c0_8, %c1, %c0_9] : memref<2x18x18x4xf32, #tpu.memory_space<vmem>>, vector<2x16x16x4xf32>
    %c0_10 = arith.constant 0 : index
    %c0_11 = arith.constant 0 : index
    %c0_12 = arith.constant 0 : index
    %c4 = arith.constant 4 : index
    %3 = vector.load %arg12[%c0_10, %c0_11, %c0_12, %c4] : memref<2x16x16x36xf32, #tpu.memory_space<vmem>>, vector<2x16x16x4xf32>
    tpu.vector_store %arg12[%c0_10, %c0_11, %c0_12, %c4], %2 {strides = array<i32>} : memref<2x16x16x36xf32, #tpu.memory_space<vmem>>, vector<2x16x16x4xf32>,
    %c0_13 = arith.constant 0 : index
    %c0_14 = arith.constant 0 : index
    %c2 = arith.constant 2 : index
    %c0_15 = arith.constant 0 : index
    %4 = vector.load %arg1[%c0_13, %c0_14, %c2, %c0_15] : memref<2x18x18x4xf32, #tpu.memory_space<vmem>>, vector<2x16x16x4xf32>
    %c0_16 = arith.constant 0 : index
    %c0_17 = arith.constant 0 : index
    %c0_18 = arith.constant 0 : index
    %c8 = arith.constant 8 : index
    %5 = vector.load %arg12[%c0_16, %c0_17, %c0_18, %c8] : memref<2x16x16x36xf32, #tpu.memory_space<vmem>>, vector<2x16x16x4xf32>
    tpu.vector_store %arg12[%c0_16, %c0_17, %c0_18, %c8], %4 {strides = array<i32>} : memref<2x16x16x36xf32, #tpu.memory_space<vmem>>, vector<2x16x16x4xf32>,
    %c0_19 = arith.constant 0 : index
    %c1_20 = arith.constant 1 : index
    %c0_21 = arith.constant 0 : index
    %c0_22 = arith.constant 0 : index
    %6 = vector.load %arg1[%c0_19, %c1_20, %c0_21, %c0_22] : memref<2x18x18x4xf32, #tpu.memory_space<vmem>>, vector<2x16x16x4xf32>
    %c0_23 = arith.constant 0 : index
    %c0_24 = arith.constant 0 : index
    %c0_25 = arith.constant 0 : index
    %c12 = arith.constant 12 : index
    %7 = vector.load %arg12[%c0_23, %c0_24, %c0_25, %c12] : memref<2x16x16x36xf32, #tpu.memory_space<vmem>>, vector<2x16x16x4xf32>
    tpu.vector_store %arg12[%c0_23, %c0_24, %c0_25, %c12], %6 {strides = array<i32>} : memref<2x16x16x36xf32, #tpu.memory_space<vmem>>, vector<2x16x16x4xf32>,
    %c0_26 = arith.constant 0 : index
    %c1_27 = arith.constant 1 : index
    %c1_28 = arith.constant 1 : index
    %c0_29 = arith.constant 0 : index
    %8 = vector.load %arg1[%c0_26, %c1_27, %c1_28, %c0_29] : memref<2x18x18x4xf32, #tpu.memory_space<vmem>>, vector<2x16x16x4xf32>
    %c0_30 = arith.constant 0 : index
    %c0_31 = arith.constant 0 : index
    %c0_32 = arith.constant 0 : index
    %c16 = arith.constant 16 : index
    %9 = vector.load %arg12[%c0_30, %c0_31, %c0_32, %c16] : memref<2x16x16x36xf32, #tpu.memory_space<vmem>>, vector<2x16x16x4xf32>
    tpu.vector_store %arg12[%c0_30, %c0_31, %c0_32, %c16], %8 {strides = array<i32>} : memref<2x16x16x36xf32, #tpu.memory_space<vmem>>, vector<2x16x16x4xf32>,
    %c0_33 = arith.constant 0 : index
    %c1_34 = arith.constant 1 : index
    %c2_35 = arith.constant 2 : index
    %c0_36 = arith.constant 0 : index
    %10 = vector.load %arg1[%c0_33, %c1_34, %c2_35, %c0_36] : memref<2x18x18x4xf32, #tpu.memory_space<vmem>>, vector<2x16x16x4xf32>
    %c0_37 = arith.constant 0 : index
    %c0_38 = arith.constant 0 : index
    %c0_39 = arith.constant 0 : index
    %c20 = arith.constant 20 : index
    %11 = vector.load %arg12[%c0_37, %c0_38, %c0_39, %c20] : memref<2x16x16x36xf32, #tpu.memory_space<vmem>>, vector<2x16x16x4xf32>
    tpu.vector_store %arg12[%c0_37, %c0_38, %c0_39, %c20], %10 {strides = array<i32>} : memref<2x16x16x36xf32, #tpu.memory_space<vmem>>, vector<2x16x16x4xf32>,
    %c0_40 = arith.constant 0 : index
    %c2_41 = arith.constant 2 : index
    %c0_42 = arith.constant 0 : index
    %c0_43 = arith.constant 0 : index
    %12 = vector.load %arg1[%c0_40, %c2_41, %c0_42, %c0_43] : memref<2x18x18x4xf32, #tpu.memory_space<vmem>>, vector<2x16x16x4xf32>
    %c0_44 = arith.constant 0 : index
    %c0_45 = arith.constant 0 : index
    %c0_46 = arith.constant 0 : index
    %c24 = arith.constant 24 : index
    %13 = vector.load %arg12[%c0_44, %c0_45, %c0_46, %c24] : memref<2x16x16x36xf32, #tpu.memory_space<vmem>>, vector<2x16x16x4xf32>
    tpu.vector_store %arg12[%c0_44, %c0_45, %c0_46, %c24], %12 {strides = array<i32>} : memref<2x16x16x36xf32, #tpu.memory_space<vmem>>, vector<2x16x16x4xf32>,
    %c0_47 = arith.constant 0 : index
    %c2_48 = arith.constant 2 : index
    %c1_49 = arith.constant 1 : index
    %c0_50 = arith.constant 0 : index
    %14 = vector.load %arg1[%c0_47, %c2_48, %c1_49, %c0_50] : memref<2x18x18x4xf32, #tpu.memory_space<vmem>>, vector<2x16x16x4xf32>
    %c0_51 = arith.constant 0 : index
    %c0_52 = arith.constant 0 : index
    %c0_53 = arith.constant 0 : index
    %c28 = arith.constant 28 : index
    %15 = vector.load %arg12[%c0_51, %c0_52, %c0_53, %c28] : memref<2x16x16x36xf32, #tpu.memory_space<vmem>>, vector<2x16x16x4xf32>
    tpu.vector_store %arg12[%c0_51, %c0_52, %c0_53, %c28], %14 {strides = array<i32>} : memref<2x16x16x36xf32, #tpu.memory_space<vmem>>, vector<2x16x16x4xf32>,
    %c0_54 = arith.constant 0 : index
    %c2_55 = arith.constant 2 : index
    %c2_56 = arith.constant 2 : index
    %c0_57 = arith.constant 0 : index
    %16 = vector.load %arg1[%c0_54, %c2_55, %c2_56, %c0_57] : memref<2x18x18x4xf32, #tpu.memory_space<vmem>>, vector<2x16x16x4xf32>
    %c0_58 = arith.constant 0 : index
    %c0_59 = arith.constant 0 : index
    %c0_60 = arith.constant 0 : index
    %c32 = arith.constant 32 : index
    %17 = vector.load %arg12[%c0_58, %c0_59, %c0_60, %c32] : memref<2x16x16x36xf32, #tpu.memory_space<vmem>>, vector<2x16x16x4xf32>
    tpu.vector_store %arg12[%c0_58, %c0_59, %c0_60, %c32], %16 {strides = array<i32>} : memref<2x16x16x36xf32, #tpu.memory_space<vmem>>, vector<2x16x16x4xf32>,
    %c0_61 = arith.constant 0 : index
    %c0_62 = arith.constant 0 : index
    %c0_63 = arith.constant 0 : index
    %c0_64 = arith.constant 0 : index
    %18 = vector.load %arg12[%c0_61, %c0_62, %c0_63, %c0_64] : memref<2x16x16x36xf32, #tpu.memory_space<vmem>>, vector<2x16x16x36xf32>
    %19 = vector.shape_cast %18 : vector<2x16x16x36xf32> to vector<512x36xf32>
    %c0_65 = arith.constant 0 : index
    %c0_66 = arith.constant 0 : index
    %20 = vector.load %arg2[%c0_65, %c0_66] : memref<36x8xf32, #tpu.memory_space<vmem>>, vector<36x8xf32>
    %cst = arith.constant dense<0.000000e+00> : vector<512x8xf32>
    %21 = tpu.matmul %19, %20, %cst {dimension_numbers = #tpu.dot_dimension_numbers<[1], [0], [0], [1], [0, 0, 1, 1], [], []>} : vector<512x36xf32>, vector<36x8xf32>, vector<512x8xf32> -> vector<512x8xf32>
    %c0_67 = arith.constant 0 : index
    %c0_68 = arith.constant 0 : index
    %22 = vector.load %arg3[%c0_67, %c0_68] : memref<1x8xf32, #tpu.memory_space<vmem>>, vector<1x8xf32>
    %c0_69 = arith.constant 0 : index
    %c0_70 = arith.constant 0 : index
    %23 = vector.load %arg4[%c0_69, %c0_70] : memref<1x8xf32, #tpu.memory_space<vmem>>, vector<1x8xf32>
    %cst_71 = arith.constant dense<0.000000e+00> : vector<8xf32>
    %24 = vector.multi_reduction <add>, %21, %cst_71 [0] : vector<512x8xf32> to vector<8xf32>
    %25 = vector.shape_cast %24 : vector<8xf32> to vector<1x8xf32>
    %cst_72 = arith.constant 5.120000e+02 : f32
    %26 = vector.broadcast %cst_72 : f32 to vector<1x8xf32>
    %27 = arith.divf %25, %26 : vector<1x8xf32>
    %28 = vector.broadcast %27 : vector<1x8xf32> to vector<512x8xf32>
    %29 = arith.subf %21, %28 : vector<512x8xf32>
    %30 = vector.broadcast %27 : vector<1x8xf32> to vector<512x8xf32>
    %31 = arith.subf %21, %30 : vector<512x8xf32>
    %32 = arith.mulf %29, %31 : vector<512x8xf32>
    %cst_73 = arith.constant dense<0.000000e+00> : vector<8xf32>
    %33 = vector.multi_reduction <add>, %32, %cst_73 [0] : vector<512x8xf32> to vector<8xf32>
    %34 = vector.shape_cast %33 : vector<8xf32> to vector<1x8xf32>
    %cst_74 = arith.constant 5.120000e+02 : f32
    %35 = vector.broadcast %cst_74 : f32 to vector<1x8xf32>
    %36 = arith.divf %34, %35 : vector<1x8xf32>
    %37 = vector.broadcast %27 : vector<1x8xf32> to vector<512x8xf32>
    %38 = arith.subf %21, %37 : vector<512x8xf32>
    %cst_75 = arith.constant 9.99999974E-6 : f32
    %39 = vector.broadcast %cst_75 : f32 to vector<1x8xf32>
    %40 = arith.addf %36, %39 : vector<1x8xf32>
    %41 = math.rsqrt %40 : vector<1x8xf32>
    %42 = vector.broadcast %41 : vector<1x8xf32> to vector<512x8xf32>
    %43 = arith.mulf %38, %42 : vector<512x8xf32>
    %44 = vector.broadcast %22 : vector<1x8xf32> to vector<512x8xf32>
    %45 = arith.mulf %43, %44 : vector<512x8xf32>
    %46 = vector.broadcast %23 : vector<1x8xf32> to vector<512x8xf32>
    %47 = arith.addf %45, %46 : vector<512x8xf32>
    %cst_76 = arith.constant 0.000000e+00 : f32
    %48 = vector.broadcast %cst_76 : f32 to vector<512x8xf32>
    %49 = arith.maximumf %47, %48 : vector<512x8xf32>
    %50 = vector.extract_strided_slice %19 {offsets = [0, 16], sizes = [512, 4], strides = [1, 1]} : vector<512x36xf32> to vector<512x4xf32>
    %c0_77 = arith.constant 0 : index
    %c0_78 = arith.constant 0 : index
    %51 = vector.load %arg8[%c0_77, %c0_78] : memref<4x8xf32, #tpu.memory_space<vmem>>, vector<4x8xf32>
    %cst_79 = arith.constant dense<0.000000e+00> : vector<512x8xf32>
    %52 = tpu.matmul %50, %51, %cst_79 {dimension_numbers = #tpu.dot_dimension_numbers<[1], [0], [0], [1], [0, 0, 1, 1], [], []>} : vector<512x4xf32>, vector<4x8xf32>, vector<512x8xf32> -> vector<512x8xf32>
    %c0_80 = arith.constant 0 : index
    %c0_81 = arith.constant 0 : index
    %53 = vector.load %arg9[%c0_80, %c0_81] : memref<1x8xf32, #tpu.memory_space<vmem>>, vector<1x8xf32>
    %c0_82 = arith.constant 0 : index
    %c0_83 = arith.constant 0 : index
    %54 = vector.load %arg10[%c0_82, %c0_83] : memref<1x8xf32, #tpu.memory_space<vmem>>, vector<1x8xf32>
    %cst_84 = arith.constant dense<0.000000e+00> : vector<8xf32>
    %55 = vector.multi_reduction <add>, %52, %cst_84 [0] : vector<512x8xf32> to vector<8xf32>
    %56 = vector.shape_cast %55 : vector<8xf32> to vector<1x8xf32>
    %cst_85 = arith.constant 5.120000e+02 : f32
    %57 = vector.broadcast %cst_85 : f32 to vector<1x8xf32>
    %58 = arith.divf %56, %57 : vector<1x8xf32>
    %59 = vector.broadcast %58 : vector<1x8xf32> to vector<512x8xf32>
    %60 = arith.subf %52, %59 : vector<512x8xf32>
    %61 = vector.broadcast %58 : vector<1x8xf32> to vector<512x8xf32>
    %62 = arith.subf %52, %61 : vector<512x8xf32>
    %63 = arith.mulf %60, %62 : vector<512x8xf32>
    %cst_86 = arith.constant dense<0.000000e+00> : vector<8xf32>
    %64 = vector.multi_reduction <add>, %63, %cst_86 [0] : vector<512x8xf32> to vector<8xf32>
    %65 = vector.shape_cast %64 : vector<8xf32> to vector<1x8xf32>
    %cst_87 = arith.constant 5.120000e+02 : f32
    %66 = vector.broadcast %cst_87 : f32 to vector<1x8xf32>
    %67 = arith.divf %65, %66 : vector<1x8xf32>
    %68 = vector.broadcast %58 : vector<1x8xf32> to vector<512x8xf32>
    %69 = arith.subf %52, %68 : vector<512x8xf32>
    %cst_88 = arith.constant 9.99999974E-6 : f32
    %70 = vector.broadcast %cst_88 : f32 to vector<1x8xf32>
    %71 = arith.addf %67, %70 : vector<1x8xf32>
    %72 = math.rsqrt %71 : vector<1x8xf32>
    %73 = vector.broadcast %72 : vector<1x8xf32> to vector<512x8xf32>
    %74 = arith.mulf %69, %73 : vector<512x8xf32>
    %75 = vector.broadcast %53 : vector<1x8xf32> to vector<512x8xf32>
    %76 = arith.mulf %74, %75 : vector<512x8xf32>
    %77 = vector.broadcast %54 : vector<1x8xf32> to vector<512x8xf32>
    %78 = arith.addf %76, %77 : vector<512x8xf32>
    %79 = vector.shape_cast %49 : vector<512x8xf32> to vector<2x16x16x8xf32>
    %cst_89 = arith.constant 0.000000e+00 : f32
    %80 = vector.broadcast %cst_89 : f32 to vector<2x16x16x72xf32>
    %c0_90 = arith.constant 0 : index
    %c0_91 = arith.constant 0 : index
    %c0_92 = arith.constant 0 : index
    %c0_93 = arith.constant 0 : index
    %81 = vector.load %arg13[%c0_90, %c0_91, %c0_92, %c0_93] : memref<2x16x16x72xf32, #tpu.memory_space<vmem>>, vector<2x16x16x72xf32>
    tpu.vector_store %arg13[%c0_90, %c0_91, %c0_92, %c0_93], %80 {strides = array<i32>} : memref<2x16x16x72xf32, #tpu.memory_space<vmem>>, vector<2x16x16x72xf32>,
    %82 = vector.extract_strided_slice %79 {offsets = [0, 0, 0, 0], sizes = [2, 15, 15, 8], strides = [1, 1, 1, 1]} : vector<2x16x16x8xf32> to vector<2x15x15x8xf32>
    %c0_94 = arith.constant 0 : index
    %c1_95 = arith.constant 1 : index
    %c1_96 = arith.constant 1 : index
    %c0_97 = arith.constant 0 : index
    %83 = vector.load %arg13[%c0_94, %c1_95, %c1_96, %c0_97] : memref<2x16x16x72xf32, #tpu.memory_space<vmem>>, vector<2x15x15x8xf32>
    tpu.vector_store %arg13[%c0_94, %c1_95, %c1_96, %c0_97], %82 {strides = array<i32>} : memref<2x16x16x72xf32, #tpu.memory_space<vmem>>, vector<2x15x15x8xf32>,
    %84 = vector.extract_strided_slice %79 {offsets = [0, 0, 0, 0], sizes = [2, 15, 16, 8], strides = [1, 1, 1, 1]} : vector<2x16x16x8xf32> to vector<2x15x16x8xf32>
    %c0_98 = arith.constant 0 : index
    %c1_99 = arith.constant 1 : index
    %c0_100 = arith.constant 0 : index
    %c8_101 = arith.constant 8 : index
    %85 = vector.load %arg13[%c0_98, %c1_99, %c0_100, %c8_101] : memref<2x16x16x72xf32, #tpu.memory_space<vmem>>, vector<2x15x16x8xf32>
    tpu.vector_store %arg13[%c0_98, %c1_99, %c0_100, %c8_101], %84 {strides = array<i32>} : memref<2x16x16x72xf32, #tpu.memory_space<vmem>>, vector<2x15x16x8xf32>,
    %86 = vector.extract_strided_slice %79 {offsets = [0, 0, 1, 0], sizes = [2, 15, 15, 8], strides = [1, 1, 1, 1]} : vector<2x16x16x8xf32> to vector<2x15x15x8xf32>
    %c0_102 = arith.constant 0 : index
    %c1_103 = arith.constant 1 : index
    %c0_104 = arith.constant 0 : index
    %c16_105 = arith.constant 16 : index
    %87 = vector.load %arg13[%c0_102, %c1_103, %c0_104, %c16_105] : memref<2x16x16x72xf32, #tpu.memory_space<vmem>>, vector<2x15x15x8xf32>
    tpu.vector_store %arg13[%c0_102, %c1_103, %c0_104, %c16_105], %86 {strides = array<i32>} : memref<2x16x16x72xf32, #tpu.memory_space<vmem>>, vector<2x15x15x8xf32>,
    %88 = vector.extract_strided_slice %79 {offsets = [0, 0, 0, 0], sizes = [2, 16, 15, 8], strides = [1, 1, 1, 1]} : vector<2x16x16x8xf32> to vector<2x16x15x8xf32>
    %c0_106 = arith.constant 0 : index
    %c0_107 = arith.constant 0 : index
    %c1_108 = arith.constant 1 : index
    %c24_109 = arith.constant 24 : index
    %89 = vector.load %arg13[%c0_106, %c0_107, %c1_108, %c24_109] : memref<2x16x16x72xf32, #tpu.memory_space<vmem>>, vector<2x16x15x8xf32>
    tpu.vector_store %arg13[%c0_106, %c0_107, %c1_108, %c24_109], %88 {strides = array<i32>} : memref<2x16x16x72xf32, #tpu.memory_space<vmem>>, vector<2x16x15x8xf32>,
    %c0_110 = arith.constant 0 : index
    %c0_111 = arith.constant 0 : index
    %c0_112 = arith.constant 0 : index
    %c32_113 = arith.constant 32 : index
    %90 = vector.load %arg13[%c0_110, %c0_111, %c0_112, %c32_113] : memref<2x16x16x72xf32, #tpu.memory_space<vmem>>, vector<2x16x16x8xf32>
    tpu.vector_store %arg13[%c0_110, %c0_111, %c0_112, %c32_113], %79 {strides = array<i32>} : memref<2x16x16x72xf32, #tpu.memory_space<vmem>>, vector<2x16x16x8xf32>,
    %91 = vector.extract_strided_slice %79 {offsets = [0, 0, 1, 0], sizes = [2, 16, 15, 8], strides = [1, 1, 1, 1]} : vector<2x16x16x8xf32> to vector<2x16x15x8xf32>
    %c0_114 = arith.constant 0 : index
    %c0_115 = arith.constant 0 : index
    %c0_116 = arith.constant 0 : index
    %c40 = arith.constant 40 : index
    %92 = vector.load %arg13[%c0_114, %c0_115, %c0_116, %c40] : memref<2x16x16x72xf32, #tpu.memory_space<vmem>>, vector<2x16x15x8xf32>
    tpu.vector_store %arg13[%c0_114, %c0_115, %c0_116, %c40], %91 {strides = array<i32>} : memref<2x16x16x72xf32, #tpu.memory_space<vmem>>, vector<2x16x15x8xf32>,
    %93 = vector.extract_strided_slice %79 {offsets = [0, 1, 0, 0], sizes = [2, 15, 15, 8], strides = [1, 1, 1, 1]} : vector<2x16x16x8xf32> to vector<2x15x15x8xf32>
    %c0_117 = arith.constant 0 : index
    %c0_118 = arith.constant 0 : index
    %c1_119 = arith.constant 1 : index
    %c48 = arith.constant 48 : index
    %94 = vector.load %arg13[%c0_117, %c0_118, %c1_119, %c48] : memref<2x16x16x72xf32, #tpu.memory_space<vmem>>, vector<2x15x15x8xf32>
    tpu.vector_store %arg13[%c0_117, %c0_118, %c1_119, %c48], %93 {strides = array<i32>} : memref<2x16x16x72xf32, #tpu.memory_space<vmem>>, vector<2x15x15x8xf32>,
    %95 = vector.extract_strided_slice %79 {offsets = [0, 1, 0, 0], sizes = [2, 15, 16, 8], strides = [1, 1, 1, 1]} : vector<2x16x16x8xf32> to vector<2x15x16x8xf32>
    %c0_120 = arith.constant 0 : index
    %c0_121 = arith.constant 0 : index
    %c0_122 = arith.constant 0 : index
    %c56 = arith.constant 56 : index
    %96 = vector.load %arg13[%c0_120, %c0_121, %c0_122, %c56] : memref<2x16x16x72xf32, #tpu.memory_space<vmem>>, vector<2x15x16x8xf32>
    tpu.vector_store %arg13[%c0_120, %c0_121, %c0_122, %c56], %95 {strides = array<i32>} : memref<2x16x16x72xf32, #tpu.memory_space<vmem>>, vector<2x15x16x8xf32>,
    %97 = vector.extract_strided_slice %79 {offsets = [0, 1, 1, 0], sizes = [2, 15, 15, 8], strides = [1, 1, 1, 1]} : vector<2x16x16x8xf32> to vector<2x15x15x8xf32>
    %c0_123 = arith.constant 0 : index
    %c0_124 = arith.constant 0 : index
    %c0_125 = arith.constant 0 : index
    %c64 = arith.constant 64 : index
    %98 = vector.load %arg13[%c0_123, %c0_124, %c0_125, %c64] : memref<2x16x16x72xf32, #tpu.memory_space<vmem>>, vector<2x15x15x8xf32>
    tpu.vector_store %arg13[%c0_123, %c0_124, %c0_125, %c64], %97 {strides = array<i32>} : memref<2x16x16x72xf32, #tpu.memory_space<vmem>>, vector<2x15x15x8xf32>,
    %c0_126 = arith.constant 0 : index
    %c0_127 = arith.constant 0 : index
    %c0_128 = arith.constant 0 : index
    %c0_129 = arith.constant 0 : index
    %99 = vector.load %arg13[%c0_126, %c0_127, %c0_128, %c0_129] : memref<2x16x16x72xf32, #tpu.memory_space<vmem>>, vector<2x16x16x72xf32>
    %100 = vector.shape_cast %99 : vector<2x16x16x72xf32> to vector<512x72xf32>
    %c0_130 = arith.constant 0 : index
    %c0_131 = arith.constant 0 : index
    %101 = vector.load %arg5[%c0_130, %c0_131] : memref<72x8xf32, #tpu.memory_space<vmem>>, vector<72x8xf32>
    %cst_132 = arith.constant dense<0.000000e+00> : vector<512x8xf32>
    %102 = tpu.matmul %100, %101, %cst_132 {dimension_numbers = #tpu.dot_dimension_numbers<[1], [0], [0], [1], [0, 0, 1, 1], [], []>} : vector<512x72xf32>, vector<72x8xf32>, vector<512x8xf32> -> vector<512x8xf32>
    %c0_133 = arith.constant 0 : index
    %c0_134 = arith.constant 0 : index
    %103 = vector.load %arg6[%c0_133, %c0_134] : memref<1x8xf32, #tpu.memory_space<vmem>>, vector<1x8xf32>
    %c0_135 = arith.constant 0 : index
    %c0_136 = arith.constant 0 : index
    %104 = vector.load %arg7[%c0_135, %c0_136] : memref<1x8xf32, #tpu.memory_space<vmem>>, vector<1x8xf32>
    %cst_137 = arith.constant dense<0.000000e+00> : vector<8xf32>
    %105 = vector.multi_reduction <add>, %102, %cst_137 [0] : vector<512x8xf32> to vector<8xf32>
    %106 = vector.shape_cast %105 : vector<8xf32> to vector<1x8xf32>
    %cst_138 = arith.constant 5.120000e+02 : f32
    %107 = vector.broadcast %cst_138 : f32 to vector<1x8xf32>
    %108 = arith.divf %106, %107 : vector<1x8xf32>
    %109 = vector.broadcast %108 : vector<1x8xf32> to vector<512x8xf32>
    %110 = arith.subf %102, %109 : vector<512x8xf32>
    %111 = vector.broadcast %108 : vector<1x8xf32> to vector<512x8xf32>
    %112 = arith.subf %102, %111 : vector<512x8xf32>
    %113 = arith.mulf %110, %112 : vector<512x8xf32>
    %cst_139 = arith.constant dense<0.000000e+00> : vector<8xf32>
    %114 = vector.multi_reduction <add>, %113, %cst_139 [0] : vector<512x8xf32> to vector<8xf32>
    %115 = vector.shape_cast %114 : vector<8xf32> to vector<1x8xf32>
    %cst_140 = arith.constant 5.120000e+02 : f32
    %116 = vector.broadcast %cst_140 : f32 to vector<1x8xf32>
    %117 = arith.divf %115, %116 : vector<1x8xf32>
    %118 = vector.broadcast %108 : vector<1x8xf32> to vector<512x8xf32>
    %119 = arith.subf %102, %118 : vector<512x8xf32>
    %cst_141 = arith.constant 9.99999974E-6 : f32
    %120 = vector.broadcast %cst_141 : f32 to vector<1x8xf32>
    %121 = arith.addf %117, %120 : vector<1x8xf32>
    %122 = math.rsqrt %121 : vector<1x8xf32>
    %123 = vector.broadcast %122 : vector<1x8xf32> to vector<512x8xf32>
    %124 = arith.mulf %119, %123 : vector<512x8xf32>
    %125 = vector.broadcast %103 : vector<1x8xf32> to vector<512x8xf32>
    %126 = arith.mulf %124, %125 : vector<512x8xf32>
    %127 = vector.broadcast %104 : vector<1x8xf32> to vector<512x8xf32>
    %128 = arith.addf %126, %127 : vector<512x8xf32>
    %129 = arith.addf %128, %78 : vector<512x8xf32>
    %cst_142 = arith.constant 0.000000e+00 : f32
    %130 = vector.broadcast %cst_142 : f32 to vector<512x8xf32>
    %131 = arith.maximumf %129, %130 : vector<512x8xf32>
    %132 = vector.shape_cast %131 : vector<512x8xf32> to vector<32x16x8xf32>
    %133 = vector.extract_strided_slice %132 {offsets = [0, 0, 0], sizes = [32, 1, 8], strides = [1, 1, 1]} : vector<32x16x8xf32> to vector<32x1x8xf32>
    %134 = vector.shape_cast %133 : vector<32x1x8xf32> to vector<32x8xf32>
    %c0_143 = arith.constant 0 : index
    %c0_144 = arith.constant 0 : index
    %135 = vector.load %arg11[%c0_143, %c0_144] : memref<32x128xf32, #tpu.memory_space<vmem>>, vector<32x8xf32>
    tpu.vector_store %arg11[%c0_143, %c0_144], %134 {strides = array<i32>} : memref<32x128xf32, #tpu.memory_space<vmem>>, vector<32x8xf32>,
    %136 = vector.extract_strided_slice %132 {offsets = [0, 1, 0], sizes = [32, 1, 8], strides = [1, 1, 1]} : vector<32x16x8xf32> to vector<32x1x8xf32>
    %137 = vector.shape_cast %136 : vector<32x1x8xf32> to vector<32x8xf32>
    %c0_145 = arith.constant 0 : index
    %c8_146 = arith.constant 8 : index
    %138 = vector.load %arg11[%c0_145, %c8_146] : memref<32x128xf32, #tpu.memory_space<vmem>>, vector<32x8xf32>
    tpu.vector_store %arg11[%c0_145, %c8_146], %137 {strides = array<i32>} : memref<32x128xf32, #tpu.memory_space<vmem>>, vector<32x8xf32>,
    %139 = vector.extract_strided_slice %132 {offsets = [0, 2, 0], sizes = [32, 1, 8], strides = [1, 1, 1]} : vector<32x16x8xf32> to vector<32x1x8xf32>
    %140 = vector.shape_cast %139 : vector<32x1x8xf32> to vector<32x8xf32>
    %c0_147 = arith.constant 0 : index
    %c16_148 = arith.constant 16 : index
    %141 = vector.load %arg11[%c0_147, %c16_148] : memref<32x128xf32, #tpu.memory_space<vmem>>, vector<32x8xf32>
    tpu.vector_store %arg11[%c0_147, %c16_148], %140 {strides = array<i32>} : memref<32x128xf32, #tpu.memory_space<vmem>>, vector<32x8xf32>,
    %142 = vector.extract_strided_slice %132 {offsets = [0, 3, 0], sizes = [32, 1, 8], strides = [1, 1, 1]} : vector<32x16x8xf32> to vector<32x1x8xf32>
    %143 = vector.shape_cast %142 : vector<32x1x8xf32> to vector<32x8xf32>
    %c0_149 = arith.constant 0 : index
    %c24_150 = arith.constant 24 : index
    %144 = vector.load %arg11[%c0_149, %c24_150] : memref<32x128xf32, #tpu.memory_space<vmem>>, vector<32x8xf32>
    tpu.vector_store %arg11[%c0_149, %c24_150], %143 {strides = array<i32>} : memref<32x128xf32, #tpu.memory_space<vmem>>, vector<32x8xf32>,
    %145 = vector.extract_strided_slice %132 {offsets = [0, 4, 0], sizes = [32, 1, 8], strides = [1, 1, 1]} : vector<32x16x8xf32> to vector<32x1x8xf32>
    %146 = vector.shape_cast %145 : vector<32x1x8xf32> to vector<32x8xf32>
    %c0_151 = arith.constant 0 : index
    %c32_152 = arith.constant 32 : index
    %147 = vector.load %arg11[%c0_151, %c32_152] : memref<32x128xf32, #tpu.memory_space<vmem>>, vector<32x8xf32>
    tpu.vector_store %arg11[%c0_151, %c32_152], %146 {strides = array<i32>} : memref<32x128xf32, #tpu.memory_space<vmem>>, vector<32x8xf32>,
    %148 = vector.extract_strided_slice %132 {offsets = [0, 5, 0], sizes = [32, 1, 8], strides = [1, 1, 1]} : vector<32x16x8xf32> to vector<32x1x8xf32>
    %149 = vector.shape_cast %148 : vector<32x1x8xf32> to vector<32x8xf32>
    %c0_153 = arith.constant 0 : index
    %c40_154 = arith.constant 40 : index
    %150 = vector.load %arg11[%c0_153, %c40_154] : memref<32x128xf32, #tpu.memory_space<vmem>>, vector<32x8xf32>
    tpu.vector_store %arg11[%c0_153, %c40_154], %149 {strides = array<i32>} : memref<32x128xf32, #tpu.memory_space<vmem>>, vector<32x8xf32>,
    %151 = vector.extract_strided_slice %132 {offsets = [0, 6, 0], sizes = [32, 1, 8], strides = [1, 1, 1]} : vector<32x16x8xf32> to vector<32x1x8xf32>
    %152 = vector.shape_cast %151 : vector<32x1x8xf32> to vector<32x8xf32>
    %c0_155 = arith.constant 0 : index
    %c48_156 = arith.constant 48 : index
    %153 = vector.load %arg11[%c0_155, %c48_156] : memref<32x128xf32, #tpu.memory_space<vmem>>, vector<32x8xf32>
    tpu.vector_store %arg11[%c0_155, %c48_156], %152 {strides = array<i32>} : memref<32x128xf32, #tpu.memory_space<vmem>>, vector<32x8xf32>,
    %154 = vector.extract_strided_slice %132 {offsets = [0, 7, 0], sizes = [32, 1, 8], strides = [1, 1, 1]} : vector<32x16x8xf32> to vector<32x1x8xf32>
    %155 = vector.shape_cast %154 : vector<32x1x8xf32> to vector<32x8xf32>
    %c0_157 = arith.constant 0 : index
    %c56_158 = arith.constant 56 : index
    %156 = vector.load %arg11[%c0_157, %c56_158] : memref<32x128xf32, #tpu.memory_space<vmem>>, vector<32x8xf32>
    tpu.vector_store %arg11[%c0_157, %c56_158], %155 {strides = array<i32>} : memref<32x128xf32, #tpu.memory_space<vmem>>, vector<32x8xf32>,
    %157 = vector.extract_strided_slice %132 {offsets = [0, 8, 0], sizes = [32, 1, 8], strides = [1, 1, 1]} : vector<32x16x8xf32> to vector<32x1x8xf32>
    %158 = vector.shape_cast %157 : vector<32x1x8xf32> to vector<32x8xf32>
    %c0_159 = arith.constant 0 : index
    %c64_160 = arith.constant 64 : index
    %159 = vector.load %arg11[%c0_159, %c64_160] : memref<32x128xf32, #tpu.memory_space<vmem>>, vector<32x8xf32>
    tpu.vector_store %arg11[%c0_159, %c64_160], %158 {strides = array<i32>} : memref<32x128xf32, #tpu.memory_space<vmem>>, vector<32x8xf32>,
    %160 = vector.extract_strided_slice %132 {offsets = [0, 9, 0], sizes = [32, 1, 8], strides = [1, 1, 1]} : vector<32x16x8xf32> to vector<32x1x8xf32>
    %161 = vector.shape_cast %160 : vector<32x1x8xf32> to vector<32x8xf32>
    %c0_161 = arith.constant 0 : index
    %c72 = arith.constant 72 : index
    %162 = vector.load %arg11[%c0_161, %c72] : memref<32x128xf32, #tpu.memory_space<vmem>>, vector<32x8xf32>
    tpu.vector_store %arg11[%c0_161, %c72], %161 {strides = array<i32>} : memref<32x128xf32, #tpu.memory_space<vmem>>, vector<32x8xf32>,
    %163 = vector.extract_strided_slice %132 {offsets = [0, 10, 0], sizes = [32, 1, 8], strides = [1, 1, 1]} : vector<32x16x8xf32> to vector<32x1x8xf32>
    %164 = vector.shape_cast %163 : vector<32x1x8xf32> to vector<32x8xf32>
    %c0_162 = arith.constant 0 : index
    %c80 = arith.constant 80 : index
    %165 = vector.load %arg11[%c0_162, %c80] : memref<32x128xf32, #tpu.memory_space<vmem>>, vector<32x8xf32>
    tpu.vector_store %arg11[%c0_162, %c80], %164 {strides = array<i32>} : memref<32x128xf32, #tpu.memory_space<vmem>>, vector<32x8xf32>,
    %166 = vector.extract_strided_slice %132 {offsets = [0, 11, 0], sizes = [32, 1, 8], strides = [1, 1, 1]} : vector<32x16x8xf32> to vector<32x1x8xf32>
    %167 = vector.shape_cast %166 : vector<32x1x8xf32> to vector<32x8xf32>
    %c0_163 = arith.constant 0 : index
    %c88 = arith.constant 88 : index
    %168 = vector.load %arg11[%c0_163, %c88] : memref<32x128xf32, #tpu.memory_space<vmem>>, vector<32x8xf32>
    tpu.vector_store %arg11[%c0_163, %c88], %167 {strides = array<i32>} : memref<32x128xf32, #tpu.memory_space<vmem>>, vector<32x8xf32>,
    %169 = vector.extract_strided_slice %132 {offsets = [0, 12, 0], sizes = [32, 1, 8], strides = [1, 1, 1]} : vector<32x16x8xf32> to vector<32x1x8xf32>
    %170 = vector.shape_cast %169 : vector<32x1x8xf32> to vector<32x8xf32>
    %c0_164 = arith.constant 0 : index
    %c96 = arith.constant 96 : index
    %171 = vector.load %arg11[%c0_164, %c96] : memref<32x128xf32, #tpu.memory_space<vmem>>, vector<32x8xf32>
    tpu.vector_store %arg11[%c0_164, %c96], %170 {strides = array<i32>} : memref<32x128xf32, #tpu.memory_space<vmem>>, vector<32x8xf32>,
    %172 = vector.extract_strided_slice %132 {offsets = [0, 13, 0], sizes = [32, 1, 8], strides = [1, 1, 1]} : vector<32x16x8xf32> to vector<32x1x8xf32>
    %173 = vector.shape_cast %172 : vector<32x1x8xf32> to vector<32x8xf32>
    %c0_165 = arith.constant 0 : index
    %c104 = arith.constant 104 : index
    %174 = vector.load %arg11[%c0_165, %c104] : memref<32x128xf32, #tpu.memory_space<vmem>>, vector<32x8xf32>
    tpu.vector_store %arg11[%c0_165, %c104], %173 {strides = array<i32>} : memref<32x128xf32, #tpu.memory_space<vmem>>, vector<32x8xf32>,
    %175 = vector.extract_strided_slice %132 {offsets = [0, 14, 0], sizes = [32, 1, 8], strides = [1, 1, 1]} : vector<32x16x8xf32> to vector<32x1x8xf32>
    %176 = vector.shape_cast %175 : vector<32x1x8xf32> to vector<32x8xf32>
    %c0_166 = arith.constant 0 : index
    %c112 = arith.constant 112 : index
    %177 = vector.load %arg11[%c0_166, %c112] : memref<32x128xf32, #tpu.memory_space<vmem>>, vector<32x8xf32>
    tpu.vector_store %arg11[%c0_166, %c112], %176 {strides = array<i32>} : memref<32x128xf32, #tpu.memory_space<vmem>>, vector<32x8xf32>,
    %178 = vector.extract_strided_slice %132 {offsets = [0, 15, 0], sizes = [32, 1, 8], strides = [1, 1, 1]} : vector<32x16x8xf32> to vector<32x1x8xf32>
    %179 = vector.shape_cast %178 : vector<32x1x8xf32> to vector<32x8xf32>
    %c0_167 = arith.constant 0 : index
    %c120 = arith.constant 120 : index
    %180 = vector.load %arg11[%c0_167, %c120] : memref<32x128xf32, #tpu.memory_space<vmem>>, vector<32x8xf32>
    tpu.vector_store %arg11[%c0_167, %c120], %179 {strides = array<i32>} : memref<32x128xf32, #tpu.memory_space<vmem>>, vector<32x8xf32>,
    return
  }
  func.func @transform_0(%arg0: i32) -> (i32, i32, i32, i32) {
    %c0_i32 = arith.constant 0 : i32
    %c0_i32_0 = arith.constant 0 : i32
    %c0_i32_1 = arith.constant 0 : i32
    %c0_i32_2 = arith.constant 0 : i32
    %c0_i32_3 = arith.constant 0 : i32
    return %c0_i32, %c0_i32_0, %c0_i32_1, %c0_i32_2 : i32, i32, i32, i32
  }
  func.func @transform_1(%arg0: i32) -> (i32, i32) {
    %c0_i32 = arith.constant 0 : i32
    %c0_i32_0 = arith.constant 0 : i32
    %c0_i32_1 = arith.constant 0 : i32
    return %c0_i32, %c0_i32_0 : i32, i32
  }
  func.func @transform_2(%arg0: i32) -> (i32, i32) {
    %c0_i32 = arith.constant 0 : i32
    %c0_i32_0 = arith.constant 0 : i32
    %c0_i32_1 = arith.constant 0 : i32
    return %c0_i32, %c0_i32_0 : i32, i32
  }
  func.func @transform_3(%arg0: i32) -> (i32, i32) {
    %c0_i32 = arith.constant 0 : i32
    %c0_i32_0 = arith.constant 0 : i32
    %c0_i32_1 = arith.constant 0 : i32
    return %c0_i32, %c0_i32_0 : i32, i32
  }
  func.func @transform_4(%arg0: i32) -> (i32, i32) {
    %c0_i32 = arith.constant 0 : i32
    %c0_i32_0 = arith.constant 0 : i32
    %c0_i32_1 = arith.constant 0 : i32
    return %c0_i32, %c0_i32_0 : i32, i32
  }
  func.func @transform_5(%arg0: i32) -> (i32, i32) {
    %c0_i32 = arith.constant 0 : i32
    %c0_i32_0 = arith.constant 0 : i32
    %c0_i32_1 = arith.constant 0 : i32
    return %c0_i32, %c0_i32_0 : i32, i32
  }
  func.func @transform_6(%arg0: i32) -> (i32, i32) {
    %c0_i32 = arith.constant 0 : i32
    %c0_i32_0 = arith.constant 0 : i32
    %c0_i32_1 = arith.constant 0 : i32
    return %c0_i32, %c0_i32_0 : i32, i32
  }
  func.func @transform_7(%arg0: i32) -> (i32, i32) {
    %c0_i32 = arith.constant 0 : i32
    %c0_i32_0 = arith.constant 0 : i32
    %c0_i32_1 = arith.constant 0 : i32
    return %c0_i32, %c0_i32_0 : i32, i32
  }
  func.func @transform_8(%arg0: i32) -> (i32, i32) {
    %c0_i32 = arith.constant 0 : i32
    %c0_i32_0 = arith.constant 0 : i32
    %c0_i32_1 = arith.constant 0 : i32
    return %c0_i32, %c0_i32_0 : i32, i32
  }
  func.func @transform_9(%arg0: i32) -> (i32, i32) {
    %c0_i32 = arith.constant 0 : i32
    %c0_i32_0 = arith.constant 0 : i32
    %c0_i32_1 = arith.constant 0 : i32
    return %c0_i32, %c0_i32_0 : i32, i32
  }
  func.func @transform_10(%arg0: i32) -> (i32, i32) {
    %c0_i32 = arith.constant 0 : i32
    %c0_i32_0 = arith.constant 0 : i32
    %c0_i32_1 = arith.constant 0 : i32
    return %c0_i32, %c0_i32_0 : i32, i32
  }
}

</mosaic_0001>

<llo_original>
// kernel: tpu_custom_call.1
$region0: #{tpu_custom_call.1}
  #allocation0 [shape = 'u32[]', space=smem, size = 0x4, offset = 0x4, fixed_abs, tag = 'smem constant byte address 0x4 - core index']
  #allocation1 [shape = 'u32[144,128]{1,0:T(1,128)}', space=vmem, size = 0x12000, scoped, tag = 'internal scratch']
  #allocation2 [shape = 'f32[2,16,16,36]{3,2,1,0:T(8,128)}', space=vmem, size = 0x40000, scoped, tag = 'scratch operand']
  #allocation3 [shape = 'f32[2,16,16,72]{3,2,1,0:T(8,128)}', space=vmem, size = 0x40000, scoped, tag = 'scratch operand']
  %s0 = inlined_call_operand.vmem [shape: f32[2,18,18,4], index: 0, kind: input, shape index: {}]
  %s1 = inlined_call_operand.vmem [shape: f32[36,8], index: 1, kind: input, shape index: {}]
  %s2 = inlined_call_operand.vmem [shape: f32[1,8], index: 2, kind: input, shape index: {}]
  %s3 = inlined_call_operand.vmem [shape: f32[1,8], index: 3, kind: input, shape index: {}]
  %s4 = inlined_call_operand.vmem [shape: f32[72,8], index: 4, kind: input, shape index: {}]
  %s5 = inlined_call_operand.vmem [shape: f32[1,8], index: 5, kind: input, shape index: {}]
  %s6 = inlined_call_operand.vmem [shape: f32[1,8], index: 6, kind: input, shape index: {}]
  %s7 = inlined_call_operand.vmem [shape: f32[4,8], index: 7, kind: input, shape index: {}]
  %s8 = inlined_call_operand.vmem [shape: f32[1,8], index: 8, kind: input, shape index: {}]
  %s9 = inlined_call_operand.vmem [shape: f32[1,8], index: 9, kind: input, shape index: {}]
  %s10 = inlined_call_operand.hbm [shape: f32[32,128], index: 10, kind: output, shape index: {}]
  %s11 = sld [smem:[#allocation0]]
  $region50: #{tpu_custom_call.1} parent=0
    _
  %s13 = ssub.s32 1, %s11
  %s14 = scalar_select 0, %s13, %s11
  $region1: #{tpu_custom_call.1} parent=0
    #allocation4 [shape = 'u8[16384]{0}', space=vmem, size = 0x4000, scoped, tag = 'output window, operand 0, single buffered']
    #allocation5 [shape = 's32[1]{0}', space=sflag, size = 0x4, scoped, tag = 'scoped memory for tpu_custom_call.1']
    %15 = vsyncpa [#allocation5], 0
    // Predicated region
    $region2: #{tpu_custom_call.1} parent=1 // pred_check
      _
    $region3: #{tpu_custom_call.1} parent=1 // pred_check_branch
      %17 = sbr.rel (0) target = $region5
    $region4: #{tpu_custom_call.1} parent=1 // pred_region
      _
    $region5: #{tpu_custom_call.1} parent=1 // pred_fallthru
      _
    // Predicated region
    $region6: #{tpu_custom_call.1} parent=1 // pred_check
      _
    $region7: #{tpu_custom_call.1} parent=1 // pred_check_branch
      %19 = sbr.rel (0) target = $region9
    $region8: #{tpu_custom_call.1} parent=1 // pred_region
      _
    $region9: #{tpu_custom_call.1} parent=1 // pred_fallthru
      _
    // Predicated region
    $region10: #{tpu_custom_call.1} parent=1 // pred_check
      _
    $region11: #{tpu_custom_call.1} parent=1 // pred_check_branch
      %21 = sbr.rel (0) target = $region13
    $region12: #{tpu_custom_call.1} parent=1 // pred_region
      _
    $region13: #{tpu_custom_call.1} parent=1 // pred_fallthru
      _
    // Predicated region
    $region14: #{tpu_custom_call.1} parent=1 // pred_check
      _
    $region15: #{tpu_custom_call.1} parent=1 // pred_check_branch
      %23 = sbr.rel (0) target = $region17
    $region16: #{tpu_custom_call.1} parent=1 // pred_region
      _
    $region17: #{tpu_custom_call.1} parent=1 // pred_fallthru
      _
    // Predicated region
    $region18: #{tpu_custom_call.1} parent=1 // pred_check
      _
    $region19: #{tpu_custom_call.1} parent=1 // pred_check_branch
      %25 = sbr.rel (0) target = $region21
    $region20: #{tpu_custom_call.1} parent=1 // pred_region
      _
    $region21: #{tpu_custom_call.1} parent=1 // pred_fallthru
      _
    // Predicated region
    $region22: #{tpu_custom_call.1} parent=1 // pred_check
      _
    $region23: #{tpu_custom_call.1} parent=1 // pred_check_branch
      %27 = sbr.rel (0) target = $region25
    $region24: #{tpu_custom_call.1} parent=1 // pred_region
      _
    $region25: #{tpu_custom_call.1} parent=1 // pred_fallthru
      _
    // Predicated region
    $region26: #{tpu_custom_call.1} parent=1 // pred_check
      _
    $region27: #{tpu_custom_call.1} parent=1 // pred_check_branch
      %29 = sbr.rel (0) target = $region29
    $region28: #{tpu_custom_call.1} parent=1 // pred_region
      _
    $region29: #{tpu_custom_call.1} parent=1 // pred_fallthru
      _
    // Predicated region
    $region30: #{tpu_custom_call.1} parent=1 // pred_check
      _
    $region31: #{tpu_custom_call.1} parent=1 // pred_check_branch
      %31 = sbr.rel (0) target = $region33
    $region32: #{tpu_custom_call.1} parent=1 // pred_region
      _
    $region33: #{tpu_custom_call.1} parent=1 // pred_fallthru
      _
    // Predicated region
    $region34: #{tpu_custom_call.1} parent=1 // pred_check
      _
    $region35: #{tpu_custom_call.1} parent=1 // pred_check_branch
      %33 = sbr.rel (0) target = $region37
    $region36: #{tpu_custom_call.1} parent=1 // pred_region
      _
    $region37: #{tpu_custom_call.1} parent=1 // pred_fallthru
      _
    // Predicated region
    $region38: #{tpu_custom_call.1} parent=1 // pred_check
      _
    $region39: #{tpu_custom_call.1} parent=1 // pred_check_branch
      %35 = sbr.rel (0) target = $region41
    $region40: #{tpu_custom_call.1} parent=1 // pred_region
      _
    $region41: #{tpu_custom_call.1} parent=1 // pred_fallthru
      _
    %v36 = vld [vmem:[%s0] sm:$0xff]
    %v37 = vld [vmem:[%s0 + $0x8] sm:$0xff]
    %v38 = vld [vmem:[%s0 + $0x18] sm:$0xff]
    %v39 = vld [vmem:[%s0 + $0x20] sm:$0xff]
    %v40 = vld [vmem:[%s0 + $0x30] sm:$0xff]
    %v41 = vld [vmem:[%s0 + $0x38] sm:$0xff]
    %v42 = vld [vmem:[%s0 + $0x48] sm:$0xff]
    %v43 = vld [vmem:[%s0 + $0x50] sm:$0xff]
    %v44 = vld [vmem:[%s0 + $0x60] sm:$0xff]
    %v45 = vld [vmem:[%s0 + $0x68] sm:$0xff]
    %v46 = vld [vmem:[%s0 + $0x78] sm:$0xff]
    %v47 = vld [vmem:[%s0 + $0x80] sm:$0xff]
    %v48 = vld [vmem:[%s0 + $0x90] sm:$0xff]
    %v49 = vld [vmem:[%s0 + $0x98] sm:$0xff]
    %v50 = vld [vmem:[%s0 + $0xa8] sm:$0xff]
    %v51 = vld [vmem:[%s0 + $0xb0] sm:$0xff]
    %v52 = vld [vmem:[%s0 + $0xc0] sm:$0xff]
    %v53 = vld [vmem:[%s0 + $0xc8] sm:$0xff]
    %v54 = vld [vmem:[%s0 + $0xd8] sm:$0xff]
    %v55 = vld [vmem:[%s0 + $0xe0] sm:$0xff]
    %v56 = vld [vmem:[%s0 + $0xf0] sm:$0xff]
    %v57 = vld [vmem:[%s0 + $0xf8] sm:$0xff]
    %v58 = vld [vmem:[%s0 + $0x108] sm:$0xff]
    %v59 = vld [vmem:[%s0 + $0x110] sm:$0xff]
    %v60 = vld [vmem:[%s0 + $0x120] sm:$0xff]
    %v61 = vld [vmem:[%s0 + $0x128] sm:$0xff]
    %v62 = vld [vmem:[%s0 + $0x138] sm:$0xff]
    %v63 = vld [vmem:[%s0 + $0x140] sm:$0xff]
    %v64 = vld [vmem:[%s0 + $0x150] sm:$0xff]
    %v65 = vld [vmem:[%s0 + $0x158] sm:$0xff]
    %v66 = vld [vmem:[%s0 + $0x168] sm:$0xff]
    %v67 = vld [vmem:[%s0 + $0x170] sm:$0xff]
    %v68 = vld [vmem:[%s0 + $0x1b0] sm:$0xff]
    %v69 = vld [vmem:[%s0 + $0x1b8] sm:$0xff]
    %v70 = vld [vmem:[%s0 + $0x1c8] sm:$0xff]
    %v71 = vld [vmem:[%s0 + $0x1d0] sm:$0xff]
    %v72 = vld [vmem:[%s0 + $0x1e0] sm:$0xff]
    %v73 = vld [vmem:[%s0 + $0x1e8] sm:$0xff]
    %v74 = vld [vmem:[%s0 + $0x1f8] sm:$0xff]
    %v75 = vld [vmem:[%s0 + $0x200] sm:$0xff]
    %v76 = vld [vmem:[%s0 + $0x210] sm:$0xff]
    %v77 = vld [vmem:[%s0 + $0x218] sm:$0xff]
    %v78 = vld [vmem:[%s0 + $0x228] sm:$0xff]
    %v79 = vld [vmem:[%s0 + $0x230] sm:$0xff]
    %v80 = vld [vmem:[%s0 + $0x240] sm:$0xff]
    %v81 = vld [vmem:[%s0 + $0x248] sm:$0xff]
    %v82 = vld [vmem:[%s0 + $0x258] sm:$0xff]
    %v83 = vld [vmem:[%s0 + $0x260] sm:$0xff]
    %v84 = vld [vmem:[%s0 + $0x270] sm:$0xff]
    %v85 = vld [vmem:[%s0 + $0x278] sm:$0xff]
    %v86 = vld [vmem:[%s0 + $0x288] sm:$0xff]
    %v87 = vld [vmem:[%s0 + $0x290] sm:$0xff]
    %v88 = vld [vmem:[%s0 + $0x2a0] sm:$0xff]
    %v89 = vld [vmem:[%s0 + $0x2a8] sm:$0xff]
    %v90 = vld [vmem:[%s0 + $0x2b8] sm:$0xff]
    %v91 = vld [vmem:[%s0 + $0x2c0] sm:$0xff]
    %v92 = vld [vmem:[%s0 + $0x2d0] sm:$0xff]
    %v93 = vld [vmem:[%s0 + $0x2d8] sm:$0xff]
    %v94 = vld [vmem:[%s0 + $0x2e8] sm:$0xff]
    %v95 = vld [vmem:[%s0 + $0x2f0] sm:$0xff]
    %v96 = vld [vmem:[%s0 + $0x300] sm:$0xff]
    %v97 = vld [vmem:[%s0 + $0x308] sm:$0xff]
    %v98 = vld [vmem:[%s0 + $0x318] sm:$0xff]
    %v99 = vld [vmem:[%s0 + $0x320] sm:$0xff]
    %vm100 = vcmask 31744
    %101 = vst.msk [vmem:[#allocation2] sm:$0xff] %vm100, %v36
    %102 = vst.msk [vmem:[#allocation2 + $0x8] sm:$0xff] %vm100, %v37
    %103 = vst.msk [vmem:[#allocation2 + $0x10] sm:$0xff] %vm100, %v38
    %104 = vst.msk [vmem:[#allocation2 + $0x18] sm:$0xff] %vm100, %v39
    %105 = vst.msk [vmem:[#allocation2 + $0x20] sm:$0xff] %vm100, %v40
    %106 = vst.msk [vmem:[#allocation2 + $0x28] sm:$0xff] %vm100, %v41
    %107 = vst.msk [vmem:[#allocation2 + $0x30] sm:$0xff] %vm100, %v42
    %108 = vst.msk [vmem:[#allocation2 + $0x38] sm:$0xff] %vm100, %v43
    %109 = vst.msk [vmem:[#allocation2 + $0x40] sm:$0xff] %vm100, %v44
    %110 = vst.msk [vmem:[#allocation2 + $0x48] sm:$0xff] %vm100, %v45
    %111 = vst.msk [vmem:[#allocation2 + $0x50] sm:$0xff] %vm100, %v46
    %112 = vst.msk [vmem:[#allocation2 + $0x58] sm:$0xff] %vm100, %v47
    %113 = vst.msk [vmem:[#allocation2 + $0x60] sm:$0xff] %vm100, %v48
    %114 = vst.msk [vmem:[#allocation2 + $0x68] sm:$0xff] %vm100, %v49
    %115 = vst.msk [vmem:[#allocation2 + $0x70] sm:$0xff] %vm100, %v50
    %116 = vst.msk [vmem:[#allocation2 + $0x78] sm:$0xff] %vm100, %v51
    %117 = vst.msk [vmem:[#allocation2 + $0x80] sm:$0xff] %vm100, %v52
    %118 = vst.msk [vmem:[#allocation2 + $0x88] sm:$0xff] %vm100, %v53
    %119 = vst.msk [vmem:[#allocation2 + $0x90] sm:$0xff] %vm100, %v54
    %120 = vst.msk [vmem:[#allocation2 + $0x98] sm:$0xff] %vm100, %v55
    %121 = vst.msk [vmem:[#allocation2 + $0xa0] sm:$0xff] %vm100, %v56
    %122 = vst.msk [vmem:[#allocation2 + $0xa8] sm:$0xff] %vm100, %v57
    %123 = vst.msk [vmem:[#allocation2 + $0xb0] sm:$0xff] %vm100, %v58
    %124 = vst.msk [vmem:[#allocation2 + $0xb8] sm:$0xff] %vm100, %v59
    %125 = vst.msk [vmem:[#allocation2 + $0xc0] sm:$0xff] %vm100, %v60
    %126 = vst.msk [vmem:[#allocation2 + $0xc8] sm:$0xff] %vm100, %v61
    %127 = vst.msk [vmem:[#allocation2 + $0xd0] sm:$0xff] %vm100, %v62
    %128 = vst.msk [vmem:[#allocation2 + $0xd8] sm:$0xff] %vm100, %v63
    %129 = vst.msk [vmem:[#allocation2 + $0xe0] sm:$0xff] %vm100, %v64
    %130 = vst.msk [vmem:[#allocation2 + $0xe8] sm:$0xff] %vm100, %v65
    %131 = vst.msk [vmem:[#allocation2 + $0xf0] sm:$0xff] %vm100, %v66
    %132 = vst.msk [vmem:[#allocation2 + $0xf8] sm:$0xff] %vm100, %v67
    %133 = vst.msk [vmem:[#allocation2 + $0x100] sm:$0xff] %vm100, %v68
    %134 = vst.msk [vmem:[#allocation2 + $0x108] sm:$0xff] %vm100, %v69
    %135 = vst.msk [vmem:[#allocation2 + $0x110] sm:$0xff] %vm100, %v70
    %136 = vst.msk [vmem:[#allocation2 + $0x118] sm:$0xff] %vm100, %v71
    %137 = vst.msk [vmem:[#allocation2 + $0x120] sm:$0xff] %vm100, %v72
    %138 = vst.msk [vmem:[#allocation2 + $0x128] sm:$0xff] %vm100, %v73
    %139 = vst.msk [vmem:[#allocation2 + $0x130] sm:$0xff] %vm100, %v74
    %140 = vst.msk [vmem:[#allocation2 + $0x138] sm:$0xff] %vm100, %v75
    %141 = vst.msk [vmem:[#allocation2 + $0x140] sm:$0xff] %vm100, %v76
    %142 = vst.msk [vmem:[#allocation2 + $0x148] sm:$0xff] %vm100, %v77
    %143 = vst.msk [vmem:[#allocation2 + $0x150] sm:$0xff] %vm100, %v78
    %144 = vst.msk [vmem:[#allocation2 + $0x158] sm:$0xff] %vm100, %v79
    %145 = vst.msk [vmem:[#allocation2 + $0x160] sm:$0xff] %vm100, %v80
    %146 = vst.msk [vmem:[#allocation2 + $0x168] sm:$0xff] %vm100, %v81
    %147 = vst.msk [vmem:[#allocation2 + $0x170] sm:$0xff] %vm100, %v82
    %148 = vst.msk [vmem:[#allocation2 + $0x178] sm:$0xff] %vm100, %v83
    %149 = vst.msk [vmem:[#allocation2 + $0x180] sm:$0xff] %vm100, %v84
    %150 = vst.msk [vmem:[#allocation2 + $0x188] sm:$0xff] %vm100, %v85
    %151 = vst.msk [vmem:[#allocation2 + $0x190] sm:$0xff] %vm100, %v86
    %152 = vst.msk [vmem:[#allocation2 + $0x198] sm:$0xff] %vm100, %v87
    %153 = vst.msk [vmem:[#allocation2 + $0x1a0] sm:$0xff] %vm100, %v88
    %154 = vst.msk [vmem:[#allocation2 + $0x1a8] sm:$0xff] %vm100, %v89
    %155 = vst.msk [vmem:[#allocation2 + $0x1b0] sm:$0xff] %vm100, %v90
    %156 = vst.msk [vmem:[#allocation2 + $0x1b8] sm:$0xff] %vm100, %v91
    %157 = vst.msk [vmem:[#allocation2 + $0x1c0] sm:$0xff] %vm100, %v92
    %158 = vst.msk [vmem:[#allocation2 + $0x1c8] sm:$0xff] %vm100, %v93
    %159 = vst.msk [vmem:[#allocation2 + $0x1d0] sm:$0xff] %vm100, %v94
    %160 = vst.msk [vmem:[#allocation2 + $0x1d8] sm:$0xff] %vm100, %v95
    %161 = vst.msk [vmem:[#allocation2 + $0x1e0] sm:$0xff] %vm100, %v96
    %162 = vst.msk [vmem:[#allocation2 + $0x1e8] sm:$0xff] %vm100, %v97
    %163 = vst.msk [vmem:[#allocation2 + $0x1f0] sm:$0xff] %vm100, %v98
    %164 = vst.msk [vmem:[#allocation2 + $0x1f8] sm:$0xff] %vm100, %v99
    %v165 = vld [vmem:[%s0 + $0x1] sm:$0xff]
    %v166 = vld [vmem:[%s0 + $0x9] sm:$0xff]
    %v167 = vld [vmem:[%s0 + $0x19] sm:$0xff]
    %v168 = vld [vmem:[%s0 + $0x21] sm:$0xff]
    %v169 = vld [vmem:[%s0 + $0x31] sm:$0xff]
    %v170 = vld [vmem:[%s0 + $0x39] sm:$0xff]
    %v171 = vld [vmem:[%s0 + $0x49] sm:$0xff]
    %v172 = vld [vmem:[%s0 + $0x51] sm:$0xff]
    %v173 = vld [vmem:[%s0 + $0x61] sm:$0xff]
    %v174 = vld [vmem:[%s0 + $0x69] sm:$0xff]
    %v175 = vld [vmem:[%s0 + $0x79] sm:$0xff]
    %v176 = vld [vmem:[%s0 + $0x81] sm:$0xff]
    %v177 = vld [vmem:[%s0 + $0x91] sm:$0xff]
    %v178 = vld [vmem:[%s0 + $0x99] sm:$0xff]
    %v179 = vld [vmem:[%s0 + $0xa9] sm:$0xff]
    %v180 = vld [vmem:[%s0 + $0xb1] sm:$0xff]
    %v181 = vld [vmem:[%s0 + $0xc1] sm:$0xff]
    %v182 = vld [vmem:[%s0 + $0xc9] sm:$0xff]
    %v183 = vld [vmem:[%s0 + $0xd9] sm:$0xff]
    %v184 = vld [vmem:[%s0 + $0xe1] sm:$0xff]
    %v185 = vld [vmem:[%s0 + $0xf1] sm:$0xff]
    %v186 = vld [vmem:[%s0 + $0xf9] sm:$0xff]
    %v187 = vld [vmem:[%s0 + $0x109] sm:$0xff]
    %v188 = vld [vmem:[%s0 + $0x111] sm:$0xff]
    %v189 = vld [vmem:[%s0 + $0x121] sm:$0xff]
    %v190 = vld [vmem:[%s0 + $0x129] sm:$0xff]
    %v191 = vld [vmem:[%s0 + $0x139] sm:$0xff]
    %v192 = vld [vmem:[%s0 + $0x141] sm:$0xff]
    %v193 = vld [vmem:[%s0 + $0x151] sm:$0xff]
    %v194 = vld [vmem:[%s0 + $0x159] sm:$0xff]
    %v195 = vld [vmem:[%s0 + $0x169] sm:$0xff]
    %v196 = vld [vmem:[%s0 + $0x171] sm:$0xff]
    %v197 = vld [vmem:[%s0 + $0x1b1] sm:$0xff]
    %v198 = vld [vmem:[%s0 + $0x1b9] sm:$0xff]
    %v199 = vld [vmem:[%s0 + $0x1c9] sm:$0xff]
    %v200 = vld [vmem:[%s0 + $0x1d1] sm:$0xff]
    %v201 = vld [vmem:[%s0 + $0x1e1] sm:$0xff]
    %v202 = vld [vmem:[%s0 + $0x1e9] sm:$0xff]
    %v203 = vld [vmem:[%s0 + $0x1f9] sm:$0xff]
    %v204 = vld [vmem:[%s0 + $0x201] sm:$0xff]
    %v205 = vld [vmem:[%s0 + $0x211] sm:$0xff]
    %v206 = vld [vmem:[%s0 + $0x219] sm:$0xff]
    %v207 = vld [vmem:[%s0 + $0x229] sm:$0xff]
    %v208 = vld [vmem:[%s0 + $0x231] sm:$0xff]
    %v209 = vld [vmem:[%s0 + $0x241] sm:$0xff]
    %v210 = vld [vmem:[%s0 + $0x249] sm:$0xff]
    %v211 = vld [vmem:[%s0 + $0x259] sm:$0xff]
    %v212 = vld [vmem:[%s0 + $0x261] sm:$0xff]
    %v213 = vld [vmem:[%s0 + $0x271] sm:$0xff]
    %v214 = vld [vmem:[%s0 + $0x279] sm:$0xff]
    %v215 = vld [vmem:[%s0 + $0x289] sm:$0xff]
    %v216 = vld [vmem:[%s0 + $0x291] sm:$0xff]
    %v217 = vld [vmem:[%s0 + $0x2a1] sm:$0xff]
    %v218 = vld [vmem:[%s0 + $0x2a9] sm:$0xff]
    %v219 = vld [vmem:[%s0 + $0x2b9] sm:$0xff]
    %v220 = vld [vmem:[%s0 + $0x2c1] sm:$0xff]
    %v221 = vld [vmem:[%s0 + $0x2d1] sm:$0xff]
    %v222 = vld [vmem:[%s0 + $0x2d9] sm:$0xff]
    %v223 = vld [vmem:[%s0 + $0x2e9] sm:$0xff]
    %v224 = vld [vmem:[%s0 + $0x2f1] sm:$0xff]
    %v225 = vld [vmem:[%s0 + $0x301] sm:$0xff]
    %v226 = vld [vmem:[%s0 + $0x309] sm:$0xff]
    %v227 = vld [vmem:[%s0 + $0x319] sm:$0xff]
    %v228 = vld [vmem:[%s0 + $0x321] sm:$0xff]
    %293 = vrot.lane.b32.xlu0 %v165, 4
    %v294 = vpop.permute.xlu0 %293
    %295 = vrot.lane.b32.xlu0 %v166, 4
    %v296 = vpop.permute.xlu0 %295
    %297 = vrot.lane.b32.xlu0 %v167, 4
    %v298 = vpop.permute.xlu0 %297
    %299 = vrot.lane.b32.xlu0 %v168, 4
    %v300 = vpop.permute.xlu0 %299
    %301 = vrot.lane.b32.xlu0 %v169, 4
    %v302 = vpop.permute.xlu0 %301
    %303 = vrot.lane.b32.xlu0 %v170, 4
    %v304 = vpop.permute.xlu0 %303
    %305 = vrot.lane.b32.xlu0 %v171, 4
    %v306 = vpop.permute.xlu0 %305
    %307 = vrot.lane.b32.xlu0 %v172, 4
    %v308 = vpop.permute.xlu0 %307
    %309 = vrot.lane.b32.xlu0 %v173, 4
    %v310 = vpop.permute.xlu0 %309
    %311 = vrot.lane.b32.xlu0 %v174, 4
    %v312 = vpop.permute.xlu0 %311
    %313 = vrot.lane.b32.xlu0 %v175, 4
    %v314 = vpop.permute.xlu0 %313
    %315 = vrot.lane.b32.xlu0 %v176, 4
    %v316 = vpop.permute.xlu0 %315
    %317 = vrot.lane.b32.xlu0 %v177, 4
    %v318 = vpop.permute.xlu0 %317
    %319 = vrot.lane.b32.xlu0 %v178, 4
    %v320 = vpop.permute.xlu0 %319
    %321 = vrot.lane.b32.xlu0 %v179, 4
    %v322 = vpop.permute.xlu0 %321
    %323 = vrot.lane.b32.xlu0 %v180, 4
    %v324 = vpop.permute.xlu0 %323
    %325 = vrot.lane.b32.xlu0 %v181, 4
    %v326 = vpop.permute.xlu0 %325
    %327 = vrot.lane.b32.xlu0 %v182, 4
    %v328 = vpop.permute.xlu0 %327
    %329 = vrot.lane.b32.xlu0 %v183, 4
    %v330 = vpop.permute.xlu0 %329
    %331 = vrot.lane.b32.xlu0 %v184, 4
    %v332 = vpop.permute.xlu0 %331
    %333 = vrot.lane.b32.xlu0 %v185, 4
    %v334 = vpop.permute.xlu0 %333
    %335 = vrot.lane.b32.xlu0 %v186, 4
    %v336 = vpop.permute.xlu0 %335
    %337 = vrot.lane.b32.xlu0 %v187, 4
    %v338 = vpop.permute.xlu0 %337
    %339 = vrot.lane.b32.xlu0 %v188, 4
    %v340 = vpop.permute.xlu0 %339
    %341 = vrot.lane.b32.xlu0 %v189, 4
    %v342 = vpop.permute.xlu0 %341
    %343 = vrot.lane.b32.xlu0 %v190, 4
    %v344 = vpop.permute.xlu0 %343
    %345 = vrot.lane.b32.xlu0 %v191, 4
    %v346 = vpop.permute.xlu0 %345
    %347 = vrot.lane.b32.xlu0 %v192, 4
    %v348 = vpop.permute.xlu0 %347
    %349 = vrot.lane.b32.xlu0 %v193, 4
    %v350 = vpop.permute.xlu0 %349
    %351 = vrot.lane.b32.xlu0 %v194, 4
    %v352 = vpop.permute.xlu0 %351
    %353 = vrot.lane.b32.xlu0 %v195, 4
    %v354 = vpop.permute.xlu0 %353
    %355 = vrot.lane.b32.xlu0 %v196, 4
    %v356 = vpop.permute.xlu0 %355
    %357 = vrot.lane.b32.xlu0 %v197, 4
    %v358 = vpop.permute.xlu0 %357
    %359 = vrot.lane.b32.xlu0 %v198, 4
    %v360 = vpop.permute.xlu0 %359
    %361 = vrot.lane.b32.xlu0 %v199, 4
    %v362 = vpop.permute.xlu0 %361
    %363 = vrot.lane.b32.xlu0 %v200, 4
    %v364 = vpop.permute.xlu0 %363
    %365 = vrot.lane.b32.xlu0 %v201, 4
    %v366 = vpop.permute.xlu0 %365
    %367 = vrot.lane.b32.xlu0 %v202, 4
    %v368 = vpop.permute.xlu0 %367
    %369 = vrot.lane.b32.xlu0 %v203, 4
    %v370 = vpop.permute.xlu0 %369
    %371 = vrot.lane.b32.xlu0 %v204, 4
    %v372 = vpop.permute.xlu0 %371
    %373 = vrot.lane.b32.xlu0 %v205, 4
    %v374 = vpop.permute.xlu0 %373
    %375 = vrot.lane.b32.xlu0 %v206, 4
    %v376 = vpop.permute.xlu0 %375
    %377 = vrot.lane.b32.xlu0 %v207, 4
    %v378 = vpop.permute.xlu0 %377
    %379 = vrot.lane.b32.xlu0 %v208, 4
    %v380 = vpop.permute.xlu0 %379
    %381 = vrot.lane.b32.xlu0 %v209, 4
    %v382 = vpop.permute.xlu0 %381
    %383 = vrot.lane.b32.xlu0 %v210, 4
    %v384 = vpop.permute.xlu0 %383
    %385 = vrot.lane.b32.xlu0 %v211, 4
    %v386 = vpop.permute.xlu0 %385
    %387 = vrot.lane.b32.xlu0 %v212, 4
    %v388 = vpop.permute.xlu0 %387
    %389 = vrot.lane.b32.xlu0 %v213, 4
    %v390 = vpop.permute.xlu0 %389
    %391 = vrot.lane.b32.xlu0 %v214, 4
    %v392 = vpop.permute.xlu0 %391
    %393 = vrot.lane.b32.xlu0 %v215, 4
    %v394 = vpop.permute.xlu0 %393
    %395 = vrot.lane.b32.xlu0 %v216, 4
    %v396 = vpop.permute.xlu0 %395
    %397 = vrot.lane.b32.xlu0 %v217, 4
    %v398 = vpop.permute.xlu0 %397
    %399 = vrot.lane.b32.xlu0 %v218, 4
    %v400 = vpop.permute.xlu0 %399
    %401 = vrot.lane.b32.xlu0 %v219, 4
    %v402 = vpop.permute.xlu0 %401
    %403 = vrot.lane.b32.xlu0 %v220, 4
    %v404 = vpop.permute.xlu0 %403
    %405 = vrot.lane.b32.xlu0 %v221, 4
    %v406 = vpop.permute.xlu0 %405
    %407 = vrot.lane.b32.xlu0 %v222, 4
    %v408 = vpop.permute.xlu0 %407
    %409 = vrot.lane.b32.xlu0 %v223, 4
    %v410 = vpop.permute.xlu0 %409
    %411 = vrot.lane.b32.xlu0 %v224, 4
    %v412 = vpop.permute.xlu0 %411
    %413 = vrot.lane.b32.xlu0 %v225, 4
    %v414 = vpop.permute.xlu0 %413
    %415 = vrot.lane.b32.xlu0 %v226, 4
    %v416 = vpop.permute.xlu0 %415
    %417 = vrot.lane.b32.xlu0 %v227, 4
    %v418 = vpop.permute.xlu0 %417
    %419 = vrot.lane.b32.xlu0 %v228, 4
    %v420 = vpop.permute.xlu0 %419
    %vm485 = vcmask 64544
    %486 = vst.msk [vmem:[#allocation2] sm:$0xff] %vm485, %v294
    %487 = vst.msk [vmem:[#allocation2 + $0x8] sm:$0xff] %vm485, %v296
    %488 = vst.msk [vmem:[#allocation2 + $0x10] sm:$0xff] %vm485, %v298
    %489 = vst.msk [vmem:[#allocation2 + $0x18] sm:$0xff] %vm485, %v300
    %490 = vst.msk [vmem:[#allocation2 + $0x20] sm:$0xff] %vm485, %v302
    %491 = vst.msk [vmem:[#allocation2 + $0x28] sm:$0xff] %vm485, %v304
    %492 = vst.msk [vmem:[#allocation2 + $0x30] sm:$0xff] %vm485, %v306
    %493 = vst.msk [vmem:[#allocation2 + $0x38] sm:$0xff] %vm485, %v308
    %494 = vst.msk [vmem:[#allocation2 + $0x40] sm:$0xff] %vm485, %v310
    %495 = vst.msk [vmem:[#allocation2 + $0x48] sm:$0xff] %vm485, %v312
    %496 = vst.msk [vmem:[#allocation2 + $0x50] sm:$0xff] %vm485, %v314
    %497 = vst.msk [vmem:[#allocation2 + $0x58] sm:$0xff] %vm485, %v316
    %498 = vst.msk [vmem:[#allocation2 + $0x60] sm:$0xff] %vm485, %v318
    %499 = vst.msk [vmem:[#allocation2 + $0x68] sm:$0xff] %vm485, %v320
    %500 = vst.msk [vmem:[#allocation2 + $0x70] sm:$0xff] %vm485, %v322
    %501 = vst.msk [vmem:[#allocation2 + $0x78] sm:$0xff] %vm485, %v324
    %502 = vst.msk [vmem:[#allocation2 + $0x80] sm:$0xff] %vm485, %v326
    %503 = vst.msk [vmem:[#allocation2 + $0x88] sm:$0xff] %vm485, %v328
    %504 = vst.msk [vmem:[#allocation2 + $0x90] sm:$0xff] %vm485, %v330
    %505 = vst.msk [vmem:[#allocation2 + $0x98] sm:$0xff] %vm485, %v332
    %506 = vst.msk [vmem:[#allocation2 + $0xa0] sm:$0xff] %vm485, %v334
    %507 = vst.msk [vmem:[#allocation2 + $0xa8] sm:$0xff] %vm485, %v336
    %508 = vst.msk [vmem:[#allocation2 + $0xb0] sm:$0xff] %vm485, %v338
    %509 = vst.msk [vmem:[#allocation2 + $0xb8] sm:$0xff] %vm485, %v340
    %510 = vst.msk [vmem:[#allocation2 + $0xc0] sm:$0xff] %vm485, %v342
    %511 = vst.msk [vmem:[#allocation2 + $0xc8] sm:$0xff] %vm485, %v344
    %512 = vst.msk [vmem:[#allocation2 + $0xd0] sm:$0xff] %vm485, %v346
    %513 = vst.msk [vmem:[#allocation2 + $0xd8] sm:$0xff] %vm485, %v348
    %514 = vst.msk [vmem:[#allocation2 + $0xe0] sm:$0xff] %vm485, %v350
    %515 = vst.msk [vmem:[#allocation2 + $0xe8] sm:$0xff] %vm485, %v352
    %516 = vst.msk [vmem:[#allocation2 + $0xf0] sm:$0xff] %vm485, %v354
    %517 = vst.msk [vmem:[#allocation2 + $0xf8] sm:$0xff] %vm485, %v356
    %518 = vst.msk [vmem:[#allocation2 + $0x100] sm:$0xff] %vm485, %v358
    %519 = vst.msk [vmem:[#allocation2 + $0x108] sm:$0xff] %vm485, %v360
    %520 = vst.msk [vmem:[#allocation2 + $0x110] sm:$0xff] %vm485, %v362
    %521 = vst.msk [vmem:[#allocation2 + $0x118] sm:$0xff] %vm485, %v364
    %522 = vst.msk [vmem:[#allocation2 + $0x120] sm:$0xff] %vm485, %v366
    %523 = vst.msk [vmem:[#allocation2 + $0x128] sm:$0xff] %vm485, %v368
    %524 = vst.msk [vmem:[#allocation2 + $0x130] sm:$0xff] %vm485, %v370
    %525 = vst.msk [vmem:[#allocation2 + $0x138] sm:$0xff] %vm485, %v372
    %526 = vst.msk [vmem:[#allocation2 + $0x140] sm:$0xff] %vm485, %v374
    %527 = vst.msk [vmem:[#allocation2 + $0x148] sm:$0xff] %vm485, %v376
    %528 = vst.msk [vmem:[#allocation2 + $0x150] sm:$0xff] %vm485, %v378
    %529 = vst.msk [vmem:[#allocation2 + $0x158] sm:$0xff] %vm485, %v380
    %530 = vst.msk [vmem:[#allocation2 + $0x160] sm:$0xff] %vm485, %v382
    %531 = vst.msk [vmem:[#allocation2 + $0x168] sm:$0xff] %vm485, %v384
    %532 = vst.msk [vmem:[#allocation2 + $0x170] sm:$0xff] %vm485, %v386
    %533 = vst.msk [vmem:[#allocation2 + $0x178] sm:$0xff] %vm485, %v388
    %534 = vst.msk [vmem:[#allocation2 + $0x180] sm:$0xff] %vm485, %v390
    %535 = vst.msk [vmem:[#allocation2 + $0x188] sm:$0xff] %vm485, %v392
    %536 = vst.msk [vmem:[#allocation2 + $0x190] sm:$0xff] %vm485, %v394
    %537 = vst.msk [vmem:[#allocation2 + $0x198] sm:$0xff] %vm485, %v396
    %538 = vst.msk [vmem:[#allocation2 + $0x1a0] sm:$0xff] %vm485, %v398
    %539 = vst.msk [vmem:[#allocation2 + $0x1a8] sm:$0xff] %vm485, %v400
    %540 = vst.msk [vmem:[#allocation2 + $0x1b0] sm:$0xff] %vm485, %v402
    %541 = vst.msk [vmem:[#allocation2 + $0x1b8] sm:$0xff] %vm485, %v404
    %542 = vst.msk [vmem:[#allocation2 + $0x1c0] sm:$0xff] %vm485, %v406
    %543 = vst.msk [vmem:[#allocation2 + $0x1c8] sm:$0xff] %vm485, %v408
    %544 = vst.msk [vmem:[#allocation2 + $0x1d0] sm:$0xff] %vm485, %v410
    %545 = vst.msk [vmem:[#allocation2 + $0x1d8] sm:$0xff] %vm485, %v412
    %546 = vst.msk [vmem:[#allocation2 + $0x1e0] sm:$0xff] %vm485, %v414
    %547 = vst.msk [vmem:[#allocation2 + $0x1e8] sm:$0xff] %vm485, %v416
    %548 = vst.msk [vmem:[#allocation2 + $0x1f0] sm:$0xff] %vm485, %v418
    %549 = vst.msk [vmem:[#allocation2 + $0x1f8] sm:$0xff] %vm485, %v420
    %v550 = vld [vmem:[%s0 + $0x2] sm:$0xff]
    %v551 = vld [vmem:[%s0 + $0xa] sm:$0xff]
    %v552 = vld [vmem:[%s0 + $0x1a] sm:$0xff]
    %v553 = vld [vmem:[%s0 + $0x22] sm:$0xff]
    %v554 = vld [vmem:[%s0 + $0x32] sm:$0xff]
    %v555 = vld [vmem:[%s0 + $0x3a] sm:$0xff]
    %v556 = vld [vmem:[%s0 + $0x4a] sm:$0xff]
    %v557 = vld [vmem:[%s0 + $0x52] sm:$0xff]
    %v558 = vld [vmem:[%s0 + $0x62] sm:$0xff]
    %v559 = vld [vmem:[%s0 + $0x6a] sm:$0xff]
    %v560 = vld [vmem:[%s0 + $0x7a] sm:$0xff]
    %v561 = vld [vmem:[%s0 + $0x82] sm:$0xff]
    %v562 = vld [vmem:[%s0 + $0x92] sm:$0xff]
    %v563 = vld [vmem:[%s0 + $0x9a] sm:$0xff]
    %v564 = vld [vmem:[%s0 + $0xaa] sm:$0xff]
    %v565 = vld [vmem:[%s0 + $0xb2] sm:$0xff]
    %v566 = vld [vmem:[%s0 + $0xc2] sm:$0xff]
    %v567 = vld [vmem:[%s0 + $0xca] sm:$0xff]
    %v568 = vld [vmem:[%s0 + $0xda] sm:$0xff]
    %v569 = vld [vmem:[%s0 + $0xe2] sm:$0xff]
    %v570 = vld [vmem:[%s0 + $0xf2] sm:$0xff]
    %v571 = vld [vmem:[%s0 + $0xfa] sm:$0xff]
    %v572 = vld [vmem:[%s0 + $0x10a] sm:$0xff]
    %v573 = vld [vmem:[%s0 + $0x112] sm:$0xff]
    %v574 = vld [vmem:[%s0 + $0x122] sm:$0xff]
    %v575 = vld [vmem:[%s0 + $0x12a] sm:$0xff]
    %v576 = vld [vmem:[%s0 + $0x13a] sm:$0xff]
    %v577 = vld [vmem:[%s0 + $0x142] sm:$0xff]
    %v578 = vld [vmem:[%s0 + $0x152] sm:$0xff]
    %v579 = vld [vmem:[%s0 + $0x15a] sm:$0xff]
    %v580 = vld [vmem:[%s0 + $0x16a] sm:$0xff]
    %v581 = vld [vmem:[%s0 + $0x172] sm:$0xff]
    %v582 = vld [vmem:[%s0 + $0x1b2] sm:$0xff]
    %v583 = vld [vmem:[%s0 + $0x1ba] sm:$0xff]
    %v584 = vld [vmem:[%s0 + $0x1ca] sm:$0xff]
    %v585 = vld [vmem:[%s0 + $0x1d2] sm:$0xff]
    %v586 = vld [vmem:[%s0 + $0x1e2] sm:$0xff]
    %v587 = vld [vmem:[%s0 + $0x1ea] sm:$0xff]
    %v588 = vld [vmem:[%s0 + $0x1fa] sm:$0xff]
    %v589 = vld [vmem:[%s0 + $0x202] sm:$0xff]
    %v590 = vld [vmem:[%s0 + $0x212] sm:$0xff]
    %v591 = vld [vmem:[%s0 + $0x21a] sm:$0xff]
    %v592 = vld [vmem:[%s0 + $0x22a] sm:$0xff]
    %v593 = vld [vmem:[%s0 + $0x232] sm:$0xff]
    %v594 = vld [vmem:[%s0 + $0x242] sm:$0xff]
    %v595 = vld [vmem:[%s0 + $0x24a] sm:$0xff]
    %v596 = vld [vmem:[%s0 + $0x25a] sm:$0xff]
    %v597 = vld [vmem:[%s0 + $0x262] sm:$0xff]
    %v598 = vld [vmem:[%s0 + $0x272] sm:$0xff]
    %v599 = vld [vmem:[%s0 + $0x27a] sm:$0xff]
    %v600 = vld [vmem:[%s0 + $0x28a] sm:$0xff]
    %v601 = vld [vmem:[%s0 + $0x292] sm:$0xff]
    %v602 = vld [vmem:[%s0 + $0x2a2] sm:$0xff]
    %v603 = vld [vmem:[%s0 + $0x2aa] sm:$0xff]
    %v604 = vld [vmem:[%s0 + $0x2ba] sm:$0xff]
    %v605 = vld [vmem:[%s0 + $0x2c2] sm:$0xff]
    %v606 = vld [vmem:[%s0 + $0x2d2] sm:$0xff]
    %v607 = vld [vmem:[%s0 + $0x2da] sm:$0xff]
    %v608 = vld [vmem:[%s0 + $0x2ea] sm:$0xff]
    %v609 = vld [vmem:[%s0 + $0x2f2] sm:$0xff]
    %v610 = vld [vmem:[%s0 + $0x302] sm:$0xff]
    %v611 = vld [vmem:[%s0 + $0x30a] sm:$0xff]
    %v612 = vld [vmem:[%s0 + $0x31a] sm:$0xff]
    %v613 = vld [vmem:[%s0 + $0x322] sm:$0xff]
    %678 = vrot.lane.b32.xlu0 %v550, 8
    %v679 = vpop.permute.xlu0 %678
    %680 = vrot.lane.b32.xlu0 %v551, 8
    %v681 = vpop.permute.xlu0 %680
    %682 = vrot.lane.b32.xlu0 %v552, 8
    %v683 = vpop.permute.xlu0 %682
    %684 = vrot.lane.b32.xlu0 %v553, 8
    %v685 = vpop.permute.xlu0 %684
    %686 = vrot.lane.b32.xlu0 %v554, 8
    %v687 = vpop.permute.xlu0 %686
    %688 = vrot.lane.b32.xlu0 %v555, 8
    %v689 = vpop.permute.xlu0 %688
    %690 = vrot.lane.b32.xlu0 %v556, 8
    %v691 = vpop.permute.xlu0 %690
    %692 = vrot.lane.b32.xlu0 %v557, 8
    %v693 = vpop.permute.xlu0 %692
    %694 = vrot.lane.b32.xlu0 %v558, 8
    %v695 = vpop.permute.xlu0 %694
    %696 = vrot.lane.b32.xlu0 %v559, 8
    %v697 = vpop.permute.xlu0 %696
    %698 = vrot.lane.b32.xlu0 %v560, 8
    %v699 = vpop.permute.xlu0 %698
    %700 = vrot.lane.b32.xlu0 %v561, 8
    %v701 = vpop.permute.xlu0 %700
    %702 = vrot.lane.b32.xlu0 %v562, 8
    %v703 = vpop.permute.xlu0 %702
    %704 = vrot.lane.b32.xlu0 %v563, 8
    %v705 = vpop.permute.xlu0 %704
    %706 = vrot.lane.b32.xlu0 %v564, 8
    %v707 = vpop.permute.xlu0 %706
    %708 = vrot.lane.b32.xlu0 %v565, 8
    %v709 = vpop.permute.xlu0 %708
    %710 = vrot.lane.b32.xlu0 %v566, 8
    %v711 = vpop.permute.xlu0 %710
    %712 = vrot.lane.b32.xlu0 %v567, 8
    %v713 = vpop.permute.xlu0 %712
    %714 = vrot.lane.b32.xlu0 %v568, 8
    %v715 = vpop.permute.xlu0 %714
    %716 = vrot.lane.b32.xlu0 %v569, 8
    %v717 = vpop.permute.xlu0 %716
    %718 = vrot.lane.b32.xlu0 %v570, 8
    %v719 = vpop.permute.xlu0 %718
    %720 = vrot.lane.b32.xlu0 %v571, 8
    %v721 = vpop.permute.xlu0 %720
    %722 = vrot.lane.b32.xlu0 %v572, 8
    %v723 = vpop.permute.xlu0 %722
    %724 = vrot.lane.b32.xlu0 %v573, 8
    %v725 = vpop.permute.xlu0 %724
    %726 = vrot.lane.b32.xlu0 %v574, 8
    %v727 = vpop.permute.xlu0 %726
    %728 = vrot.lane.b32.xlu0 %v575, 8
    %v729 = vpop.permute.xlu0 %728
    %730 = vrot.lane.b32.xlu0 %v576, 8
    %v731 = vpop.permute.xlu0 %730
    %732 = vrot.lane.b32.xlu0 %v577, 8
    %v733 = vpop.permute.xlu0 %732
    %734 = vrot.lane.b32.xlu0 %v578, 8
    %v735 = vpop.permute.xlu0 %734
    %736 = vrot.lane.b32.xlu0 %v579, 8
    %v737 = vpop.permute.xlu0 %736
    %738 = vrot.lane.b32.xlu0 %v580, 8
    %v739 = vpop.permute.xlu0 %738
    %740 = vrot.lane.b32.xlu0 %v581, 8
    %v741 = vpop.permute.xlu0 %740
    %742 = vrot.lane.b32.xlu0 %v582, 8
    %v743 = vpop.permute.xlu0 %742
    %744 = vrot.lane.b32.xlu0 %v583, 8
    %v745 = vpop.permute.xlu0 %744
    %746 = vrot.lane.b32.xlu0 %v584, 8
    %v747 = vpop.permute.xlu0 %746
    %748 = vrot.lane.b32.xlu0 %v585, 8
    %v749 = vpop.permute.xlu0 %748
    %750 = vrot.lane.b32.xlu0 %v586, 8
    %v751 = vpop.permute.xlu0 %750
    %752 = vrot.lane.b32.xlu0 %v587, 8
    %v753 = vpop.permute.xlu0 %752
    %754 = vrot.lane.b32.xlu0 %v588, 8
    %v755 = vpop.permute.xlu0 %754
    %756 = vrot.lane.b32.xlu0 %v589, 8
    %v757 = vpop.permute.xlu0 %756
    %758 = vrot.lane.b32.xlu0 %v590, 8
    %v759 = vpop.permute.xlu0 %758
    %760 = vrot.lane.b32.xlu0 %v591, 8
    %v761 = vpop.permute.xlu0 %760
    %762 = vrot.lane.b32.xlu0 %v592, 8
    %v763 = vpop.permute.xlu0 %762
    %764 = vrot.lane.b32.xlu0 %v593, 8
    %v765 = vpop.permute.xlu0 %764
    %766 = vrot.lane.b32.xlu0 %v594, 8
    %v767 = vpop.permute.xlu0 %766
    %768 = vrot.lane.b32.xlu0 %v595, 8
    %v769 = vpop.permute.xlu0 %768
    %770 = vrot.lane.b32.xlu0 %v596, 8
    %v771 = vpop.permute.xlu0 %770
    %772 = vrot.lane.b32.xlu0 %v597, 8
    %v773 = vpop.permute.xlu0 %772
    %774 = vrot.lane.b32.xlu0 %v598, 8
    %v775 = vpop.permute.xlu0 %774
    %776 = vrot.lane.b32.xlu0 %v599, 8
    %v777 = vpop.permute.xlu0 %776
    %778 = vrot.lane.b32.xlu0 %v600, 8
    %v779 = vpop.permute.xlu0 %778
    %780 = vrot.lane.b32.xlu0 %v601, 8
    %v781 = vpop.permute.xlu0 %780
    %782 = vrot.lane.b32.xlu0 %v602, 8
    %v783 = vpop.permute.xlu0 %782
    %784 = vrot.lane.b32.xlu0 %v603, 8
    %v785 = vpop.permute.xlu0 %784
    %786 = vrot.lane.b32.xlu0 %v604, 8
    %v787 = vpop.permute.xlu0 %786
    %788 = vrot.lane.b32.xlu0 %v605, 8
    %v789 = vpop.permute.xlu0 %788
    %790 = vrot.lane.b32.xlu0 %v606, 8
    %v791 = vpop.permute.xlu0 %790
    %792 = vrot.lane.b32.xlu0 %v607, 8
    %v793 = vpop.permute.xlu0 %792
    %794 = vrot.lane.b32.xlu0 %v608, 8
    %v795 = vpop.permute.xlu0 %794
    %796 = vrot.lane.b32.xlu0 %v609, 8
    %v797 = vpop.permute.xlu0 %796
    %798 = vrot.lane.b32.xlu0 %v610, 8
    %v799 = vpop.permute.xlu0 %798
    %800 = vrot.lane.b32.xlu0 %v611, 8
    %v801 = vpop.permute.xlu0 %800
    %802 = vrot.lane.b32.xlu0 %v612, 8
    %v803 = vpop.permute.xlu0 %802
    %804 = vrot.lane.b32.xlu0 %v613, 8
    %v805 = vpop.permute.xlu0 %804
    %vm870 = vcmask 97344
    %871 = vst.msk [vmem:[#allocation2] sm:$0xff] %vm870, %v679
    %872 = vst.msk [vmem:[#allocation2 + $0x8] sm:$0xff] %vm870, %v681
    %873 = vst.msk [vmem:[#allocation2 + $0x10] sm:$0xff] %vm870, %v683
    %874 = vst.msk [vmem:[#allocation2 + $0x18] sm:$0xff] %vm870, %v685
    %875 = vst.msk [vmem:[#allocation2 + $0x20] sm:$0xff] %vm870, %v687
    %876 = vst.msk [vmem:[#allocation2 + $0x28] sm:$0xff] %vm870, %v689
    %877 = vst.msk [vmem:[#allocation2 + $0x30] sm:$0xff] %vm870, %v691
    %878 = vst.msk [vmem:[#allocation2 + $0x38] sm:$0xff] %vm870, %v693
    %879 = vst.msk [vmem:[#allocation2 + $0x40] sm:$0xff] %vm870, %v695
    %880 = vst.msk [vmem:[#allocation2 + $0x48] sm:$0xff] %vm870, %v697
    %881 = vst.msk [vmem:[#allocation2 + $0x50] sm:$0xff] %vm870, %v699
    %882 = vst.msk [vmem:[#allocation2 + $0x58] sm:$0xff] %vm870, %v701
    %883 = vst.msk [vmem:[#allocation2 + $0x60] sm:$0xff] %vm870, %v703
    %884 = vst.msk [vmem:[#allocation2 + $0x68] sm:$0xff] %vm870, %v705
    %885 = vst.msk [vmem:[#allocation2 + $0x70] sm:$0xff] %vm870, %v707
    %886 = vst.msk [vmem:[#allocation2 + $0x78] sm:$0xff] %vm870, %v709
    %887 = vst.msk [vmem:[#allocation2 + $0x80] sm:$0xff] %vm870, %v711
    %888 = vst.msk [vmem:[#allocation2 + $0x88] sm:$0xff] %vm870, %v713
    %889 = vst.msk [vmem:[#allocation2 + $0x90] sm:$0xff] %vm870, %v715
    %890 = vst.msk [vmem:[#allocation2 + $0x98] sm:$0xff] %vm870, %v717
    %891 = vst.msk [vmem:[#allocation2 + $0xa0] sm:$0xff] %vm870, %v719
    %892 = vst.msk [vmem:[#allocation2 + $0xa8] sm:$0xff] %vm870, %v721
    %893 = vst.msk [vmem:[#allocation2 + $0xb0] sm:$0xff] %vm870, %v723
    %894 = vst.msk [vmem:[#allocation2 + $0xb8] sm:$0xff] %vm870, %v725
    %895 = vst.msk [vmem:[#allocation2 + $0xc0] sm:$0xff] %vm870, %v727
    %896 = vst.msk [vmem:[#allocation2 + $0xc8] sm:$0xff] %vm870, %v729
    %897 = vst.msk [vmem:[#allocation2 + $0xd0] sm:$0xff] %vm870, %v731
    %898 = vst.msk [vmem:[#allocation2 + $0xd8] sm:$0xff] %vm870, %v733
    %899 = vst.msk [vmem:[#allocation2 + $0xe0] sm:$0xff] %vm870, %v735
    %900 = vst.msk [vmem:[#allocation2 + $0xe8] sm:$0xff] %vm870, %v737
    %901 = vst.msk [vmem:[#allocation2 + $0xf0] sm:$0xff] %vm870, %v739
    %902 = vst.msk [vmem:[#allocation2 + $0xf8] sm:$0xff] %vm870, %v741
    %903 = vst.msk [vmem:[#allocation2 + $0x100] sm:$0xff] %vm870, %v743
    %904 = vst.msk [vmem:[#allocation2 + $0x108] sm:$0xff] %vm870, %v745
    %905 = vst.msk [vmem:[#allocation2 + $0x110] sm:$0xff] %vm870, %v747
    %906 = vst.msk [vmem:[#allocation2 + $0x118] sm:$0xff] %vm870, %v749
    %907 = vst.msk [vmem:[#allocation2 + $0x120] sm:$0xff] %vm870, %v751
    %908 = vst.msk [vmem:[#allocation2 + $0x128] sm:$0xff] %vm870, %v753
    %909 = vst.msk [vmem:[#allocation2 + $0x130] sm:$0xff] %vm870, %v755
    %910 = vst.msk [vmem:[#allocation2 + $0x138] sm:$0xff] %vm870, %v757
    %911 = vst.msk [vmem:[#allocation2 + $0x140] sm:$0xff] %vm870, %v759
    %912 = vst.msk [vmem:[#allocation2 + $0x148] sm:$0xff] %vm870, %v761
    %913 = vst.msk [vmem:[#allocation2 + $0x150] sm:$0xff] %vm870, %v763
    %914 = vst.msk [vmem:[#allocation2 + $0x158] sm:$0xff] %vm870, %v765
    %915 = vst.msk [vmem:[#allocation2 + $0x160] sm:$0xff] %vm870, %v767
    %916 = vst.msk [vmem:[#allocation2 + $0x168] sm:$0xff] %vm870, %v769
    %917 = vst.msk [vmem:[#allocation2 + $0x170] sm:$0xff] %vm870, %v771
    %918 = vst.msk [vmem:[#allocation2 + $0x178] sm:$0xff] %vm870, %v773
    %919 = vst.msk [vmem:[#allocation2 + $0x180] sm:$0xff] %vm870, %v775
    %920 = vst.msk [vmem:[#allocation2 + $0x188] sm:$0xff] %vm870, %v777
    %921 = vst.msk [vmem:[#allocation2 + $0x190] sm:$0xff] %vm870, %v779
    %922 = vst.msk [vmem:[#allocation2 + $0x198] sm:$0xff] %vm870, %v781
    %923 = vst.msk [vmem:[#allocation2 + $0x1a0] sm:$0xff] %vm870, %v783
    %924 = vst.msk [vmem:[#allocation2 + $0x1a8] sm:$0xff] %vm870, %v785
    %925 = vst.msk [vmem:[#allocation2 + $0x1b0] sm:$0xff] %vm870, %v787
    %926 = vst.msk [vmem:[#allocation2 + $0x1b8] sm:$0xff] %vm870, %v789
    %927 = vst.msk [vmem:[#allocation2 + $0x1c0] sm:$0xff] %vm870, %v791
    %928 = vst.msk [vmem:[#allocation2 + $0x1c8] sm:$0xff] %vm870, %v793
    %929 = vst.msk [vmem:[#allocation2 + $0x1d0] sm:$0xff] %vm870, %v795
    %930 = vst.msk [vmem:[#allocation2 + $0x1d8] sm:$0xff] %vm870, %v797
    %931 = vst.msk [vmem:[#allocation2 + $0x1e0] sm:$0xff] %vm870, %v799
    %932 = vst.msk [vmem:[#allocation2 + $0x1e8] sm:$0xff] %vm870, %v801
    %933 = vst.msk [vmem:[#allocation2 + $0x1f0] sm:$0xff] %vm870, %v803
    %934 = vst.msk [vmem:[#allocation2 + $0x1f8] sm:$0xff] %vm870, %v805
    %s935 = scalar_lea.vmem %s0, 24
    %v936 = vld [vmem:[%s935] sm:$0xff]
    %v937 = vld [vmem:[%s935 + $0x8] sm:$0xff]
    %v938 = vld [vmem:[%s935 + $0x18] sm:$0xff]
    %v939 = vld [vmem:[%s935 + $0x20] sm:$0xff]
    %v940 = vld [vmem:[%s935 + $0x30] sm:$0xff]
    %v941 = vld [vmem:[%s935 + $0x38] sm:$0xff]
    %v942 = vld [vmem:[%s935 + $0x48] sm:$0xff]
    %v943 = vld [vmem:[%s935 + $0x50] sm:$0xff]
    %v944 = vld [vmem:[%s935 + $0x60] sm:$0xff]
    %v945 = vld [vmem:[%s935 + $0x68] sm:$0xff]
    %v946 = vld [vmem:[%s935 + $0x78] sm:$0xff]
    %v947 = vld [vmem:[%s935 + $0x80] sm:$0xff]
    %v948 = vld [vmem:[%s935 + $0x90] sm:$0xff]
    %v949 = vld [vmem:[%s935 + $0x98] sm:$0xff]
    %v950 = vld [vmem:[%s935 + $0xa8] sm:$0xff]
    %v951 = vld [vmem:[%s935 + $0xb0] sm:$0xff]
    %v952 = vld [vmem:[%s935 + $0xc0] sm:$0xff]
    %v953 = vld [vmem:[%s935 + $0xc8] sm:$0xff]
    %v954 = vld [vmem:[%s935 + $0xd8] sm:$0xff]
    %v955 = vld [vmem:[%s935 + $0xe0] sm:$0xff]
    %v956 = vld [vmem:[%s935 + $0xf0] sm:$0xff]
    %v957 = vld [vmem:[%s935 + $0xf8] sm:$0xff]
    %v958 = vld [vmem:[%s935 + $0x108] sm:$0xff]
    %v959 = vld [vmem:[%s935 + $0x110] sm:$0xff]
    %v960 = vld [vmem:[%s935 + $0x120] sm:$0xff]
    %v961 = vld [vmem:[%s935 + $0x128] sm:$0xff]
    %v962 = vld [vmem:[%s935 + $0x138] sm:$0xff]
    %v963 = vld [vmem:[%s935 + $0x140] sm:$0xff]
    %v964 = vld [vmem:[%s935 + $0x150] sm:$0xff]
    %v965 = vld [vmem:[%s935 + $0x158] sm:$0xff]
    %v966 = vld [vmem:[%s935 + $0x168] sm:$0xff]
    %v967 = vld [vmem:[%s935 + $0x170] sm:$0xff]
    %v968 = vld [vmem:[%s935 + $0x1b0] sm:$0xff]
    %v969 = vld [vmem:[%s935 + $0x1b8] sm:$0xff]
    %v970 = vld [vmem:[%s935 + $0x1c8] sm:$0xff]
    %v971 = vld [vmem:[%s935 + $0x1d0] sm:$0xff]
    %v972 = vld [vmem:[%s935 + $0x1e0] sm:$0xff]
    %v973 = vld [vmem:[%s935 + $0x1e8] sm:$0xff]
    %v974 = vld [vmem:[%s935 + $0x1f8] sm:$0xff]
    %v975 = vld [vmem:[%s935 + $0x200] sm:$0xff]
    %v976 = vld [vmem:[%s935 + $0x210] sm:$0xff]
    %v977 = vld [vmem:[%s935 + $0x218] sm:$0xff]
    %v978 = vld [vmem:[%s935 + $0x228] sm:$0xff]
    %v979 = vld [vmem:[%s935 + $0x230] sm:$0xff]
    %v980 = vld [vmem:[%s935 + $0x240] sm:$0xff]
    %v981 = vld [vmem:[%s935 + $0x248] sm:$0xff]
    %v982 = vld [vmem:[%s935 + $0x258] sm:$0xff]
    %v983 = vld [vmem:[%s935 + $0x260] sm:$0xff]
    %v984 = vld [vmem:[%s935 + $0x270] sm:$0xff]
    %v985 = vld [vmem:[%s935 + $0x278] sm:$0xff]
    %v986 = vld [vmem:[%s935 + $0x288] sm:$0xff]
    %v987 = vld [vmem:[%s935 + $0x290] sm:$0xff]
    %v988 = vld [vmem:[%s935 + $0x2a0] sm:$0xff]
    %v989 = vld [vmem:[%s935 + $0x2a8] sm:$0xff]
    %v990 = vld [vmem:[%s935 + $0x2b8] sm:$0xff]
    %v991 = vld [vmem:[%s935 + $0x2c0] sm:$0xff]
    %v992 = vld [vmem:[%s935 + $0x2d0] sm:$0xff]
    %v993 = vld [vmem:[%s935 + $0x2d8] sm:$0xff]
    %v994 = vld [vmem:[%s935 + $0x2e8] sm:$0xff]
    %v995 = vld [vmem:[%s935 + $0x2f0] sm:$0xff]
    %v996 = vld [vmem:[%s935 + $0x300] sm:$0xff]
    %v997 = vld [vmem:[%s935 + $0x308] sm:$0xff]
    %v998 = vld [vmem:[%s935 + $0x318] sm:$0xff]
    %v999 = vld [vmem:[%s935 + $0x320] sm:$0xff]
    %1064 = vrot.lane.b32.xlu0 %v936, 12
    %v1065 = vpop.permute.xlu0 %1064
    %1066 = vrot.lane.b32.xlu0 %v937, 12
    %v1067 = vpop.permute.xlu0 %1066
    %1068 = vrot.lane.b32.xlu0 %v938, 12
    %v1069 = vpop.permute.xlu0 %1068
    %1070 = vrot.lane.b32.xlu0 %v939, 12
    %v1071 = vpop.permute.xlu0 %1070
    %1072 = vrot.lane.b32.xlu0 %v940, 12
    %v1073 = vpop.permute.xlu0 %1072
    %1074 = vrot.lane.b32.xlu0 %v941, 12
    %v1075 = vpop.permute.xlu0 %1074
    %1076 = vrot.lane.b32.xlu0 %v942, 12
    %v1077 = vpop.permute.xlu0 %1076
    %1078 = vrot.lane.b32.xlu0 %v943, 12
    %v1079 = vpop.permute.xlu0 %1078
    %1080 = vrot.lane.b32.xlu0 %v944, 12
    %v1081 = vpop.permute.xlu0 %1080
    %1082 = vrot.lane.b32.xlu0 %v945, 12
    %v1083 = vpop.permute.xlu0 %1082
    %1084 = vrot.lane.b32.xlu0 %v946, 12
    %v1085 = vpop.permute.xlu0 %1084
    %1086 = vrot.lane.b32.xlu0 %v947, 12
    %v1087 = vpop.permute.xlu0 %1086
    %1088 = vrot.lane.b32.xlu0 %v948, 12
    %v1089 = vpop.permute.xlu0 %1088
    %1090 = vrot.lane.b32.xlu0 %v949, 12
    %v1091 = vpop.permute.xlu0 %1090
    %1092 = vrot.lane.b32.xlu0 %v950, 12
    %v1093 = vpop.permute.xlu0 %1092
    %1094 = vrot.lane.b32.xlu0 %v951, 12
    %v1095 = vpop.permute.xlu0 %1094
    %1096 = vrot.lane.b32.xlu0 %v952, 12
    %v1097 = vpop.permute.xlu0 %1096
    %1098 = vrot.lane.b32.xlu0 %v953, 12
    %v1099 = vpop.permute.xlu0 %1098
    %1100 = vrot.lane.b32.xlu0 %v954, 12
    %v1101 = vpop.permute.xlu0 %1100
    %1102 = vrot.lane.b32.xlu0 %v955, 12
    %v1103 = vpop.permute.xlu0 %1102
    %1104 = vrot.lane.b32.xlu0 %v956, 12
    %v1105 = vpop.permute.xlu0 %1104
    %1106 = vrot.lane.b32.xlu0 %v957, 12
    %v1107 = vpop.permute.xlu0 %1106
    %1108 = vrot.lane.b32.xlu0 %v958, 12
    %v1109 = vpop.permute.xlu0 %1108
    %1110 = vrot.lane.b32.xlu0 %v959, 12
    %v1111 = vpop.permute.xlu0 %1110
    %1112 = vrot.lane.b32.xlu0 %v960, 12
    %v1113 = vpop.permute.xlu0 %1112
    %1114 = vrot.lane.b32.xlu0 %v961, 12
    %v1115 = vpop.permute.xlu0 %1114
    %1116 = vrot.lane.b32.xlu0 %v962, 12
    %v1117 = vpop.permute.xlu0 %1116
    %1118 = vrot.lane.b32.xlu0 %v963, 12
    %v1119 = vpop.permute.xlu0 %1118
    %1120 = vrot.lane.b32.xlu0 %v964, 12
    %v1121 = vpop.permute.xlu0 %1120
    %1122 = vrot.lane.b32.xlu0 %v965, 12
    %v1123 = vpop.permute.xlu0 %1122
    %1124 = vrot.lane.b32.xlu0 %v966, 12
    %v1125 = vpop.permute.xlu0 %1124
    %1126 = vrot.lane.b32.xlu0 %v967, 12
    %v1127 = vpop.permute.xlu0 %1126
    %1128 = vrot.lane.b32.xlu0 %v968, 12
    %v1129 = vpop.permute.xlu0 %1128
    %1130 = vrot.lane.b32.xlu0 %v969, 12
    %v1131 = vpop.permute.xlu0 %1130
    %1132 = vrot.lane.b32.xlu0 %v970, 12
    %v1133 = vpop.permute.xlu0 %1132
    %1134 = vrot.lane.b32.xlu0 %v971, 12
    %v1135 = vpop.permute.xlu0 %1134
    %1136 = vrot.lane.b32.xlu0 %v972, 12
    %v1137 = vpop.permute.xlu0 %1136
    %1138 = vrot.lane.b32.xlu0 %v973, 12
    %v1139 = vpop.permute.xlu0 %1138
    %1140 = vrot.lane.b32.xlu0 %v974, 12
    %v1141 = vpop.permute.xlu0 %1140
    %1142 = vrot.lane.b32.xlu0 %v975, 12
    %v1143 = vpop.permute.xlu0 %1142
    %1144 = vrot.lane.b32.xlu0 %v976, 12
    %v1145 = vpop.permute.xlu0 %1144
    %1146 = vrot.lane.b32.xlu0 %v977, 12
    %v1147 = vpop.permute.xlu0 %1146
    %1148 = vrot.lane.b32.xlu0 %v978, 12
    %v1149 = vpop.permute.xlu0 %1148
    %1150 = vrot.lane.b32.xlu0 %v979, 12
    %v1151 = vpop.permute.xlu0 %1150
    %1152 = vrot.lane.b32.xlu0 %v980, 12
    %v1153 = vpop.permute.xlu0 %1152
    %1154 = vrot.lane.b32.xlu0 %v981, 12
    %v1155 = vpop.permute.xlu0 %1154
    %1156 = vrot.lane.b32.xlu0 %v982, 12
    %v1157 = vpop.permute.xlu0 %1156
    %1158 = vrot.lane.b32.xlu0 %v983, 12
    %v1159 = vpop.permute.xlu0 %1158
    %1160 = vrot.lane.b32.xlu0 %v984, 12
    %v1161 = vpop.permute.xlu0 %1160
    %1162 = vrot.lane.b32.xlu0 %v985, 12
    %v1163 = vpop.permute.xlu0 %1162
    %1164 = vrot.lane.b32.xlu0 %v986, 12
    %v1165 = vpop.permute.xlu0 %1164
    %1166 = vrot.lane.b32.xlu0 %v987, 12
    %v1167 = vpop.permute.xlu0 %1166
    %1168 = vrot.lane.b32.xlu0 %v988, 12
    %v1169 = vpop.permute.xlu0 %1168
    %1170 = vrot.lane.b32.xlu0 %v989, 12
    %v1171 = vpop.permute.xlu0 %1170
    %1172 = vrot.lane.b32.xlu0 %v990, 12
    %v1173 = vpop.permute.xlu0 %1172
    %1174 = vrot.lane.b32.xlu0 %v991, 12
    %v1175 = vpop.permute.xlu0 %1174
    %1176 = vrot.lane.b32.xlu0 %v992, 12
    %v1177 = vpop.permute.xlu0 %1176
    %1178 = vrot.lane.b32.xlu0 %v993, 12
    %v1179 = vpop.permute.xlu0 %1178
    %1180 = vrot.lane.b32.xlu0 %v994, 12
    %v1181 = vpop.permute.xlu0 %1180
    %1182 = vrot.lane.b32.xlu0 %v995, 12
    %v1183 = vpop.permute.xlu0 %1182
    %1184 = vrot.lane.b32.xlu0 %v996, 12
    %v1185 = vpop.permute.xlu0 %1184
    %1186 = vrot.lane.b32.xlu0 %v997, 12
    %v1187 = vpop.permute.xlu0 %1186
    %1188 = vrot.lane.b32.xlu0 %v998, 12
    %v1189 = vpop.permute.xlu0 %1188
    %1190 = vrot.lane.b32.xlu0 %v999, 12
    %v1191 = vpop.permute.xlu0 %1190
    %vm1256 = vcmask 130144
    %1257 = vst.msk [vmem:[#allocation2] sm:$0xff] %vm1256, %v1065
    %1258 = vst.msk [vmem:[#allocation2 + $0x8] sm:$0xff] %vm1256, %v1067
    %1259 = vst.msk [vmem:[#allocation2 + $0x10] sm:$0xff] %vm1256, %v1069
    %1260 = vst.msk [vmem:[#allocation2 + $0x18] sm:$0xff] %vm1256, %v1071
    %1261 = vst.msk [vmem:[#allocation2 + $0x20] sm:$0xff] %vm1256, %v1073
    %1262 = vst.msk [vmem:[#allocation2 + $0x28] sm:$0xff] %vm1256, %v1075
    %1263 = vst.msk [vmem:[#allocation2 + $0x30] sm:$0xff] %vm1256, %v1077
    %1264 = vst.msk [vmem:[#allocation2 + $0x38] sm:$0xff] %vm1256, %v1079
    %1265 = vst.msk [vmem:[#allocation2 + $0x40] sm:$0xff] %vm1256, %v1081
    %1266 = vst.msk [vmem:[#allocation2 + $0x48] sm:$0xff] %vm1256, %v1083
    %1267 = vst.msk [vmem:[#allocation2 + $0x50] sm:$0xff] %vm1256, %v1085
    %1268 = vst.msk [vmem:[#allocation2 + $0x58] sm:$0xff] %vm1256, %v1087
    %1269 = vst.msk [vmem:[#allocation2 + $0x60] sm:$0xff] %vm1256, %v1089
    %1270 = vst.msk [vmem:[#allocation2 + $0x68] sm:$0xff] %vm1256, %v1091
    %1271 = vst.msk [vmem:[#allocation2 + $0x70] sm:$0xff] %vm1256, %v1093
    %1272 = vst.msk [vmem:[#allocation2 + $0x78] sm:$0xff] %vm1256, %v1095
    %1273 = vst.msk [vmem:[#allocation2 + $0x80] sm:$0xff] %vm1256, %v1097
    %1274 = vst.msk [vmem:[#allocation2 + $0x88] sm:$0xff] %vm1256, %v1099
    %1275 = vst.msk [vmem:[#allocation2 + $0x90] sm:$0xff] %vm1256, %v1101
    %1276 = vst.msk [vmem:[#allocation2 + $0x98] sm:$0xff] %vm1256, %v1103
    %1277 = vst.msk [vmem:[#allocation2 + $0xa0] sm:$0xff] %vm1256, %v1105
    %1278 = vst.msk [vmem:[#allocation2 + $0xa8] sm:$0xff] %vm1256, %v1107
    %1279 = vst.msk [vmem:[#allocation2 + $0xb0] sm:$0xff] %vm1256, %v1109
    %1280 = vst.msk [vmem:[#allocation2 + $0xb8] sm:$0xff] %vm1256, %v1111
    %1281 = vst.msk [vmem:[#allocation2 + $0xc0] sm:$0xff] %vm1256, %v1113
    %1282 = vst.msk [vmem:[#allocation2 + $0xc8] sm:$0xff] %vm1256, %v1115
    %1283 = vst.msk [vmem:[#allocation2 + $0xd0] sm:$0xff] %vm1256, %v1117
    %1284 = vst.msk [vmem:[#allocation2 + $0xd8] sm:$0xff] %vm1256, %v1119
    %1285 = vst.msk [vmem:[#allocation2 + $0xe0] sm:$0xff] %vm1256, %v1121
    %1286 = vst.msk [vmem:[#allocation2 + $0xe8] sm:$0xff] %vm1256, %v1123
    %1287 = vst.msk [vmem:[#allocation2 + $0xf0] sm:$0xff] %vm1256, %v1125
    %1288 = vst.msk [vmem:[#allocation2 + $0xf8] sm:$0xff] %vm1256, %v1127
    %1289 = vst.msk [vmem:[#allocation2 + $0x100] sm:$0xff] %vm1256, %v1129
    %1290 = vst.msk [vmem:[#allocation2 + $0x108] sm:$0xff] %vm1256, %v1131
    %1291 = vst.msk [vmem:[#allocation2 + $0x110] sm:$0xff] %vm1256, %v1133
    %1292 = vst.msk [vmem:[#allocation2 + $0x118] sm:$0xff] %vm1256, %v1135
    %1293 = vst.msk [vmem:[#allocation2 + $0x120] sm:$0xff] %vm1256, %v1137
    %1294 = vst.msk [vmem:[#allocation2 + $0x128] sm:$0xff] %vm1256, %v1139
    %1295 = vst.msk [vmem:[#allocation2 + $0x130] sm:$0xff] %vm1256, %v1141
    %1296 = vst.msk [vmem:[#allocation2 + $0x138] sm:$0xff] %vm1256, %v1143
    %1297 = vst.msk [vmem:[#allocation2 + $0x140] sm:$0xff] %vm1256, %v1145
    %1298 = vst.msk [vmem:[#allocation2 + $0x148] sm:$0xff] %vm1256, %v1147
    %1299 = vst.msk [vmem:[#allocation2 + $0x150] sm:$0xff] %vm1256, %v1149
    %1300 = vst.msk [vmem:[#allocation2 + $0x158] sm:$0xff] %vm1256, %v1151
    %1301 = vst.msk [vmem:[#allocation2 + $0x160] sm:$0xff] %vm1256, %v1153
    %1302 = vst.msk [vmem:[#allocation2 + $0x168] sm:$0xff] %vm1256, %v1155
    %1303 = vst.msk [vmem:[#allocation2 + $0x170] sm:$0xff] %vm1256, %v1157
    %1304 = vst.msk [vmem:[#allocation2 + $0x178] sm:$0xff] %vm1256, %v1159
    %1305 = vst.msk [vmem:[#allocation2 + $0x180] sm:$0xff] %vm1256, %v1161
    %1306 = vst.msk [vmem:[#allocation2 + $0x188] sm:$0xff] %vm1256, %v1163
    %1307 = vst.msk [vmem:[#allocation2 + $0x190] sm:$0xff] %vm1256, %v1165
    %1308 = vst.msk [vmem:[#allocation2 + $0x198] sm:$0xff] %vm1256, %v1167
    %1309 = vst.msk [vmem:[#allocation2 + $0x1a0] sm:$0xff] %vm1256, %v1169
    %1310 = vst.msk [vmem:[#allocation2 + $0x1a8] sm:$0xff] %vm1256, %v1171
    %1311 = vst.msk [vmem:[#allocation2 + $0x1b0] sm:$0xff] %vm1256, %v1173
    %1312 = vst.msk [vmem:[#allocation2 + $0x1b8] sm:$0xff] %vm1256, %v1175
    %1313 = vst.msk [vmem:[#allocation2 + $0x1c0] sm:$0xff] %vm1256, %v1177
    %1314 = vst.msk [vmem:[#allocation2 + $0x1c8] sm:$0xff] %vm1256, %v1179
    %1315 = vst.msk [vmem:[#allocation2 + $0x1d0] sm:$0xff] %vm1256, %v1181
    %1316 = vst.msk [vmem:[#allocation2 + $0x1d8] sm:$0xff] %vm1256, %v1183
    %1317 = vst.msk [vmem:[#allocation2 + $0x1e0] sm:$0xff] %vm1256, %v1185
    %1318 = vst.msk [vmem:[#allocation2 + $0x1e8] sm:$0xff] %vm1256, %v1187
    %1319 = vst.msk [vmem:[#allocation2 + $0x1f0] sm:$0xff] %vm1256, %v1189
    %1320 = vst.msk [vmem:[#allocation2 + $0x1f8] sm:$0xff] %vm1256, %v1191
    %v1321 = vld [vmem:[%s935 + $0x1] sm:$0xff]
    %v1322 = vld [vmem:[%s935 + $0x9] sm:$0xff]
    %v1323 = vld [vmem:[%s935 + $0x19] sm:$0xff]
    %v1324 = vld [vmem:[%s935 + $0x21] sm:$0xff]
    %v1325 = vld [vmem:[%s935 + $0x31] sm:$0xff]
    %v1326 = vld [vmem:[%s935 + $0x39] sm:$0xff]
    %v1327 = vld [vmem:[%s935 + $0x49] sm:$0xff]
    %v1328 = vld [vmem:[%s935 + $0x51] sm:$0xff]
    %v1329 = vld [vmem:[%s935 + $0x61] sm:$0xff]
    %v1330 = vld [vmem:[%s935 + $0x69] sm:$0xff]
    %v1331 = vld [vmem:[%s935 + $0x79] sm:$0xff]
    %v1332 = vld [vmem:[%s935 + $0x81] sm:$0xff]
    %v1333 = vld [vmem:[%s935 + $0x91] sm:$0xff]
    %v1334 = vld [vmem:[%s935 + $0x99] sm:$0xff]
    %v1335 = vld [vmem:[%s935 + $0xa9] sm:$0xff]
    %v1336 = vld [vmem:[%s935 + $0xb1] sm:$0xff]
    %v1337 = vld [vmem:[%s935 + $0xc1] sm:$0xff]
    %v1338 = vld [vmem:[%s935 + $0xc9] sm:$0xff]
    %v1339 = vld [vmem:[%s935 + $0xd9] sm:$0xff]
    %v1340 = vld [vmem:[%s935 + $0xe1] sm:$0xff]
    %v1341 = vld [vmem:[%s935 + $0xf1] sm:$0xff]
    %v1342 = vld [vmem:[%s935 + $0xf9] sm:$0xff]
    %v1343 = vld [vmem:[%s935 + $0x109] sm:$0xff]
    %v1344 = vld [vmem:[%s935 + $0x111] sm:$0xff]
    %v1345 = vld [vmem:[%s935 + $0x121] sm:$0xff]
    %v1346 = vld [vmem:[%s935 + $0x129] sm:$0xff]
    %v1347 = vld [vmem:[%s935 + $0x139] sm:$0xff]
    %v1348 = vld [vmem:[%s935 + $0x141] sm:$0xff]
    %v1349 = vld [vmem:[%s935 + $0x151] sm:$0xff]
    %v1350 = vld [vmem:[%s935 + $0x159] sm:$0xff]
    %v1351 = vld [vmem:[%s935 + $0x169] sm:$0xff]
    %v1352 = vld [vmem:[%s935 + $0x171] sm:$0xff]
    %v1353 = vld [vmem:[%s935 + $0x1b1] sm:$0xff]
    %v1354 = vld [vmem:[%s935 + $0x1b9] sm:$0xff]
    %v1355 = vld [vmem:[%s935 + $0x1c9] sm:$0xff]
    %v1356 = vld [vmem:[%s935 + $0x1d1] sm:$0xff]
    %v1357 = vld [vmem:[%s935 + $0x1e1] sm:$0xff]
    %v1358 = vld [vmem:[%s935 + $0x1e9] sm:$0xff]
    %v1359 = vld [vmem:[%s935 + $0x1f9] sm:$0xff]
    %v1360 = vld [vmem:[%s935 + $0x201] sm:$0xff]
    %v1361 = vld [vmem:[%s935 + $0x211] sm:$0xff]
    %v1362 = vld [vmem:[%s935 + $0x219] sm:$0xff]
    %v1363 = vld [vmem:[%s935 + $0x229] sm:$0xff]
    %v1364 = vld [vmem:[%s935 + $0x231] sm:$0xff]
    %v1365 = vld [vmem:[%s935 + $0x241] sm:$0xff]
    %v1366 = vld [vmem:[%s935 + $0x249] sm:$0xff]
    %v1367 = vld [vmem:[%s935 + $0x259] sm:$0xff]
    %v1368 = vld [vmem:[%s935 + $0x261] sm:$0xff]
    %v1369 = vld [vmem:[%s935 + $0x271] sm:$0xff]
    %v1370 = vld [vmem:[%s935 + $0x279] sm:$0xff]
    %v1371 = vld [vmem:[%s935 + $0x289] sm:$0xff]
    %v1372 = vld [vmem:[%s935 + $0x291] sm:$0xff]
    %v1373 = vld [vmem:[%s935 + $0x2a1] sm:$0xff]
    %v1374 = vld [vmem:[%s935 + $0x2a9] sm:$0xff]
    %v1375 = vld [vmem:[%s935 + $0x2b9] sm:$0xff]
    %v1376 = vld [vmem:[%s935 + $0x2c1] sm:$0xff]
    %v1377 = vld [vmem:[%s935 + $0x2d1] sm:$0xff]
    %v1378 = vld [vmem:[%s935 + $0x2d9] sm:$0xff]
    %v1379 = vld [vmem:[%s935 + $0x2e9] sm:$0xff]
    %v1380 = vld [vmem:[%s935 + $0x2f1] sm:$0xff]
    %v1381 = vld [vmem:[%s935 + $0x301] sm:$0xff]
    %v1382 = vld [vmem:[%s935 + $0x309] sm:$0xff]
    %v1383 = vld [vmem:[%s935 + $0x319] sm:$0xff]
    %v1384 = vld [vmem:[%s935 + $0x321] sm:$0xff]
    %1449 = vrot.lane.b32.xlu0 %v1321, 16
    %v1450 = vpop.permute.xlu0 %1449
    %1451 = vrot.lane.b32.xlu0 %v1322, 16
    %v1452 = vpop.permute.xlu0 %1451
    %1453 = vrot.lane.b32.xlu0 %v1323, 16
    %v1454 = vpop.permute.xlu0 %1453
    %1455 = vrot.lane.b32.xlu0 %v1324, 16
    %v1456 = vpop.permute.xlu0 %1455
    %1457 = vrot.lane.b32.xlu0 %v1325, 16
    %v1458 = vpop.permute.xlu0 %1457
    %1459 = vrot.lane.b32.xlu0 %v1326, 16
    %v1460 = vpop.permute.xlu0 %1459
    %1461 = vrot.lane.b32.xlu0 %v1327, 16
    %v1462 = vpop.permute.xlu0 %1461
    %1463 = vrot.lane.b32.xlu0 %v1328, 16
    %v1464 = vpop.permute.xlu0 %1463
    %1465 = vrot.lane.b32.xlu0 %v1329, 16
    %v1466 = vpop.permute.xlu0 %1465
    %1467 = vrot.lane.b32.xlu0 %v1330, 16
    %v1468 = vpop.permute.xlu0 %1467
    %1469 = vrot.lane.b32.xlu0 %v1331, 16
    %v1470 = vpop.permute.xlu0 %1469
    %1471 = vrot.lane.b32.xlu0 %v1332, 16
    %v1472 = vpop.permute.xlu0 %1471
    %1473 = vrot.lane.b32.xlu0 %v1333, 16
    %v1474 = vpop.permute.xlu0 %1473
    %1475 = vrot.lane.b32.xlu0 %v1334, 16
    %v1476 = vpop.permute.xlu0 %1475
    %1477 = vrot.lane.b32.xlu0 %v1335, 16
    %v1478 = vpop.permute.xlu0 %1477
    %1479 = vrot.lane.b32.xlu0 %v1336, 16
    %v1480 = vpop.permute.xlu0 %1479
    %1481 = vrot.lane.b32.xlu0 %v1337, 16
    %v1482 = vpop.permute.xlu0 %1481
    %1483 = vrot.lane.b32.xlu0 %v1338, 16
    %v1484 = vpop.permute.xlu0 %1483
    %1485 = vrot.lane.b32.xlu0 %v1339, 16
    %v1486 = vpop.permute.xlu0 %1485
    %1487 = vrot.lane.b32.xlu0 %v1340, 16
    %v1488 = vpop.permute.xlu0 %1487
    %1489 = vrot.lane.b32.xlu0 %v1341, 16
    %v1490 = vpop.permute.xlu0 %1489
    %1491 = vrot.lane.b32.xlu0 %v1342, 16
    %v1492 = vpop.permute.xlu0 %1491
    %1493 = vrot.lane.b32.xlu0 %v1343, 16
    %v1494 = vpop.permute.xlu0 %1493
    %1495 = vrot.lane.b32.xlu0 %v1344, 16
    %v1496 = vpop.permute.xlu0 %1495
    %1497 = vrot.lane.b32.xlu0 %v1345, 16
    %v1498 = vpop.permute.xlu0 %1497
    %1499 = vrot.lane.b32.xlu0 %v1346, 16
    %v1500 = vpop.permute.xlu0 %1499
    %1501 = vrot.lane.b32.xlu0 %v1347, 16
    %v1502 = vpop.permute.xlu0 %1501
    %1503 = vrot.lane.b32.xlu0 %v1348, 16
    %v1504 = vpop.permute.xlu0 %1503
    %1505 = vrot.lane.b32.xlu0 %v1349, 16
    %v1506 = vpop.permute.xlu0 %1505
    %1507 = vrot.lane.b32.xlu0 %v1350, 16
    %v1508 = vpop.permute.xlu0 %1507
    %1509 = vrot.lane.b32.xlu0 %v1351, 16
    %v1510 = vpop.permute.xlu0 %1509
    %1511 = vrot.lane.b32.xlu0 %v1352, 16
    %v1512 = vpop.permute.xlu0 %1511
    %1513 = vrot.lane.b32.xlu0 %v1353, 16
    %v1514 = vpop.permute.xlu0 %1513
    %1515 = vrot.lane.b32.xlu0 %v1354, 16
    %v1516 = vpop.permute.xlu0 %1515
    %1517 = vrot.lane.b32.xlu0 %v1355, 16
    %v1518 = vpop.permute.xlu0 %1517
    %1519 = vrot.lane.b32.xlu0 %v1356, 16
    %v1520 = vpop.permute.xlu0 %1519
    %1521 = vrot.lane.b32.xlu0 %v1357, 16
    %v1522 = vpop.permute.xlu0 %1521
    %1523 = vrot.lane.b32.xlu0 %v1358, 16
    %v1524 = vpop.permute.xlu0 %1523
    %1525 = vrot.lane.b32.xlu0 %v1359, 16
    %v1526 = vpop.permute.xlu0 %1525
    %1527 = vrot.lane.b32.xlu0 %v1360, 16
    %v1528 = vpop.permute.xlu0 %1527
    %1529 = vrot.lane.b32.xlu0 %v1361, 16
    %v1530 = vpop.permute.xlu0 %1529
    %1531 = vrot.lane.b32.xlu0 %v1362, 16
    %v1532 = vpop.permute.xlu0 %1531
    %1533 = vrot.lane.b32.xlu0 %v1363, 16
    %v1534 = vpop.permute.xlu0 %1533
    %1535 = vrot.lane.b32.xlu0 %v1364, 16
    %v1536 = vpop.permute.xlu0 %1535
    %1537 = vrot.lane.b32.xlu0 %v1365, 16
    %v1538 = vpop.permute.xlu0 %1537
    %1539 = vrot.lane.b32.xlu0 %v1366, 16
    %v1540 = vpop.permute.xlu0 %1539
    %1541 = vrot.lane.b32.xlu0 %v1367, 16
    %v1542 = vpop.permute.xlu0 %1541
    %1543 = vrot.lane.b32.xlu0 %v1368, 16
    %v1544 = vpop.permute.xlu0 %1543
    %1545 = vrot.lane.b32.xlu0 %v1369, 16
    %v1546 = vpop.permute.xlu0 %1545
    %1547 = vrot.lane.b32.xlu0 %v1370, 16
    %v1548 = vpop.permute.xlu0 %1547
    %1549 = vrot.lane.b32.xlu0 %v1371, 16
    %v1550 = vpop.permute.xlu0 %1549
    %1551 = vrot.lane.b32.xlu0 %v1372, 16
    %v1552 = vpop.permute.xlu0 %1551
    %1553 = vrot.lane.b32.xlu0 %v1373, 16
    %v1554 = vpop.permute.xlu0 %1553
    %1555 = vrot.lane.b32.xlu0 %v1374, 16
    %v1556 = vpop.permute.xlu0 %1555
    %1557 = vrot.lane.b32.xlu0 %v1375, 16
    %v1558 = vpop.permute.xlu0 %1557
    %1559 = vrot.lane.b32.xlu0 %v1376, 16
    %v1560 = vpop.permute.xlu0 %1559
    %1561 = vrot.lane.b32.xlu0 %v1377, 16
    %v1562 = vpop.permute.xlu0 %1561
    %1563 = vrot.lane.b32.xlu0 %v1378, 16
    %v1564 = vpop.permute.xlu0 %1563
    %1565 = vrot.lane.b32.xlu0 %v1379, 16
    %v1566 = vpop.permute.xlu0 %1565
    %1567 = vrot.lane.b32.xlu0 %v1380, 16
    %v1568 = vpop.permute.xlu0 %1567
    %1569 = vrot.lane.b32.xlu0 %v1381, 16
    %v1570 = vpop.permute.xlu0 %1569
    %1571 = vrot.lane.b32.xlu0 %v1382, 16
    %v1572 = vpop.permute.xlu0 %1571
    %1573 = vrot.lane.b32.xlu0 %v1383, 16
    %v1574 = vpop.permute.xlu0 %1573
    %1575 = vrot.lane.b32.xlu0 %v1384, 16
    %v1576 = vpop.permute.xlu0 %1575
    %vm1641 = vcmask 162944
    %1642 = vst.msk [vmem:[#allocation2] sm:$0xff] %vm1641, %v1450
    %1643 = vst.msk [vmem:[#allocation2 + $0x8] sm:$0xff] %vm1641, %v1452
    %1644 = vst.msk [vmem:[#allocation2 + $0x10] sm:$0xff] %vm1641, %v1454
    %1645 = vst.msk [vmem:[#allocation2 + $0x18] sm:$0xff] %vm1641, %v1456
    %1646 = vst.msk [vmem:[#allocation2 + $0x20] sm:$0xff] %vm1641, %v1458
    %1647 = vst.msk [vmem:[#allocation2 + $0x28] sm:$0xff] %vm1641, %v1460
    %1648 = vst.msk [vmem:[#allocation2 + $0x30] sm:$0xff] %vm1641, %v1462
    %1649 = vst.msk [vmem:[#allocation2 + $0x38] sm:$0xff] %vm1641, %v1464
    %1650 = vst.msk [vmem:[#allocation2 + $0x40] sm:$0xff] %vm1641, %v1466
    %1651 = vst.msk [vmem:[#allocation2 + $0x48] sm:$0xff] %vm1641, %v1468
    %1652 = vst.msk [vmem:[#allocation2 + $0x50] sm:$0xff] %vm1641, %v1470
    %1653 = vst.msk [vmem:[#allocation2 + $0x58] sm:$0xff] %vm1641, %v1472
    %1654 = vst.msk [vmem:[#allocation2 + $0x60] sm:$0xff] %vm1641, %v1474
    %1655 = vst.msk [vmem:[#allocation2 + $0x68] sm:$0xff] %vm1641, %v1476
    %1656 = vst.msk [vmem:[#allocation2 + $0x70] sm:$0xff] %vm1641, %v1478
    %1657 = vst.msk [vmem:[#allocation2 + $0x78] sm:$0xff] %vm1641, %v1480
    %1658 = vst.msk [vmem:[#allocation2 + $0x80] sm:$0xff] %vm1641, %v1482
    %1659 = vst.msk [vmem:[#allocation2 + $0x88] sm:$0xff] %vm1641, %v1484
    %1660 = vst.msk [vmem:[#allocation2 + $0x90] sm:$0xff] %vm1641, %v1486
    %1661 = vst.msk [vmem:[#allocation2 + $0x98] sm:$0xff] %vm1641, %v1488
    %1662 = vst.msk [vmem:[#allocation2 + $0xa0] sm:$0xff] %vm1641, %v1490
    %1663 = vst.msk [vmem:[#allocation2 + $0xa8] sm:$0xff] %vm1641, %v1492
    %1664 = vst.msk [vmem:[#allocation2 + $0xb0] sm:$0xff] %vm1641, %v1494
    %1665 = vst.msk [vmem:[#allocation2 + $0xb8] sm:$0xff] %vm1641, %v1496
    %1666 = vst.msk [vmem:[#allocation2 + $0xc0] sm:$0xff] %vm1641, %v1498
    %1667 = vst.msk [vmem:[#allocation2 + $0xc8] sm:$0xff] %vm1641, %v1500
    %1668 = vst.msk [vmem:[#allocation2 + $0xd0] sm:$0xff] %vm1641, %v1502
    %1669 = vst.msk [vmem:[#allocation2 + $0xd8] sm:$0xff] %vm1641, %v1504
    %1670 = vst.msk [vmem:[#allocation2 + $0xe0] sm:$0xff] %vm1641, %v1506
    %1671 = vst.msk [vmem:[#allocation2 + $0xe8] sm:$0xff] %vm1641, %v1508
    %1672 = vst.msk [vmem:[#allocation2 + $0xf0] sm:$0xff] %vm1641, %v1510
    %1673 = vst.msk [vmem:[#allocation2 + $0xf8] sm:$0xff] %vm1641, %v1512
    %1674 = vst.msk [vmem:[#allocation2 + $0x100] sm:$0xff] %vm1641, %v1514
    %1675 = vst.msk [vmem:[#allocation2 + $0x108] sm:$0xff] %vm1641, %v1516
    %1676 = vst.msk [vmem:[#allocation2 + $0x110] sm:$0xff] %vm1641, %v1518
    %1677 = vst.msk [vmem:[#allocation2 + $0x118] sm:$0xff] %vm1641, %v1520
    %1678 = vst.msk [vmem:[#allocation2 + $0x120] sm:$0xff] %vm1641, %v1522
    %1679 = vst.msk [vmem:[#allocation2 + $0x128] sm:$0xff] %vm1641, %v1524
    %1680 = vst.msk [vmem:[#allocation2 + $0x130] sm:$0xff] %vm1641, %v1526
    %1681 = vst.msk [vmem:[#allocation2 + $0x138] sm:$0xff] %vm1641, %v1528
    %1682 = vst.msk [vmem:[#allocation2 + $0x140] sm:$0xff] %vm1641, %v1530
    %1683 = vst.msk [vmem:[#allocation2 + $0x148] sm:$0xff] %vm1641, %v1532
    %1684 = vst.msk [vmem:[#allocation2 + $0x150] sm:$0xff] %vm1641, %v1534
    %1685 = vst.msk [vmem:[#allocation2 + $0x158] sm:$0xff] %vm1641, %v1536
    %1686 = vst.msk [vmem:[#allocation2 + $0x160] sm:$0xff] %vm1641, %v1538
    %1687 = vst.msk [vmem:[#allocation2 + $0x168] sm:$0xff] %vm1641, %v1540
    %1688 = vst.msk [vmem:[#allocation2 + $0x170] sm:$0xff] %vm1641, %v1542
    %1689 = vst.msk [vmem:[#allocation2 + $0x178] sm:$0xff] %vm1641, %v1544
    %1690 = vst.msk [vmem:[#allocation2 + $0x180] sm:$0xff] %vm1641, %v1546
    %1691 = vst.msk [vmem:[#allocation2 + $0x188] sm:$0xff] %vm1641, %v1548
    %1692 = vst.msk [vmem:[#allocation2 + $0x190] sm:$0xff] %vm1641, %v1550
    %1693 = vst.msk [vmem:[#allocation2 + $0x198] sm:$0xff] %vm1641, %v1552
    %1694 = vst.msk [vmem:[#allocation2 + $0x1a0] sm:$0xff] %vm1641, %v1554
    %1695 = vst.msk [vmem:[#allocation2 + $0x1a8] sm:$0xff] %vm1641, %v1556
    %1696 = vst.msk [vmem:[#allocation2 + $0x1b0] sm:$0xff] %vm1641, %v1558
    %1697 = vst.msk [vmem:[#allocation2 + $0x1b8] sm:$0xff] %vm1641, %v1560
    %1698 = vst.msk [vmem:[#allocation2 + $0x1c0] sm:$0xff] %vm1641, %v1562
    %1699 = vst.msk [vmem:[#allocation2 + $0x1c8] sm:$0xff] %vm1641, %v1564
    %1700 = vst.msk [vmem:[#allocation2 + $0x1d0] sm:$0xff] %vm1641, %v1566
    %1701 = vst.msk [vmem:[#allocation2 + $0x1d8] sm:$0xff] %vm1641, %v1568
    %1702 = vst.msk [vmem:[#allocation2 + $0x1e0] sm:$0xff] %vm1641, %v1570
    %1703 = vst.msk [vmem:[#allocation2 + $0x1e8] sm:$0xff] %vm1641, %v1572
    %1704 = vst.msk [vmem:[#allocation2 + $0x1f0] sm:$0xff] %vm1641, %v1574
    %1705 = vst.msk [vmem:[#allocation2 + $0x1f8] sm:$0xff] %vm1641, %v1576
    %v1706 = vld [vmem:[%s935 + $0x2] sm:$0xff]
    %v1707 = vld [vmem:[%s935 + $0xa] sm:$0xff]
    %v1708 = vld [vmem:[%s935 + $0x1a] sm:$0xff]
    %v1709 = vld [vmem:[%s935 + $0x22] sm:$0xff]
    %v1710 = vld [vmem:[%s935 + $0x32] sm:$0xff]
    %v1711 = vld [vmem:[%s935 + $0x3a] sm:$0xff]
    %v1712 = vld [vmem:[%s935 + $0x4a] sm:$0xff]
    %v1713 = vld [vmem:[%s935 + $0x52] sm:$0xff]
    %v1714 = vld [vmem:[%s935 + $0x62] sm:$0xff]
    %v1715 = vld [vmem:[%s935 + $0x6a] sm:$0xff]
    %v1716 = vld [vmem:[%s935 + $0x7a] sm:$0xff]
    %v1717 = vld [vmem:[%s935 + $0x82] sm:$0xff]
    %v1718 = vld [vmem:[%s935 + $0x92] sm:$0xff]
    %v1719 = vld [vmem:[%s935 + $0x9a] sm:$0xff]
    %v1720 = vld [vmem:[%s935 + $0xaa] sm:$0xff]
    %v1721 = vld [vmem:[%s935 + $0xb2] sm:$0xff]
    %v1722 = vld [vmem:[%s935 + $0xc2] sm:$0xff]
    %v1723 = vld [vmem:[%s935 + $0xca] sm:$0xff]
    %v1724 = vld [vmem:[%s935 + $0xda] sm:$0xff]
    %v1725 = vld [vmem:[%s935 + $0xe2] sm:$0xff]
    %v1726 = vld [vmem:[%s935 + $0xf2] sm:$0xff]
    %v1727 = vld [vmem:[%s935 + $0xfa] sm:$0xff]
    %v1728 = vld [vmem:[%s935 + $0x10a] sm:$0xff]
    %v1729 = vld [vmem:[%s935 + $0x112] sm:$0xff]
    %v1730 = vld [vmem:[%s935 + $0x122] sm:$0xff]
    %v1731 = vld [vmem:[%s935 + $0x12a] sm:$0xff]
    %v1732 = vld [vmem:[%s935 + $0x13a] sm:$0xff]
    %v1733 = vld [vmem:[%s935 + $0x142] sm:$0xff]
    %v1734 = vld [vmem:[%s935 + $0x152] sm:$0xff]
    %v1735 = vld [vmem:[%s935 + $0x15a] sm:$0xff]
    %v1736 = vld [vmem:[%s935 + $0x16a] sm:$0xff]
    %v1737 = vld [vmem:[%s935 + $0x172] sm:$0xff]
    %v1738 = vld [vmem:[%s935 + $0x1b2] sm:$0xff]
    %v1739 = vld [vmem:[%s935 + $0x1ba] sm:$0xff]
    %v1740 = vld [vmem:[%s935 + $0x1ca] sm:$0xff]
    %v1741 = vld [vmem:[%s935 + $0x1d2] sm:$0xff]
    %v1742 = vld [vmem:[%s935 + $0x1e2] sm:$0xff]
    %v1743 = vld [vmem:[%s935 + $0x1ea] sm:$0xff]
    %v1744 = vld [vmem:[%s935 + $0x1fa] sm:$0xff]
    %v1745 = vld [vmem:[%s935 + $0x202] sm:$0xff]
    %v1746 = vld [vmem:[%s935 + $0x212] sm:$0xff]
    %v1747 = vld [vmem:[%s935 + $0x21a] sm:$0xff]
    %v1748 = vld [vmem:[%s935 + $0x22a] sm:$0xff]
    %v1749 = vld [vmem:[%s935 + $0x232] sm:$0xff]
    %v1750 = vld [vmem:[%s935 + $0x242] sm:$0xff]
    %v1751 = vld [vmem:[%s935 + $0x24a] sm:$0xff]
    %v1752 = vld [vmem:[%s935 + $0x25a] sm:$0xff]
    %v1753 = vld [vmem:[%s935 + $0x262] sm:$0xff]
    %v1754 = vld [vmem:[%s935 + $0x272] sm:$0xff]
    %v1755 = vld [vmem:[%s935 + $0x27a] sm:$0xff]
    %v1756 = vld [vmem:[%s935 + $0x28a] sm:$0xff]
    %v1757 = vld [vmem:[%s935 + $0x292] sm:$0xff]
    %v1758 = vld [vmem:[%s935 + $0x2a2] sm:$0xff]
    %v1759 = vld [vmem:[%s935 + $0x2aa] sm:$0xff]
    %v1760 = vld [vmem:[%s935 + $0x2ba] sm:$0xff]
    %v1761 = vld [vmem:[%s935 + $0x2c2] sm:$0xff]
    %v1762 = vld [vmem:[%s935 + $0x2d2] sm:$0xff]
    %v1763 = vld [vmem:[%s935 + $0x2da] sm:$0xff]
    %v1764 = vld [vmem:[%s935 + $0x2ea] sm:$0xff]
    %v1765 = vld [vmem:[%s935 + $0x2f2] sm:$0xff]
    %v1766 = vld [vmem:[%s935 + $0x302] sm:$0xff]
    %v1767 = vld [vmem:[%s935 + $0x30a] sm:$0xff]
    %v1768 = vld [vmem:[%s935 + $0x31a] sm:$0xff]
    %v1769 = vld [vmem:[%s935 + $0x322] sm:$0xff]
    %1834 = vrot.lane.b32.xlu0 %v1706, 20
    %v1835 = vpop.permute.xlu0 %1834
    %1836 = vrot.lane.b32.xlu0 %v1707, 20
    %v1837 = vpop.permute.xlu0 %1836
    %1838 = vrot.lane.b32.xlu0 %v1708, 20
    %v1839 = vpop.permute.xlu0 %1838
    %1840 = vrot.lane.b32.xlu0 %v1709, 20
    %v1841 = vpop.permute.xlu0 %1840
    %1842 = vrot.lane.b32.xlu0 %v1710, 20
    %v1843 = vpop.permute.xlu0 %1842
    %1844 = vrot.lane.b32.xlu0 %v1711, 20
    %v1845 = vpop.permute.xlu0 %1844
    %1846 = vrot.lane.b32.xlu0 %v1712, 20
    %v1847 = vpop.permute.xlu0 %1846
    %1848 = vrot.lane.b32.xlu0 %v1713, 20
    %v1849 = vpop.permute.xlu0 %1848
    %1850 = vrot.lane.b32.xlu0 %v1714, 20
    %v1851 = vpop.permute.xlu0 %1850
    %1852 = vrot.lane.b32.xlu0 %v1715, 20
    %v1853 = vpop.permute.xlu0 %1852
    %1854 = vrot.lane.b32.xlu0 %v1716, 20
    %v1855 = vpop.permute.xlu0 %1854
    %1856 = vrot.lane.b32.xlu0 %v1717, 20
    %v1857 = vpop.permute.xlu0 %1856
    %1858 = vrot.lane.b32.xlu0 %v1718, 20
    %v1859 = vpop.permute.xlu0 %1858
    %1860 = vrot.lane.b32.xlu0 %v1719, 20
    %v1861 = vpop.permute.xlu0 %1860
    %1862 = vrot.lane.b32.xlu0 %v1720, 20
    %v1863 = vpop.permute.xlu0 %1862
    %1864 = vrot.lane.b32.xlu0 %v1721, 20
    %v1865 = vpop.permute.xlu0 %1864
    %1866 = vrot.lane.b32.xlu0 %v1722, 20
    %v1867 = vpop.permute.xlu0 %1866
    %1868 = vrot.lane.b32.xlu0 %v1723, 20
    %v1869 = vpop.permute.xlu0 %1868
    %1870 = vrot.lane.b32.xlu0 %v1724, 20
    %v1871 = vpop.permute.xlu0 %1870
    %1872 = vrot.lane.b32.xlu0 %v1725, 20
    %v1873 = vpop.permute.xlu0 %1872
    %1874 = vrot.lane.b32.xlu0 %v1726, 20
    %v1875 = vpop.permute.xlu0 %1874
    %1876 = vrot.lane.b32.xlu0 %v1727, 20
    %v1877 = vpop.permute.xlu0 %1876
    %1878 = vrot.lane.b32.xlu0 %v1728, 20
    %v1879 = vpop.permute.xlu0 %1878
    %1880 = vrot.lane.b32.xlu0 %v1729, 20
    %v1881 = vpop.permute.xlu0 %1880
    %1882 = vrot.lane.b32.xlu0 %v1730, 20
    %v1883 = vpop.permute.xlu0 %1882
    %1884 = vrot.lane.b32.xlu0 %v1731, 20
    %v1885 = vpop.permute.xlu0 %1884
    %1886 = vrot.lane.b32.xlu0 %v1732, 20
    %v1887 = vpop.permute.xlu0 %1886
    %1888 = vrot.lane.b32.xlu0 %v1733, 20
    %v1889 = vpop.permute.xlu0 %1888
    %1890 = vrot.lane.b32.xlu0 %v1734, 20
    %v1891 = vpop.permute.xlu0 %1890
    %1892 = vrot.lane.b32.xlu0 %v1735, 20
    %v1893 = vpop.permute.xlu0 %1892
    %1894 = vrot.lane.b32.xlu0 %v1736, 20
    %v1895 = vpop.permute.xlu0 %1894
    %1896 = vrot.lane.b32.xlu0 %v1737, 20
    %v1897 = vpop.permute.xlu0 %1896
    %1898 = vrot.lane.b32.xlu0 %v1738, 20
    %v1899 = vpop.permute.xlu0 %1898
    %1900 = vrot.lane.b32.xlu0 %v1739, 20
    %v1901 = vpop.permute.xlu0 %1900
    %1902 = vrot.lane.b32.xlu0 %v1740, 20
    %v1903 = vpop.permute.xlu0 %1902
    %1904 = vrot.lane.b32.xlu0 %v1741, 20
    %v1905 = vpop.permute.xlu0 %1904
    %1906 = vrot.lane.b32.xlu0 %v1742, 20
    %v1907 = vpop.permute.xlu0 %1906
    %1908 = vrot.lane.b32.xlu0 %v1743, 20
    %v1909 = vpop.permute.xlu0 %1908
    %1910 = vrot.lane.b32.xlu0 %v1744, 20
    %v1911 = vpop.permute.xlu0 %1910
    %1912 = vrot.lane.b32.xlu0 %v1745, 20
    %v1913 = vpop.permute.xlu0 %1912
    %1914 = vrot.lane.b32.xlu0 %v1746, 20
    %v1915 = vpop.permute.xlu0 %1914
    %1916 = vrot.lane.b32.xlu0 %v1747, 20
    %v1917 = vpop.permute.xlu0 %1916
    %1918 = vrot.lane.b32.xlu0 %v1748, 20
    %v1919 = vpop.permute.xlu0 %1918
    %1920 = vrot.lane.b32.xlu0 %v1749, 20
    %v1921 = vpop.permute.xlu0 %1920
    %1922 = vrot.lane.b32.xlu0 %v1750, 20
    %v1923 = vpop.permute.xlu0 %1922
    %1924 = vrot.lane.b32.xlu0 %v1751, 20
    %v1925 = vpop.permute.xlu0 %1924
    %1926 = vrot.lane.b32.xlu0 %v1752, 20
    %v1927 = vpop.permute.xlu0 %1926
    %1928 = vrot.lane.b32.xlu0 %v1753, 20
    %v1929 = vpop.permute.xlu0 %1928
    %1930 = vrot.lane.b32.xlu0 %v1754, 20
    %v1931 = vpop.permute.xlu0 %1930
    %1932 = vrot.lane.b32.xlu0 %v1755, 20
    %v1933 = vpop.permute.xlu0 %1932
    %1934 = vrot.lane.b32.xlu0 %v1756, 20
    %v1935 = vpop.permute.xlu0 %1934
    %1936 = vrot.lane.b32.xlu0 %v1757, 20
    %v1937 = vpop.permute.xlu0 %1936
    %1938 = vrot.lane.b32.xlu0 %v1758, 20
    %v1939 = vpop.permute.xlu0 %1938
    %1940 = vrot.lane.b32.xlu0 %v1759, 20
    %v1941 = vpop.permute.xlu0 %1940
    %1942 = vrot.lane.b32.xlu0 %v1760, 20
    %v1943 = vpop.permute.xlu0 %1942
    %1944 = vrot.lane.b32.xlu0 %v1761, 20
    %v1945 = vpop.permute.xlu0 %1944
    %1946 = vrot.lane.b32.xlu0 %v1762, 20
    %v1947 = vpop.permute.xlu0 %1946
    %1948 = vrot.lane.b32.xlu0 %v1763, 20
    %v1949 = vpop.permute.xlu0 %1948
    %1950 = vrot.lane.b32.xlu0 %v1764, 20
    %v1951 = vpop.permute.xlu0 %1950
    %1952 = vrot.lane.b32.xlu0 %v1765, 20
    %v1953 = vpop.permute.xlu0 %1952
    %1954 = vrot.lane.b32.xlu0 %v1766, 20
    %v1955 = vpop.permute.xlu0 %1954
    %1956 = vrot.lane.b32.xlu0 %v1767, 20
    %v1957 = vpop.permute.xlu0 %1956
    %1958 = vrot.lane.b32.xlu0 %v1768, 20
    %v1959 = vpop.permute.xlu0 %1958
    %1960 = vrot.lane.b32.xlu0 %v1769, 20
    %v1961 = vpop.permute.xlu0 %1960
    %vm2026 = vcmask 195744
    %2027 = vst.msk [vmem:[#allocation2] sm:$0xff] %vm2026, %v1835
    %2028 = vst.msk [vmem:[#allocation2 + $0x8] sm:$0xff] %vm2026, %v1837
    %2029 = vst.msk [vmem:[#allocation2 + $0x10] sm:$0xff] %vm2026, %v1839
    %2030 = vst.msk [vmem:[#allocation2 + $0x18] sm:$0xff] %vm2026, %v1841
    %2031 = vst.msk [vmem:[#allocation2 + $0x20] sm:$0xff] %vm2026, %v1843
    %2032 = vst.msk [vmem:[#allocation2 + $0x28] sm:$0xff] %vm2026, %v1845
    %2033 = vst.msk [vmem:[#allocation2 + $0x30] sm:$0xff] %vm2026, %v1847
    %2034 = vst.msk [vmem:[#allocation2 + $0x38] sm:$0xff] %vm2026, %v1849
    %2035 = vst.msk [vmem:[#allocation2 + $0x40] sm:$0xff] %vm2026, %v1851
    %2036 = vst.msk [vmem:[#allocation2 + $0x48] sm:$0xff] %vm2026, %v1853
    %2037 = vst.msk [vmem:[#allocation2 + $0x50] sm:$0xff] %vm2026, %v1855
    %2038 = vst.msk [vmem:[#allocation2 + $0x58] sm:$0xff] %vm2026, %v1857
    %2039 = vst.msk [vmem:[#allocation2 + $0x60] sm:$0xff] %vm2026, %v1859
    %2040 = vst.msk [vmem:[#allocation2 + $0x68] sm:$0xff] %vm2026, %v1861
    %2041 = vst.msk [vmem:[#allocation2 + $0x70] sm:$0xff] %vm2026, %v1863
    %2042 = vst.msk [vmem:[#allocation2 + $0x78] sm:$0xff] %vm2026, %v1865
    %2043 = vst.msk [vmem:[#allocation2 + $0x80] sm:$0xff] %vm2026, %v1867
    %2044 = vst.msk [vmem:[#allocation2 + $0x88] sm:$0xff] %vm2026, %v1869
    %2045 = vst.msk [vmem:[#allocation2 + $0x90] sm:$0xff] %vm2026, %v1871
    %2046 = vst.msk [vmem:[#allocation2 + $0x98] sm:$0xff] %vm2026, %v1873
    %2047 = vst.msk [vmem:[#allocation2 + $0xa0] sm:$0xff] %vm2026, %v1875
    %2048 = vst.msk [vmem:[#allocation2 + $0xa8] sm:$0xff] %vm2026, %v1877
    %2049 = vst.msk [vmem:[#allocation2 + $0xb0] sm:$0xff] %vm2026, %v1879
    %2050 = vst.msk [vmem:[#allocation2 + $0xb8] sm:$0xff] %vm2026, %v1881
    %2051 = vst.msk [vmem:[#allocation2 + $0xc0] sm:$0xff] %vm2026, %v1883
    %2052 = vst.msk [vmem:[#allocation2 + $0xc8] sm:$0xff] %vm2026, %v1885
    %2053 = vst.msk [vmem:[#allocation2 + $0xd0] sm:$0xff] %vm2026, %v1887
    %2054 = vst.msk [vmem:[#allocation2 + $0xd8] sm:$0xff] %vm2026, %v1889
    %2055 = vst.msk [vmem:[#allocation2 + $0xe0] sm:$0xff] %vm2026, %v1891
    %2056 = vst.msk [vmem:[#allocation2 + $0xe8] sm:$0xff] %vm2026, %v1893
    %2057 = vst.msk [vmem:[#allocation2 + $0xf0] sm:$0xff] %vm2026, %v1895
    %2058 = vst.msk [vmem:[#allocation2 + $0xf8] sm:$0xff] %vm2026, %v1897
    %2059 = vst.msk [vmem:[#allocation2 + $0x100] sm:$0xff] %vm2026, %v1899
    %2060 = vst.msk [vmem:[#allocation2 + $0x108] sm:$0xff] %vm2026, %v1901
    %2061 = vst.msk [vmem:[#allocation2 + $0x110] sm:$0xff] %vm2026, %v1903
    %2062 = vst.msk [vmem:[#allocation2 + $0x118] sm:$0xff] %vm2026, %v1905
    %2063 = vst.msk [vmem:[#allocation2 + $0x120] sm:$0xff] %vm2026, %v1907
    %2064 = vst.msk [vmem:[#allocation2 + $0x128] sm:$0xff] %vm2026, %v1909
    %2065 = vst.msk [vmem:[#allocation2 + $0x130] sm:$0xff] %vm2026, %v1911
    %2066 = vst.msk [vmem:[#allocation2 + $0x138] sm:$0xff] %vm2026, %v1913
    %2067 = vst.msk [vmem:[#allocation2 + $0x140] sm:$0xff] %vm2026, %v1915
    %2068 = vst.msk [vmem:[#allocation2 + $0x148] sm:$0xff] %vm2026, %v1917
    %2069 = vst.msk [vmem:[#allocation2 + $0x150] sm:$0xff] %vm2026, %v1919
    %2070 = vst.msk [vmem:[#allocation2 + $0x158] sm:$0xff] %vm2026, %v1921
    %2071 = vst.msk [vmem:[#allocation2 + $0x160] sm:$0xff] %vm2026, %v1923
    %2072 = vst.msk [vmem:[#allocation2 + $0x168] sm:$0xff] %vm2026, %v1925
    %2073 = vst.msk [vmem:[#allocation2 + $0x170] sm:$0xff] %vm2026, %v1927
    %2074 = vst.msk [vmem:[#allocation2 + $0x178] sm:$0xff] %vm2026, %v1929
    %2075 = vst.msk [vmem:[#allocation2 + $0x180] sm:$0xff] %vm2026, %v1931
    %2076 = vst.msk [vmem:[#allocation2 + $0x188] sm:$0xff] %vm2026, %v1933
    %2077 = vst.msk [vmem:[#allocation2 + $0x190] sm:$0xff] %vm2026, %v1935
    %2078 = vst.msk [vmem:[#allocation2 + $0x198] sm:$0xff] %vm2026, %v1937
    %2079 = vst.msk [vmem:[#allocation2 + $0x1a0] sm:$0xff] %vm2026, %v1939
    %2080 = vst.msk [vmem:[#allocation2 + $0x1a8] sm:$0xff] %vm2026, %v1941
    %2081 = vst.msk [vmem:[#allocation2 + $0x1b0] sm:$0xff] %vm2026, %v1943
    %2082 = vst.msk [vmem:[#allocation2 + $0x1b8] sm:$0xff] %vm2026, %v1945
    %2083 = vst.msk [vmem:[#allocation2 + $0x1c0] sm:$0xff] %vm2026, %v1947
    %2084 = vst.msk [vmem:[#allocation2 + $0x1c8] sm:$0xff] %vm2026, %v1949
    %2085 = vst.msk [vmem:[#allocation2 + $0x1d0] sm:$0xff] %vm2026, %v1951
    %2086 = vst.msk [vmem:[#allocation2 + $0x1d8] sm:$0xff] %vm2026, %v1953
    %2087 = vst.msk [vmem:[#allocation2 + $0x1e0] sm:$0xff] %vm2026, %v1955
    %2088 = vst.msk [vmem:[#allocation2 + $0x1e8] sm:$0xff] %vm2026, %v1957
    %2089 = vst.msk [vmem:[#allocation2 + $0x1f0] sm:$0xff] %vm2026, %v1959
    %2090 = vst.msk [vmem:[#allocation2 + $0x1f8] sm:$0xff] %vm2026, %v1961
    %s2091 = scalar_lea.vmem %s0, 48
    %v2092 = vld [vmem:[%s2091] sm:$0xff]
    %v2093 = vld [vmem:[%s2091 + $0x8] sm:$0xff]
    %v2094 = vld [vmem:[%s2091 + $0x18] sm:$0xff]
    %v2095 = vld [vmem:[%s2091 + $0x20] sm:$0xff]
    %v2096 = vld [vmem:[%s2091 + $0x30] sm:$0xff]
    %v2097 = vld [vmem:[%s2091 + $0x38] sm:$0xff]
    %v2098 = vld [vmem:[%s2091 + $0x48] sm:$0xff]
    %v2099 = vld [vmem:[%s2091 + $0x50] sm:$0xff]
    %v2100 = vld [vmem:[%s2091 + $0x60] sm:$0xff]
    %v2101 = vld [vmem:[%s2091 + $0x68] sm:$0xff]
    %v2102 = vld [vmem:[%s2091 + $0x78] sm:$0xff]
    %v2103 = vld [vmem:[%s2091 + $0x80] sm:$0xff]
    %v2104 = vld [vmem:[%s2091 + $0x90] sm:$0xff]
    %v2105 = vld [vmem:[%s2091 + $0x98] sm:$0xff]
    %v2106 = vld [vmem:[%s2091 + $0xa8] sm:$0xff]
    %v2107 = vld [vmem:[%s2091 + $0xb0] sm:$0xff]
    %v2108 = vld [vmem:[%s2091 + $0xc0] sm:$0xff]
    %v2109 = vld [vmem:[%s2091 + $0xc8] sm:$0xff]
    %v2110 = vld [vmem:[%s2091 + $0xd8] sm:$0xff]
    %v2111 = vld [vmem:[%s2091 + $0xe0] sm:$0xff]
    %v2112 = vld [vmem:[%s2091 + $0xf0] sm:$0xff]
    %v2113 = vld [vmem:[%s2091 + $0xf8] sm:$0xff]
    %v2114 = vld [vmem:[%s2091 + $0x108] sm:$0xff]
    %v2115 = vld [vmem:[%s2091 + $0x110] sm:$0xff]
    %v2116 = vld [vmem:[%s2091 + $0x120] sm:$0xff]
    %v2117 = vld [vmem:[%s2091 + $0x128] sm:$0xff]
    %v2118 = vld [vmem:[%s2091 + $0x138] sm:$0xff]
    %v2119 = vld [vmem:[%s2091 + $0x140] sm:$0xff]
    %v2120 = vld [vmem:[%s2091 + $0x150] sm:$0xff]
    %v2121 = vld [vmem:[%s2091 + $0x158] sm:$0xff]
    %v2122 = vld [vmem:[%s2091 + $0x168] sm:$0xff]
    %v2123 = vld [vmem:[%s2091 + $0x170] sm:$0xff]
    %v2124 = vld [vmem:[%s2091 + $0x1b0] sm:$0xff]
    %v2125 = vld [vmem:[%s2091 + $0x1b8] sm:$0xff]
    %v2126 = vld [vmem:[%s2091 + $0x1c8] sm:$0xff]
    %v2127 = vld [vmem:[%s2091 + $0x1d0] sm:$0xff]
    %v2128 = vld [vmem:[%s2091 + $0x1e0] sm:$0xff]
    %v2129 = vld [vmem:[%s2091 + $0x1e8] sm:$0xff]
    %v2130 = vld [vmem:[%s2091 + $0x1f8] sm:$0xff]
    %v2131 = vld [vmem:[%s2091 + $0x200] sm:$0xff]
    %v2132 = vld [vmem:[%s2091 + $0x210] sm:$0xff]
    %v2133 = vld [vmem:[%s2091 + $0x218] sm:$0xff]
    %v2134 = vld [vmem:[%s2091 + $0x228] sm:$0xff]
    %v2135 = vld [vmem:[%s2091 + $0x230] sm:$0xff]
    %v2136 = vld [vmem:[%s2091 + $0x240] sm:$0xff]
    %v2137 = vld [vmem:[%s2091 + $0x248] sm:$0xff]
    %v2138 = vld [vmem:[%s2091 + $0x258] sm:$0xff]
    %v2139 = vld [vmem:[%s2091 + $0x260] sm:$0xff]
    %v2140 = vld [vmem:[%s2091 + $0x270] sm:$0xff]
    %v2141 = vld [vmem:[%s2091 + $0x278] sm:$0xff]
    %v2142 = vld [vmem:[%s2091 + $0x288] sm:$0xff]
    %v2143 = vld [vmem:[%s2091 + $0x290] sm:$0xff]
    %v2144 = vld [vmem:[%s2091 + $0x2a0] sm:$0xff]
    %v2145 = vld [vmem:[%s2091 + $0x2a8] sm:$0xff]
    %v2146 = vld [vmem:[%s2091 + $0x2b8] sm:$0xff]
    %v2147 = vld [vmem:[%s2091 + $0x2c0] sm:$0xff]
    %v2148 = vld [vmem:[%s2091 + $0x2d0] sm:$0xff]
    %v2149 = vld [vmem:[%s2091 + $0x2d8] sm:$0xff]
    %v2150 = vld [vmem:[%s2091 + $0x2e8] sm:$0xff]
    %v2151 = vld [vmem:[%s2091 + $0x2f0] sm:$0xff]
    %v2152 = vld [vmem:[%s2091 + $0x300] sm:$0xff]
    %v2153 = vld [vmem:[%s2091 + $0x308] sm:$0xff]
    %v2154 = vld [vmem:[%s2091 + $0x318] sm:$0xff]
    %v2155 = vld [vmem:[%s2091 + $0x320] sm:$0xff]
    %2220 = vrot.lane.b32.xlu0 %v2092, 24
    %v2221 = vpop.permute.xlu0 %2220
    %2222 = vrot.lane.b32.xlu0 %v2093, 24
    %v2223 = vpop.permute.xlu0 %2222
    %2224 = vrot.lane.b32.xlu0 %v2094, 24
    %v2225 = vpop.permute.xlu0 %2224
    %2226 = vrot.lane.b32.xlu0 %v2095, 24
    %v2227 = vpop.permute.xlu0 %2226
    %2228 = vrot.lane.b32.xlu0 %v2096, 24
    %v2229 = vpop.permute.xlu0 %2228
    %2230 = vrot.lane.b32.xlu0 %v2097, 24
    %v2231 = vpop.permute.xlu0 %2230
    %2232 = vrot.lane.b32.xlu0 %v2098, 24
    %v2233 = vpop.permute.xlu0 %2232
    %2234 = vrot.lane.b32.xlu0 %v2099, 24
    %v2235 = vpop.permute.xlu0 %2234
    %2236 = vrot.lane.b32.xlu0 %v2100, 24
    %v2237 = vpop.permute.xlu0 %2236
    %2238 = vrot.lane.b32.xlu0 %v2101, 24
    %v2239 = vpop.permute.xlu0 %2238
    %2240 = vrot.lane.b32.xlu0 %v2102, 24
    %v2241 = vpop.permute.xlu0 %2240
    %2242 = vrot.lane.b32.xlu0 %v2103, 24
    %v2243 = vpop.permute.xlu0 %2242
    %2244 = vrot.lane.b32.xlu0 %v2104, 24
    %v2245 = vpop.permute.xlu0 %2244
    %2246 = vrot.lane.b32.xlu0 %v2105, 24
    %v2247 = vpop.permute.xlu0 %2246
    %2248 = vrot.lane.b32.xlu0 %v2106, 24
    %v2249 = vpop.permute.xlu0 %2248
    %2250 = vrot.lane.b32.xlu0 %v2107, 24
    %v2251 = vpop.permute.xlu0 %2250
    %2252 = vrot.lane.b32.xlu0 %v2108, 24
    %v2253 = vpop.permute.xlu0 %2252
    %2254 = vrot.lane.b32.xlu0 %v2109, 24
    %v2255 = vpop.permute.xlu0 %2254
    %2256 = vrot.lane.b32.xlu0 %v2110, 24
    %v2257 = vpop.permute.xlu0 %2256
    %2258 = vrot.lane.b32.xlu0 %v2111, 24
    %v2259 = vpop.permute.xlu0 %2258
    %2260 = vrot.lane.b32.xlu0 %v2112, 24
    %v2261 = vpop.permute.xlu0 %2260
    %2262 = vrot.lane.b32.xlu0 %v2113, 24
    %v2263 = vpop.permute.xlu0 %2262
    %2264 = vrot.lane.b32.xlu0 %v2114, 24
    %v2265 = vpop.permute.xlu0 %2264
    %2266 = vrot.lane.b32.xlu0 %v2115, 24
    %v2267 = vpop.permute.xlu0 %2266
    %2268 = vrot.lane.b32.xlu0 %v2116, 24
    %v2269 = vpop.permute.xlu0 %2268
    %2270 = vrot.lane.b32.xlu0 %v2117, 24
    %v2271 = vpop.permute.xlu0 %2270
    %2272 = vrot.lane.b32.xlu0 %v2118, 24
    %v2273 = vpop.permute.xlu0 %2272
    %2274 = vrot.lane.b32.xlu0 %v2119, 24
    %v2275 = vpop.permute.xlu0 %2274
    %2276 = vrot.lane.b32.xlu0 %v2120, 24
    %v2277 = vpop.permute.xlu0 %2276
    %2278 = vrot.lane.b32.xlu0 %v2121, 24
    %v2279 = vpop.permute.xlu0 %2278
    %2280 = vrot.lane.b32.xlu0 %v2122, 24
    %v2281 = vpop.permute.xlu0 %2280
    %2282 = vrot.lane.b32.xlu0 %v2123, 24
    %v2283 = vpop.permute.xlu0 %2282
    %2284 = vrot.lane.b32.xlu0 %v2124, 24
    %v2285 = vpop.permute.xlu0 %2284
    %2286 = vrot.lane.b32.xlu0 %v2125, 24
    %v2287 = vpop.permute.xlu0 %2286
    %2288 = vrot.lane.b32.xlu0 %v2126, 24
    %v2289 = vpop.permute.xlu0 %2288
    %2290 = vrot.lane.b32.xlu0 %v2127, 24
    %v2291 = vpop.permute.xlu0 %2290
    %2292 = vrot.lane.b32.xlu0 %v2128, 24
    %v2293 = vpop.permute.xlu0 %2292
    %2294 = vrot.lane.b32.xlu0 %v2129, 24
    %v2295 = vpop.permute.xlu0 %2294
    %2296 = vrot.lane.b32.xlu0 %v2130, 24
    %v2297 = vpop.permute.xlu0 %2296
    %2298 = vrot.lane.b32.xlu0 %v2131, 24
    %v2299 = vpop.permute.xlu0 %2298
    %2300 = vrot.lane.b32.xlu0 %v2132, 24
    %v2301 = vpop.permute.xlu0 %2300
    %2302 = vrot.lane.b32.xlu0 %v2133, 24
    %v2303 = vpop.permute.xlu0 %2302
    %2304 = vrot.lane.b32.xlu0 %v2134, 24
    %v2305 = vpop.permute.xlu0 %2304
    %2306 = vrot.lane.b32.xlu0 %v2135, 24
    %v2307 = vpop.permute.xlu0 %2306
    %2308 = vrot.lane.b32.xlu0 %v2136, 24
    %v2309 = vpop.permute.xlu0 %2308
    %2310 = vrot.lane.b32.xlu0 %v2137, 24
    %v2311 = vpop.permute.xlu0 %2310
    %2312 = vrot.lane.b32.xlu0 %v2138, 24
    %v2313 = vpop.permute.xlu0 %2312
    %2314 = vrot.lane.b32.xlu0 %v2139, 24
    %v2315 = vpop.permute.xlu0 %2314
    %2316 = vrot.lane.b32.xlu0 %v2140, 24
    %v2317 = vpop.permute.xlu0 %2316
    %2318 = vrot.lane.b32.xlu0 %v2141, 24
    %v2319 = vpop.permute.xlu0 %2318
    %2320 = vrot.lane.b32.xlu0 %v2142, 24
    %v2321 = vpop.permute.xlu0 %2320
    %2322 = vrot.lane.b32.xlu0 %v2143, 24
    %v2323 = vpop.permute.xlu0 %2322
    %2324 = vrot.lane.b32.xlu0 %v2144, 24
    %v2325 = vpop.permute.xlu0 %2324
    %2326 = vrot.lane.b32.xlu0 %v2145, 24
    %v2327 = vpop.permute.xlu0 %2326
    %2328 = vrot.lane.b32.xlu0 %v2146, 24
    %v2329 = vpop.permute.xlu0 %2328
    %2330 = vrot.lane.b32.xlu0 %v2147, 24
    %v2331 = vpop.permute.xlu0 %2330
    %2332 = vrot.lane.b32.xlu0 %v2148, 24
    %v2333 = vpop.permute.xlu0 %2332
    %2334 = vrot.lane.b32.xlu0 %v2149, 24
    %v2335 = vpop.permute.xlu0 %2334
    %2336 = vrot.lane.b32.xlu0 %v2150, 24
    %v2337 = vpop.permute.xlu0 %2336
    %2338 = vrot.lane.b32.xlu0 %v2151, 24
    %v2339 = vpop.permute.xlu0 %2338
    %2340 = vrot.lane.b32.xlu0 %v2152, 24
    %v2341 = vpop.permute.xlu0 %2340
    %2342 = vrot.lane.b32.xlu0 %v2153, 24
    %v2343 = vpop.permute.xlu0 %2342
    %2344 = vrot.lane.b32.xlu0 %v2154, 24
    %v2345 = vpop.permute.xlu0 %2344
    %2346 = vrot.lane.b32.xlu0 %v2155, 24
    %v2347 = vpop.permute.xlu0 %2346
    %vm2412 = vcmask 228544
    %2413 = vst.msk [vmem:[#allocation2] sm:$0xff] %vm2412, %v2221
    %2414 = vst.msk [vmem:[#allocation2 + $0x8] sm:$0xff] %vm2412, %v2223
    %2415 = vst.msk [vmem:[#allocation2 + $0x10] sm:$0xff] %vm2412, %v2225
    %2416 = vst.msk [vmem:[#allocation2 + $0x18] sm:$0xff] %vm2412, %v2227
    %2417 = vst.msk [vmem:[#allocation2 + $0x20] sm:$0xff] %vm2412, %v2229
    %2418 = vst.msk [vmem:[#allocation2 + $0x28] sm:$0xff] %vm2412, %v2231
    %2419 = vst.msk [vmem:[#allocation2 + $0x30] sm:$0xff] %vm2412, %v2233
    %2420 = vst.msk [vmem:[#allocation2 + $0x38] sm:$0xff] %vm2412, %v2235
    %2421 = vst.msk [vmem:[#allocation2 + $0x40] sm:$0xff] %vm2412, %v2237
    %2422 = vst.msk [vmem:[#allocation2 + $0x48] sm:$0xff] %vm2412, %v2239
    %2423 = vst.msk [vmem:[#allocation2 + $0x50] sm:$0xff] %vm2412, %v2241
    %2424 = vst.msk [vmem:[#allocation2 + $0x58] sm:$0xff] %vm2412, %v2243
    %2425 = vst.msk [vmem:[#allocation2 + $0x60] sm:$0xff] %vm2412, %v2245
    %2426 = vst.msk [vmem:[#allocation2 + $0x68] sm:$0xff] %vm2412, %v2247
    %2427 = vst.msk [vmem:[#allocation2 + $0x70] sm:$0xff] %vm2412, %v2249
    %2428 = vst.msk [vmem:[#allocation2 + $0x78] sm:$0xff] %vm2412, %v2251
    %2429 = vst.msk [vmem:[#allocation2 + $0x80] sm:$0xff] %vm2412, %v2253
    %2430 = vst.msk [vmem:[#allocation2 + $0x88] sm:$0xff] %vm2412, %v2255
    %2431 = vst.msk [vmem:[#allocation2 + $0x90] sm:$0xff] %vm2412, %v2257
    %2432 = vst.msk [vmem:[#allocation2 + $0x98] sm:$0xff] %vm2412, %v2259
    %2433 = vst.msk [vmem:[#allocation2 + $0xa0] sm:$0xff] %vm2412, %v2261
    %2434 = vst.msk [vmem:[#allocation2 + $0xa8] sm:$0xff] %vm2412, %v2263
    %2435 = vst.msk [vmem:[#allocation2 + $0xb0] sm:$0xff] %vm2412, %v2265
    %2436 = vst.msk [vmem:[#allocation2 + $0xb8] sm:$0xff] %vm2412, %v2267
    %2437 = vst.msk [vmem:[#allocation2 + $0xc0] sm:$0xff] %vm2412, %v2269
    %2438 = vst.msk [vmem:[#allocation2 + $0xc8] sm:$0xff] %vm2412, %v2271
    %2439 = vst.msk [vmem:[#allocation2 + $0xd0] sm:$0xff] %vm2412, %v2273
    %2440 = vst.msk [vmem:[#allocation2 + $0xd8] sm:$0xff] %vm2412, %v2275
    %2441 = vst.msk [vmem:[#allocation2 + $0xe0] sm:$0xff] %vm2412, %v2277
    %2442 = vst.msk [vmem:[#allocation2 + $0xe8] sm:$0xff] %vm2412, %v2279
    %2443 = vst.msk [vmem:[#allocation2 + $0xf0] sm:$0xff] %vm2412, %v2281
    %2444 = vst.msk [vmem:[#allocation2 + $0xf8] sm:$0xff] %vm2412, %v2283
    %2445 = vst.msk [vmem:[#allocation2 + $0x100] sm:$0xff] %vm2412, %v2285
    %2446 = vst.msk [vmem:[#allocation2 + $0x108] sm:$0xff] %vm2412, %v2287
    %2447 = vst.msk [vmem:[#allocation2 + $0x110] sm:$0xff] %vm2412, %v2289
    %2448 = vst.msk [vmem:[#allocation2 + $0x118] sm:$0xff] %vm2412, %v2291
    %2449 = vst.msk [vmem:[#allocation2 + $0x120] sm:$0xff] %vm2412, %v2293
    %2450 = vst.msk [vmem:[#allocation2 + $0x128] sm:$0xff] %vm2412, %v2295
    %2451 = vst.msk [vmem:[#allocation2 + $0x130] sm:$0xff] %vm2412, %v2297
    %2452 = vst.msk [vmem:[#allocation2 + $0x138] sm:$0xff] %vm2412, %v2299
    %2453 = vst.msk [vmem:[#allocation2 + $0x140] sm:$0xff] %vm2412, %v2301
    %2454 = vst.msk [vmem:[#allocation2 + $0x148] sm:$0xff] %vm2412, %v2303
    %2455 = vst.msk [vmem:[#allocation2 + $0x150] sm:$0xff] %vm2412, %v2305
    %2456 = vst.msk [vmem:[#allocation2 + $0x158] sm:$0xff] %vm2412, %v2307
    %2457 = vst.msk [vmem:[#allocation2 + $0x160] sm:$0xff] %vm2412, %v2309
    %2458 = vst.msk [vmem:[#allocation2 + $0x168] sm:$0xff] %vm2412, %v2311
    %2459 = vst.msk [vmem:[#allocation2 + $0x170] sm:$0xff] %vm2412, %v2313
    %2460 = vst.msk [vmem:[#allocation2 + $0x178] sm:$0xff] %vm2412, %v2315
    %2461 = vst.msk [vmem:[#allocation2 + $0x180] sm:$0xff] %vm2412, %v2317
    %2462 = vst.msk [vmem:[#allocation2 + $0x188] sm:$0xff] %vm2412, %v2319
    %2463 = vst.msk [vmem:[#allocation2 + $0x190] sm:$0xff] %vm2412, %v2321
    %2464 = vst.msk [vmem:[#allocation2 + $0x198] sm:$0xff] %vm2412, %v2323
    %2465 = vst.msk [vmem:[#allocation2 + $0x1a0] sm:$0xff] %vm2412, %v2325
    %2466 = vst.msk [vmem:[#allocation2 + $0x1a8] sm:$0xff] %vm2412, %v2327
    %2467 = vst.msk [vmem:[#allocation2 + $0x1b0] sm:$0xff] %vm2412, %v2329
    %2468 = vst.msk [vmem:[#allocation2 + $0x1b8] sm:$0xff] %vm2412, %v2331
    %2469 = vst.msk [vmem:[#allocation2 + $0x1c0] sm:$0xff] %vm2412, %v2333
    %2470 = vst.msk [vmem:[#allocation2 + $0x1c8] sm:$0xff] %vm2412, %v2335
    %2471 = vst.msk [vmem:[#allocation2 + $0x1d0] sm:$0xff] %vm2412, %v2337
    %2472 = vst.msk [vmem:[#allocation2 + $0x1d8] sm:$0xff] %vm2412, %v2339
    %2473 = vst.msk [vmem:[#allocation2 + $0x1e0] sm:$0xff] %vm2412, %v2341
    %2474 = vst.msk [vmem:[#allocation2 + $0x1e8] sm:$0xff] %vm2412, %v2343
    %2475 = vst.msk [vmem:[#allocation2 + $0x1f0] sm:$0xff] %vm2412, %v2345
    %2476 = vst.msk [vmem:[#allocation2 + $0x1f8] sm:$0xff] %vm2412, %v2347
    %v2477 = vld [vmem:[%s2091 + $0x1] sm:$0xff]
    %v2478 = vld [vmem:[%s2091 + $0x9] sm:$0xff]
    %v2479 = vld [vmem:[%s2091 + $0x19] sm:$0xff]
    %v2480 = vld [vmem:[%s2091 + $0x21] sm:$0xff]
    %v2481 = vld [vmem:[%s2091 + $0x31] sm:$0xff]
    %v2482 = vld [vmem:[%s2091 + $0x39] sm:$0xff]
    %v2483 = vld [vmem:[%s2091 + $0x49] sm:$0xff]
    %v2484 = vld [vmem:[%s2091 + $0x51] sm:$0xff]
    %v2485 = vld [vmem:[%s2091 + $0x61] sm:$0xff]
    %v2486 = vld [vmem:[%s2091 + $0x69] sm:$0xff]
    %v2487 = vld [vmem:[%s2091 + $0x79] sm:$0xff]
    %v2488 = vld [vmem:[%s2091 + $0x81] sm:$0xff]
    %v2489 = vld [vmem:[%s2091 + $0x91] sm:$0xff]
    %v2490 = vld [vmem:[%s2091 + $0x99] sm:$0xff]
    %v2491 = vld [vmem:[%s2091 + $0xa9] sm:$0xff]
    %v2492 = vld [vmem:[%s2091 + $0xb1] sm:$0xff]
    %v2493 = vld [vmem:[%s2091 + $0xc1] sm:$0xff]
    %v2494 = vld [vmem:[%s2091 + $0xc9] sm:$0xff]
    %v2495 = vld [vmem:[%s2091 + $0xd9] sm:$0xff]
    %v2496 = vld [vmem:[%s2091 + $0xe1] sm:$0xff]
    %v2497 = vld [vmem:[%s2091 + $0xf1] sm:$0xff]
    %v2498 = vld [vmem:[%s2091 + $0xf9] sm:$0xff]
    %v2499 = vld [vmem:[%s2091 + $0x109] sm:$0xff]
    %v2500 = vld [vmem:[%s2091 + $0x111] sm:$0xff]
    %v2501 = vld [vmem:[%s2091 + $0x121] sm:$0xff]
    %v2502 = vld [vmem:[%s2091 + $0x129] sm:$0xff]
    %v2503 = vld [vmem:[%s2091 + $0x139] sm:$0xff]
    %v2504 = vld [vmem:[%s2091 + $0x141] sm:$0xff]
    %v2505 = vld [vmem:[%s2091 + $0x151] sm:$0xff]
    %v2506 = vld [vmem:[%s2091 + $0x159] sm:$0xff]
    %v2507 = vld [vmem:[%s2091 + $0x169] sm:$0xff]
    %v2508 = vld [vmem:[%s2091 + $0x171] sm:$0xff]
    %v2509 = vld [vmem:[%s2091 + $0x1b1] sm:$0xff]
    %v2510 = vld [vmem:[%s2091 + $0x1b9] sm:$0xff]
    %v2511 = vld [vmem:[%s2091 + $0x1c9] sm:$0xff]
    %v2512 = vld [vmem:[%s2091 + $0x1d1] sm:$0xff]
    %v2513 = vld [vmem:[%s2091 + $0x1e1] sm:$0xff]
    %v2514 = vld [vmem:[%s2091 + $0x1e9] sm:$0xff]
    %v2515 = vld [vmem:[%s2091 + $0x1f9] sm:$0xff]
    %v2516 = vld [vmem:[%s2091 + $0x201] sm:$0xff]
    %v2517 = vld [vmem:[%s2091 + $0x211] sm:$0xff]
    %v2518 = vld [vmem:[%s2091 + $0x219] sm:$0xff]
    %v2519 = vld [vmem:[%s2091 + $0x229] sm:$0xff]
    %v2520 = vld [vmem:[%s2091 + $0x231] sm:$0xff]
    %v2521 = vld [vmem:[%s2091 + $0x241] sm:$0xff]
    %v2522 = vld [vmem:[%s2091 + $0x249] sm:$0xff]
    %v2523 = vld [vmem:[%s2091 + $0x259] sm:$0xff]
    %v2524 = vld [vmem:[%s2091 + $0x261] sm:$0xff]
    %v2525 = vld [vmem:[%s2091 + $0x271] sm:$0xff]
    %v2526 = vld [vmem:[%s2091 + $0x279] sm:$0xff]
    %v2527 = vld [vmem:[%s2091 + $0x289] sm:$0xff]
    %v2528 = vld [vmem:[%s2091 + $0x291] sm:$0xff]
    %v2529 = vld [vmem:[%s2091 + $0x2a1] sm:$0xff]
    %v2530 = vld [vmem:[%s2091 + $0x2a9] sm:$0xff]
    %v2531 = vld [vmem:[%s2091 + $0x2b9] sm:$0xff]
    %v2532 = vld [vmem:[%s2091 + $0x2c1] sm:$0xff]
    %v2533 = vld [vmem:[%s2091 + $0x2d1] sm:$0xff]
    %v2534 = vld [vmem:[%s2091 + $0x2d9] sm:$0xff]
    %v2535 = vld [vmem:[%s2091 + $0x2e9] sm:$0xff]
    %v2536 = vld [vmem:[%s2091 + $0x2f1] sm:$0xff]
    %v2537 = vld [vmem:[%s2091 + $0x301] sm:$0xff]
    %v2538 = vld [vmem:[%s2091 + $0x309] sm:$0xff]
    %v2539 = vld [vmem:[%s2091 + $0x319] sm:$0xff]
    %v2540 = vld [vmem:[%s2091 + $0x321] sm:$0xff]
    %2605 = vrot.lane.b32.xlu0 %v2477, 28
    %v2606 = vpop.permute.xlu0 %2605
    %2607 = vrot.lane.b32.xlu0 %v2478, 28
    %v2608 = vpop.permute.xlu0 %2607
    %2609 = vrot.lane.b32.xlu0 %v2479, 28
    %v2610 = vpop.permute.xlu0 %2609
    %2611 = vrot.lane.b32.xlu0 %v2480, 28
    %v2612 = vpop.permute.xlu0 %2611
    %2613 = vrot.lane.b32.xlu0 %v2481, 28
    %v2614 = vpop.permute.xlu0 %2613
    %2615 = vrot.lane.b32.xlu0 %v2482, 28
    %v2616 = vpop.permute.xlu0 %2615
    %2617 = vrot.lane.b32.xlu0 %v2483, 28
    %v2618 = vpop.permute.xlu0 %2617
    %2619 = vrot.lane.b32.xlu0 %v2484, 28
    %v2620 = vpop.permute.xlu0 %2619
    %2621 = vrot.lane.b32.xlu0 %v2485, 28
    %v2622 = vpop.permute.xlu0 %2621
    %2623 = vrot.lane.b32.xlu0 %v2486, 28
    %v2624 = vpop.permute.xlu0 %2623
    %2625 = vrot.lane.b32.xlu0 %v2487, 28
    %v2626 = vpop.permute.xlu0 %2625
    %2627 = vrot.lane.b32.xlu0 %v2488, 28
    %v2628 = vpop.permute.xlu0 %2627
    %2629 = vrot.lane.b32.xlu0 %v2489, 28
    %v2630 = vpop.permute.xlu0 %2629
    %2631 = vrot.lane.b32.xlu0 %v2490, 28
    %v2632 = vpop.permute.xlu0 %2631
    %2633 = vrot.lane.b32.xlu0 %v2491, 28
    %v2634 = vpop.permute.xlu0 %2633
    %2635 = vrot.lane.b32.xlu0 %v2492, 28
    %v2636 = vpop.permute.xlu0 %2635
    %2637 = vrot.lane.b32.xlu0 %v2493, 28
    %v2638 = vpop.permute.xlu0 %2637
    %2639 = vrot.lane.b32.xlu0 %v2494, 28
    %v2640 = vpop.permute.xlu0 %2639
    %2641 = vrot.lane.b32.xlu0 %v2495, 28
    %v2642 = vpop.permute.xlu0 %2641
    %2643 = vrot.lane.b32.xlu0 %v2496, 28
    %v2644 = vpop.permute.xlu0 %2643
    %2645 = vrot.lane.b32.xlu0 %v2497, 28
    %v2646 = vpop.permute.xlu0 %2645
    %2647 = vrot.lane.b32.xlu0 %v2498, 28
    %v2648 = vpop.permute.xlu0 %2647
    %2649 = vrot.lane.b32.xlu0 %v2499, 28
    %v2650 = vpop.permute.xlu0 %2649
    %2651 = vrot.lane.b32.xlu0 %v2500, 28
    %v2652 = vpop.permute.xlu0 %2651
    %2653 = vrot.lane.b32.xlu0 %v2501, 28
    %v2654 = vpop.permute.xlu0 %2653
    %2655 = vrot.lane.b32.xlu0 %v2502, 28
    %v2656 = vpop.permute.xlu0 %2655
    %2657 = vrot.lane.b32.xlu0 %v2503, 28
    %v2658 = vpop.permute.xlu0 %2657
    %2659 = vrot.lane.b32.xlu0 %v2504, 28
    %v2660 = vpop.permute.xlu0 %2659
    %2661 = vrot.lane.b32.xlu0 %v2505, 28
    %v2662 = vpop.permute.xlu0 %2661
    %2663 = vrot.lane.b32.xlu0 %v2506, 28
    %v2664 = vpop.permute.xlu0 %2663
    %2665 = vrot.lane.b32.xlu0 %v2507, 28
    %v2666 = vpop.permute.xlu0 %2665
    %2667 = vrot.lane.b32.xlu0 %v2508, 28
    %v2668 = vpop.permute.xlu0 %2667
    %2669 = vrot.lane.b32.xlu0 %v2509, 28
    %v2670 = vpop.permute.xlu0 %2669
    %2671 = vrot.lane.b32.xlu0 %v2510, 28
    %v2672 = vpop.permute.xlu0 %2671
    %2673 = vrot.lane.b32.xlu0 %v2511, 28
    %v2674 = vpop.permute.xlu0 %2673
    %2675 = vrot.lane.b32.xlu0 %v2512, 28
    %v2676 = vpop.permute.xlu0 %2675
    %2677 = vrot.lane.b32.xlu0 %v2513, 28
    %v2678 = vpop.permute.xlu0 %2677
    %2679 = vrot.lane.b32.xlu0 %v2514, 28
    %v2680 = vpop.permute.xlu0 %2679
    %2681 = vrot.lane.b32.xlu0 %v2515, 28
    %v2682 = vpop.permute.xlu0 %2681
    %2683 = vrot.lane.b32.xlu0 %v2516, 28
    %v2684 = vpop.permute.xlu0 %2683
    %2685 = vrot.lane.b32.xlu0 %v2517, 28
    %v2686 = vpop.permute.xlu0 %2685
    %2687 = vrot.lane.b32.xlu0 %v2518, 28
    %v2688 = vpop.permute.xlu0 %2687
    %2689 = vrot.lane.b32.xlu0 %v2519, 28
    %v2690 = vpop.permute.xlu0 %2689
    %2691 = vrot.lane.b32.xlu0 %v2520, 28
    %v2692 = vpop.permute.xlu0 %2691
    %2693 = vrot.lane.b32.xlu0 %v2521, 28
    %v2694 = vpop.permute.xlu0 %2693
    %2695 = vrot.lane.b32.xlu0 %v2522, 28
    %v2696 = vpop.permute.xlu0 %2695
    %2697 = vrot.lane.b32.xlu0 %v2523, 28
    %v2698 = vpop.permute.xlu0 %2697
    %2699 = vrot.lane.b32.xlu0 %v2524, 28
    %v2700 = vpop.permute.xlu0 %2699
    %2701 = vrot.lane.b32.xlu0 %v2525, 28
    %v2702 = vpop.permute.xlu0 %2701
    %2703 = vrot.lane.b32.xlu0 %v2526, 28
    %v2704 = vpop.permute.xlu0 %2703
    %2705 = vrot.lane.b32.xlu0 %v2527, 28
    %v2706 = vpop.permute.xlu0 %2705
    %2707 = vrot.lane.b32.xlu0 %v2528, 28
    %v2708 = vpop.permute.xlu0 %2707
    %2709 = vrot.lane.b32.xlu0 %v2529, 28
    %v2710 = vpop.permute.xlu0 %2709
    %2711 = vrot.lane.b32.xlu0 %v2530, 28
    %v2712 = vpop.permute.xlu0 %2711
    %2713 = vrot.lane.b32.xlu0 %v2531, 28
    %v2714 = vpop.permute.xlu0 %2713
    %2715 = vrot.lane.b32.xlu0 %v2532, 28
    %v2716 = vpop.permute.xlu0 %2715
    %2717 = vrot.lane.b32.xlu0 %v2533, 28
    %v2718 = vpop.permute.xlu0 %2717
    %2719 = vrot.lane.b32.xlu0 %v2534, 28
    %v2720 = vpop.permute.xlu0 %2719
    %2721 = vrot.lane.b32.xlu0 %v2535, 28
    %v2722 = vpop.permute.xlu0 %2721
    %2723 = vrot.lane.b32.xlu0 %v2536, 28
    %v2724 = vpop.permute.xlu0 %2723
    %2725 = vrot.lane.b32.xlu0 %v2537, 28
    %v2726 = vpop.permute.xlu0 %2725
    %2727 = vrot.lane.b32.xlu0 %v2538, 28
    %v2728 = vpop.permute.xlu0 %2727
    %2729 = vrot.lane.b32.xlu0 %v2539, 28
    %v2730 = vpop.permute.xlu0 %2729
    %2731 = vrot.lane.b32.xlu0 %v2540, 28
    %v2732 = vpop.permute.xlu0 %2731
    %vm2797 = vcmask 261344
    %2798 = vst.msk [vmem:[#allocation2] sm:$0xff] %vm2797, %v2606
    %2799 = vst.msk [vmem:[#allocation2 + $0x8] sm:$0xff] %vm2797, %v2608
    %2800 = vst.msk [vmem:[#allocation2 + $0x10] sm:$0xff] %vm2797, %v2610
    %2801 = vst.msk [vmem:[#allocation2 + $0x18] sm:$0xff] %vm2797, %v2612
    %2802 = vst.msk [vmem:[#allocation2 + $0x20] sm:$0xff] %vm2797, %v2614
    %2803 = vst.msk [vmem:[#allocation2 + $0x28] sm:$0xff] %vm2797, %v2616
    %2804 = vst.msk [vmem:[#allocation2 + $0x30] sm:$0xff] %vm2797, %v2618
    %2805 = vst.msk [vmem:[#allocation2 + $0x38] sm:$0xff] %vm2797, %v2620
    %2806 = vst.msk [vmem:[#allocation2 + $0x40] sm:$0xff] %vm2797, %v2622
    %2807 = vst.msk [vmem:[#allocation2 + $0x48] sm:$0xff] %vm2797, %v2624
    %2808 = vst.msk [vmem:[#allocation2 + $0x50] sm:$0xff] %vm2797, %v2626
    %2809 = vst.msk [vmem:[#allocation2 + $0x58] sm:$0xff] %vm2797, %v2628
    %2810 = vst.msk [vmem:[#allocation2 + $0x60] sm:$0xff] %vm2797, %v2630
    %2811 = vst.msk [vmem:[#allocation2 + $0x68] sm:$0xff] %vm2797, %v2632
    %2812 = vst.msk [vmem:[#allocation2 + $0x70] sm:$0xff] %vm2797, %v2634
    %2813 = vst.msk [vmem:[#allocation2 + $0x78] sm:$0xff] %vm2797, %v2636
    %2814 = vst.msk [vmem:[#allocation2 + $0x80] sm:$0xff] %vm2797, %v2638
    %2815 = vst.msk [vmem:[#allocation2 + $0x88] sm:$0xff] %vm2797, %v2640
    %2816 = vst.msk [vmem:[#allocation2 + $0x90] sm:$0xff] %vm2797, %v2642
    %2817 = vst.msk [vmem:[#allocation2 + $0x98] sm:$0xff] %vm2797, %v2644
    %2818 = vst.msk [vmem:[#allocation2 + $0xa0] sm:$0xff] %vm2797, %v2646
    %2819 = vst.msk [vmem:[#allocation2 + $0xa8] sm:$0xff] %vm2797, %v2648
    %2820 = vst.msk [vmem:[#allocation2 + $0xb0] sm:$0xff] %vm2797, %v2650
    %2821 = vst.msk [vmem:[#allocation2 + $0xb8] sm:$0xff] %vm2797, %v2652
    %2822 = vst.msk [vmem:[#allocation2 + $0xc0] sm:$0xff] %vm2797, %v2654
    %2823 = vst.msk [vmem:[#allocation2 + $0xc8] sm:$0xff] %vm2797, %v2656
    %2824 = vst.msk [vmem:[#allocation2 + $0xd0] sm:$0xff] %vm2797, %v2658
    %2825 = vst.msk [vmem:[#allocation2 + $0xd8] sm:$0xff] %vm2797, %v2660
    %2826 = vst.msk [vmem:[#allocation2 + $0xe0] sm:$0xff] %vm2797, %v2662
    %2827 = vst.msk [vmem:[#allocation2 + $0xe8] sm:$0xff] %vm2797, %v2664
    %2828 = vst.msk [vmem:[#allocation2 + $0xf0] sm:$0xff] %vm2797, %v2666
    %2829 = vst.msk [vmem:[#allocation2 + $0xf8] sm:$0xff] %vm2797, %v2668
    %2830 = vst.msk [vmem:[#allocation2 + $0x100] sm:$0xff] %vm2797, %v2670
    %2831 = vst.msk [vmem:[#allocation2 + $0x108] sm:$0xff] %vm2797, %v2672
    %2832 = vst.msk [vmem:[#allocation2 + $0x110] sm:$0xff] %vm2797, %v2674
    %2833 = vst.msk [vmem:[#allocation2 + $0x118] sm:$0xff] %vm2797, %v2676
    %2834 = vst.msk [vmem:[#allocation2 + $0x120] sm:$0xff] %vm2797, %v2678
    %2835 = vst.msk [vmem:[#allocation2 + $0x128] sm:$0xff] %vm2797, %v2680
    %2836 = vst.msk [vmem:[#allocation2 + $0x130] sm:$0xff] %vm2797, %v2682
    %2837 = vst.msk [vmem:[#allocation2 + $0x138] sm:$0xff] %vm2797, %v2684
    %2838 = vst.msk [vmem:[#allocation2 + $0x140] sm:$0xff] %vm2797, %v2686
    %2839 = vst.msk [vmem:[#allocation2 + $0x148] sm:$0xff] %vm2797, %v2688
    %2840 = vst.msk [vmem:[#allocation2 + $0x150] sm:$0xff] %vm2797, %v2690
    %2841 = vst.msk [vmem:[#allocation2 + $0x158] sm:$0xff] %vm2797, %v2692
    %2842 = vst.msk [vmem:[#allocation2 + $0x160] sm:$0xff] %vm2797, %v2694
    %2843 = vst.msk [vmem:[#allocation2 + $0x168] sm:$0xff] %vm2797, %v2696
    %2844 = vst.msk [vmem:[#allocation2 + $0x170] sm:$0xff] %vm2797, %v2698
    %2845 = vst.msk [vmem:[#allocation2 + $0x178] sm:$0xff] %vm2797, %v2700
    %2846 = vst.msk [vmem:[#allocation2 + $0x180] sm:$0xff] %vm2797, %v2702
    %2847 = vst.msk [vmem:[#allocation2 + $0x188] sm:$0xff] %vm2797, %v2704
    %2848 = vst.msk [vmem:[#allocation2 + $0x190] sm:$0xff] %vm2797, %v2706
    %2849 = vst.msk [vmem:[#allocation2 + $0x198] sm:$0xff] %vm2797, %v2708
    %2850 = vst.msk [vmem:[#allocation2 + $0x1a0] sm:$0xff] %vm2797, %v2710
    %2851 = vst.msk [vmem:[#allocation2 + $0x1a8] sm:$0xff] %vm2797, %v2712
    %2852 = vst.msk [vmem:[#allocation2 + $0x1b0] sm:$0xff] %vm2797, %v2714
    %2853 = vst.msk [vmem:[#allocation2 + $0x1b8] sm:$0xff] %vm2797, %v2716
    %2854 = vst.msk [vmem:[#allocation2 + $0x1c0] sm:$0xff] %vm2797, %v2718
    %2855 = vst.msk [vmem:[#allocation2 + $0x1c8] sm:$0xff] %vm2797, %v2720
    %2856 = vst.msk [vmem:[#allocation2 + $0x1d0] sm:$0xff] %vm2797, %v2722
    %2857 = vst.msk [vmem:[#allocation2 + $0x1d8] sm:$0xff] %vm2797, %v2724
    %2858 = vst.msk [vmem:[#allocation2 + $0x1e0] sm:$0xff] %vm2797, %v2726
    %2859 = vst.msk [vmem:[#allocation2 + $0x1e8] sm:$0xff] %vm2797, %v2728
    %2860 = vst.msk [vmem:[#allocation2 + $0x1f0] sm:$0xff] %vm2797, %v2730
    %2861 = vst.msk [vmem:[#allocation2 + $0x1f8] sm:$0xff] %vm2797, %v2732
    %v2862 = vld [vmem:[%s2091 + $0x2] sm:$0xff]
    %v2863 = vld [vmem:[%s2091 + $0xa] sm:$0xff]
    %v2864 = vld [vmem:[%s2091 + $0x1a] sm:$0xff]
    %v2865 = vld [vmem:[%s2091 + $0x22] sm:$0xff]
    %v2866 = vld [vmem:[%s2091 + $0x32] sm:$0xff]
    %v2867 = vld [vmem:[%s2091 + $0x3a] sm:$0xff]
    %v2868 = vld [vmem:[%s2091 + $0x4a] sm:$0xff]
    %v2869 = vld [vmem:[%s2091 + $0x52] sm:$0xff]
    %v2870 = vld [vmem:[%s2091 + $0x62] sm:$0xff]
    %v2871 = vld [vmem:[%s2091 + $0x6a] sm:$0xff]
    %v2872 = vld [vmem:[%s2091 + $0x7a] sm:$0xff]
    %v2873 = vld [vmem:[%s2091 + $0x82] sm:$0xff]
    %v2874 = vld [vmem:[%s2091 + $0x92] sm:$0xff]
    %v2875 = vld [vmem:[%s2091 + $0x9a] sm:$0xff]
    %v2876 = vld [vmem:[%s2091 + $0xaa] sm:$0xff]
    %v2877 = vld [vmem:[%s2091 + $0xb2] sm:$0xff]
    %v2878 = vld [vmem:[%s2091 + $0xc2] sm:$0xff]
    %v2879 = vld [vmem:[%s2091 + $0xca] sm:$0xff]
    %v2880 = vld [vmem:[%s2091 + $0xda] sm:$0xff]
    %v2881 = vld [vmem:[%s2091 + $0xe2] sm:$0xff]
    %v2882 = vld [vmem:[%s2091 + $0xf2] sm:$0xff]
    %v2883 = vld [vmem:[%s2091 + $0xfa] sm:$0xff]
    %v2884 = vld [vmem:[%s2091 + $0x10a] sm:$0xff]
    %v2885 = vld [vmem:[%s2091 + $0x112] sm:$0xff]
    %v2886 = vld [vmem:[%s2091 + $0x122] sm:$0xff]
    %v2887 = vld [vmem:[%s2091 + $0x12a] sm:$0xff]
    %v2888 = vld [vmem:[%s2091 + $0x13a] sm:$0xff]
    %v2889 = vld [vmem:[%s2091 + $0x142] sm:$0xff]
    %v2890 = vld [vmem:[%s2091 + $0x152] sm:$0xff]
    %v2891 = vld [vmem:[%s2091 + $0x15a] sm:$0xff]
    %v2892 = vld [vmem:[%s2091 + $0x16a] sm:$0xff]
    %v2893 = vld [vmem:[%s2091 + $0x172] sm:$0xff]
    %v2894 = vld [vmem:[%s2091 + $0x1b2] sm:$0xff]
    %v2895 = vld [vmem:[%s2091 + $0x1ba] sm:$0xff]
    %v2896 = vld [vmem:[%s2091 + $0x1ca] sm:$0xff]
    %v2897 = vld [vmem:[%s2091 + $0x1d2] sm:$0xff]
    %v2898 = vld [vmem:[%s2091 + $0x1e2] sm:$0xff]
    %v2899 = vld [vmem:[%s2091 + $0x1ea] sm:$0xff]
    %v2900 = vld [vmem:[%s2091 + $0x1fa] sm:$0xff]
    %v2901 = vld [vmem:[%s2091 + $0x202] sm:$0xff]
    %v2902 = vld [vmem:[%s2091 + $0x212] sm:$0xff]
    %v2903 = vld [vmem:[%s2091 + $0x21a] sm:$0xff]
    %v2904 = vld [vmem:[%s2091 + $0x22a] sm:$0xff]
    %v2905 = vld [vmem:[%s2091 + $0x232] sm:$0xff]
    %v2906 = vld [vmem:[%s2091 + $0x242] sm:$0xff]
    %v2907 = vld [vmem:[%s2091 + $0x24a] sm:$0xff]
    %v2908 = vld [vmem:[%s2091 + $0x25a] sm:$0xff]
    %v2909 = vld [vmem:[%s2091 + $0x262] sm:$0xff]
    %v2910 = vld [vmem:[%s2091 + $0x272] sm:$0xff]
    %v2911 = vld [vmem:[%s2091 + $0x27a] sm:$0xff]
    %v2912 = vld [vmem:[%s2091 + $0x28a] sm:$0xff]
    %v2913 = vld [vmem:[%s2091 + $0x292] sm:$0xff]
    %v2914 = vld [vmem:[%s2091 + $0x2a2] sm:$0xff]
    %v2915 = vld [vmem:[%s2091 + $0x2aa] sm:$0xff]
    %v2916 = vld [vmem:[%s2091 + $0x2ba] sm:$0xff]
    %v2917 = vld [vmem:[%s2091 + $0x2c2] sm:$0xff]
    %v2918 = vld [vmem:[%s2091 + $0x2d2] sm:$0xff]
    %v2919 = vld [vmem:[%s2091 + $0x2da] sm:$0xff]
    %v2920 = vld [vmem:[%s2091 + $0x2ea] sm:$0xff]
    %v2921 = vld [vmem:[%s2091 + $0x2f2] sm:$0xff]
    %v2922 = vld [vmem:[%s2091 + $0x302] sm:$0xff]
    %v2923 = vld [vmem:[%s2091 + $0x30a] sm:$0xff]
    %v2924 = vld [vmem:[%s2091 + $0x31a] sm:$0xff]
    %v2925 = vld [vmem:[%s2091 + $0x322] sm:$0xff]
    %2990 = vrot.lane.b32.xlu0 %v2862, 32
    %v2991 = vpop.permute.xlu0 %2990
    %2992 = vrot.lane.b32.xlu0 %v2863, 32
    %v2993 = vpop.permute.xlu0 %2992
    %2994 = vrot.lane.b32.xlu0 %v2864, 32
    %v2995 = vpop.permute.xlu0 %2994
    %2996 = vrot.lane.b32.xlu0 %v2865, 32
    %v2997 = vpop.permute.xlu0 %2996
    %2998 = vrot.lane.b32.xlu0 %v2866, 32
    %v2999 = vpop.permute.xlu0 %2998
    %3000 = vrot.lane.b32.xlu0 %v2867, 32
    %v3001 = vpop.permute.xlu0 %3000
    %3002 = vrot.lane.b32.xlu0 %v2868, 32
    %v3003 = vpop.permute.xlu0 %3002
    %3004 = vrot.lane.b32.xlu0 %v2869, 32
    %v3005 = vpop.permute.xlu0 %3004
    %3006 = vrot.lane.b32.xlu0 %v2870, 32
    %v3007 = vpop.permute.xlu0 %3006
    %3008 = vrot.lane.b32.xlu0 %v2871, 32
    %v3009 = vpop.permute.xlu0 %3008
    %3010 = vrot.lane.b32.xlu0 %v2872, 32
    %v3011 = vpop.permute.xlu0 %3010
    %3012 = vrot.lane.b32.xlu0 %v2873, 32
    %v3013 = vpop.permute.xlu0 %3012
    %3014 = vrot.lane.b32.xlu0 %v2874, 32
    %v3015 = vpop.permute.xlu0 %3014
    %3016 = vrot.lane.b32.xlu0 %v2875, 32
    %v3017 = vpop.permute.xlu0 %3016
    %3018 = vrot.lane.b32.xlu0 %v2876, 32
    %v3019 = vpop.permute.xlu0 %3018
    %3020 = vrot.lane.b32.xlu0 %v2877, 32
    %v3021 = vpop.permute.xlu0 %3020
    %3022 = vrot.lane.b32.xlu0 %v2878, 32
    %v3023 = vpop.permute.xlu0 %3022
    %3024 = vrot.lane.b32.xlu0 %v2879, 32
    %v3025 = vpop.permute.xlu0 %3024
    %3026 = vrot.lane.b32.xlu0 %v2880, 32
    %v3027 = vpop.permute.xlu0 %3026
    %3028 = vrot.lane.b32.xlu0 %v2881, 32
    %v3029 = vpop.permute.xlu0 %3028
    %3030 = vrot.lane.b32.xlu0 %v2882, 32
    %v3031 = vpop.permute.xlu0 %3030
    %3032 = vrot.lane.b32.xlu0 %v2883, 32
    %v3033 = vpop.permute.xlu0 %3032
    %3034 = vrot.lane.b32.xlu0 %v2884, 32
    %v3035 = vpop.permute.xlu0 %3034
    %3036 = vrot.lane.b32.xlu0 %v2885, 32
    %v3037 = vpop.permute.xlu0 %3036
    %3038 = vrot.lane.b32.xlu0 %v2886, 32
    %v3039 = vpop.permute.xlu0 %3038
    %3040 = vrot.lane.b32.xlu0 %v2887, 32
    %v3041 = vpop.permute.xlu0 %3040
    %3042 = vrot.lane.b32.xlu0 %v2888, 32
    %v3043 = vpop.permute.xlu0 %3042
    %3044 = vrot.lane.b32.xlu0 %v2889, 32
    %v3045 = vpop.permute.xlu0 %3044
    %3046 = vrot.lane.b32.xlu0 %v2890, 32
    %v3047 = vpop.permute.xlu0 %3046
    %3048 = vrot.lane.b32.xlu0 %v2891, 32
    %v3049 = vpop.permute.xlu0 %3048
    %3050 = vrot.lane.b32.xlu0 %v2892, 32
    %v3051 = vpop.permute.xlu0 %3050
    %3052 = vrot.lane.b32.xlu0 %v2893, 32
    %v3053 = vpop.permute.xlu0 %3052
    %3054 = vrot.lane.b32.xlu0 %v2894, 32
    %v3055 = vpop.permute.xlu0 %3054
    %3056 = vrot.lane.b32.xlu0 %v2895, 32
    %v3057 = vpop.permute.xlu0 %3056
    %3058 = vrot.lane.b32.xlu0 %v2896, 32
    %v3059 = vpop.permute.xlu0 %3058
    %3060 = vrot.lane.b32.xlu0 %v2897, 32
    %v3061 = vpop.permute.xlu0 %3060
    %3062 = vrot.lane.b32.xlu0 %v2898, 32
    %v3063 = vpop.permute.xlu0 %3062
    %3064 = vrot.lane.b32.xlu0 %v2899, 32
    %v3065 = vpop.permute.xlu0 %3064
    %3066 = vrot.lane.b32.xlu0 %v2900, 32
    %v3067 = vpop.permute.xlu0 %3066
    %3068 = vrot.lane.b32.xlu0 %v2901, 32
    %v3069 = vpop.permute.xlu0 %3068
    %3070 = vrot.lane.b32.xlu0 %v2902, 32
    %v3071 = vpop.permute.xlu0 %3070
    %3072 = vrot.lane.b32.xlu0 %v2903, 32
    %v3073 = vpop.permute.xlu0 %3072
    %3074 = vrot.lane.b32.xlu0 %v2904, 32
    %v3075 = vpop.permute.xlu0 %3074
    %3076 = vrot.lane.b32.xlu0 %v2905, 32
    %v3077 = vpop.permute.xlu0 %3076
    %3078 = vrot.lane.b32.xlu0 %v2906, 32
    %v3079 = vpop.permute.xlu0 %3078
    %3080 = vrot.lane.b32.xlu0 %v2907, 32
    %v3081 = vpop.permute.xlu0 %3080
    %3082 = vrot.lane.b32.xlu0 %v2908, 32
    %v3083 = vpop.permute.xlu0 %3082
    %3084 = vrot.lane.b32.xlu0 %v2909, 32
    %v3085 = vpop.permute.xlu0 %3084
    %3086 = vrot.lane.b32.xlu0 %v2910, 32
    %v3087 = vpop.permute.xlu0 %3086
    %3088 = vrot.lane.b32.xlu0 %v2911, 32
    %v3089 = vpop.permute.xlu0 %3088
    %3090 = vrot.lane.b32.xlu0 %v2912, 32
    %v3091 = vpop.permute.xlu0 %3090
    %3092 = vrot.lane.b32.xlu0 %v2913, 32
    %v3093 = vpop.permute.xlu0 %3092
    %3094 = vrot.lane.b32.xlu0 %v2914, 32
    %v3095 = vpop.permute.xlu0 %3094
    %3096 = vrot.lane.b32.xlu0 %v2915, 32
    %v3097 = vpop.permute.xlu0 %3096
    %3098 = vrot.lane.b32.xlu0 %v2916, 32
    %v3099 = vpop.permute.xlu0 %3098
    %3100 = vrot.lane.b32.xlu0 %v2917, 32
    %v3101 = vpop.permute.xlu0 %3100
    %3102 = vrot.lane.b32.xlu0 %v2918, 32
    %v3103 = vpop.permute.xlu0 %3102
    %3104 = vrot.lane.b32.xlu0 %v2919, 32
    %v3105 = vpop.permute.xlu0 %3104
    %3106 = vrot.lane.b32.xlu0 %v2920, 32
    %v3107 = vpop.permute.xlu0 %3106
    %3108 = vrot.lane.b32.xlu0 %v2921, 32
    %v3109 = vpop.permute.xlu0 %3108
    %3110 = vrot.lane.b32.xlu0 %v2922, 32
    %v3111 = vpop.permute.xlu0 %3110
    %3112 = vrot.lane.b32.xlu0 %v2923, 32
    %v3113 = vpop.permute.xlu0 %3112
    %3114 = vrot.lane.b32.xlu0 %v2924, 32
    %v3115 = vpop.permute.xlu0 %3114
    %3116 = vrot.lane.b32.xlu0 %v2925, 32
    %v3117 = vpop.permute.xlu0 %3116
    %vm3182 = vcmask 294144
    %3183 = vst.msk [vmem:[#allocation2] sm:$0xff] %vm3182, %v2991
    %3184 = vst.msk [vmem:[#allocation2 + $0x8] sm:$0xff] %vm3182, %v2993
    %3185 = vst.msk [vmem:[#allocation2 + $0x10] sm:$0xff] %vm3182, %v2995
    %3186 = vst.msk [vmem:[#allocation2 + $0x18] sm:$0xff] %vm3182, %v2997
    %3187 = vst.msk [vmem:[#allocation2 + $0x20] sm:$0xff] %vm3182, %v2999
    %3188 = vst.msk [vmem:[#allocation2 + $0x28] sm:$0xff] %vm3182, %v3001
    %3189 = vst.msk [vmem:[#allocation2 + $0x30] sm:$0xff] %vm3182, %v3003
    %3190 = vst.msk [vmem:[#allocation2 + $0x38] sm:$0xff] %vm3182, %v3005
    %3191 = vst.msk [vmem:[#allocation2 + $0x40] sm:$0xff] %vm3182, %v3007
    %3192 = vst.msk [vmem:[#allocation2 + $0x48] sm:$0xff] %vm3182, %v3009
    %3193 = vst.msk [vmem:[#allocation2 + $0x50] sm:$0xff] %vm3182, %v3011
    %3194 = vst.msk [vmem:[#allocation2 + $0x58] sm:$0xff] %vm3182, %v3013
    %3195 = vst.msk [vmem:[#allocation2 + $0x60] sm:$0xff] %vm3182, %v3015
    %3196 = vst.msk [vmem:[#allocation2 + $0x68] sm:$0xff] %vm3182, %v3017
    %3197 = vst.msk [vmem:[#allocation2 + $0x70] sm:$0xff] %vm3182, %v3019
    %3198 = vst.msk [vmem:[#allocation2 + $0x78] sm:$0xff] %vm3182, %v3021
    %3199 = vst.msk [vmem:[#allocation2 + $0x80] sm:$0xff] %vm3182, %v3023
    %3200 = vst.msk [vmem:[#allocation2 + $0x88] sm:$0xff] %vm3182, %v3025
    %3201 = vst.msk [vmem:[#allocation2 + $0x90] sm:$0xff] %vm3182, %v3027
    %3202 = vst.msk [vmem:[#allocation2 + $0x98] sm:$0xff] %vm3182, %v3029
    %3203 = vst.msk [vmem:[#allocation2 + $0xa0] sm:$0xff] %vm3182, %v3031
    %3204 = vst.msk [vmem:[#allocation2 + $0xa8] sm:$0xff] %vm3182, %v3033
    %3205 = vst.msk [vmem:[#allocation2 + $0xb0] sm:$0xff] %vm3182, %v3035
    %3206 = vst.msk [vmem:[#allocation2 + $0xb8] sm:$0xff] %vm3182, %v3037
    %3207 = vst.msk [vmem:[#allocation2 + $0xc0] sm:$0xff] %vm3182, %v3039
    %3208 = vst.msk [vmem:[#allocation2 + $0xc8] sm:$0xff] %vm3182, %v3041
    %3209 = vst.msk [vmem:[#allocation2 + $0xd0] sm:$0xff] %vm3182, %v3043
    %3210 = vst.msk [vmem:[#allocation2 + $0xd8] sm:$0xff] %vm3182, %v3045
    %3211 = vst.msk [vmem:[#allocation2 + $0xe0] sm:$0xff] %vm3182, %v3047
    %3212 = vst.msk [vmem:[#allocation2 + $0xe8] sm:$0xff] %vm3182, %v3049
    %3213 = vst.msk [vmem:[#allocation2 + $0xf0] sm:$0xff] %vm3182, %v3051
    %3214 = vst.msk [vmem:[#allocation2 + $0xf8] sm:$0xff] %vm3182, %v3053
    %3215 = vst.msk [vmem:[#allocation2 + $0x100] sm:$0xff] %vm3182, %v3055
    %3216 = vst.msk [vmem:[#allocation2 + $0x108] sm:$0xff] %vm3182, %v3057
    %3217 = vst.msk [vmem:[#allocation2 + $0x110] sm:$0xff] %vm3182, %v3059
    %3218 = vst.msk [vmem:[#allocation2 + $0x118] sm:$0xff] %vm3182, %v3061
    %3219 = vst.msk [vmem:[#allocation2 + $0x120] sm:$0xff] %vm3182, %v3063
    %3220 = vst.msk [vmem:[#allocation2 + $0x128] sm:$0xff] %vm3182, %v3065
    %3221 = vst.msk [vmem:[#allocation2 + $0x130] sm:$0xff] %vm3182, %v3067
    %3222 = vst.msk [vmem:[#allocation2 + $0x138] sm:$0xff] %vm3182, %v3069
    %3223 = vst.msk [vmem:[#allocation2 + $0x140] sm:$0xff] %vm3182, %v3071
    %3224 = vst.msk [vmem:[#allocation2 + $0x148] sm:$0xff] %vm3182, %v3073
    %3225 = vst.msk [vmem:[#allocation2 + $0x150] sm:$0xff] %vm3182, %v3075
    %3226 = vst.msk [vmem:[#allocation2 + $0x158] sm:$0xff] %vm3182, %v3077
    %3227 = vst.msk [vmem:[#allocation2 + $0x160] sm:$0xff] %vm3182, %v3079
    %3228 = vst.msk [vmem:[#allocation2 + $0x168] sm:$0xff] %vm3182, %v3081
    %3229 = vst.msk [vmem:[#allocation2 + $0x170] sm:$0xff] %vm3182, %v3083
    %3230 = vst.msk [vmem:[#allocation2 + $0x178] sm:$0xff] %vm3182, %v3085
    %3231 = vst.msk [vmem:[#allocation2 + $0x180] sm:$0xff] %vm3182, %v3087
    %3232 = vst.msk [vmem:[#allocation2 + $0x188] sm:$0xff] %vm3182, %v3089
    %3233 = vst.msk [vmem:[#allocation2 + $0x190] sm:$0xff] %vm3182, %v3091
    %3234 = vst.msk [vmem:[#allocation2 + $0x198] sm:$0xff] %vm3182, %v3093
    %3235 = vst.msk [vmem:[#allocation2 + $0x1a0] sm:$0xff] %vm3182, %v3095
    %3236 = vst.msk [vmem:[#allocation2 + $0x1a8] sm:$0xff] %vm3182, %v3097
    %3237 = vst.msk [vmem:[#allocation2 + $0x1b0] sm:$0xff] %vm3182, %v3099
    %3238 = vst.msk [vmem:[#allocation2 + $0x1b8] sm:$0xff] %vm3182, %v3101
    %3239 = vst.msk [vmem:[#allocation2 + $0x1c0] sm:$0xff] %vm3182, %v3103
    %3240 = vst.msk [vmem:[#allocation2 + $0x1c8] sm:$0xff] %vm3182, %v3105
    %3241 = vst.msk [vmem:[#allocation2 + $0x1d0] sm:$0xff] %vm3182, %v3107
    %3242 = vst.msk [vmem:[#allocation2 + $0x1d8] sm:$0xff] %vm3182, %v3109
    %3243 = vst.msk [vmem:[#allocation2 + $0x1e0] sm:$0xff] %vm3182, %v3111
    %3244 = vst.msk [vmem:[#allocation2 + $0x1e8] sm:$0xff] %vm3182, %v3113
    %3245 = vst.msk [vmem:[#allocation2 + $0x1f0] sm:$0xff] %vm3182, %v3115
    %3246 = vst.msk [vmem:[#allocation2 + $0x1f8] sm:$0xff] %vm3182, %v3117
    %v3247 = vld [vmem:[#allocation2] sm:$0xff]
    %v3248 = vld [vmem:[#allocation2 + $0x8] sm:$0xff]
    %v3249 = vld [vmem:[#allocation2 + $0x10] sm:$0xff]
    %v3250 = vld [vmem:[#allocation2 + $0x18] sm:$0xff]
    %v3251 = vld [vmem:[#allocation2 + $0x20] sm:$0xff]
    %v3252 = vld [vmem:[#allocation2 + $0x28] sm:$0xff]
    %v3253 = vld [vmem:[#allocation2 + $0x30] sm:$0xff]
    %v3254 = vld [vmem:[#allocation2 + $0x38] sm:$0xff]
    %v3255 = vld [vmem:[#allocation2 + $0x40] sm:$0xff]
    %v3256 = vld [vmem:[#allocation2 + $0x48] sm:$0xff]
    %v3257 = vld [vmem:[#allocation2 + $0x50] sm:$0xff]
    %v3258 = vld [vmem:[#allocation2 + $0x58] sm:$0xff]
    %v3259 = vld [vmem:[#allocation2 + $0x60] sm:$0xff]
    %v3260 = vld [vmem:[#allocation2 + $0x68] sm:$0xff]
    %v3261 = vld [vmem:[#allocation2 + $0x70] sm:$0xff]
    %v3262 = vld [vmem:[#allocation2 + $0x78] sm:$0xff]
    %v3263 = vld [vmem:[#allocation2 + $0x80] sm:$0xff]
    %v3264 = vld [vmem:[#allocation2 + $0x88] sm:$0xff]
    %v3265 = vld [vmem:[#allocation2 + $0x90] sm:$0xff]
    %v3266 = vld [vmem:[#allocation2 + $0x98] sm:$0xff]
    %v3267 = vld [vmem:[#allocation2 + $0xa0] sm:$0xff]
    %v3268 = vld [vmem:[#allocation2 + $0xa8] sm:$0xff]
    %v3269 = vld [vmem:[#allocation2 + $0xb0] sm:$0xff]
    %v3270 = vld [vmem:[#allocation2 + $0xb8] sm:$0xff]
    %v3271 = vld [vmem:[#allocation2 + $0xc0] sm:$0xff]
    %v3272 = vld [vmem:[#allocation2 + $0xc8] sm:$0xff]
    %v3273 = vld [vmem:[#allocation2 + $0xd0] sm:$0xff]
    %v3274 = vld [vmem:[#allocation2 + $0xd8] sm:$0xff]
    %v3275 = vld [vmem:[#allocation2 + $0xe0] sm:$0xff]
    %v3276 = vld [vmem:[#allocation2 + $0xe8] sm:$0xff]
    %v3277 = vld [vmem:[#allocation2 + $0xf0] sm:$0xff]
    %v3278 = vld [vmem:[#allocation2 + $0xf8] sm:$0xff]
    %v3279 = vld [vmem:[#allocation2 + $0x100] sm:$0xff]
    %v3280 = vld [vmem:[#allocation2 + $0x108] sm:$0xff]
    %v3281 = vld [vmem:[#allocation2 + $0x110] sm:$0xff]
    %v3282 = vld [vmem:[#allocation2 + $0x118] sm:$0xff]
    %v3283 = vld [vmem:[#allocation2 + $0x120] sm:$0xff]
    %v3284 = vld [vmem:[#allocation2 + $0x128] sm:$0xff]
    %v3285 = vld [vmem:[#allocation2 + $0x130] sm:$0xff]
    %v3286 = vld [vmem:[#allocation2 + $0x138] sm:$0xff]
    %v3287 = vld [vmem:[#allocation2 + $0x140] sm:$0xff]
    %v3288 = vld [vmem:[#allocation2 + $0x148] sm:$0xff]
    %v3289 = vld [vmem:[#allocation2 + $0x150] sm:$0xff]
    %v3290 = vld [vmem:[#allocation2 + $0x158] sm:$0xff]
    %v3291 = vld [vmem:[#allocation2 + $0x160] sm:$0xff]
    %v3292 = vld [vmem:[#allocation2 + $0x168] sm:$0xff]
    %v3293 = vld [vmem:[#allocation2 + $0x170] sm:$0xff]
    %v3294 = vld [vmem:[#allocation2 + $0x178] sm:$0xff]
    %v3295 = vld [vmem:[#allocation2 + $0x180] sm:$0xff]
    %v3296 = vld [vmem:[#allocation2 + $0x188] sm:$0xff]
    %v3297 = vld [vmem:[#allocation2 + $0x190] sm:$0xff]
    %v3298 = vld [vmem:[#allocation2 + $0x198] sm:$0xff]
    %v3299 = vld [vmem:[#allocation2 + $0x1a0] sm:$0xff]
    %v3300 = vld [vmem:[#allocation2 + $0x1a8] sm:$0xff]
    %v3301 = vld [vmem:[#allocation2 + $0x1b0] sm:$0xff]
    %v3302 = vld [vmem:[#allocation2 + $0x1b8] sm:$0xff]
    %v3303 = vld [vmem:[#allocation2 + $0x1c0] sm:$0xff]
    %v3304 = vld [vmem:[#allocation2 + $0x1c8] sm:$0xff]
    %v3305 = vld [vmem:[#allocation2 + $0x1d0] sm:$0xff]
    %v3306 = vld [vmem:[#allocation2 + $0x1d8] sm:$0xff]
    %v3307 = vld [vmem:[#allocation2 + $0x1e0] sm:$0xff]
    %v3308 = vld [vmem:[#allocation2 + $0x1e8] sm:$0xff]
    %v3309 = vld [vmem:[#allocation2 + $0x1f0] sm:$0xff]
    %v3310 = vld [vmem:[#allocation2 + $0x1f8] sm:$0xff]
    %v3311 = vld [vmem:[%s1] sm:$0xff]
    %v3312 = vld [vmem:[%s1 + $0x8] sm:$0xff]
    %v3313 = vld [vmem:[%s1 + $0x10] sm:$0xff]
    %v3314 = vld [vmem:[%s1 + $0x18] sm:$0xff]
    %v3315 = vld [vmem:[%s1 + $0x20] sm:$0xf]
    %vm3316 = vcmask 293888
    %v3318 = vsel %vm3316, %v3247, 0
    %v3321 = vsel %vm3316, %v3248, 0
    %v3324 = vsel %vm3316, %v3249, 0
    %v3327 = vsel %vm3316, %v3250, 0
    %v3330 = vsel %vm3316, %v3251, 0
    %v3333 = vsel %vm3316, %v3252, 0
    %v3336 = vsel %vm3316, %v3253, 0
    %v3339 = vsel %vm3316, %v3254, 0
    %v3342 = vsel %vm3316, %v3255, 0
    %v3345 = vsel %vm3316, %v3256, 0
    %v3348 = vsel %vm3316, %v3257, 0
    %v3351 = vsel %vm3316, %v3258, 0
    %v3354 = vsel %vm3316, %v3259, 0
    %v3357 = vsel %vm3316, %v3260, 0
    %v3360 = vsel %vm3316, %v3261, 0
    %v3363 = vsel %vm3316, %v3262, 0
    %v3366 = vsel %vm3316, %v3263, 0
    %v3369 = vsel %vm3316, %v3264, 0
    %v3372 = vsel %vm3316, %v3265, 0
    %v3375 = vsel %vm3316, %v3266, 0
    %v3378 = vsel %vm3316, %v3267, 0
    %v3381 = vsel %vm3316, %v3268, 0
    %v3384 = vsel %vm3316, %v3269, 0
    %v3387 = vsel %vm3316, %v3270, 0
    %v3390 = vsel %vm3316, %v3271, 0
    %v3393 = vsel %vm3316, %v3272, 0
    %v3396 = vsel %vm3316, %v3273, 0
    %v3399 = vsel %vm3316, %v3274, 0
    %v3402 = vsel %vm3316, %v3275, 0
    %v3405 = vsel %vm3316, %v3276, 0
    %v3408 = vsel %vm3316, %v3277, 0
    %v3411 = vsel %vm3316, %v3278, 0
    %v3414 = vsel %vm3316, %v3279, 0
    %v3417 = vsel %vm3316, %v3280, 0
    %v3420 = vsel %vm3316, %v3281, 0
    %v3423 = vsel %vm3316, %v3282, 0
    %v3426 = vsel %vm3316, %v3283, 0
    %v3429 = vsel %vm3316, %v3284, 0
    %v3432 = vsel %vm3316, %v3285, 0
    %v3435 = vsel %vm3316, %v3286, 0
    %v3438 = vsel %vm3316, %v3287, 0
    %v3441 = vsel %vm3316, %v3288, 0
    %v3444 = vsel %vm3316, %v3289, 0
    %v3447 = vsel %vm3316, %v3290, 0
    %v3450 = vsel %vm3316, %v3291, 0
    %v3453 = vsel %vm3316, %v3292, 0
    %v3456 = vsel %vm3316, %v3293, 0
    %v3459 = vsel %vm3316, %v3294, 0
    %v3462 = vsel %vm3316, %v3295, 0
    %v3465 = vsel %vm3316, %v3296, 0
    %v3468 = vsel %vm3316, %v3297, 0
    %v3471 = vsel %vm3316, %v3298, 0
    %v3474 = vsel %vm3316, %v3299, 0
    %v3477 = vsel %vm3316, %v3300, 0
    %v3480 = vsel %vm3316, %v3301, 0
    %v3483 = vsel %vm3316, %v3302, 0
    %v3486 = vsel %vm3316, %v3303, 0
    %v3489 = vsel %vm3316, %v3304, 0
    %v3492 = vsel %vm3316, %v3305, 0
    %v3495 = vsel %vm3316, %v3306, 0
    %v3498 = vsel %vm3316, %v3307, 0
    %v3501 = vsel %vm3316, %v3308, 0
    %v3504 = vsel %vm3316, %v3309, 0
    %v3507 = vsel %vm3316, %v3310, 0
    %vm3509 = vcmask 1043456
    %v3511 = vsel %vm3509, %v3315, 0
    %3513 = vmatprep.subr.mxu0 0.0
    %3514 = vmatpush1.msra.mxu0 0.0
    %3515 = vmatprep.subr.mxu0 0.0
    %3516 = vmatpush1.msra.mxu0 0.0
    %3517 = vmatprep.subr.mxu0 0.0
    %3518 = vmatpush1.msra.mxu0 0.0
    %3519 = vmatprep.subr.mxu0 0.0
    %3520 = vmatpush1.msra.mxu0 0.0
    %3521 = vmatprep.subr.mxu0 0.0
    %3522 = vmatpush1.msra.mxu0 0.0
    %3523 = vmatprep.subr.mxu0 0.0
    %3524 = vmatpush1.msra.mxu0 0.0
    %3525 = vmatprep.subr.mxu0 0.0
    %3526 = vmatpush1.msra.mxu0 0.0
    %3527 = vmatprep.subr.mxu0 0.0
    %3528 = vmatpush1.msra.mxu0 0.0
    %3529 = vmatprep.subr.mxu0 0.0
    %3530 = vmatpush1.msra.mxu0 0.0
    %3531 = vmatprep.subr.mxu0 0.0
    %3532 = vmatpush1.msra.mxu0 0.0
    %3533 = vmatprep.subr.mxu0 0.0
    %3534 = vmatpush1.msra.mxu0 0.0
    %3535 = vmatprep.subr.mxu0 0.0
    %3536 = vmatpush1.msra.mxu0 %v3511
    %3537 = vmatprep.subr.mxu0 0.0
    %3538 = vmatpush1.msra.mxu0 %v3314
    %3539 = vmatprep.subr.mxu0 0.0
    %3540 = vmatpush1.msra.mxu0 %v3313
    %3541 = vmatprep.subr.mxu0 0.0
    %3542 = vmatpush1.msra.mxu0 %v3312
    %3543 = vmatprep.subr.mxu0 0.0
    %3544 = vmatpush1.msra.mxu0 %v3311
    %3545 = vmatprep.subr.mxu0 0.0
    %3546 = vmatpush2.msra.mxu0 0.0
    %3547 = vmatprep.subr.mxu0 0.0
    %3548 = vmatpush2.msra.mxu0 0.0
    %3549 = vmatprep.subr.mxu0 0.0
    %3550 = vmatpush2.msra.mxu0 0.0
    %3551 = vmatprep.subr.mxu0 0.0
    %3552 = vmatpush2.msra.mxu0 0.0
    %3553 = vmatprep.subr.mxu0 0.0
    %3554 = vmatpush2.msra.mxu0 0.0
    %3555 = vmatprep.subr.mxu0 0.0
    %3556 = vmatpush2.msra.mxu0 0.0
    %3557 = vmatprep.subr.mxu0 0.0
    %3558 = vmatpush2.msra.mxu0 0.0
    %3559 = vmatprep.subr.mxu0 0.0
    %3560 = vmatpush2.msra.mxu0 0.0
    %3561 = vmatprep.subr.mxu0 0.0
    %3562 = vmatpush2.msra.mxu0 0.0
    %3563 = vmatprep.subr.mxu0 0.0
    %3564 = vmatpush2.msra.mxu0 0.0
    %3565 = vmatprep.subr.mxu0 0.0
    %3566 = vmatpush2.msra.mxu0 0.0
    %3567 = vmatprep.subr.mxu0 0.0
    %3568 = vmatpush2.msra.mxu0 0.0
    %3569 = vmatprep.subr.mxu0 0.0
    %3570 = vmatpush2.msra.mxu0 0.0
    %3571 = vmatprep.subr.mxu0 0.0
    %3572 = vmatpush2.msra.mxu0 0.0
    %3573 = vmatprep.subr.mxu0 0.0
    %3574 = vmatpush2.msra.mxu0 0.0
    %3575 = vmatprep.subr.mxu0 0.0
    %3576 = vmatpush2.msra.mxu0 0.0
    %3577 = vmatprep.mubr.f32.mxu0 0.0
    %3578 = vmatmul.mubr.f32.gmra.mxu0 %v3318
    %v3579 = vpop.f32.mrf.mxu0
    %v3580 = vadd.f32 0.0, %v3579
    %v3581 = vpop.f32.mrf.mxu0
    %3582 = vmatprep.mubr.f32.mxu0 0.0
    %3583 = vmatmul.mubr.f32.gmra.mxu0 %v3321
    %v3584 = vpop.f32.mrf.mxu0
    %v3585 = vadd.f32 0.0, %v3584
    %v3586 = vpop.f32.mrf.mxu0
    %3587 = vmatprep.mubr.f32.mxu0 0.0
    %3588 = vmatmul.mubr.f32.gmra.mxu0 %v3324
    %v3589 = vpop.f32.mrf.mxu0
    %v3590 = vadd.f32 0.0, %v3589
    %v3591 = vpop.f32.mrf.mxu0
    %3592 = vmatprep.mubr.f32.mxu0 0.0
    %3593 = vmatmul.mubr.f32.gmra.mxu0 %v3327
    %v3594 = vpop.f32.mrf.mxu0
    %v3595 = vadd.f32 0.0, %v3594
    %v3596 = vpop.f32.mrf.mxu0
    %3597 = vmatprep.mubr.f32.mxu0 0.0
    %3598 = vmatmul.mubr.f32.gmra.mxu0 %v3330
    %v3599 = vpop.f32.mrf.mxu0
    %v3600 = vadd.f32 0.0, %v3599
    %v3601 = vpop.f32.mrf.mxu0
    %3602 = vmatprep.mubr.f32.mxu0 0.0
    %3603 = vmatmul.mubr.f32.gmra.mxu0 %v3333
    %v3604 = vpop.f32.mrf.mxu0
    %v3605 = vadd.f32 0.0, %v3604
    %v3606 = vpop.f32.mrf.mxu0
    %3607 = vmatprep.mubr.f32.mxu0 0.0
    %3608 = vmatmul.mubr.f32.gmra.mxu0 %v3336
    %v3609 = vpop.f32.mrf.mxu0
    %v3610 = vadd.f32 0.0, %v3609
    %v3611 = vpop.f32.mrf.mxu0
    %3612 = vmatprep.mubr.f32.mxu0 0.0
    %3613 = vmatmul.mubr.f32.gmra.mxu0 %v3339
    %v3614 = vpop.f32.mrf.mxu0
    %v3615 = vadd.f32 0.0, %v3614
    %v3616 = vpop.f32.mrf.mxu0
    %3617 = vmatprep.mubr.f32.mxu0 0.0
    %3618 = vmatmul.mubr.f32.gmra.mxu0 %v3342
    %v3619 = vpop.f32.mrf.mxu0
    %v3620 = vadd.f32 0.0, %v3619
    %v3621 = vpop.f32.mrf.mxu0
    %3622 = vmatprep.mubr.f32.mxu0 0.0
    %3623 = vmatmul.mubr.f32.gmra.mxu0 %v3345
    %v3624 = vpop.f32.mrf.mxu0
    %v3625 = vadd.f32 0.0, %v3624
    %v3626 = vpop.f32.mrf.mxu0
    %3627 = vmatprep.mubr.f32.mxu0 0.0
    %3628 = vmatmul.mubr.f32.gmra.mxu0 %v3348
    %v3629 = vpop.f32.mrf.mxu0
    %v3630 = vadd.f32 0.0, %v3629
    %v3631 = vpop.f32.mrf.mxu0
    %3632 = vmatprep.mubr.f32.mxu0 0.0
    %3633 = vmatmul.mubr.f32.gmra.mxu0 %v3351
    %v3634 = vpop.f32.mrf.mxu0
    %v3635 = vadd.f32 0.0, %v3634
    %v3636 = vpop.f32.mrf.mxu0
    %3637 = vmatprep.mubr.f32.mxu0 0.0
    %3638 = vmatmul.mubr.f32.gmra.mxu0 %v3354
    %v3639 = vpop.f32.mrf.mxu0
    %v3640 = vadd.f32 0.0, %v3639
    %v3641 = vpop.f32.mrf.mxu0
    %3642 = vmatprep.mubr.f32.mxu0 0.0
    %3643 = vmatmul.mubr.f32.gmra.mxu0 %v3357
    %v3644 = vpop.f32.mrf.mxu0
    %v3645 = vadd.f32 0.0, %v3644
    %v3646 = vpop.f32.mrf.mxu0
    %3647 = vmatprep.mubr.f32.mxu0 0.0
    %3648 = vmatmul.mubr.f32.gmra.mxu0 %v3360
    %v3649 = vpop.f32.mrf.mxu0
    %v3650 = vadd.f32 0.0, %v3649
    %v3651 = vpop.f32.mrf.mxu0
    %3652 = vmatprep.mubr.f32.mxu0 0.0
    %3653 = vmatmul.mubr.f32.gmra.mxu0 %v3363
    %v3654 = vpop.f32.mrf.mxu0
    %v3655 = vadd.f32 0.0, %v3654
    %v3656 = vpop.f32.mrf.mxu0
    %3657 = vmatprep.mubr.f32.mxu0 0.0
    %3658 = vmatmul.mubr.f32.gmra.mxu0 %v3366
    %v3659 = vpop.f32.mrf.mxu0
    %v3660 = vadd.f32 0.0, %v3659
    %v3661 = vpop.f32.mrf.mxu0
    %3662 = vmatprep.mubr.f32.mxu0 0.0
    %3663 = vmatmul.mubr.f32.gmra.mxu0 %v3369
    %v3664 = vpop.f32.mrf.mxu0
    %v3665 = vadd.f32 0.0, %v3664
    %v3666 = vpop.f32.mrf.mxu0
    %3667 = vmatprep.mubr.f32.mxu0 0.0
    %3668 = vmatmul.mubr.f32.gmra.mxu0 %v3372
    %v3669 = vpop.f32.mrf.mxu0
    %v3670 = vadd.f32 0.0, %v3669
    %v3671 = vpop.f32.mrf.mxu0
    %3672 = vmatprep.mubr.f32.mxu0 0.0
    %3673 = vmatmul.mubr.f32.gmra.mxu0 %v3375
    %v3674 = vpop.f32.mrf.mxu0
    %v3675 = vadd.f32 0.0, %v3674
    %v3676 = vpop.f32.mrf.mxu0
    %3677 = vmatprep.mubr.f32.mxu0 0.0
    %3678 = vmatmul.mubr.f32.gmra.mxu0 %v3378
    %v3679 = vpop.f32.mrf.mxu0
    %v3680 = vadd.f32 0.0, %v3679
    %v3681 = vpop.f32.mrf.mxu0
    %3682 = vmatprep.mubr.f32.mxu0 0.0
    %3683 = vmatmul.mubr.f32.gmra.mxu0 %v3381
    %v3684 = vpop.f32.mrf.mxu0
    %v3685 = vadd.f32 0.0, %v3684
    %v3686 = vpop.f32.mrf.mxu0
    %3687 = vmatprep.mubr.f32.mxu0 0.0
    %3688 = vmatmul.mubr.f32.gmra.mxu0 %v3384
    %v3689 = vpop.f32.mrf.mxu0
    %v3690 = vadd.f32 0.0, %v3689
    %v3691 = vpop.f32.mrf.mxu0
    %3692 = vmatprep.mubr.f32.mxu0 0.0
    %3693 = vmatmul.mubr.f32.gmra.mxu0 %v3387
    %v3694 = vpop.f32.mrf.mxu0
    %v3695 = vadd.f32 0.0, %v3694
    %v3696 = vpop.f32.mrf.mxu0
    %3697 = vmatprep.mubr.f32.mxu0 0.0
    %3698 = vmatmul.mubr.f32.gmra.mxu0 %v3390
    %v3699 = vpop.f32.mrf.mxu0
    %v3700 = vadd.f32 0.0, %v3699
    %v3701 = vpop.f32.mrf.mxu0
    %3702 = vmatprep.mubr.f32.mxu0 0.0
    %3703 = vmatmul.mubr.f32.gmra.mxu0 %v3393
    %v3704 = vpop.f32.mrf.mxu0
    %v3705 = vadd.f32 0.0, %v3704
    %v3706 = vpop.f32.mrf.mxu0
    %3707 = vmatprep.mubr.f32.mxu0 0.0
    %3708 = vmatmul.mubr.f32.gmra.mxu0 %v3396
    %v3709 = vpop.f32.mrf.mxu0
    %v3710 = vadd.f32 0.0, %v3709
    %v3711 = vpop.f32.mrf.mxu0
    %3712 = vmatprep.mubr.f32.mxu0 0.0
    %3713 = vmatmul.mubr.f32.gmra.mxu0 %v3399
    %v3714 = vpop.f32.mrf.mxu0
    %v3715 = vadd.f32 0.0, %v3714
    %v3716 = vpop.f32.mrf.mxu0
    %3717 = vmatprep.mubr.f32.mxu0 0.0
    %3718 = vmatmul.mubr.f32.gmra.mxu0 %v3402
    %v3719 = vpop.f32.mrf.mxu0
    %v3720 = vadd.f32 0.0, %v3719
    %v3721 = vpop.f32.mrf.mxu0
    %3722 = vmatprep.mubr.f32.mxu0 0.0
    %3723 = vmatmul.mubr.f32.gmra.mxu0 %v3405
    %v3724 = vpop.f32.mrf.mxu0
    %v3725 = vadd.f32 0.0, %v3724
    %v3726 = vpop.f32.mrf.mxu0
    %3727 = vmatprep.mubr.f32.mxu0 0.0
    %3728 = vmatmul.mubr.f32.gmra.mxu0 %v3408
    %v3729 = vpop.f32.mrf.mxu0
    %v3730 = vadd.f32 0.0, %v3729
    %v3731 = vpop.f32.mrf.mxu0
    %3732 = vmatprep.mubr.f32.mxu0 0.0
    %3733 = vmatmul.mubr.f32.gmra.mxu0 %v3411
    %v3734 = vpop.f32.mrf.mxu0
    %v3735 = vadd.f32 0.0, %v3734
    %v3736 = vpop.f32.mrf.mxu0
    %3737 = vmatprep.mubr.f32.mxu0 0.0
    %3738 = vmatmul.mubr.f32.gmra.mxu0 %v3414
    %v3739 = vpop.f32.mrf.mxu0
    %v3740 = vadd.f32 0.0, %v3739
    %v3741 = vpop.f32.mrf.mxu0
    %3742 = vmatprep.mubr.f32.mxu0 0.0
    %3743 = vmatmul.mubr.f32.gmra.mxu0 %v3417
    %v3744 = vpop.f32.mrf.mxu0
    %v3745 = vadd.f32 0.0, %v3744
    %v3746 = vpop.f32.mrf.mxu0
    %3747 = vmatprep.mubr.f32.mxu0 0.0
    %3748 = vmatmul.mubr.f32.gmra.mxu0 %v3420
    %v3749 = vpop.f32.mrf.mxu0
    %v3750 = vadd.f32 0.0, %v3749
    %v3751 = vpop.f32.mrf.mxu0
    %3752 = vmatprep.mubr.f32.mxu0 0.0
    %3753 = vmatmul.mubr.f32.gmra.mxu0 %v3423
    %v3754 = vpop.f32.mrf.mxu0
    %v3755 = vadd.f32 0.0, %v3754
    %v3756 = vpop.f32.mrf.mxu0
    %3757 = vmatprep.mubr.f32.mxu0 0.0
    %3758 = vmatmul.mubr.f32.gmra.mxu0 %v3426
    %v3759 = vpop.f32.mrf.mxu0
    %v3760 = vadd.f32 0.0, %v3759
    %v3761 = vpop.f32.mrf.mxu0
    %3762 = vmatprep.mubr.f32.mxu0 0.0
    %3763 = vmatmul.mubr.f32.gmra.mxu0 %v3429
    %v3764 = vpop.f32.mrf.mxu0
    %v3765 = vadd.f32 0.0, %v3764
    %v3766 = vpop.f32.mrf.mxu0
    %3767 = vmatprep.mubr.f32.mxu0 0.0
    %3768 = vmatmul.mubr.f32.gmra.mxu0 %v3432
    %v3769 = vpop.f32.mrf.mxu0
    %v3770 = vadd.f32 0.0, %v3769
    %v3771 = vpop.f32.mrf.mxu0
    %3772 = vmatprep.mubr.f32.mxu0 0.0
    %3773 = vmatmul.mubr.f32.gmra.mxu0 %v3435
    %v3774 = vpop.f32.mrf.mxu0
    %v3775 = vadd.f32 0.0, %v3774
    %v3776 = vpop.f32.mrf.mxu0
    %3777 = vmatprep.mubr.f32.mxu0 0.0
    %3778 = vmatmul.mubr.f32.gmra.mxu0 %v3438
    %v3779 = vpop.f32.mrf.mxu0
    %v3780 = vadd.f32 0.0, %v3779
    %v3781 = vpop.f32.mrf.mxu0
    %3782 = vmatprep.mubr.f32.mxu0 0.0
    %3783 = vmatmul.mubr.f32.gmra.mxu0 %v3441
    %v3784 = vpop.f32.mrf.mxu0
    %v3785 = vadd.f32 0.0, %v3784
    %v3786 = vpop.f32.mrf.mxu0
    %3787 = vmatprep.mubr.f32.mxu0 0.0
    %3788 = vmatmul.mubr.f32.gmra.mxu0 %v3444
    %v3789 = vpop.f32.mrf.mxu0
    %v3790 = vadd.f32 0.0, %v3789
    %v3791 = vpop.f32.mrf.mxu0
    %3792 = vmatprep.mubr.f32.mxu0 0.0
    %3793 = vmatmul.mubr.f32.gmra.mxu0 %v3447
    %v3794 = vpop.f32.mrf.mxu0
    %v3795 = vadd.f32 0.0, %v3794
    %v3796 = vpop.f32.mrf.mxu0
    %3797 = vmatprep.mubr.f32.mxu0 0.0
    %3798 = vmatmul.mubr.f32.gmra.mxu0 %v3450
    %v3799 = vpop.f32.mrf.mxu0
    %v3800 = vadd.f32 0.0, %v3799
    %v3801 = vpop.f32.mrf.mxu0
    %3802 = vmatprep.mubr.f32.mxu0 0.0
    %3803 = vmatmul.mubr.f32.gmra.mxu0 %v3453
    %v3804 = vpop.f32.mrf.mxu0
    %v3805 = vadd.f32 0.0, %v3804
    %v3806 = vpop.f32.mrf.mxu0
    %3807 = vmatprep.mubr.f32.mxu0 0.0
    %3808 = vmatmul.mubr.f32.gmra.mxu0 %v3456
    %v3809 = vpop.f32.mrf.mxu0
    %v3810 = vadd.f32 0.0, %v3809
    %v3811 = vpop.f32.mrf.mxu0
    %3812 = vmatprep.mubr.f32.mxu0 0.0
    %3813 = vmatmul.mubr.f32.gmra.mxu0 %v3459
    %v3814 = vpop.f32.mrf.mxu0
    %v3815 = vadd.f32 0.0, %v3814
    %v3816 = vpop.f32.mrf.mxu0
    %3817 = vmatprep.mubr.f32.mxu0 0.0
    %3818 = vmatmul.mubr.f32.gmra.mxu0 %v3462
    %v3819 = vpop.f32.mrf.mxu0
    %v3820 = vadd.f32 0.0, %v3819
    %v3821 = vpop.f32.mrf.mxu0
    %3822 = vmatprep.mubr.f32.mxu0 0.0
    %3823 = vmatmul.mubr.f32.gmra.mxu0 %v3465
    %v3824 = vpop.f32.mrf.mxu0
    %v3825 = vadd.f32 0.0, %v3824
    %v3826 = vpop.f32.mrf.mxu0
    %3827 = vmatprep.mubr.f32.mxu0 0.0
    %3828 = vmatmul.mubr.f32.gmra.mxu0 %v3468
    %v3829 = vpop.f32.mrf.mxu0
    %v3830 = vadd.f32 0.0, %v3829
    %v3831 = vpop.f32.mrf.mxu0
    %3832 = vmatprep.mubr.f32.mxu0 0.0
    %3833 = vmatmul.mubr.f32.gmra.mxu0 %v3471
    %v3834 = vpop.f32.mrf.mxu0
    %v3835 = vadd.f32 0.0, %v3834
    %v3836 = vpop.f32.mrf.mxu0
    %3837 = vmatprep.mubr.f32.mxu0 0.0
    %3838 = vmatmul.mubr.f32.gmra.mxu0 %v3474
    %v3839 = vpop.f32.mrf.mxu0
    %v3840 = vadd.f32 0.0, %v3839
    %v3841 = vpop.f32.mrf.mxu0
    %3842 = vmatprep.mubr.f32.mxu0 0.0
    %3843 = vmatmul.mubr.f32.gmra.mxu0 %v3477
    %v3844 = vpop.f32.mrf.mxu0
    %v3845 = vadd.f32 0.0, %v3844
    %v3846 = vpop.f32.mrf.mxu0
    %3847 = vmatprep.mubr.f32.mxu0 0.0
    %3848 = vmatmul.mubr.f32.gmra.mxu0 %v3480
    %v3849 = vpop.f32.mrf.mxu0
    %v3850 = vadd.f32 0.0, %v3849
    %v3851 = vpop.f32.mrf.mxu0
    %3852 = vmatprep.mubr.f32.mxu0 0.0
    %3853 = vmatmul.mubr.f32.gmra.mxu0 %v3483
    %v3854 = vpop.f32.mrf.mxu0
    %v3855 = vadd.f32 0.0, %v3854
    %v3856 = vpop.f32.mrf.mxu0
    %3857 = vmatprep.mubr.f32.mxu0 0.0
    %3858 = vmatmul.mubr.f32.gmra.mxu0 %v3486
    %v3859 = vpop.f32.mrf.mxu0
    %v3860 = vadd.f32 0.0, %v3859
    %v3861 = vpop.f32.mrf.mxu0
    %3862 = vmatprep.mubr.f32.mxu0 0.0
    %3863 = vmatmul.mubr.f32.gmra.mxu0 %v3489
    %v3864 = vpop.f32.mrf.mxu0
    %v3865 = vadd.f32 0.0, %v3864
    %v3866 = vpop.f32.mrf.mxu0
    %3867 = vmatprep.mubr.f32.mxu0 0.0
    %3868 = vmatmul.mubr.f32.gmra.mxu0 %v3492
    %v3869 = vpop.f32.mrf.mxu0
    %v3870 = vadd.f32 0.0, %v3869
    %v3871 = vpop.f32.mrf.mxu0
    %3872 = vmatprep.mubr.f32.mxu0 0.0
    %3873 = vmatmul.mubr.f32.gmra.mxu0 %v3495
    %v3874 = vpop.f32.mrf.mxu0
    %v3875 = vadd.f32 0.0, %v3874
    %v3876 = vpop.f32.mrf.mxu0
    %3877 = vmatprep.mubr.f32.mxu0 0.0
    %3878 = vmatmul.mubr.f32.gmra.mxu0 %v3498
    %v3879 = vpop.f32.mrf.mxu0
    %v3880 = vadd.f32 0.0, %v3879
    %v3881 = vpop.f32.mrf.mxu0
    %3882 = vmatprep.mubr.f32.mxu0 0.0
    %3883 = vmatmul.mubr.f32.gmra.mxu0 %v3501
    %v3884 = vpop.f32.mrf.mxu0
    %v3885 = vadd.f32 0.0, %v3884
    %v3886 = vpop.f32.mrf.mxu0
    %3887 = vmatprep.mubr.f32.mxu0 0.0
    %3888 = vmatmul.mubr.f32.gmra.mxu0 %v3504
    %v3889 = vpop.f32.mrf.mxu0
    %v3890 = vadd.f32 0.0, %v3889
    %v3891 = vpop.f32.mrf.mxu0
    %3892 = vmatprep.mubr.f32.mxu0 0.0
    %3893 = vmatmul.mubr.f32.gmra.mxu0 %v3507
    %v3894 = vpop.f32.mrf.mxu0
    %v3895 = vadd.f32 0.0, %v3894
    %v3896 = vpop.f32.mrf.mxu0
    %3897 = vdwg.mxu0
    %v3898 = vld [vmem:[%s2] sm:$0x1]
    %v3899 = vld [vmem:[%s3] sm:$0x1]
    %vm3900 = vcmask 64512
    %v3901 = vsel %vm3900, %v3580, 0.0
    %v3902 = vsel %vm3900, %v3585, 0.0
    %v3903 = vadd.f32 %v3901, %v3902
    %v3904 = vsel %vm3900, %v3590, 0.0
    %v3905 = vadd.f32 %v3903, %v3904
    %v3906 = vsel %vm3900, %v3595, 0.0
    %v3907 = vadd.f32 %v3905, %v3906
    %v3908 = vsel %vm3900, %v3600, 0.0
    %v3909 = vadd.f32 %v3907, %v3908
    %v3910 = vsel %vm3900, %v3605, 0.0
    %v3911 = vadd.f32 %v3909, %v3910
    %v3912 = vsel %vm3900, %v3610, 0.0
    %v3913 = vadd.f32 %v3911, %v3912
    %v3914 = vsel %vm3900, %v3615, 0.0
    %v3915 = vadd.f32 %v3913, %v3914
    %v3916 = vsel %vm3900, %v3620, 0.0
    %v3917 = vadd.f32 %v3915, %v3916
    %v3918 = vsel %vm3900, %v3625, 0.0
    %v3919 = vadd.f32 %v3917, %v3918
    %v3920 = vsel %vm3900, %v3630, 0.0
    %v3921 = vadd.f32 %v3919, %v3920
    %v3922 = vsel %vm3900, %v3635, 0.0
    %v3923 = vadd.f32 %v3921, %v3922
    %v3924 = vsel %vm3900, %v3640, 0.0
    %v3925 = vadd.f32 %v3923, %v3924
    %v3926 = vsel %vm3900, %v3645, 0.0
    %v3927 = vadd.f32 %v3925, %v3926
    %v3928 = vsel %vm3900, %v3650, 0.0
    %v3929 = vadd.f32 %v3927, %v3928
    %v3930 = vsel %vm3900, %v3655, 0.0
    %v3931 = vadd.f32 %v3929, %v3930
    %v3932 = vsel %vm3900, %v3660, 0.0
    %v3933 = vadd.f32 %v3931, %v3932
    %v3934 = vsel %vm3900, %v3665, 0.0
    %v3935 = vadd.f32 %v3933, %v3934
    %v3936 = vsel %vm3900, %v3670, 0.0
    %v3937 = vadd.f32 %v3935, %v3936
    %v3938 = vsel %vm3900, %v3675, 0.0
    %v3939 = vadd.f32 %v3937, %v3938
    %v3940 = vsel %vm3900, %v3680, 0.0
    %v3941 = vadd.f32 %v3939, %v3940
    %v3942 = vsel %vm3900, %v3685, 0.0
    %v3943 = vadd.f32 %v3941, %v3942
    %v3944 = vsel %vm3900, %v3690, 0.0
    %v3945 = vadd.f32 %v3943, %v3944
    %v3946 = vsel %vm3900, %v3695, 0.0
    %v3947 = vadd.f32 %v3945, %v3946
    %v3948 = vsel %vm3900, %v3700, 0.0
    %v3949 = vadd.f32 %v3947, %v3948
    %v3950 = vsel %vm3900, %v3705, 0.0
    %v3951 = vadd.f32 %v3949, %v3950
    %v3952 = vsel %vm3900, %v3710, 0.0
    %v3953 = vadd.f32 %v3951, %v3952
    %v3954 = vsel %vm3900, %v3715, 0.0
    %v3955 = vadd.f32 %v3953, %v3954
    %v3956 = vsel %vm3900, %v3720, 0.0
    %v3957 = vadd.f32 %v3955, %v3956
    %v3958 = vsel %vm3900, %v3725, 0.0
    %v3959 = vadd.f32 %v3957, %v3958
    %v3960 = vsel %vm3900, %v3730, 0.0
    %v3961 = vadd.f32 %v3959, %v3960
    %v3962 = vsel %vm3900, %v3735, 0.0
    %v3963 = vadd.f32 %v3961, %v3962
    %v3964 = vsel %vm3900, %v3740, 0.0
    %v3965 = vadd.f32 %v3963, %v3964
    %v3966 = vsel %vm3900, %v3745, 0.0
    %v3967 = vadd.f32 %v3965, %v3966
    %v3968 = vsel %vm3900, %v3750, 0.0
    %v3969 = vadd.f32 %v3967, %v3968
    %v3970 = vsel %vm3900, %v3755, 0.0
    %v3971 = vadd.f32 %v3969, %v3970
    %v3972 = vsel %vm3900, %v3760, 0.0
    %v3973 = vadd.f32 %v3971, %v3972
    %v3974 = vsel %vm3900, %v3765, 0.0
    %v3975 = vadd.f32 %v3973, %v3974
    %v3976 = vsel %vm3900, %v3770, 0.0
    %v3977 = vadd.f32 %v3975, %v3976
    %v3978 = vsel %vm3900, %v3775, 0.0
    %v3979 = vadd.f32 %v3977, %v3978
    %v3980 = vsel %vm3900, %v3780, 0.0
    %v3981 = vadd.f32 %v3979, %v3980
    %v3982 = vsel %vm3900, %v3785, 0.0
    %v3983 = vadd.f32 %v3981, %v3982
    %v3984 = vsel %vm3900, %v3790, 0.0
    %v3985 = vadd.f32 %v3983, %v3984
    %v3986 = vsel %vm3900, %v3795, 0.0
    %v3987 = vadd.f32 %v3985, %v3986
    %v3988 = vsel %vm3900, %v3800, 0.0
    %v3989 = vadd.f32 %v3987, %v3988
    %v3990 = vsel %vm3900, %v3805, 0.0
    %v3991 = vadd.f32 %v3989, %v3990
    %v3992 = vsel %vm3900, %v3810, 0.0
    %v3993 = vadd.f32 %v3991, %v3992
    %v3994 = vsel %vm3900, %v3815, 0.0
    %v3995 = vadd.f32 %v3993, %v3994
    %v3996 = vsel %vm3900, %v3820, 0.0
    %v3997 = vadd.f32 %v3995, %v3996
    %v3998 = vsel %vm3900, %v3825, 0.0
    %v3999 = vadd.f32 %v3997, %v3998
    %v4000 = vsel %vm3900, %v3830, 0.0
    %v4001 = vadd.f32 %v3999, %v4000
    %v4002 = vsel %vm3900, %v3835, 0.0
    %v4003 = vadd.f32 %v4001, %v4002
    %v4004 = vsel %vm3900, %v3840, 0.0
    %v4005 = vadd.f32 %v4003, %v4004
    %v4006 = vsel %vm3900, %v3845, 0.0
    %v4007 = vadd.f32 %v4005, %v4006
    %v4008 = vsel %vm3900, %v3850, 0.0
    %v4009 = vadd.f32 %v4007, %v4008
    %v4010 = vsel %vm3900, %v3855, 0.0
    %v4011 = vadd.f32 %v4009, %v4010
    %v4012 = vsel %vm3900, %v3860, 0.0
    %v4013 = vadd.f32 %v4011, %v4012
    %v4014 = vsel %vm3900, %v3865, 0.0
    %v4015 = vadd.f32 %v4013, %v4014
    %v4016 = vsel %vm3900, %v3870, 0.0
    %v4017 = vadd.f32 %v4015, %v4016
    %v4018 = vsel %vm3900, %v3875, 0.0
    %v4019 = vadd.f32 %v4017, %v4018
    %v4020 = vsel %vm3900, %v3880, 0.0
    %v4021 = vadd.f32 %v4019, %v4020
    %v4022 = vsel %vm3900, %v3885, 0.0
    %v4023 = vadd.f32 %v4021, %v4022
    %v4024 = vsel %vm3900, %v3890, 0.0
    %v4025 = vadd.f32 %v4023, %v4024
    %v4026 = vsel %vm3900, %v3895, 0.0
    %v4027 = vadd.f32 %v4025, %v4026
    %v4028 = vrot.slane %v4027, 4
    %v4029 = vadd.f32 %v4027, %v4028
    %v4030 = vrot.slane %v4029, 2
    %v4031 = vadd.f32 %v4029, %v4030
    %v4032 = vrot.slane %v4031, 1
    %v4033 = vadd.f32 %v4031, %v4032
    %v4034 = vrcp.pop 512.0
    %v4035 = vmul.f32 %v4033, %v4034
    %v4036 = vsub.f32 %v3580, %v4035
    %v4037 = vsub.f32 %v3585, %v4035
    %v4038 = vsub.f32 %v3590, %v4035
    %v4039 = vsub.f32 %v3595, %v4035
    %v4040 = vsub.f32 %v3600, %v4035
    %v4041 = vsub.f32 %v3605, %v4035
    %v4042 = vsub.f32 %v3610, %v4035
    %v4043 = vsub.f32 %v3615, %v4035
    %v4044 = vsub.f32 %v3620, %v4035
    %v4045 = vsub.f32 %v3625, %v4035
    %v4046 = vsub.f32 %v3630, %v4035
    %v4047 = vsub.f32 %v3635, %v4035
    %v4048 = vsub.f32 %v3640, %v4035
    %v4049 = vsub.f32 %v3645, %v4035
    %v4050 = vsub.f32 %v3650, %v4035
    %v4051 = vsub.f32 %v3655, %v4035
    %v4052 = vsub.f32 %v3660, %v4035
    %v4053 = vsub.f32 %v3665, %v4035
    %v4054 = vsub.f32 %v3670, %v4035
    %v4055 = vsub.f32 %v3675, %v4035
    %v4056 = vsub.f32 %v3680, %v4035
    %v4057 = vsub.f32 %v3685, %v4035
    %v4058 = vsub.f32 %v3690, %v4035
    %v4059 = vsub.f32 %v3695, %v4035
    %v4060 = vsub.f32 %v3700, %v4035
    %v4061 = vsub.f32 %v3705, %v4035
    %v4062 = vsub.f32 %v3710, %v4035
    %v4063 = vsub.f32 %v3715, %v4035
    %v4064 = vsub.f32 %v3720, %v4035
    %v4065 = vsub.f32 %v3725, %v4035
    %v4066 = vsub.f32 %v3730, %v4035
    %v4067 = vsub.f32 %v3735, %v4035
    %v4068 = vsub.f32 %v3740, %v4035
    %v4069 = vsub.f32 %v3745, %v4035
    %v4070 = vsub.f32 %v3750, %v4035
    %v4071 = vsub.f32 %v3755, %v4035
    %v4072 = vsub.f32 %v3760, %v4035
    %v4073 = vsub.f32 %v3765, %v4035
    %v4074 = vsub.f32 %v3770, %v4035
    %v4075 = vsub.f32 %v3775, %v4035
    %v4076 = vsub.f32 %v3780, %v4035
    %v4077 = vsub.f32 %v3785, %v4035
    %v4078 = vsub.f32 %v3790, %v4035
    %v4079 = vsub.f32 %v3795, %v4035
    %v4080 = vsub.f32 %v3800, %v4035
    %v4081 = vsub.f32 %v3805, %v4035
    %v4082 = vsub.f32 %v3810, %v4035
    %v4083 = vsub.f32 %v3815, %v4035
    %v4084 = vsub.f32 %v3820, %v4035
    %v4085 = vsub.f32 %v3825, %v4035
    %v4086 = vsub.f32 %v3830, %v4035
    %v4087 = vsub.f32 %v3835, %v4035
    %v4088 = vsub.f32 %v3840, %v4035
    %v4089 = vsub.f32 %v3845, %v4035
    %v4090 = vsub.f32 %v3850, %v4035
    %v4091 = vsub.f32 %v3855, %v4035
    %v4092 = vsub.f32 %v3860, %v4035
    %v4093 = vsub.f32 %v3865, %v4035
    %v4094 = vsub.f32 %v3870, %v4035
    %v4095 = vsub.f32 %v3875, %v4035
    %v4096 = vsub.f32 %v3880, %v4035
    %v4097 = vsub.f32 %v3885, %v4035
    %v4098 = vsub.f32 %v3890, %v4035
    %v4099 = vsub.f32 %v3895, %v4035
    %v4100 = vmul.f32 %v4036, %v4036
    %v4101 = vmul.f32 %v4037, %v4037
    %v4102 = vmul.f32 %v4038, %v4038
    %v4103 = vmul.f32 %v4039, %v4039
    %v4104 = vmul.f32 %v4040, %v4040
    %v4105 = vmul.f32 %v4041, %v4041
    %v4106 = vmul.f32 %v4042, %v4042
    %v4107 = vmul.f32 %v4043, %v4043
    %v4108 = vmul.f32 %v4044, %v4044
    %v4109 = vmul.f32 %v4045, %v4045
    %v4110 = vmul.f32 %v4046, %v4046
    %v4111 = vmul.f32 %v4047, %v4047
    %v4112 = vmul.f32 %v4048, %v4048
    %v4113 = vmul.f32 %v4049, %v4049
    %v4114 = vmul.f32 %v4050, %v4050
    %v4115 = vmul.f32 %v4051, %v4051
    %v4116 = vmul.f32 %v4052, %v4052
    %v4117 = vmul.f32 %v4053, %v4053
    %v4118 = vmul.f32 %v4054, %v4054
    %v4119 = vmul.f32 %v4055, %v4055
    %v4120 = vmul.f32 %v4056, %v4056
    %v4121 = vmul.f32 %v4057, %v4057
    %v4122 = vmul.f32 %v4058, %v4058
    %v4123 = vmul.f32 %v4059, %v4059
    %v4124 = vmul.f32 %v4060, %v4060
    %v4125 = vmul.f32 %v4061, %v4061
    %v4126 = vmul.f32 %v4062, %v4062
    %v4127 = vmul.f32 %v4063, %v4063
    %v4128 = vmul.f32 %v4064, %v4064
    %v4129 = vmul.f32 %v4065, %v4065
    %v4130 = vmul.f32 %v4066, %v4066
    %v4131 = vmul.f32 %v4067, %v4067
    %v4132 = vmul.f32 %v4068, %v4068
    %v4133 = vmul.f32 %v4069, %v4069
    %v4134 = vmul.f32 %v4070, %v4070
    %v4135 = vmul.f32 %v4071, %v4071
    %v4136 = vmul.f32 %v4072, %v4072
    %v4137 = vmul.f32 %v4073, %v4073
    %v4138 = vmul.f32 %v4074, %v4074
    %v4139 = vmul.f32 %v4075, %v4075
    %v4140 = vmul.f32 %v4076, %v4076
    %v4141 = vmul.f32 %v4077, %v4077
    %v4142 = vmul.f32 %v4078, %v4078
    %v4143 = vmul.f32 %v4079, %v4079
    %v4144 = vmul.f32 %v4080, %v4080
    %v4145 = vmul.f32 %v4081, %v4081
    %v4146 = vmul.f32 %v4082, %v4082
    %v4147 = vmul.f32 %v4083, %v4083
    %v4148 = vmul.f32 %v4084, %v4084
    %v4149 = vmul.f32 %v4085, %v4085
    %v4150 = vmul.f32 %v4086, %v4086
    %v4151 = vmul.f32 %v4087, %v4087
    %v4152 = vmul.f32 %v4088, %v4088
    %v4153 = vmul.f32 %v4089, %v4089
    %v4154 = vmul.f32 %v4090, %v4090
    %v4155 = vmul.f32 %v4091, %v4091
    %v4156 = vmul.f32 %v4092, %v4092
    %v4157 = vmul.f32 %v4093, %v4093
    %v4158 = vmul.f32 %v4094, %v4094
    %v4159 = vmul.f32 %v4095, %v4095
    %v4160 = vmul.f32 %v4096, %v4096
    %v4161 = vmul.f32 %v4097, %v4097
    %v4162 = vmul.f32 %v4098, %v4098
    %v4163 = vmul.f32 %v4099, %v4099
    %v4164 = vsel %vm3900, %v4100, 0.0
    %v4165 = vsel %vm3900, %v4101, 0.0
    %v4166 = vadd.f32 %v4164, %v4165
    %v4167 = vsel %vm3900, %v4102, 0.0
    %v4168 = vadd.f32 %v4166, %v4167
    %v4169 = vsel %vm3900, %v4103, 0.0
    %v4170 = vadd.f32 %v4168, %v4169
    %v4171 = vsel %vm3900, %v4104, 0.0
    %v4172 = vadd.f32 %v4170, %v4171
    %v4173 = vsel %vm3900, %v4105, 0.0
    %v4174 = vadd.f32 %v4172, %v4173
    %v4175 = vsel %vm3900, %v4106, 0.0
    %v4176 = vadd.f32 %v4174, %v4175
    %v4177 = vsel %vm3900, %v4107, 0.0
    %v4178 = vadd.f32 %v4176, %v4177
    %v4179 = vsel %vm3900, %v4108, 0.0
    %v4180 = vadd.f32 %v4178, %v4179
    %v4181 = vsel %vm3900, %v4109, 0.0
    %v4182 = vadd.f32 %v4180, %v4181
    %v4183 = vsel %vm3900, %v4110, 0.0
    %v4184 = vadd.f32 %v4182, %v4183
    %v4185 = vsel %vm3900, %v4111, 0.0
    %v4186 = vadd.f32 %v4184, %v4185
    %v4187 = vsel %vm3900, %v4112, 0.0
    %v4188 = vadd.f32 %v4186, %v4187
    %v4189 = vsel %vm3900, %v4113, 0.0
    %v4190 = vadd.f32 %v4188, %v4189
    %v4191 = vsel %vm3900, %v4114, 0.0
    %v4192 = vadd.f32 %v4190, %v4191
    %v4193 = vsel %vm3900, %v4115, 0.0
    %v4194 = vadd.f32 %v4192, %v4193
    %v4195 = vsel %vm3900, %v4116, 0.0
    %v4196 = vadd.f32 %v4194, %v4195
    %v4197 = vsel %vm3900, %v4117, 0.0
    %v4198 = vadd.f32 %v4196, %v4197
    %v4199 = vsel %vm3900, %v4118, 0.0
    %v4200 = vadd.f32 %v4198, %v4199
    %v4201 = vsel %vm3900, %v4119, 0.0
    %v4202 = vadd.f32 %v4200, %v4201
    %v4203 = vsel %vm3900, %v4120, 0.0
    %v4204 = vadd.f32 %v4202, %v4203
    %v4205 = vsel %vm3900, %v4121, 0.0
    %v4206 = vadd.f32 %v4204, %v4205
    %v4207 = vsel %vm3900, %v4122, 0.0
    %v4208 = vadd.f32 %v4206, %v4207
    %v4209 = vsel %vm3900, %v4123, 0.0
    %v4210 = vadd.f32 %v4208, %v4209
    %v4211 = vsel %vm3900, %v4124, 0.0
    %v4212 = vadd.f32 %v4210, %v4211
    %v4213 = vsel %vm3900, %v4125, 0.0
    %v4214 = vadd.f32 %v4212, %v4213
    %v4215 = vsel %vm3900, %v4126, 0.0
    %v4216 = vadd.f32 %v4214, %v4215
    %v4217 = vsel %vm3900, %v4127, 0.0
    %v4218 = vadd.f32 %v4216, %v4217
    %v4219 = vsel %vm3900, %v4128, 0.0
    %v4220 = vadd.f32 %v4218, %v4219
    %v4221 = vsel %vm3900, %v4129, 0.0
    %v4222 = vadd.f32 %v4220, %v4221
    %v4223 = vsel %vm3900, %v4130, 0.0
    %v4224 = vadd.f32 %v4222, %v4223
    %v4225 = vsel %vm3900, %v4131, 0.0
    %v4226 = vadd.f32 %v4224, %v4225
    %v4227 = vsel %vm3900, %v4132, 0.0
    %v4228 = vadd.f32 %v4226, %v4227
    %v4229 = vsel %vm3900, %v4133, 0.0
    %v4230 = vadd.f32 %v4228, %v4229
    %v4231 = vsel %vm3900, %v4134, 0.0
    %v4232 = vadd.f32 %v4230, %v4231
    %v4233 = vsel %vm3900, %v4135, 0.0
    %v4234 = vadd.f32 %v4232, %v4233
    %v4235 = vsel %vm3900, %v4136, 0.0
    %v4236 = vadd.f32 %v4234, %v4235
    %v4237 = vsel %vm3900, %v4137, 0.0
    %v4238 = vadd.f32 %v4236, %v4237
    %v4239 = vsel %vm3900, %v4138, 0.0
    %v4240 = vadd.f32 %v4238, %v4239
    %v4241 = vsel %vm3900, %v4139, 0.0
    %v4242 = vadd.f32 %v4240, %v4241
    %v4243 = vsel %vm3900, %v4140, 0.0
    %v4244 = vadd.f32 %v4242, %v4243
    %v4245 = vsel %vm3900, %v4141, 0.0
    %v4246 = vadd.f32 %v4244, %v4245
    %v4247 = vsel %vm3900, %v4142, 0.0
    %v4248 = vadd.f32 %v4246, %v4247
    %v4249 = vsel %vm3900, %v4143, 0.0
    %v4250 = vadd.f32 %v4248, %v4249
    %v4251 = vsel %vm3900, %v4144, 0.0
    %v4252 = vadd.f32 %v4250, %v4251
    %v4253 = vsel %vm3900, %v4145, 0.0
    %v4254 = vadd.f32 %v4252, %v4253
    %v4255 = vsel %vm3900, %v4146, 0.0
    %v4256 = vadd.f32 %v4254, %v4255
    %v4257 = vsel %vm3900, %v4147, 0.0
    %v4258 = vadd.f32 %v4256, %v4257
    %v4259 = vsel %vm3900, %v4148, 0.0
    %v4260 = vadd.f32 %v4258, %v4259
    %v4261 = vsel %vm3900, %v4149, 0.0
    %v4262 = vadd.f32 %v4260, %v4261
    %v4263 = vsel %vm3900, %v4150, 0.0
    %v4264 = vadd.f32 %v4262, %v4263
    %v4265 = vsel %vm3900, %v4151, 0.0
    %v4266 = vadd.f32 %v4264, %v4265
    %v4267 = vsel %vm3900, %v4152, 0.0
    %v4268 = vadd.f32 %v4266, %v4267
    %v4269 = vsel %vm3900, %v4153, 0.0
    %v4270 = vadd.f32 %v4268, %v4269
    %v4271 = vsel %vm3900, %v4154, 0.0
    %v4272 = vadd.f32 %v4270, %v4271
    %v4273 = vsel %vm3900, %v4155, 0.0
    %v4274 = vadd.f32 %v4272, %v4273
    %v4275 = vsel %vm3900, %v4156, 0.0
    %v4276 = vadd.f32 %v4274, %v4275
    %v4277 = vsel %vm3900, %v4157, 0.0
    %v4278 = vadd.f32 %v4276, %v4277
    %v4279 = vsel %vm3900, %v4158, 0.0
    %v4280 = vadd.f32 %v4278, %v4279
    %v4281 = vsel %vm3900, %v4159, 0.0
    %v4282 = vadd.f32 %v4280, %v4281
    %v4283 = vsel %vm3900, %v4160, 0.0
    %v4284 = vadd.f32 %v4282, %v4283
    %v4285 = vsel %vm3900, %v4161, 0.0
    %v4286 = vadd.f32 %v4284, %v4285
    %v4287 = vsel %vm3900, %v4162, 0.0
    %v4288 = vadd.f32 %v4286, %v4287
    %v4289 = vsel %vm3900, %v4163, 0.0
    %v4290 = vadd.f32 %v4288, %v4289
    %v4291 = vrot.slane %v4290, 4
    %v4292 = vadd.f32 %v4290, %v4291
    %v4293 = vrot.slane %v4292, 2
    %v4294 = vadd.f32 %v4292, %v4293
    %v4295 = vrot.slane %v4294, 1
    %v4296 = vadd.f32 %v4294, %v4295
    %v4297 = vmul.f32 %v4296, %v4034
    %v4298 = vadd.f32 %v4297, 1e-05
    %v4299 = vrsqrt.pop %v4298
    %v4300 = vmul.f32 %v4036, %v4299
    %v4301 = vmul.f32 %v4037, %v4299
    %v4302 = vmul.f32 %v4038, %v4299
    %v4303 = vmul.f32 %v4039, %v4299
    %v4304 = vmul.f32 %v4040, %v4299
    %v4305 = vmul.f32 %v4041, %v4299
    %v4306 = vmul.f32 %v4042, %v4299
    %v4307 = vmul.f32 %v4043, %v4299
    %v4308 = vmul.f32 %v4044, %v4299
    %v4309 = vmul.f32 %v4045, %v4299
    %v4310 = vmul.f32 %v4046, %v4299
    %v4311 = vmul.f32 %v4047, %v4299
    %v4312 = vmul.f32 %v4048, %v4299
    %v4313 = vmul.f32 %v4049, %v4299
    %v4314 = vmul.f32 %v4050, %v4299
    %v4315 = vmul.f32 %v4051, %v4299
    %v4316 = vmul.f32 %v4052, %v4299
    %v4317 = vmul.f32 %v4053, %v4299
    %v4318 = vmul.f32 %v4054, %v4299
    %v4319 = vmul.f32 %v4055, %v4299
    %v4320 = vmul.f32 %v4056, %v4299
    %v4321 = vmul.f32 %v4057, %v4299
    %v4322 = vmul.f32 %v4058, %v4299
    %v4323 = vmul.f32 %v4059, %v4299
    %v4324 = vmul.f32 %v4060, %v4299
    %v4325 = vmul.f32 %v4061, %v4299
    %v4326 = vmul.f32 %v4062, %v4299
    %v4327 = vmul.f32 %v4063, %v4299
    %v4328 = vmul.f32 %v4064, %v4299
    %v4329 = vmul.f32 %v4065, %v4299
    %v4330 = vmul.f32 %v4066, %v4299
    %v4331 = vmul.f32 %v4067, %v4299
    %v4332 = vmul.f32 %v4068, %v4299
    %v4333 = vmul.f32 %v4069, %v4299
    %v4334 = vmul.f32 %v4070, %v4299
    %v4335 = vmul.f32 %v4071, %v4299
    %v4336 = vmul.f32 %v4072, %v4299
    %v4337 = vmul.f32 %v4073, %v4299
    %v4338 = vmul.f32 %v4074, %v4299
    %v4339 = vmul.f32 %v4075, %v4299
    %v4340 = vmul.f32 %v4076, %v4299
    %v4341 = vmul.f32 %v4077, %v4299
    %v4342 = vmul.f32 %v4078, %v4299
    %v4343 = vmul.f32 %v4079, %v4299
    %v4344 = vmul.f32 %v4080, %v4299
    %v4345 = vmul.f32 %v4081, %v4299
    %v4346 = vmul.f32 %v4082, %v4299
    %v4347 = vmul.f32 %v4083, %v4299
    %v4348 = vmul.f32 %v4084, %v4299
    %v4349 = vmul.f32 %v4085, %v4299
    %v4350 = vmul.f32 %v4086, %v4299
    %v4351 = vmul.f32 %v4087, %v4299
    %v4352 = vmul.f32 %v4088, %v4299
    %v4353 = vmul.f32 %v4089, %v4299
    %v4354 = vmul.f32 %v4090, %v4299
    %v4355 = vmul.f32 %v4091, %v4299
    %v4356 = vmul.f32 %v4092, %v4299
    %v4357 = vmul.f32 %v4093, %v4299
    %v4358 = vmul.f32 %v4094, %v4299
    %v4359 = vmul.f32 %v4095, %v4299
    %v4360 = vmul.f32 %v4096, %v4299
    %v4361 = vmul.f32 %v4097, %v4299
    %v4362 = vmul.f32 %v4098, %v4299
    %v4363 = vmul.f32 %v4099, %v4299
    %v4365 = vlaneseq
    %v4366 = vshrl.u32 %v4365, 7
    %v4367 = vsub.s32 0, %v4366
    %v4368 = vrot.slane %v3898, %v4367
    %v4370 = vmul.f32 %v4300, %v4368
    %v4371 = vmul.f32 %v4301, %v4368
    %v4372 = vmul.f32 %v4302, %v4368
    %v4373 = vmul.f32 %v4303, %v4368
    %v4374 = vmul.f32 %v4304, %v4368
    %v4375 = vmul.f32 %v4305, %v4368
    %v4376 = vmul.f32 %v4306, %v4368
    %v4377 = vmul.f32 %v4307, %v4368
    %v4378 = vmul.f32 %v4308, %v4368
    %v4379 = vmul.f32 %v4309, %v4368
    %v4380 = vmul.f32 %v4310, %v4368
    %v4381 = vmul.f32 %v4311, %v4368
    %v4382 = vmul.f32 %v4312, %v4368
    %v4383 = vmul.f32 %v4313, %v4368
    %v4384 = vmul.f32 %v4314, %v4368
    %v4385 = vmul.f32 %v4315, %v4368
    %v4386 = vmul.f32 %v4316, %v4368
    %v4387 = vmul.f32 %v4317, %v4368
    %v4388 = vmul.f32 %v4318, %v4368
    %v4389 = vmul.f32 %v4319, %v4368
    %v4390 = vmul.f32 %v4320, %v4368
    %v4391 = vmul.f32 %v4321, %v4368
    %v4392 = vmul.f32 %v4322, %v4368
    %v4393 = vmul.f32 %v4323, %v4368
    %v4394 = vmul.f32 %v4324, %v4368
    %v4395 = vmul.f32 %v4325, %v4368
    %v4396 = vmul.f32 %v4326, %v4368
    %v4397 = vmul.f32 %v4327, %v4368
    %v4398 = vmul.f32 %v4328, %v4368
    %v4399 = vmul.f32 %v4329, %v4368
    %v4400 = vmul.f32 %v4330, %v4368
    %v4401 = vmul.f32 %v4331, %v4368
    %v4402 = vmul.f32 %v4332, %v4368
    %v4403 = vmul.f32 %v4333, %v4368
    %v4404 = vmul.f32 %v4334, %v4368
    %v4405 = vmul.f32 %v4335, %v4368
    %v4406 = vmul.f32 %v4336, %v4368
    %v4407 = vmul.f32 %v4337, %v4368
    %v4408 = vmul.f32 %v4338, %v4368
    %v4409 = vmul.f32 %v4339, %v4368
    %v4410 = vmul.f32 %v4340, %v4368
    %v4411 = vmul.f32 %v4341, %v4368
    %v4412 = vmul.f32 %v4342, %v4368
    %v4413 = vmul.f32 %v4343, %v4368
    %v4414 = vmul.f32 %v4344, %v4368
    %v4415 = vmul.f32 %v4345, %v4368
    %v4416 = vmul.f32 %v4346, %v4368
    %v4417 = vmul.f32 %v4347, %v4368
    %v4418 = vmul.f32 %v4348, %v4368
    %v4419 = vmul.f32 %v4349, %v4368
    %v4420 = vmul.f32 %v4350, %v4368
    %v4421 = vmul.f32 %v4351, %v4368
    %v4422 = vmul.f32 %v4352, %v4368
    %v4423 = vmul.f32 %v4353, %v4368
    %v4424 = vmul.f32 %v4354, %v4368
    %v4425 = vmul.f32 %v4355, %v4368
    %v4426 = vmul.f32 %v4356, %v4368
    %v4427 = vmul.f32 %v4357, %v4368
    %v4428 = vmul.f32 %v4358, %v4368
    %v4429 = vmul.f32 %v4359, %v4368
    %v4430 = vmul.f32 %v4360, %v4368
    %v4431 = vmul.f32 %v4361, %v4368
    %v4432 = vmul.f32 %v4362, %v4368
    %v4433 = vmul.f32 %v4363, %v4368
    %v4435 = vlaneseq
    %v4436 = vshrl.u32 %v4435, 7
    %v4437 = vsub.s32 0, %v4436
    %v4438 = vrot.slane %v3899, %v4437
    %v4440 = vadd.f32 %v4370, %v4438
    %v4441 = vadd.f32 %v4371, %v4438
    %v4442 = vadd.f32 %v4372, %v4438
    %v4443 = vadd.f32 %v4373, %v4438
    %v4444 = vadd.f32 %v4374, %v4438
    %v4445 = vadd.f32 %v4375, %v4438
    %v4446 = vadd.f32 %v4376, %v4438
    %v4447 = vadd.f32 %v4377, %v4438
    %v4448 = vadd.f32 %v4378, %v4438
    %v4449 = vadd.f32 %v4379, %v4438
    %v4450 = vadd.f32 %v4380, %v4438
    %v4451 = vadd.f32 %v4381, %v4438
    %v4452 = vadd.f32 %v4382, %v4438
    %v4453 = vadd.f32 %v4383, %v4438
    %v4454 = vadd.f32 %v4384, %v4438
    %v4455 = vadd.f32 %v4385, %v4438
    %v4456 = vadd.f32 %v4386, %v4438
    %v4457 = vadd.f32 %v4387, %v4438
    %v4458 = vadd.f32 %v4388, %v4438
    %v4459 = vadd.f32 %v4389, %v4438
    %v4460 = vadd.f32 %v4390, %v4438
    %v4461 = vadd.f32 %v4391, %v4438
    %v4462 = vadd.f32 %v4392, %v4438
    %v4463 = vadd.f32 %v4393, %v4438
    %v4464 = vadd.f32 %v4394, %v4438
    %v4465 = vadd.f32 %v4395, %v4438
    %v4466 = vadd.f32 %v4396, %v4438
    %v4467 = vadd.f32 %v4397, %v4438
    %v4468 = vadd.f32 %v4398, %v4438
    %v4469 = vadd.f32 %v4399, %v4438
    %v4470 = vadd.f32 %v4400, %v4438
    %v4471 = vadd.f32 %v4401, %v4438
    %v4472 = vadd.f32 %v4402, %v4438
    %v4473 = vadd.f32 %v4403, %v4438
    %v4474 = vadd.f32 %v4404, %v4438
    %v4475 = vadd.f32 %v4405, %v4438
    %v4476 = vadd.f32 %v4406, %v4438
    %v4477 = vadd.f32 %v4407, %v4438
    %v4478 = vadd.f32 %v4408, %v4438
    %v4479 = vadd.f32 %v4409, %v4438
    %v4480 = vadd.f32 %v4410, %v4438
    %v4481 = vadd.f32 %v4411, %v4438
    %v4482 = vadd.f32 %v4412, %v4438
    %v4483 = vadd.f32 %v4413, %v4438
    %v4484 = vadd.f32 %v4414, %v4438
    %v4485 = vadd.f32 %v4415, %v4438
    %v4486 = vadd.f32 %v4416, %v4438
    %v4487 = vadd.f32 %v4417, %v4438
    %v4488 = vadd.f32 %v4418, %v4438
    %v4489 = vadd.f32 %v4419, %v4438
    %v4490 = vadd.f32 %v4420, %v4438
    %v4491 = vadd.f32 %v4421, %v4438
    %v4492 = vadd.f32 %v4422, %v4438
    %v4493 = vadd.f32 %v4423, %v4438
    %v4494 = vadd.f32 %v4424, %v4438
    %v4495 = vadd.f32 %v4425, %v4438
    %v4496 = vadd.f32 %v4426, %v4438
    %v4497 = vadd.f32 %v4427, %v4438
    %v4498 = vadd.f32 %v4428, %v4438
    %v4499 = vadd.f32 %v4429, %v4438
    %v4500 = vadd.f32 %v4430, %v4438
    %v4501 = vadd.f32 %v4431, %v4438
    %v4502 = vadd.f32 %v4432, %v4438
    %v4503 = vadd.f32 %v4433, %v4438
    %v4504 = vmax.f32 %v4440, 0.0
    %v4505 = vmax.f32 %v4441, 0.0
    %v4506 = vmax.f32 %v4442, 0.0
    %v4507 = vmax.f32 %v4443, 0.0
    %v4508 = vmax.f32 %v4444, 0.0
    %v4509 = vmax.f32 %v4445, 0.0
    %v4510 = vmax.f32 %v4446, 0.0
    %v4511 = vmax.f32 %v4447, 0.0
    %v4512 = vmax.f32 %v4448, 0.0
    %v4513 = vmax.f32 %v4449, 0.0
    %v4514 = vmax.f32 %v4450, 0.0
    %v4515 = vmax.f32 %v4451, 0.0
    %v4516 = vmax.f32 %v4452, 0.0
    %v4517 = vmax.f32 %v4453, 0.0
    %v4518 = vmax.f32 %v4454, 0.0
    %v4519 = vmax.f32 %v4455, 0.0
    %v4520 = vmax.f32 %v4456, 0.0
    %v4521 = vmax.f32 %v4457, 0.0
    %v4522 = vmax.f32 %v4458, 0.0
    %v4523 = vmax.f32 %v4459, 0.0
    %v4524 = vmax.f32 %v4460, 0.0
    %v4525 = vmax.f32 %v4461, 0.0
    %v4526 = vmax.f32 %v4462, 0.0
    %v4527 = vmax.f32 %v4463, 0.0
    %v4528 = vmax.f32 %v4464, 0.0
    %v4529 = vmax.f32 %v4465, 0.0
    %v4530 = vmax.f32 %v4466, 0.0
    %v4531 = vmax.f32 %v4467, 0.0
    %v4532 = vmax.f32 %v4468, 0.0
    %v4533 = vmax.f32 %v4469, 0.0
    %v4534 = vmax.f32 %v4470, 0.0
    %v4535 = vmax.f32 %v4471, 0.0
    %v4536 = vmax.f32 %v4472, 0.0
    %v4537 = vmax.f32 %v4473, 0.0
    %v4538 = vmax.f32 %v4474, 0.0
    %v4539 = vmax.f32 %v4475, 0.0
    %v4540 = vmax.f32 %v4476, 0.0
    %v4541 = vmax.f32 %v4477, 0.0
    %v4542 = vmax.f32 %v4478, 0.0
    %v4543 = vmax.f32 %v4479, 0.0
    %v4544 = vmax.f32 %v4480, 0.0
    %v4545 = vmax.f32 %v4481, 0.0
    %v4546 = vmax.f32 %v4482, 0.0
    %v4547 = vmax.f32 %v4483, 0.0
    %v4548 = vmax.f32 %v4484, 0.0
    %v4549 = vmax.f32 %v4485, 0.0
    %v4550 = vmax.f32 %v4486, 0.0
    %v4551 = vmax.f32 %v4487, 0.0
    %v4552 = vmax.f32 %v4488, 0.0
    %v4553 = vmax.f32 %v4489, 0.0
    %v4554 = vmax.f32 %v4490, 0.0
    %v4555 = vmax.f32 %v4491, 0.0
    %v4556 = vmax.f32 %v4492, 0.0
    %v4557 = vmax.f32 %v4493, 0.0
    %v4558 = vmax.f32 %v4494, 0.0
    %v4559 = vmax.f32 %v4495, 0.0
    %v4560 = vmax.f32 %v4496, 0.0
    %v4561 = vmax.f32 %v4497, 0.0
    %v4562 = vmax.f32 %v4498, 0.0
    %v4563 = vmax.f32 %v4499, 0.0
    %v4564 = vmax.f32 %v4500, 0.0
    %v4565 = vmax.f32 %v4501, 0.0
    %v4566 = vmax.f32 %v4502, 0.0
    %v4567 = vmax.f32 %v4503, 0.0
    %v4568 = vld [vmem:[%s7] sm:$0xf]
    %4569 = vrot.lane.b32.xlu0 %v3247, 112
    %v4570 = vpop.permute.xlu0 %4569
    %4571 = vrot.lane.b32.xlu0 %v3248, 112
    %v4572 = vpop.permute.xlu0 %4571
    %4573 = vrot.lane.b32.xlu0 %v3249, 112
    %v4574 = vpop.permute.xlu0 %4573
    %4575 = vrot.lane.b32.xlu0 %v3250, 112
    %v4576 = vpop.permute.xlu0 %4575
    %4577 = vrot.lane.b32.xlu0 %v3251, 112
    %v4578 = vpop.permute.xlu0 %4577
    %4579 = vrot.lane.b32.xlu0 %v3252, 112
    %v4580 = vpop.permute.xlu0 %4579
    %4581 = vrot.lane.b32.xlu0 %v3253, 112
    %v4582 = vpop.permute.xlu0 %4581
    %4583 = vrot.lane.b32.xlu0 %v3254, 112
    %v4584 = vpop.permute.xlu0 %4583
    %4585 = vrot.lane.b32.xlu0 %v3255, 112
    %v4586 = vpop.permute.xlu0 %4585
    %4587 = vrot.lane.b32.xlu0 %v3256, 112
    %v4588 = vpop.permute.xlu0 %4587
    %4589 = vrot.lane.b32.xlu0 %v3257, 112
    %v4590 = vpop.permute.xlu0 %4589
    %4591 = vrot.lane.b32.xlu0 %v3258, 112
    %v4592 = vpop.permute.xlu0 %4591
    %4593 = vrot.lane.b32.xlu0 %v3259, 112
    %v4594 = vpop.permute.xlu0 %4593
    %4595 = vrot.lane.b32.xlu0 %v3260, 112
    %v4596 = vpop.permute.xlu0 %4595
    %4597 = vrot.lane.b32.xlu0 %v3261, 112
    %v4598 = vpop.permute.xlu0 %4597
    %4599 = vrot.lane.b32.xlu0 %v3262, 112
    %v4600 = vpop.permute.xlu0 %4599
    %4601 = vrot.lane.b32.xlu0 %v3263, 112
    %v4602 = vpop.permute.xlu0 %4601
    %4603 = vrot.lane.b32.xlu0 %v3264, 112
    %v4604 = vpop.permute.xlu0 %4603
    %4605 = vrot.lane.b32.xlu0 %v3265, 112
    %v4606 = vpop.permute.xlu0 %4605
    %4607 = vrot.lane.b32.xlu0 %v3266, 112
    %v4608 = vpop.permute.xlu0 %4607
    %4609 = vrot.lane.b32.xlu0 %v3267, 112
    %v4610 = vpop.permute.xlu0 %4609
    %4611 = vrot.lane.b32.xlu0 %v3268, 112
    %v4612 = vpop.permute.xlu0 %4611
    %4613 = vrot.lane.b32.xlu0 %v3269, 112
    %v4614 = vpop.permute.xlu0 %4613
    %4615 = vrot.lane.b32.xlu0 %v3270, 112
    %v4616 = vpop.permute.xlu0 %4615
    %4617 = vrot.lane.b32.xlu0 %v3271, 112
    %v4618 = vpop.permute.xlu0 %4617
    %4619 = vrot.lane.b32.xlu0 %v3272, 112
    %v4620 = vpop.permute.xlu0 %4619
    %4621 = vrot.lane.b32.xlu0 %v3273, 112
    %v4622 = vpop.permute.xlu0 %4621
    %4623 = vrot.lane.b32.xlu0 %v3274, 112
    %v4624 = vpop.permute.xlu0 %4623
    %4625 = vrot.lane.b32.xlu0 %v3275, 112
    %v4626 = vpop.permute.xlu0 %4625
    %4627 = vrot.lane.b32.xlu0 %v3276, 112
    %v4628 = vpop.permute.xlu0 %4627
    %4629 = vrot.lane.b32.xlu0 %v3277, 112
    %v4630 = vpop.permute.xlu0 %4629
    %4631 = vrot.lane.b32.xlu0 %v3278, 112
    %v4632 = vpop.permute.xlu0 %4631
    %4633 = vrot.lane.b32.xlu0 %v3279, 112
    %v4634 = vpop.permute.xlu0 %4633
    %4635 = vrot.lane.b32.xlu0 %v3280, 112
    %v4636 = vpop.permute.xlu0 %4635
    %4637 = vrot.lane.b32.xlu0 %v3281, 112
    %v4638 = vpop.permute.xlu0 %4637
    %4639 = vrot.lane.b32.xlu0 %v3282, 112
    %v4640 = vpop.permute.xlu0 %4639
    %4641 = vrot.lane.b32.xlu0 %v3283, 112
    %v4642 = vpop.permute.xlu0 %4641
    %4643 = vrot.lane.b32.xlu0 %v3284, 112
    %v4644 = vpop.permute.xlu0 %4643
    %4645 = vrot.lane.b32.xlu0 %v3285, 112
    %v4646 = vpop.permute.xlu0 %4645
    %4647 = vrot.lane.b32.xlu0 %v3286, 112
    %v4648 = vpop.permute.xlu0 %4647
    %4649 = vrot.lane.b32.xlu0 %v3287, 112
    %v4650 = vpop.permute.xlu0 %4649
    %4651 = vrot.lane.b32.xlu0 %v3288, 112
    %v4652 = vpop.permute.xlu0 %4651
    %4653 = vrot.lane.b32.xlu0 %v3289, 112
    %v4654 = vpop.permute.xlu0 %4653
    %4655 = vrot.lane.b32.xlu0 %v3290, 112
    %v4656 = vpop.permute.xlu0 %4655
    %4657 = vrot.lane.b32.xlu0 %v3291, 112
    %v4658 = vpop.permute.xlu0 %4657
    %4659 = vrot.lane.b32.xlu0 %v3292, 112
    %v4660 = vpop.permute.xlu0 %4659
    %4661 = vrot.lane.b32.xlu0 %v3293, 112
    %v4662 = vpop.permute.xlu0 %4661
    %4663 = vrot.lane.b32.xlu0 %v3294, 112
    %v4664 = vpop.permute.xlu0 %4663
    %4665 = vrot.lane.b32.xlu0 %v3295, 112
    %v4666 = vpop.permute.xlu0 %4665
    %4667 = vrot.lane.b32.xlu0 %v3296, 112
    %v4668 = vpop.permute.xlu0 %4667
    %4669 = vrot.lane.b32.xlu0 %v3297, 112
    %v4670 = vpop.permute.xlu0 %4669
    %4671 = vrot.lane.b32.xlu0 %v3298, 112
    %v4672 = vpop.permute.xlu0 %4671
    %4673 = vrot.lane.b32.xlu0 %v3299, 112
    %v4674 = vpop.permute.xlu0 %4673
    %4675 = vrot.lane.b32.xlu0 %v3300, 112
    %v4676 = vpop.permute.xlu0 %4675
    %4677 = vrot.lane.b32.xlu0 %v3301, 112
    %v4678 = vpop.permute.xlu0 %4677
    %4679 = vrot.lane.b32.xlu0 %v3302, 112
    %v4680 = vpop.permute.xlu0 %4679
    %4681 = vrot.lane.b32.xlu0 %v3303, 112
    %v4682 = vpop.permute.xlu0 %4681
    %4683 = vrot.lane.b32.xlu0 %v3304, 112
    %v4684 = vpop.permute.xlu0 %4683
    %4685 = vrot.lane.b32.xlu0 %v3305, 112
    %v4686 = vpop.permute.xlu0 %4685
    %4687 = vrot.lane.b32.xlu0 %v3306, 112
    %v4688 = vpop.permute.xlu0 %4687
    %4689 = vrot.lane.b32.xlu0 %v3307, 112
    %v4690 = vpop.permute.xlu0 %4689
    %4691 = vrot.lane.b32.xlu0 %v3308, 112
    %v4692 = vpop.permute.xlu0 %4691
    %4693 = vrot.lane.b32.xlu0 %v3309, 112
    %v4694 = vpop.permute.xlu0 %4693
    %4695 = vrot.lane.b32.xlu0 %v3310, 112
    %v4696 = vpop.permute.xlu0 %4695
    %v4697 = vsel %vm100, %v4570, 0
    %v4699 = vsel %vm100, %v4572, 0
    %v4701 = vsel %vm100, %v4574, 0
    %v4703 = vsel %vm100, %v4576, 0
    %v4705 = vsel %vm100, %v4578, 0
    %v4707 = vsel %vm100, %v4580, 0
    %v4709 = vsel %vm100, %v4582, 0
    %v4711 = vsel %vm100, %v4584, 0
    %v4713 = vsel %vm100, %v4586, 0
    %v4715 = vsel %vm100, %v4588, 0
    %v4717 = vsel %vm100, %v4590, 0
    %v4719 = vsel %vm100, %v4592, 0
    %v4721 = vsel %vm100, %v4594, 0
    %v4723 = vsel %vm100, %v4596, 0
    %v4725 = vsel %vm100, %v4598, 0
    %v4727 = vsel %vm100, %v4600, 0
    %v4729 = vsel %vm100, %v4602, 0
    %v4731 = vsel %vm100, %v4604, 0
    %v4733 = vsel %vm100, %v4606, 0
    %v4735 = vsel %vm100, %v4608, 0
    %v4737 = vsel %vm100, %v4610, 0
    %v4739 = vsel %vm100, %v4612, 0
    %v4741 = vsel %vm100, %v4614, 0
    %v4743 = vsel %vm100, %v4616, 0
    %v4745 = vsel %vm100, %v4618, 0
    %v4747 = vsel %vm100, %v4620, 0
    %v4749 = vsel %vm100, %v4622, 0
    %v4751 = vsel %vm100, %v4624, 0
    %v4753 = vsel %vm100, %v4626, 0
    %v4755 = vsel %vm100, %v4628, 0
    %v4757 = vsel %vm100, %v4630, 0
    %v4759 = vsel %vm100, %v4632, 0
    %v4761 = vsel %vm100, %v4634, 0
    %v4763 = vsel %vm100, %v4636, 0
    %v4765 = vsel %vm100, %v4638, 0
    %v4767 = vsel %vm100, %v4640, 0
    %v4769 = vsel %vm100, %v4642, 0
    %v4771 = vsel %vm100, %v4644, 0
    %v4773 = vsel %vm100, %v4646, 0
    %v4775 = vsel %vm100, %v4648, 0
    %v4777 = vsel %vm100, %v4650, 0
    %v4779 = vsel %vm100, %v4652, 0
    %v4781 = vsel %vm100, %v4654, 0
    %v4783 = vsel %vm100, %v4656, 0
    %v4785 = vsel %vm100, %v4658, 0
    %v4787 = vsel %vm100, %v4660, 0
    %v4789 = vsel %vm100, %v4662, 0
    %v4791 = vsel %vm100, %v4664, 0
    %v4793 = vsel %vm100, %v4666, 0
    %v4795 = vsel %vm100, %v4668, 0
    %v4797 = vsel %vm100, %v4670, 0
    %v4799 = vsel %vm100, %v4672, 0
    %v4801 = vsel %vm100, %v4674, 0
    %v4803 = vsel %vm100, %v4676, 0
    %v4805 = vsel %vm100, %v4678, 0
    %v4807 = vsel %vm100, %v4680, 0
    %v4809 = vsel %vm100, %v4682, 0
    %v4811 = vsel %vm100, %v4684, 0
    %v4813 = vsel %vm100, %v4686, 0
    %v4815 = vsel %vm100, %v4688, 0
    %v4817 = vsel %vm100, %v4690, 0
    %v4819 = vsel %vm100, %v4692, 0
    %v4821 = vsel %vm100, %v4694, 0
    %v4823 = vsel %vm100, %v4696, 0
    %v4826 = vsel %vm3509, %v4568, 0
    %4828 = vmatprep.subr.mxu0 0.0
    %4829 = vmatpush1.msra.mxu0 0.0
    %4830 = vmatprep.subr.mxu0 0.0
    %4831 = vmatpush1.msra.mxu0 0.0
    %4832 = vmatprep.subr.mxu0 0.0
    %4833 = vmatpush1.msra.mxu0 0.0
    %4834 = vmatprep.subr.mxu0 0.0
    %4835 = vmatpush1.msra.mxu0 0.0
    %4836 = vmatprep.subr.mxu0 0.0
    %4837 = vmatpush1.msra.mxu0 0.0
    %4838 = vmatprep.subr.mxu0 0.0
    %4839 = vmatpush1.msra.mxu0 0.0
    %4840 = vmatprep.subr.mxu0 0.0
    %4841 = vmatpush1.msra.mxu0 0.0
    %4842 = vmatprep.subr.mxu0 0.0
    %4843 = vmatpush1.msra.mxu0 0.0
    %4844 = vmatprep.subr.mxu0 0.0
    %4845 = vmatpush1.msra.mxu0 0.0
    %4846 = vmatprep.subr.mxu0 0.0
    %4847 = vmatpush1.msra.mxu0 0.0
    %4848 = vmatprep.subr.mxu0 0.0
    %4849 = vmatpush1.msra.mxu0 0.0
    %4850 = vmatprep.subr.mxu0 0.0
    %4851 = vmatpush1.msra.mxu0 0.0
    %4852 = vmatprep.subr.mxu0 0.0
    %4853 = vmatpush1.msra.mxu0 0.0
    %4854 = vmatprep.subr.mxu0 0.0
    %4855 = vmatpush1.msra.mxu0 0.0
    %4856 = vmatprep.subr.mxu0 0.0
    %4857 = vmatpush1.msra.mxu0 0.0
    %4858 = vmatprep.subr.mxu0 0.0
    %4859 = vmatpush1.msra.mxu0 %v4826
    %4860 = vmatprep.subr.mxu0 0.0
    %4861 = vmatpush2.msra.mxu0 0.0
    %4862 = vmatprep.subr.mxu0 0.0
    %4863 = vmatpush2.msra.mxu0 0.0
    %4864 = vmatprep.subr.mxu0 0.0
    %4865 = vmatpush2.msra.mxu0 0.0
    %4866 = vmatprep.subr.mxu0 0.0
    %4867 = vmatpush2.msra.mxu0 0.0
    %4868 = vmatprep.subr.mxu0 0.0
    %4869 = vmatpush2.msra.mxu0 0.0
    %4870 = vmatprep.subr.mxu0 0.0
    %4871 = vmatpush2.msra.mxu0 0.0
    %4872 = vmatprep.subr.mxu0 0.0
    %4873 = vmatpush2.msra.mxu0 0.0
    %4874 = vmatprep.subr.mxu0 0.0
    %4875 = vmatpush2.msra.mxu0 0.0
    %4876 = vmatprep.subr.mxu0 0.0
    %4877 = vmatpush2.msra.mxu0 0.0
    %4878 = vmatprep.subr.mxu0 0.0
    %4879 = vmatpush2.msra.mxu0 0.0
    %4880 = vmatprep.subr.mxu0 0.0
    %4881 = vmatpush2.msra.mxu0 0.0
    %4882 = vmatprep.subr.mxu0 0.0
    %4883 = vmatpush2.msra.mxu0 0.0
    %4884 = vmatprep.subr.mxu0 0.0
    %4885 = vmatpush2.msra.mxu0 0.0
    %4886 = vmatprep.subr.mxu0 0.0
    %4887 = vmatpush2.msra.mxu0 0.0
    %4888 = vmatprep.subr.mxu0 0.0
    %4889 = vmatpush2.msra.mxu0 0.0
    %4890 = vmatprep.subr.mxu0 0.0
    %4891 = vmatpush2.msra.mxu0 0.0
    %4892 = vmatprep.mubr.f32.mxu0 0.0
    %4893 = vmatmul.mubr.f32.gmra.mxu0 %v4697
    %v4894 = vpop.f32.mrf.mxu0
    %v4895 = vadd.f32 0.0, %v4894
    %v4896 = vpop.f32.mrf.mxu0
    %4897 = vmatprep.mubr.f32.mxu0 0.0
    %4898 = vmatmul.mubr.f32.gmra.mxu0 %v4699
    %v4899 = vpop.f32.mrf.mxu0
    %v4900 = vadd.f32 0.0, %v4899
    %v4901 = vpop.f32.mrf.mxu0
    %4902 = vmatprep.mubr.f32.mxu0 0.0
    %4903 = vmatmul.mubr.f32.gmra.mxu0 %v4701
    %v4904 = vpop.f32.mrf.mxu0
    %v4905 = vadd.f32 0.0, %v4904
    %v4906 = vpop.f32.mrf.mxu0
    %4907 = vmatprep.mubr.f32.mxu0 0.0
    %4908 = vmatmul.mubr.f32.gmra.mxu0 %v4703
    %v4909 = vpop.f32.mrf.mxu0
    %v4910 = vadd.f32 0.0, %v4909
    %v4911 = vpop.f32.mrf.mxu0
    %4912 = vmatprep.mubr.f32.mxu0 0.0
    %4913 = vmatmul.mubr.f32.gmra.mxu0 %v4705
    %v4914 = vpop.f32.mrf.mxu0
    %v4915 = vadd.f32 0.0, %v4914
    %v4916 = vpop.f32.mrf.mxu0
    %4917 = vmatprep.mubr.f32.mxu0 0.0
    %4918 = vmatmul.mubr.f32.gmra.mxu0 %v4707
    %v4919 = vpop.f32.mrf.mxu0
    %v4920 = vadd.f32 0.0, %v4919
    %v4921 = vpop.f32.mrf.mxu0
    %4922 = vmatprep.mubr.f32.mxu0 0.0
    %4923 = vmatmul.mubr.f32.gmra.mxu0 %v4709
    %v4924 = vpop.f32.mrf.mxu0
    %v4925 = vadd.f32 0.0, %v4924
    %v4926 = vpop.f32.mrf.mxu0
    %4927 = vmatprep.mubr.f32.mxu0 0.0
    %4928 = vmatmul.mubr.f32.gmra.mxu0 %v4711
    %v4929 = vpop.f32.mrf.mxu0
    %v4930 = vadd.f32 0.0, %v4929
    %v4931 = vpop.f32.mrf.mxu0
    %4932 = vmatprep.mubr.f32.mxu0 0.0
    %4933 = vmatmul.mubr.f32.gmra.mxu0 %v4713
    %v4934 = vpop.f32.mrf.mxu0
    %v4935 = vadd.f32 0.0, %v4934
    %v4936 = vpop.f32.mrf.mxu0
    %4937 = vmatprep.mubr.f32.mxu0 0.0
    %4938 = vmatmul.mubr.f32.gmra.mxu0 %v4715
    %v4939 = vpop.f32.mrf.mxu0
    %v4940 = vadd.f32 0.0, %v4939
    %v4941 = vpop.f32.mrf.mxu0
    %4942 = vmatprep.mubr.f32.mxu0 0.0
    %4943 = vmatmul.mubr.f32.gmra.mxu0 %v4717
    %v4944 = vpop.f32.mrf.mxu0
    %v4945 = vadd.f32 0.0, %v4944
    %v4946 = vpop.f32.mrf.mxu0
    %4947 = vmatprep.mubr.f32.mxu0 0.0
    %4948 = vmatmul.mubr.f32.gmra.mxu0 %v4719
    %v4949 = vpop.f32.mrf.mxu0
    %v4950 = vadd.f32 0.0, %v4949
    %v4951 = vpop.f32.mrf.mxu0
    %4952 = vmatprep.mubr.f32.mxu0 0.0
    %4953 = vmatmul.mubr.f32.gmra.mxu0 %v4721
    %v4954 = vpop.f32.mrf.mxu0
    %v4955 = vadd.f32 0.0, %v4954
    %v4956 = vpop.f32.mrf.mxu0
    %4957 = vmatprep.mubr.f32.mxu0 0.0
    %4958 = vmatmul.mubr.f32.gmra.mxu0 %v4723
    %v4959 = vpop.f32.mrf.mxu0
    %v4960 = vadd.f32 0.0, %v4959
    %v4961 = vpop.f32.mrf.mxu0
    %4962 = vmatprep.mubr.f32.mxu0 0.0
    %4963 = vmatmul.mubr.f32.gmra.mxu0 %v4725
    %v4964 = vpop.f32.mrf.mxu0
    %v4965 = vadd.f32 0.0, %v4964
    %v4966 = vpop.f32.mrf.mxu0
    %4967 = vmatprep.mubr.f32.mxu0 0.0
    %4968 = vmatmul.mubr.f32.gmra.mxu0 %v4727
    %v4969 = vpop.f32.mrf.mxu0
    %v4970 = vadd.f32 0.0, %v4969
    %v4971 = vpop.f32.mrf.mxu0
    %4972 = vmatprep.mubr.f32.mxu0 0.0
    %4973 = vmatmul.mubr.f32.gmra.mxu0 %v4729
    %v4974 = vpop.f32.mrf.mxu0
    %v4975 = vadd.f32 0.0, %v4974
    %v4976 = vpop.f32.mrf.mxu0
    %4977 = vmatprep.mubr.f32.mxu0 0.0
    %4978 = vmatmul.mubr.f32.gmra.mxu0 %v4731
    %v4979 = vpop.f32.mrf.mxu0
    %v4980 = vadd.f32 0.0, %v4979
    %v4981 = vpop.f32.mrf.mxu0
    %4982 = vmatprep.mubr.f32.mxu0 0.0
    %4983 = vmatmul.mubr.f32.gmra.mxu0 %v4733
    %v4984 = vpop.f32.mrf.mxu0
    %v4985 = vadd.f32 0.0, %v4984
    %v4986 = vpop.f32.mrf.mxu0
    %4987 = vmatprep.mubr.f32.mxu0 0.0
    %4988 = vmatmul.mubr.f32.gmra.mxu0 %v4735
    %v4989 = vpop.f32.mrf.mxu0
    %v4990 = vadd.f32 0.0, %v4989
    %v4991 = vpop.f32.mrf.mxu0
    %4992 = vmatprep.mubr.f32.mxu0 0.0
    %4993 = vmatmul.mubr.f32.gmra.mxu0 %v4737
    %v4994 = vpop.f32.mrf.mxu0
    %v4995 = vadd.f32 0.0, %v4994
    %v4996 = vpop.f32.mrf.mxu0
    %4997 = vmatprep.mubr.f32.mxu0 0.0
    %4998 = vmatmul.mubr.f32.gmra.mxu0 %v4739
    %v4999 = vpop.f32.mrf.mxu0
    %v5000 = vadd.f32 0.0, %v4999
    %v5001 = vpop.f32.mrf.mxu0
    %5002 = vmatprep.mubr.f32.mxu0 0.0
    %5003 = vmatmul.mubr.f32.gmra.mxu0 %v4741
    %v5004 = vpop.f32.mrf.mxu0
    %v5005 = vadd.f32 0.0, %v5004
    %v5006 = vpop.f32.mrf.mxu0
    %5007 = vmatprep.mubr.f32.mxu0 0.0
    %5008 = vmatmul.mubr.f32.gmra.mxu0 %v4743
    %v5009 = vpop.f32.mrf.mxu0
    %v5010 = vadd.f32 0.0, %v5009
    %v5011 = vpop.f32.mrf.mxu0
    %5012 = vmatprep.mubr.f32.mxu0 0.0
    %5013 = vmatmul.mubr.f32.gmra.mxu0 %v4745
    %v5014 = vpop.f32.mrf.mxu0
    %v5015 = vadd.f32 0.0, %v5014
    %v5016 = vpop.f32.mrf.mxu0
    %5017 = vmatprep.mubr.f32.mxu0 0.0
    %5018 = vmatmul.mubr.f32.gmra.mxu0 %v4747
    %v5019 = vpop.f32.mrf.mxu0
    %v5020 = vadd.f32 0.0, %v5019
    %v5021 = vpop.f32.mrf.mxu0
    %5022 = vmatprep.mubr.f32.mxu0 0.0
    %5023 = vmatmul.mubr.f32.gmra.mxu0 %v4749
    %v5024 = vpop.f32.mrf.mxu0
    %v5025 = vadd.f32 0.0, %v5024
    %v5026 = vpop.f32.mrf.mxu0
    %5027 = vmatprep.mubr.f32.mxu0 0.0
    %5028 = vmatmul.mubr.f32.gmra.mxu0 %v4751
    %v5029 = vpop.f32.mrf.mxu0
    %v5030 = vadd.f32 0.0, %v5029
    %v5031 = vpop.f32.mrf.mxu0
    %5032 = vmatprep.mubr.f32.mxu0 0.0
    %5033 = vmatmul.mubr.f32.gmra.mxu0 %v4753
    %v5034 = vpop.f32.mrf.mxu0
    %v5035 = vadd.f32 0.0, %v5034
    %v5036 = vpop.f32.mrf.mxu0
    %5037 = vmatprep.mubr.f32.mxu0 0.0
    %5038 = vmatmul.mubr.f32.gmra.mxu0 %v4755
    %v5039 = vpop.f32.mrf.mxu0
    %v5040 = vadd.f32 0.0, %v5039
    %v5041 = vpop.f32.mrf.mxu0
    %5042 = vmatprep.mubr.f32.mxu0 0.0
    %5043 = vmatmul.mubr.f32.gmra.mxu0 %v4757
    %v5044 = vpop.f32.mrf.mxu0
    %v5045 = vadd.f32 0.0, %v5044
    %v5046 = vpop.f32.mrf.mxu0
    %5047 = vmatprep.mubr.f32.mxu0 0.0
    %5048 = vmatmul.mubr.f32.gmra.mxu0 %v4759
    %v5049 = vpop.f32.mrf.mxu0
    %v5050 = vadd.f32 0.0, %v5049
    %v5051 = vpop.f32.mrf.mxu0
    %5052 = vmatprep.mubr.f32.mxu0 0.0
    %5053 = vmatmul.mubr.f32.gmra.mxu0 %v4761
    %v5054 = vpop.f32.mrf.mxu0
    %v5055 = vadd.f32 0.0, %v5054
    %v5056 = vpop.f32.mrf.mxu0
    %5057 = vmatprep.mubr.f32.mxu0 0.0
    %5058 = vmatmul.mubr.f32.gmra.mxu0 %v4763
    %v5059 = vpop.f32.mrf.mxu0
    %v5060 = vadd.f32 0.0, %v5059
    %v5061 = vpop.f32.mrf.mxu0
    %5062 = vmatprep.mubr.f32.mxu0 0.0
    %5063 = vmatmul.mubr.f32.gmra.mxu0 %v4765
    %v5064 = vpop.f32.mrf.mxu0
    %v5065 = vadd.f32 0.0, %v5064
    %v5066 = vpop.f32.mrf.mxu0
    %5067 = vmatprep.mubr.f32.mxu0 0.0
    %5068 = vmatmul.mubr.f32.gmra.mxu0 %v4767
    %v5069 = vpop.f32.mrf.mxu0
    %v5070 = vadd.f32 0.0, %v5069
    %v5071 = vpop.f32.mrf.mxu0
    %5072 = vmatprep.mubr.f32.mxu0 0.0
    %5073 = vmatmul.mubr.f32.gmra.mxu0 %v4769
    %v5074 = vpop.f32.mrf.mxu0
    %v5075 = vadd.f32 0.0, %v5074
    %v5076 = vpop.f32.mrf.mxu0
    %5077 = vmatprep.mubr.f32.mxu0 0.0
    %5078 = vmatmul.mubr.f32.gmra.mxu0 %v4771
    %v5079 = vpop.f32.mrf.mxu0
    %v5080 = vadd.f32 0.0, %v5079
    %v5081 = vpop.f32.mrf.mxu0
    %5082 = vmatprep.mubr.f32.mxu0 0.0
    %5083 = vmatmul.mubr.f32.gmra.mxu0 %v4773
    %v5084 = vpop.f32.mrf.mxu0
    %v5085 = vadd.f32 0.0, %v5084
    %v5086 = vpop.f32.mrf.mxu0
    %5087 = vmatprep.mubr.f32.mxu0 0.0
    %5088 = vmatmul.mubr.f32.gmra.mxu0 %v4775
    %v5089 = vpop.f32.mrf.mxu0
    %v5090 = vadd.f32 0.0, %v5089
    %v5091 = vpop.f32.mrf.mxu0
    %5092 = vmatprep.mubr.f32.mxu0 0.0
    %5093 = vmatmul.mubr.f32.gmra.mxu0 %v4777
    %v5094 = vpop.f32.mrf.mxu0
    %v5095 = vadd.f32 0.0, %v5094
    %v5096 = vpop.f32.mrf.mxu0
    %5097 = vmatprep.mubr.f32.mxu0 0.0
    %5098 = vmatmul.mubr.f32.gmra.mxu0 %v4779
    %v5099 = vpop.f32.mrf.mxu0
    %v5100 = vadd.f32 0.0, %v5099
    %v5101 = vpop.f32.mrf.mxu0
    %5102 = vmatprep.mubr.f32.mxu0 0.0
    %5103 = vmatmul.mubr.f32.gmra.mxu0 %v4781
    %v5104 = vpop.f32.mrf.mxu0
    %v5105 = vadd.f32 0.0, %v5104
    %v5106 = vpop.f32.mrf.mxu0
    %5107 = vmatprep.mubr.f32.mxu0 0.0
    %5108 = vmatmul.mubr.f32.gmra.mxu0 %v4783
    %v5109 = vpop.f32.mrf.mxu0
    %v5110 = vadd.f32 0.0, %v5109
    %v5111 = vpop.f32.mrf.mxu0
    %5112 = vmatprep.mubr.f32.mxu0 0.0
    %5113 = vmatmul.mubr.f32.gmra.mxu0 %v4785
    %v5114 = vpop.f32.mrf.mxu0
    %v5115 = vadd.f32 0.0, %v5114
    %v5116 = vpop.f32.mrf.mxu0
    %5117 = vmatprep.mubr.f32.mxu0 0.0
    %5118 = vmatmul.mubr.f32.gmra.mxu0 %v4787
    %v5119 = vpop.f32.mrf.mxu0
    %v5120 = vadd.f32 0.0, %v5119
    %v5121 = vpop.f32.mrf.mxu0
    %5122 = vmatprep.mubr.f32.mxu0 0.0
    %5123 = vmatmul.mubr.f32.gmra.mxu0 %v4789
    %v5124 = vpop.f32.mrf.mxu0
    %v5125 = vadd.f32 0.0, %v5124
    %v5126 = vpop.f32.mrf.mxu0
    %5127 = vmatprep.mubr.f32.mxu0 0.0
    %5128 = vmatmul.mubr.f32.gmra.mxu0 %v4791
    %v5129 = vpop.f32.mrf.mxu0
    %v5130 = vadd.f32 0.0, %v5129
    %v5131 = vpop.f32.mrf.mxu0
    %5132 = vmatprep.mubr.f32.mxu0 0.0
    %5133 = vmatmul.mubr.f32.gmra.mxu0 %v4793
    %v5134 = vpop.f32.mrf.mxu0
    %v5135 = vadd.f32 0.0, %v5134
    %v5136 = vpop.f32.mrf.mxu0
    %5137 = vmatprep.mubr.f32.mxu0 0.0
    %5138 = vmatmul.mubr.f32.gmra.mxu0 %v4795
    %v5139 = vpop.f32.mrf.mxu0
    %v5140 = vadd.f32 0.0, %v5139
    %v5141 = vpop.f32.mrf.mxu0
    %5142 = vmatprep.mubr.f32.mxu0 0.0
    %5143 = vmatmul.mubr.f32.gmra.mxu0 %v4797
    %v5144 = vpop.f32.mrf.mxu0
    %v5145 = vadd.f32 0.0, %v5144
    %v5146 = vpop.f32.mrf.mxu0
    %5147 = vmatprep.mubr.f32.mxu0 0.0
    %5148 = vmatmul.mubr.f32.gmra.mxu0 %v4799
    %v5149 = vpop.f32.mrf.mxu0
    %v5150 = vadd.f32 0.0, %v5149
    %v5151 = vpop.f32.mrf.mxu0
    %5152 = vmatprep.mubr.f32.mxu0 0.0
    %5153 = vmatmul.mubr.f32.gmra.mxu0 %v4801
    %v5154 = vpop.f32.mrf.mxu0
    %v5155 = vadd.f32 0.0, %v5154
    %v5156 = vpop.f32.mrf.mxu0
    %5157 = vmatprep.mubr.f32.mxu0 0.0
    %5158 = vmatmul.mubr.f32.gmra.mxu0 %v4803
    %v5159 = vpop.f32.mrf.mxu0
    %v5160 = vadd.f32 0.0, %v5159
    %v5161 = vpop.f32.mrf.mxu0
    %5162 = vmatprep.mubr.f32.mxu0 0.0
    %5163 = vmatmul.mubr.f32.gmra.mxu0 %v4805
    %v5164 = vpop.f32.mrf.mxu0
    %v5165 = vadd.f32 0.0, %v5164
    %v5166 = vpop.f32.mrf.mxu0
    %5167 = vmatprep.mubr.f32.mxu0 0.0
    %5168 = vmatmul.mubr.f32.gmra.mxu0 %v4807
    %v5169 = vpop.f32.mrf.mxu0
    %v5170 = vadd.f32 0.0, %v5169
    %v5171 = vpop.f32.mrf.mxu0
    %5172 = vmatprep.mubr.f32.mxu0 0.0
    %5173 = vmatmul.mubr.f32.gmra.mxu0 %v4809
    %v5174 = vpop.f32.mrf.mxu0
    %v5175 = vadd.f32 0.0, %v5174
    %v5176 = vpop.f32.mrf.mxu0
    %5177 = vmatprep.mubr.f32.mxu0 0.0
    %5178 = vmatmul.mubr.f32.gmra.mxu0 %v4811
    %v5179 = vpop.f32.mrf.mxu0
    %v5180 = vadd.f32 0.0, %v5179
    %v5181 = vpop.f32.mrf.mxu0
    %5182 = vmatprep.mubr.f32.mxu0 0.0
    %5183 = vmatmul.mubr.f32.gmra.mxu0 %v4813
    %v5184 = vpop.f32.mrf.mxu0
    %v5185 = vadd.f32 0.0, %v5184
    %v5186 = vpop.f32.mrf.mxu0
    %5187 = vmatprep.mubr.f32.mxu0 0.0
    %5188 = vmatmul.mubr.f32.gmra.mxu0 %v4815
    %v5189 = vpop.f32.mrf.mxu0
    %v5190 = vadd.f32 0.0, %v5189
    %v5191 = vpop.f32.mrf.mxu0
    %5192 = vmatprep.mubr.f32.mxu0 0.0
    %5193 = vmatmul.mubr.f32.gmra.mxu0 %v4817
    %v5194 = vpop.f32.mrf.mxu0
    %v5195 = vadd.f32 0.0, %v5194
    %v5196 = vpop.f32.mrf.mxu0
    %5197 = vmatprep.mubr.f32.mxu0 0.0
    %5198 = vmatmul.mubr.f32.gmra.mxu0 %v4819
    %v5199 = vpop.f32.mrf.mxu0
    %v5200 = vadd.f32 0.0, %v5199
    %v5201 = vpop.f32.mrf.mxu0
    %5202 = vmatprep.mubr.f32.mxu0 0.0
    %5203 = vmatmul.mubr.f32.gmra.mxu0 %v4821
    %v5204 = vpop.f32.mrf.mxu0
    %v5205 = vadd.f32 0.0, %v5204
    %v5206 = vpop.f32.mrf.mxu0
    %5207 = vmatprep.mubr.f32.mxu0 0.0
    %5208 = vmatmul.mubr.f32.gmra.mxu0 %v4823
    %v5209 = vpop.f32.mrf.mxu0
    %v5210 = vadd.f32 0.0, %v5209
    %v5211 = vpop.f32.mrf.mxu0
    %5212 = vdwg.mxu0
    %v5213 = vld [vmem:[%s8] sm:$0x1]
    %v5214 = vld [vmem:[%s9] sm:$0x1]
    %v5215 = vsel %vm3900, %v4895, 0.0
    %v5216 = vsel %vm3900, %v4900, 0.0
    %v5217 = vadd.f32 %v5215, %v5216
    %v5218 = vsel %vm3900, %v4905, 0.0
    %v5219 = vadd.f32 %v5217, %v5218
    %v5220 = vsel %vm3900, %v4910, 0.0
    %v5221 = vadd.f32 %v5219, %v5220
    %v5222 = vsel %vm3900, %v4915, 0.0
    %v5223 = vadd.f32 %v5221, %v5222
    %v5224 = vsel %vm3900, %v4920, 0.0
    %v5225 = vadd.f32 %v5223, %v5224
    %v5226 = vsel %vm3900, %v4925, 0.0
    %v5227 = vadd.f32 %v5225, %v5226
    %v5228 = vsel %vm3900, %v4930, 0.0
    %v5229 = vadd.f32 %v5227, %v5228
    %v5230 = vsel %vm3900, %v4935, 0.0
    %v5231 = vadd.f32 %v5229, %v5230
    %v5232 = vsel %vm3900, %v4940, 0.0
    %v5233 = vadd.f32 %v5231, %v5232
    %v5234 = vsel %vm3900, %v4945, 0.0
    %v5235 = vadd.f32 %v5233, %v5234
    %v5236 = vsel %vm3900, %v4950, 0.0
    %v5237 = vadd.f32 %v5235, %v5236
    %v5238 = vsel %vm3900, %v4955, 0.0
    %v5239 = vadd.f32 %v5237, %v5238
    %v5240 = vsel %vm3900, %v4960, 0.0
    %v5241 = vadd.f32 %v5239, %v5240
    %v5242 = vsel %vm3900, %v4965, 0.0
    %v5243 = vadd.f32 %v5241, %v5242
    %v5244 = vsel %vm3900, %v4970, 0.0
    %v5245 = vadd.f32 %v5243, %v5244
    %v5246 = vsel %vm3900, %v4975, 0.0
    %v5247 = vadd.f32 %v5245, %v5246
    %v5248 = vsel %vm3900, %v4980, 0.0
    %v5249 = vadd.f32 %v5247, %v5248
    %v5250 = vsel %vm3900, %v4985, 0.0
    %v5251 = vadd.f32 %v5249, %v5250
    %v5252 = vsel %vm3900, %v4990, 0.0
    %v5253 = vadd.f32 %v5251, %v5252
    %v5254 = vsel %vm3900, %v4995, 0.0
    %v5255 = vadd.f32 %v5253, %v5254
    %v5256 = vsel %vm3900, %v5000, 0.0
    %v5257 = vadd.f32 %v5255, %v5256
    %v5258 = vsel %vm3900, %v5005, 0.0
    %v5259 = vadd.f32 %v5257, %v5258
    %v5260 = vsel %vm3900, %v5010, 0.0
    %v5261 = vadd.f32 %v5259, %v5260
    %v5262 = vsel %vm3900, %v5015, 0.0
    %v5263 = vadd.f32 %v5261, %v5262
    %v5264 = vsel %vm3900, %v5020, 0.0
    %v5265 = vadd.f32 %v5263, %v5264
    %v5266 = vsel %vm3900, %v5025, 0.0
    %v5267 = vadd.f32 %v5265, %v5266
    %v5268 = vsel %vm3900, %v5030, 0.0
    %v5269 = vadd.f32 %v5267, %v5268
    %v5270 = vsel %vm3900, %v5035, 0.0
    %v5271 = vadd.f32 %v5269, %v5270
    %v5272 = vsel %vm3900, %v5040, 0.0
    %v5273 = vadd.f32 %v5271, %v5272
    %v5274 = vsel %vm3900, %v5045, 0.0
    %v5275 = vadd.f32 %v5273, %v5274
    %v5276 = vsel %vm3900, %v5050, 0.0
    %v5277 = vadd.f32 %v5275, %v5276
    %v5278 = vsel %vm3900, %v5055, 0.0
    %v5279 = vadd.f32 %v5277, %v5278
    %v5280 = vsel %vm3900, %v5060, 0.0
    %v5281 = vadd.f32 %v5279, %v5280
    %v5282 = vsel %vm3900, %v5065, 0.0
    %v5283 = vadd.f32 %v5281, %v5282
    %v5284 = vsel %vm3900, %v5070, 0.0
    %v5285 = vadd.f32 %v5283, %v5284
    %v5286 = vsel %vm3900, %v5075, 0.0
    %v5287 = vadd.f32 %v5285, %v5286
    %v5288 = vsel %vm3900, %v5080, 0.0
    %v5289 = vadd.f32 %v5287, %v5288
    %v5290 = vsel %vm3900, %v5085, 0.0
    %v5291 = vadd.f32 %v5289, %v5290
    %v5292 = vsel %vm3900, %v5090, 0.0
    %v5293 = vadd.f32 %v5291, %v5292
    %v5294 = vsel %vm3900, %v5095, 0.0
    %v5295 = vadd.f32 %v5293, %v5294
    %v5296 = vsel %vm3900, %v5100, 0.0
    %v5297 = vadd.f32 %v5295, %v5296
    %v5298 = vsel %vm3900, %v5105, 0.0
    %v5299 = vadd.f32 %v5297, %v5298
    %v5300 = vsel %vm3900, %v5110, 0.0
    %v5301 = vadd.f32 %v5299, %v5300
    %v5302 = vsel %vm3900, %v5115, 0.0
    %v5303 = vadd.f32 %v5301, %v5302
    %v5304 = vsel %vm3900, %v5120, 0.0
    %v5305 = vadd.f32 %v5303, %v5304
    %v5306 = vsel %vm3900, %v5125, 0.0
    %v5307 = vadd.f32 %v5305, %v5306
    %v5308 = vsel %vm3900, %v5130, 0.0
    %v5309 = vadd.f32 %v5307, %v5308
    %v5310 = vsel %vm3900, %v5135, 0.0
    %v5311 = vadd.f32 %v5309, %v5310
    %v5312 = vsel %vm3900, %v5140, 0.0
    %v5313 = vadd.f32 %v5311, %v5312
    %v5314 = vsel %vm3900, %v5145, 0.0
    %v5315 = vadd.f32 %v5313, %v5314
    %v5316 = vsel %vm3900, %v5150, 0.0
    %v5317 = vadd.f32 %v5315, %v5316
    %v5318 = vsel %vm3900, %v5155, 0.0
    %v5319 = vadd.f32 %v5317, %v5318
    %v5320 = vsel %vm3900, %v5160, 0.0
    %v5321 = vadd.f32 %v5319, %v5320
    %v5322 = vsel %vm3900, %v5165, 0.0
    %v5323 = vadd.f32 %v5321, %v5322
    %v5324 = vsel %vm3900, %v5170, 0.0
    %v5325 = vadd.f32 %v5323, %v5324
    %v5326 = vsel %vm3900, %v5175, 0.0
    %v5327 = vadd.f32 %v5325, %v5326
    %v5328 = vsel %vm3900, %v5180, 0.0
    %v5329 = vadd.f32 %v5327, %v5328
    %v5330 = vsel %vm3900, %v5185, 0.0
    %v5331 = vadd.f32 %v5329, %v5330
    %v5332 = vsel %vm3900, %v5190, 0.0
    %v5333 = vadd.f32 %v5331, %v5332
    %v5334 = vsel %vm3900, %v5195, 0.0
    %v5335 = vadd.f32 %v5333, %v5334
    %v5336 = vsel %vm3900, %v5200, 0.0
    %v5337 = vadd.f32 %v5335, %v5336
    %v5338 = vsel %vm3900, %v5205, 0.0
    %v5339 = vadd.f32 %v5337, %v5338
    %v5340 = vsel %vm3900, %v5210, 0.0
    %v5341 = vadd.f32 %v5339, %v5340
    %v5342 = vrot.slane %v5341, 4
    %v5343 = vadd.f32 %v5341, %v5342
    %v5344 = vrot.slane %v5343, 2
    %v5345 = vadd.f32 %v5343, %v5344
    %v5346 = vrot.slane %v5345, 1
    %v5347 = vadd.f32 %v5345, %v5346
    %v5348 = vmul.f32 %v5347, %v4034
    %v5349 = vsub.f32 %v4895, %v5348
    %v5350 = vsub.f32 %v4900, %v5348
    %v5351 = vsub.f32 %v4905, %v5348
    %v5352 = vsub.f32 %v4910, %v5348
    %v5353 = vsub.f32 %v4915, %v5348
    %v5354 = vsub.f32 %v4920, %v5348
    %v5355 = vsub.f32 %v4925, %v5348
    %v5356 = vsub.f32 %v4930, %v5348
    %v5357 = vsub.f32 %v4935, %v5348
    %v5358 = vsub.f32 %v4940, %v5348
    %v5359 = vsub.f32 %v4945, %v5348
    %v5360 = vsub.f32 %v4950, %v5348
    %v5361 = vsub.f32 %v4955, %v5348
    %v5362 = vsub.f32 %v4960, %v5348
    %v5363 = vsub.f32 %v4965, %v5348
    %v5364 = vsub.f32 %v4970, %v5348
    %v5365 = vsub.f32 %v4975, %v5348
    %v5366 = vsub.f32 %v4980, %v5348
    %v5367 = vsub.f32 %v4985, %v5348
    %v5368 = vsub.f32 %v4990, %v5348
    %v5369 = vsub.f32 %v4995, %v5348
    %v5370 = vsub.f32 %v5000, %v5348
    %v5371 = vsub.f32 %v5005, %v5348
    %v5372 = vsub.f32 %v5010, %v5348
    %v5373 = vsub.f32 %v5015, %v5348
    %v5374 = vsub.f32 %v5020, %v5348
    %v5375 = vsub.f32 %v5025, %v5348
    %v5376 = vsub.f32 %v5030, %v5348
    %v5377 = vsub.f32 %v5035, %v5348
    %v5378 = vsub.f32 %v5040, %v5348
    %v5379 = vsub.f32 %v5045, %v5348
    %v5380 = vsub.f32 %v5050, %v5348
    %v5381 = vsub.f32 %v5055, %v5348
    %v5382 = vsub.f32 %v5060, %v5348
    %v5383 = vsub.f32 %v5065, %v5348
    %v5384 = vsub.f32 %v5070, %v5348
    %v5385 = vsub.f32 %v5075, %v5348
    %v5386 = vsub.f32 %v5080, %v5348
    %v5387 = vsub.f32 %v5085, %v5348
    %v5388 = vsub.f32 %v5090, %v5348
    %v5389 = vsub.f32 %v5095, %v5348
    %v5390 = vsub.f32 %v5100, %v5348
    %v5391 = vsub.f32 %v5105, %v5348
    %v5392 = vsub.f32 %v5110, %v5348
    %v5393 = vsub.f32 %v5115, %v5348
    %v5394 = vsub.f32 %v5120, %v5348
    %v5395 = vsub.f32 %v5125, %v5348
    %v5396 = vsub.f32 %v5130, %v5348
    %v5397 = vsub.f32 %v5135, %v5348
    %v5398 = vsub.f32 %v5140, %v5348
    %v5399 = vsub.f32 %v5145, %v5348
    %v5400 = vsub.f32 %v5150, %v5348
    %v5401 = vsub.f32 %v5155, %v5348
    %v5402 = vsub.f32 %v5160, %v5348
    %v5403 = vsub.f32 %v5165, %v5348
    %v5404 = vsub.f32 %v5170, %v5348
    %v5405 = vsub.f32 %v5175, %v5348
    %v5406 = vsub.f32 %v5180, %v5348
    %v5407 = vsub.f32 %v5185, %v5348
    %v5408 = vsub.f32 %v5190, %v5348
    %v5409 = vsub.f32 %v5195, %v5348
    %v5410 = vsub.f32 %v5200, %v5348
    %v5411 = vsub.f32 %v5205, %v5348
    %v5412 = vsub.f32 %v5210, %v5348
    %v5413 = vmul.f32 %v5349, %v5349
    %v5414 = vmul.f32 %v5350, %v5350
    %v5415 = vmul.f32 %v5351, %v5351
    %v5416 = vmul.f32 %v5352, %v5352
    %v5417 = vmul.f32 %v5353, %v5353
    %v5418 = vmul.f32 %v5354, %v5354
    %v5419 = vmul.f32 %v5355, %v5355
    %v5420 = vmul.f32 %v5356, %v5356
    %v5421 = vmul.f32 %v5357, %v5357
    %v5422 = vmul.f32 %v5358, %v5358
    %v5423 = vmul.f32 %v5359, %v5359
    %v5424 = vmul.f32 %v5360, %v5360
    %v5425 = vmul.f32 %v5361, %v5361
    %v5426 = vmul.f32 %v5362, %v5362
    %v5427 = vmul.f32 %v5363, %v5363
    %v5428 = vmul.f32 %v5364, %v5364
    %v5429 = vmul.f32 %v5365, %v5365
    %v5430 = vmul.f32 %v5366, %v5366
    %v5431 = vmul.f32 %v5367, %v5367
    %v5432 = vmul.f32 %v5368, %v5368
    %v5433 = vmul.f32 %v5369, %v5369
    %v5434 = vmul.f32 %v5370, %v5370
    %v5435 = vmul.f32 %v5371, %v5371
    %v5436 = vmul.f32 %v5372, %v5372
    %v5437 = vmul.f32 %v5373, %v5373
    %v5438 = vmul.f32 %v5374, %v5374
    %v5439 = vmul.f32 %v5375, %v5375
    %v5440 = vmul.f32 %v5376, %v5376
    %v5441 = vmul.f32 %v5377, %v5377
    %v5442 = vmul.f32 %v5378, %v5378
    %v5443 = vmul.f32 %v5379, %v5379
    %v5444 = vmul.f32 %v5380, %v5380
    %v5445 = vmul.f32 %v5381, %v5381
    %v5446 = vmul.f32 %v5382, %v5382
    %v5447 = vmul.f32 %v5383, %v5383
    %v5448 = vmul.f32 %v5384, %v5384
    %v5449 = vmul.f32 %v5385, %v5385
    %v5450 = vmul.f32 %v5386, %v5386
    %v5451 = vmul.f32 %v5387, %v5387
    %v5452 = vmul.f32 %v5388, %v5388
    %v5453 = vmul.f32 %v5389, %v5389
    %v5454 = vmul.f32 %v5390, %v5390
    %v5455 = vmul.f32 %v5391, %v5391
    %v5456 = vmul.f32 %v5392, %v5392
    %v5457 = vmul.f32 %v5393, %v5393
    %v5458 = vmul.f32 %v5394, %v5394
    %v5459 = vmul.f32 %v5395, %v5395
    %v5460 = vmul.f32 %v5396, %v5396
    %v5461 = vmul.f32 %v5397, %v5397
    %v5462 = vmul.f32 %v5398, %v5398
    %v5463 = vmul.f32 %v5399, %v5399
    %v5464 = vmul.f32 %v5400, %v5400
    %v5465 = vmul.f32 %v5401, %v5401
    %v5466 = vmul.f32 %v5402, %v5402
    %v5467 = vmul.f32 %v5403, %v5403
    %v5468 = vmul.f32 %v5404, %v5404
    %v5469 = vmul.f32 %v5405, %v5405
    %v5470 = vmul.f32 %v5406, %v5406
    %v5471 = vmul.f32 %v5407, %v5407
    %v5472 = vmul.f32 %v5408, %v5408
    %v5473 = vmul.f32 %v5409, %v5409
    %v5474 = vmul.f32 %v5410, %v5410
    %v5475 = vmul.f32 %v5411, %v5411
    %v5476 = vmul.f32 %v5412, %v5412
    %v5477 = vsel %vm3900, %v5413, 0.0
    %v5478 = vsel %vm3900, %v5414, 0.0
    %v5479 = vadd.f32 %v5477, %v5478
    %v5480 = vsel %vm3900, %v5415, 0.0
    %v5481 = vadd.f32 %v5479, %v5480
    %v5482 = vsel %vm3900, %v5416, 0.0
    %v5483 = vadd.f32 %v5481, %v5482
    %v5484 = vsel %vm3900, %v5417, 0.0
    %v5485 = vadd.f32 %v5483, %v5484
    %v5486 = vsel %vm3900, %v5418, 0.0
    %v5487 = vadd.f32 %v5485, %v5486
    %v5488 = vsel %vm3900, %v5419, 0.0
    %v5489 = vadd.f32 %v5487, %v5488
    %v5490 = vsel %vm3900, %v5420, 0.0
    %v5491 = vadd.f32 %v5489, %v5490
    %v5492 = vsel %vm3900, %v5421, 0.0
    %v5493 = vadd.f32 %v5491, %v5492
    %v5494 = vsel %vm3900, %v5422, 0.0
    %v5495 = vadd.f32 %v5493, %v5494
    %v5496 = vsel %vm3900, %v5423, 0.0
    %v5497 = vadd.f32 %v5495, %v5496
    %v5498 = vsel %vm3900, %v5424, 0.0
    %v5499 = vadd.f32 %v5497, %v5498
    %v5500 = vsel %vm3900, %v5425, 0.0
    %v5501 = vadd.f32 %v5499, %v5500
    %v5502 = vsel %vm3900, %v5426, 0.0
    %v5503 = vadd.f32 %v5501, %v5502
    %v5504 = vsel %vm3900, %v5427, 0.0
    %v5505 = vadd.f32 %v5503, %v5504
    %v5506 = vsel %vm3900, %v5428, 0.0
    %v5507 = vadd.f32 %v5505, %v5506
    %v5508 = vsel %vm3900, %v5429, 0.0
    %v5509 = vadd.f32 %v5507, %v5508
    %v5510 = vsel %vm3900, %v5430, 0.0
    %v5511 = vadd.f32 %v5509, %v5510
    %v5512 = vsel %vm3900, %v5431, 0.0
    %v5513 = vadd.f32 %v5511, %v5512
    %v5514 = vsel %vm3900, %v5432, 0.0
    %v5515 = vadd.f32 %v5513, %v5514
    %v5516 = vsel %vm3900, %v5433, 0.0
    %v5517 = vadd.f32 %v5515, %v5516
    %v5518 = vsel %vm3900, %v5434, 0.0
    %v5519 = vadd.f32 %v5517, %v5518
    %v5520 = vsel %vm3900, %v5435, 0.0
    %v5521 = vadd.f32 %v5519, %v5520
    %v5522 = vsel %vm3900, %v5436, 0.0
    %v5523 = vadd.f32 %v5521, %v5522
    %v5524 = vsel %vm3900, %v5437, 0.0
    %v5525 = vadd.f32 %v5523, %v5524
    %v5526 = vsel %vm3900, %v5438, 0.0
    %v5527 = vadd.f32 %v5525, %v5526
    %v5528 = vsel %vm3900, %v5439, 0.0
    %v5529 = vadd.f32 %v5527, %v5528
    %v5530 = vsel %vm3900, %v5440, 0.0
    %v5531 = vadd.f32 %v5529, %v5530
    %v5532 = vsel %vm3900, %v5441, 0.0
    %v5533 = vadd.f32 %v5531, %v5532
    %v5534 = vsel %vm3900, %v5442, 0.0
    %v5535 = vadd.f32 %v5533, %v5534
    %v5536 = vsel %vm3900, %v5443, 0.0
    %v5537 = vadd.f32 %v5535, %v5536
    %v5538 = vsel %vm3900, %v5444, 0.0
    %v5539 = vadd.f32 %v5537, %v5538
    %v5540 = vsel %vm3900, %v5445, 0.0
    %v5541 = vadd.f32 %v5539, %v5540
    %v5542 = vsel %vm3900, %v5446, 0.0
    %v5543 = vadd.f32 %v5541, %v5542
    %v5544 = vsel %vm3900, %v5447, 0.0
    %v5545 = vadd.f32 %v5543, %v5544
    %v5546 = vsel %vm3900, %v5448, 0.0
    %v5547 = vadd.f32 %v5545, %v5546
    %v5548 = vsel %vm3900, %v5449, 0.0
    %v5549 = vadd.f32 %v5547, %v5548
    %v5550 = vsel %vm3900, %v5450, 0.0
    %v5551 = vadd.f32 %v5549, %v5550
    %v5552 = vsel %vm3900, %v5451, 0.0
    %v5553 = vadd.f32 %v5551, %v5552
    %v5554 = vsel %vm3900, %v5452, 0.0
    %v5555 = vadd.f32 %v5553, %v5554
    %v5556 = vsel %vm3900, %v5453, 0.0
    %v5557 = vadd.f32 %v5555, %v5556
    %v5558 = vsel %vm3900, %v5454, 0.0
    %v5559 = vadd.f32 %v5557, %v5558
    %v5560 = vsel %vm3900, %v5455, 0.0
    %v5561 = vadd.f32 %v5559, %v5560
    %v5562 = vsel %vm3900, %v5456, 0.0
    %v5563 = vadd.f32 %v5561, %v5562
    %v5564 = vsel %vm3900, %v5457, 0.0
    %v5565 = vadd.f32 %v5563, %v5564
    %v5566 = vsel %vm3900, %v5458, 0.0
    %v5567 = vadd.f32 %v5565, %v5566
    %v5568 = vsel %vm3900, %v5459, 0.0
    %v5569 = vadd.f32 %v5567, %v5568
    %v5570 = vsel %vm3900, %v5460, 0.0
    %v5571 = vadd.f32 %v5569, %v5570
    %v5572 = vsel %vm3900, %v5461, 0.0
    %v5573 = vadd.f32 %v5571, %v5572
    %v5574 = vsel %vm3900, %v5462, 0.0
    %v5575 = vadd.f32 %v5573, %v5574
    %v5576 = vsel %vm3900, %v5463, 0.0
    %v5577 = vadd.f32 %v5575, %v5576
    %v5578 = vsel %vm3900, %v5464, 0.0
    %v5579 = vadd.f32 %v5577, %v5578
    %v5580 = vsel %vm3900, %v5465, 0.0
    %v5581 = vadd.f32 %v5579, %v5580
    %v5582 = vsel %vm3900, %v5466, 0.0
    %v5583 = vadd.f32 %v5581, %v5582
    %v5584 = vsel %vm3900, %v5467, 0.0
    %v5585 = vadd.f32 %v5583, %v5584
    %v5586 = vsel %vm3900, %v5468, 0.0
    %v5587 = vadd.f32 %v5585, %v5586
    %v5588 = vsel %vm3900, %v5469, 0.0
    %v5589 = vadd.f32 %v5587, %v5588
    %v5590 = vsel %vm3900, %v5470, 0.0
    %v5591 = vadd.f32 %v5589, %v5590
    %v5592 = vsel %vm3900, %v5471, 0.0
    %v5593 = vadd.f32 %v5591, %v5592
    %v5594 = vsel %vm3900, %v5472, 0.0
    %v5595 = vadd.f32 %v5593, %v5594
    %v5596 = vsel %vm3900, %v5473, 0.0
    %v5597 = vadd.f32 %v5595, %v5596
    %v5598 = vsel %vm3900, %v5474, 0.0
    %v5599 = vadd.f32 %v5597, %v5598
    %v5600 = vsel %vm3900, %v5475, 0.0
    %v5601 = vadd.f32 %v5599, %v5600
    %v5602 = vsel %vm3900, %v5476, 0.0
    %v5603 = vadd.f32 %v5601, %v5602
    %v5604 = vrot.slane %v5603, 4
    %v5605 = vadd.f32 %v5603, %v5604
    %v5606 = vrot.slane %v5605, 2
    %v5607 = vadd.f32 %v5605, %v5606
    %v5608 = vrot.slane %v5607, 1
    %v5609 = vadd.f32 %v5607, %v5608
    %v5610 = vmul.f32 %v5609, %v4034
    %v5611 = vadd.f32 %v5610, 1e-05
    %v5612 = vrsqrt.pop %v5611
    %v5613 = vmul.f32 %v5349, %v5612
    %v5614 = vmul.f32 %v5350, %v5612
    %v5615 = vmul.f32 %v5351, %v5612
    %v5616 = vmul.f32 %v5352, %v5612
    %v5617 = vmul.f32 %v5353, %v5612
    %v5618 = vmul.f32 %v5354, %v5612
    %v5619 = vmul.f32 %v5355, %v5612
    %v5620 = vmul.f32 %v5356, %v5612
    %v5621 = vmul.f32 %v5357, %v5612
    %v5622 = vmul.f32 %v5358, %v5612
    %v5623 = vmul.f32 %v5359, %v5612
    %v5624 = vmul.f32 %v5360, %v5612
    %v5625 = vmul.f32 %v5361, %v5612
    %v5626 = vmul.f32 %v5362, %v5612
    %v5627 = vmul.f32 %v5363, %v5612
    %v5628 = vmul.f32 %v5364, %v5612
    %v5629 = vmul.f32 %v5365, %v5612
    %v5630 = vmul.f32 %v5366, %v5612
    %v5631 = vmul.f32 %v5367, %v5612
    %v5632 = vmul.f32 %v5368, %v5612
    %v5633 = vmul.f32 %v5369, %v5612
    %v5634 = vmul.f32 %v5370, %v5612
    %v5635 = vmul.f32 %v5371, %v5612
    %v5636 = vmul.f32 %v5372, %v5612
    %v5637 = vmul.f32 %v5373, %v5612
    %v5638 = vmul.f32 %v5374, %v5612
    %v5639 = vmul.f32 %v5375, %v5612
    %v5640 = vmul.f32 %v5376, %v5612
    %v5641 = vmul.f32 %v5377, %v5612
    %v5642 = vmul.f32 %v5378, %v5612
    %v5643 = vmul.f32 %v5379, %v5612
    %v5644 = vmul.f32 %v5380, %v5612
    %v5645 = vmul.f32 %v5381, %v5612
    %v5646 = vmul.f32 %v5382, %v5612
    %v5647 = vmul.f32 %v5383, %v5612
    %v5648 = vmul.f32 %v5384, %v5612
    %v5649 = vmul.f32 %v5385, %v5612
    %v5650 = vmul.f32 %v5386, %v5612
    %v5651 = vmul.f32 %v5387, %v5612
    %v5652 = vmul.f32 %v5388, %v5612
    %v5653 = vmul.f32 %v5389, %v5612
    %v5654 = vmul.f32 %v5390, %v5612
    %v5655 = vmul.f32 %v5391, %v5612
    %v5656 = vmul.f32 %v5392, %v5612
    %v5657 = vmul.f32 %v5393, %v5612
    %v5658 = vmul.f32 %v5394, %v5612
    %v5659 = vmul.f32 %v5395, %v5612
    %v5660 = vmul.f32 %v5396, %v5612
    %v5661 = vmul.f32 %v5397, %v5612
    %v5662 = vmul.f32 %v5398, %v5612
    %v5663 = vmul.f32 %v5399, %v5612
    %v5664 = vmul.f32 %v5400, %v5612
    %v5665 = vmul.f32 %v5401, %v5612
    %v5666 = vmul.f32 %v5402, %v5612
    %v5667 = vmul.f32 %v5403, %v5612
    %v5668 = vmul.f32 %v5404, %v5612
    %v5669 = vmul.f32 %v5405, %v5612
    %v5670 = vmul.f32 %v5406, %v5612
    %v5671 = vmul.f32 %v5407, %v5612
    %v5672 = vmul.f32 %v5408, %v5612
    %v5673 = vmul.f32 %v5409, %v5612
    %v5674 = vmul.f32 %v5410, %v5612
    %v5675 = vmul.f32 %v5411, %v5612
    %v5676 = vmul.f32 %v5412, %v5612
    %v5678 = vlaneseq
    %v5679 = vshrl.u32 %v5678, 7
    %v5680 = vsub.s32 0, %v5679
    %v5681 = vrot.slane %v5213, %v5680
    %v5683 = vmul.f32 %v5613, %v5681
    %v5684 = vmul.f32 %v5614, %v5681
    %v5685 = vmul.f32 %v5615, %v5681
    %v5686 = vmul.f32 %v5616, %v5681
    %v5687 = vmul.f32 %v5617, %v5681
    %v5688 = vmul.f32 %v5618, %v5681
    %v5689 = vmul.f32 %v5619, %v5681
    %v5690 = vmul.f32 %v5620, %v5681
    %v5691 = vmul.f32 %v5621, %v5681
    %v5692 = vmul.f32 %v5622, %v5681
    %v5693 = vmul.f32 %v5623, %v5681
    %v5694 = vmul.f32 %v5624, %v5681
    %v5695 = vmul.f32 %v5625, %v5681
    %v5696 = vmul.f32 %v5626, %v5681
    %v5697 = vmul.f32 %v5627, %v5681
    %v5698 = vmul.f32 %v5628, %v5681
    %v5699 = vmul.f32 %v5629, %v5681
    %v5700 = vmul.f32 %v5630, %v5681
    %v5701 = vmul.f32 %v5631, %v5681
    %v5702 = vmul.f32 %v5632, %v5681
    %v5703 = vmul.f32 %v5633, %v5681
    %v5704 = vmul.f32 %v5634, %v5681
    %v5705 = vmul.f32 %v5635, %v5681
    %v5706 = vmul.f32 %v5636, %v5681
    %v5707 = vmul.f32 %v5637, %v5681
    %v5708 = vmul.f32 %v5638, %v5681
    %v5709 = vmul.f32 %v5639, %v5681
    %v5710 = vmul.f32 %v5640, %v5681
    %v5711 = vmul.f32 %v5641, %v5681
    %v5712 = vmul.f32 %v5642, %v5681
    %v5713 = vmul.f32 %v5643, %v5681
    %v5714 = vmul.f32 %v5644, %v5681
    %v5715 = vmul.f32 %v5645, %v5681
    %v5716 = vmul.f32 %v5646, %v5681
    %v5717 = vmul.f32 %v5647, %v5681
    %v5718 = vmul.f32 %v5648, %v5681
    %v5719 = vmul.f32 %v5649, %v5681
    %v5720 = vmul.f32 %v5650, %v5681
    %v5721 = vmul.f32 %v5651, %v5681
    %v5722 = vmul.f32 %v5652, %v5681
    %v5723 = vmul.f32 %v5653, %v5681
    %v5724 = vmul.f32 %v5654, %v5681
    %v5725 = vmul.f32 %v5655, %v5681
    %v5726 = vmul.f32 %v5656, %v5681
    %v5727 = vmul.f32 %v5657, %v5681
    %v5728 = vmul.f32 %v5658, %v5681
    %v5729 = vmul.f32 %v5659, %v5681
    %v5730 = vmul.f32 %v5660, %v5681
    %v5731 = vmul.f32 %v5661, %v5681
    %v5732 = vmul.f32 %v5662, %v5681
    %v5733 = vmul.f32 %v5663, %v5681
    %v5734 = vmul.f32 %v5664, %v5681
    %v5735 = vmul.f32 %v5665, %v5681
    %v5736 = vmul.f32 %v5666, %v5681
    %v5737 = vmul.f32 %v5667, %v5681
    %v5738 = vmul.f32 %v5668, %v5681
    %v5739 = vmul.f32 %v5669, %v5681
    %v5740 = vmul.f32 %v5670, %v5681
    %v5741 = vmul.f32 %v5671, %v5681
    %v5742 = vmul.f32 %v5672, %v5681
    %v5743 = vmul.f32 %v5673, %v5681
    %v5744 = vmul.f32 %v5674, %v5681
    %v5745 = vmul.f32 %v5675, %v5681
    %v5746 = vmul.f32 %v5676, %v5681
    %v5748 = vlaneseq
    %v5749 = vshrl.u32 %v5748, 7
    %v5750 = vsub.s32 0, %v5749
    %v5751 = vrot.slane %v5214, %v5750
    %v5753 = vadd.f32 %v5683, %v5751
    %v5754 = vadd.f32 %v5684, %v5751
    %v5755 = vadd.f32 %v5685, %v5751
    %v5756 = vadd.f32 %v5686, %v5751
    %v5757 = vadd.f32 %v5687, %v5751
    %v5758 = vadd.f32 %v5688, %v5751
    %v5759 = vadd.f32 %v5689, %v5751
    %v5760 = vadd.f32 %v5690, %v5751
    %v5761 = vadd.f32 %v5691, %v5751
    %v5762 = vadd.f32 %v5692, %v5751
    %v5763 = vadd.f32 %v5693, %v5751
    %v5764 = vadd.f32 %v5694, %v5751
    %v5765 = vadd.f32 %v5695, %v5751
    %v5766 = vadd.f32 %v5696, %v5751
    %v5767 = vadd.f32 %v5697, %v5751
    %v5768 = vadd.f32 %v5698, %v5751
    %v5769 = vadd.f32 %v5699, %v5751
    %v5770 = vadd.f32 %v5700, %v5751
    %v5771 = vadd.f32 %v5701, %v5751
    %v5772 = vadd.f32 %v5702, %v5751
    %v5773 = vadd.f32 %v5703, %v5751
    %v5774 = vadd.f32 %v5704, %v5751
    %v5775 = vadd.f32 %v5705, %v5751
    %v5776 = vadd.f32 %v5706, %v5751
    %v5777 = vadd.f32 %v5707, %v5751
    %v5778 = vadd.f32 %v5708, %v5751
    %v5779 = vadd.f32 %v5709, %v5751
    %v5780 = vadd.f32 %v5710, %v5751
    %v5781 = vadd.f32 %v5711, %v5751
    %v5782 = vadd.f32 %v5712, %v5751
    %v5783 = vadd.f32 %v5713, %v5751
    %v5784 = vadd.f32 %v5714, %v5751
    %v5785 = vadd.f32 %v5715, %v5751
    %v5786 = vadd.f32 %v5716, %v5751
    %v5787 = vadd.f32 %v5717, %v5751
    %v5788 = vadd.f32 %v5718, %v5751
    %v5789 = vadd.f32 %v5719, %v5751
    %v5790 = vadd.f32 %v5720, %v5751
    %v5791 = vadd.f32 %v5721, %v5751
    %v5792 = vadd.f32 %v5722, %v5751
    %v5793 = vadd.f32 %v5723, %v5751
    %v5794 = vadd.f32 %v5724, %v5751
    %v5795 = vadd.f32 %v5725, %v5751
    %v5796 = vadd.f32 %v5726, %v5751
    %v5797 = vadd.f32 %v5727, %v5751
    %v5798 = vadd.f32 %v5728, %v5751
    %v5799 = vadd.f32 %v5729, %v5751
    %v5800 = vadd.f32 %v5730, %v5751
    %v5801 = vadd.f32 %v5731, %v5751
    %v5802 = vadd.f32 %v5732, %v5751
    %v5803 = vadd.f32 %v5733, %v5751
    %v5804 = vadd.f32 %v5734, %v5751
    %v5805 = vadd.f32 %v5735, %v5751
    %v5806 = vadd.f32 %v5736, %v5751
    %v5807 = vadd.f32 %v5737, %v5751
    %v5808 = vadd.f32 %v5738, %v5751
    %v5809 = vadd.f32 %v5739, %v5751
    %v5810 = vadd.f32 %v5740, %v5751
    %v5811 = vadd.f32 %v5741, %v5751
    %v5812 = vadd.f32 %v5742, %v5751
    %v5813 = vadd.f32 %v5743, %v5751
    %v5814 = vadd.f32 %v5744, %v5751
    %v5815 = vadd.f32 %v5745, %v5751
    %v5816 = vadd.f32 %v5746, %v5751
    %vm5817 = vcmask 588800
    %5818 = vst.msk [vmem:[#allocation3] sm:$0xff] %vm5817, 0.0
    %5819 = vst.msk [vmem:[#allocation3 + $0x8] sm:$0xff] %vm5817, 0.0
    %5820 = vst.msk [vmem:[#allocation3 + $0x10] sm:$0xff] %vm5817, 0.0
    %5821 = vst.msk [vmem:[#allocation3 + $0x18] sm:$0xff] %vm5817, 0.0
    %5822 = vst.msk [vmem:[#allocation3 + $0x20] sm:$0xff] %vm5817, 0.0
    %5823 = vst.msk [vmem:[#allocation3 + $0x28] sm:$0xff] %vm5817, 0.0
    %5824 = vst.msk [vmem:[#allocation3 + $0x30] sm:$0xff] %vm5817, 0.0
    %5825 = vst.msk [vmem:[#allocation3 + $0x38] sm:$0xff] %vm5817, 0.0
    %5826 = vst.msk [vmem:[#allocation3 + $0x40] sm:$0xff] %vm5817, 0.0
    %5827 = vst.msk [vmem:[#allocation3 + $0x48] sm:$0xff] %vm5817, 0.0
    %5828 = vst.msk [vmem:[#allocation3 + $0x50] sm:$0xff] %vm5817, 0.0
    %5829 = vst.msk [vmem:[#allocation3 + $0x58] sm:$0xff] %vm5817, 0.0
    %5830 = vst.msk [vmem:[#allocation3 + $0x60] sm:$0xff] %vm5817, 0.0
    %5831 = vst.msk [vmem:[#allocation3 + $0x68] sm:$0xff] %vm5817, 0.0
    %5832 = vst.msk [vmem:[#allocation3 + $0x70] sm:$0xff] %vm5817, 0.0
    %5833 = vst.msk [vmem:[#allocation3 + $0x78] sm:$0xff] %vm5817, 0.0
    %5834 = vst.msk [vmem:[#allocation3 + $0x80] sm:$0xff] %vm5817, 0.0
    %5835 = vst.msk [vmem:[#allocation3 + $0x88] sm:$0xff] %vm5817, 0.0
    %5836 = vst.msk [vmem:[#allocation3 + $0x90] sm:$0xff] %vm5817, 0.0
    %5837 = vst.msk [vmem:[#allocation3 + $0x98] sm:$0xff] %vm5817, 0.0
    %5838 = vst.msk [vmem:[#allocation3 + $0xa0] sm:$0xff] %vm5817, 0.0
    %5839 = vst.msk [vmem:[#allocation3 + $0xa8] sm:$0xff] %vm5817, 0.0
    %5840 = vst.msk [vmem:[#allocation3 + $0xb0] sm:$0xff] %vm5817, 0.0
    %5841 = vst.msk [vmem:[#allocation3 + $0xb8] sm:$0xff] %vm5817, 0.0
    %5842 = vst.msk [vmem:[#allocation3 + $0xc0] sm:$0xff] %vm5817, 0.0
    %5843 = vst.msk [vmem:[#allocation3 + $0xc8] sm:$0xff] %vm5817, 0.0
    %5844 = vst.msk [vmem:[#allocation3 + $0xd0] sm:$0xff] %vm5817, 0.0
    %5845 = vst.msk [vmem:[#allocation3 + $0xd8] sm:$0xff] %vm5817, 0.0
    %5846 = vst.msk [vmem:[#allocation3 + $0xe0] sm:$0xff] %vm5817, 0.0
    %5847 = vst.msk [vmem:[#allocation3 + $0xe8] sm:$0xff] %vm5817, 0.0
    %5848 = vst.msk [vmem:[#allocation3 + $0xf0] sm:$0xff] %vm5817, 0.0
    %5849 = vst.msk [vmem:[#allocation3 + $0xf8] sm:$0xff] %vm5817, 0.0
    %5850 = vst.msk [vmem:[#allocation3 + $0x100] sm:$0xff] %vm5817, 0.0
    %5851 = vst.msk [vmem:[#allocation3 + $0x108] sm:$0xff] %vm5817, 0.0
    %5852 = vst.msk [vmem:[#allocation3 + $0x110] sm:$0xff] %vm5817, 0.0
    %5853 = vst.msk [vmem:[#allocation3 + $0x118] sm:$0xff] %vm5817, 0.0
    %5854 = vst.msk [vmem:[#allocation3 + $0x120] sm:$0xff] %vm5817, 0.0
    %5855 = vst.msk [vmem:[#allocation3 + $0x128] sm:$0xff] %vm5817, 0.0
    %5856 = vst.msk [vmem:[#allocation3 + $0x130] sm:$0xff] %vm5817, 0.0
    %5857 = vst.msk [vmem:[#allocation3 + $0x138] sm:$0xff] %vm5817, 0.0
    %5858 = vst.msk [vmem:[#allocation3 + $0x140] sm:$0xff] %vm5817, 0.0
    %5859 = vst.msk [vmem:[#allocation3 + $0x148] sm:$0xff] %vm5817, 0.0
    %5860 = vst.msk [vmem:[#allocation3 + $0x150] sm:$0xff] %vm5817, 0.0
    %5861 = vst.msk [vmem:[#allocation3 + $0x158] sm:$0xff] %vm5817, 0.0
    %5862 = vst.msk [vmem:[#allocation3 + $0x160] sm:$0xff] %vm5817, 0.0
    %5863 = vst.msk [vmem:[#allocation3 + $0x168] sm:$0xff] %vm5817, 0.0
    %5864 = vst.msk [vmem:[#allocation3 + $0x170] sm:$0xff] %vm5817, 0.0
    %5865 = vst.msk [vmem:[#allocation3 + $0x178] sm:$0xff] %vm5817, 0.0
    %5866 = vst.msk [vmem:[#allocation3 + $0x180] sm:$0xff] %vm5817, 0.0
    %5867 = vst.msk [vmem:[#allocation3 + $0x188] sm:$0xff] %vm5817, 0.0
    %5868 = vst.msk [vmem:[#allocation3 + $0x190] sm:$0xff] %vm5817, 0.0
    %5869 = vst.msk [vmem:[#allocation3 + $0x198] sm:$0xff] %vm5817, 0.0
    %5870 = vst.msk [vmem:[#allocation3 + $0x1a0] sm:$0xff] %vm5817, 0.0
    %5871 = vst.msk [vmem:[#allocation3 + $0x1a8] sm:$0xff] %vm5817, 0.0
    %5872 = vst.msk [vmem:[#allocation3 + $0x1b0] sm:$0xff] %vm5817, 0.0
    %5873 = vst.msk [vmem:[#allocation3 + $0x1b8] sm:$0xff] %vm5817, 0.0
    %5874 = vst.msk [vmem:[#allocation3 + $0x1c0] sm:$0xff] %vm5817, 0.0
    %5875 = vst.msk [vmem:[#allocation3 + $0x1c8] sm:$0xff] %vm5817, 0.0
    %5876 = vst.msk [vmem:[#allocation3 + $0x1d0] sm:$0xff] %vm5817, 0.0
    %5877 = vst.msk [vmem:[#allocation3 + $0x1d8] sm:$0xff] %vm5817, 0.0
    %5878 = vst.msk [vmem:[#allocation3 + $0x1e0] sm:$0xff] %vm5817, 0.0
    %5879 = vst.msk [vmem:[#allocation3 + $0x1e8] sm:$0xff] %vm5817, 0.0
    %5880 = vst.msk [vmem:[#allocation3 + $0x1f0] sm:$0xff] %vm5817, 0.0
    %5881 = vst.msk [vmem:[#allocation3 + $0x1f8] sm:$0xff] %vm5817, 0.0
    %s5882 = scalar_lea.vmem [#allocation3], 16
    %5883 = vst.msk [vmem:[%s5882 + $0x1] sm:$0xff] %vm3900, %v4504
    %vm5884 = vcmask 63488
    %5885 = vst.msk [vmem:[%s5882 + $0x9] sm:$0x7f] %vm5884, %v4505
    %5886 = vst.msk [vmem:[%s5882 + $0x11] sm:$0xff] %vm3900, %v4506
    %5887 = vst.msk [vmem:[%s5882 + $0x19] sm:$0x7f] %vm5884, %v4507
    %5888 = vst.msk [vmem:[%s5882 + $0x21] sm:$0xff] %vm3900, %v4508
    %5889 = vst.msk [vmem:[%s5882 + $0x29] sm:$0x7f] %vm5884, %v4509
    %5890 = vst.msk [vmem:[%s5882 + $0x31] sm:$0xff] %vm3900, %v4510
    %5891 = vst.msk [vmem:[%s5882 + $0x39] sm:$0x7f] %vm5884, %v4511
    %5892 = vst.msk [vmem:[%s5882 + $0x41] sm:$0xff] %vm3900, %v4512
    %5893 = vst.msk [vmem:[%s5882 + $0x49] sm:$0x7f] %vm5884, %v4513
    %5894 = vst.msk [vmem:[%s5882 + $0x51] sm:$0xff] %vm3900, %v4514
    %5895 = vst.msk [vmem:[%s5882 + $0x59] sm:$0x7f] %vm5884, %v4515
    %5896 = vst.msk [vmem:[%s5882 + $0x61] sm:$0xff] %vm3900, %v4516
    %5897 = vst.msk [vmem:[%s5882 + $0x69] sm:$0x7f] %vm5884, %v4517
    %5898 = vst.msk [vmem:[%s5882 + $0x71] sm:$0xff] %vm3900, %v4518
    %5899 = vst.msk [vmem:[%s5882 + $0x79] sm:$0x7f] %vm5884, %v4519
    %5900 = vst.msk [vmem:[%s5882 + $0x81] sm:$0xff] %vm3900, %v4520
    %5901 = vst.msk [vmem:[%s5882 + $0x89] sm:$0x7f] %vm5884, %v4521
    %5902 = vst.msk [vmem:[%s5882 + $0x91] sm:$0xff] %vm3900, %v4522
    %5903 = vst.msk [vmem:[%s5882 + $0x99] sm:$0x7f] %vm5884, %v4523
    %5904 = vst.msk [vmem:[%s5882 + $0xa1] sm:$0xff] %vm3900, %v4524
    %5905 = vst.msk [vmem:[%s5882 + $0xa9] sm:$0x7f] %vm5884, %v4525
    %5906 = vst.msk [vmem:[%s5882 + $0xb1] sm:$0xff] %vm3900, %v4526
    %5907 = vst.msk [vmem:[%s5882 + $0xb9] sm:$0x7f] %vm5884, %v4527
    %5908 = vst.msk [vmem:[%s5882 + $0xc1] sm:$0xff] %vm3900, %v4528
    %5909 = vst.msk [vmem:[%s5882 + $0xc9] sm:$0x7f] %vm5884, %v4529
    %5910 = vst.msk [vmem:[%s5882 + $0xd1] sm:$0xff] %vm3900, %v4530
    %5911 = vst.msk [vmem:[%s5882 + $0xd9] sm:$0x7f] %vm5884, %v4531
    %5912 = vst.msk [vmem:[%s5882 + $0xe1] sm:$0xff] %vm3900, %v4532
    %5913 = vst.msk [vmem:[%s5882 + $0xe9] sm:$0x7f] %vm5884, %v4533
    %5914 = vst.msk [vmem:[%s5882 + $0x101] sm:$0xff] %vm3900, %v4536
    %5915 = vst.msk [vmem:[%s5882 + $0x109] sm:$0x7f] %vm5884, %v4537
    %5916 = vst.msk [vmem:[%s5882 + $0x111] sm:$0xff] %vm3900, %v4538
    %5917 = vst.msk [vmem:[%s5882 + $0x119] sm:$0x7f] %vm5884, %v4539
    %5918 = vst.msk [vmem:[%s5882 + $0x121] sm:$0xff] %vm3900, %v4540
    %5919 = vst.msk [vmem:[%s5882 + $0x129] sm:$0x7f] %vm5884, %v4541
    %5920 = vst.msk [vmem:[%s5882 + $0x131] sm:$0xff] %vm3900, %v4542
    %5921 = vst.msk [vmem:[%s5882 + $0x139] sm:$0x7f] %vm5884, %v4543
    %5922 = vst.msk [vmem:[%s5882 + $0x141] sm:$0xff] %vm3900, %v4544
    %5923 = vst.msk [vmem:[%s5882 + $0x149] sm:$0x7f] %vm5884, %v4545
    %5924 = vst.msk [vmem:[%s5882 + $0x151] sm:$0xff] %vm3900, %v4546
    %5925 = vst.msk [vmem:[%s5882 + $0x159] sm:$0x7f] %vm5884, %v4547
    %5926 = vst.msk [vmem:[%s5882 + $0x161] sm:$0xff] %vm3900, %v4548
    %5927 = vst.msk [vmem:[%s5882 + $0x169] sm:$0x7f] %vm5884, %v4549
    %5928 = vst.msk [vmem:[%s5882 + $0x171] sm:$0xff] %vm3900, %v4550
    %5929 = vst.msk [vmem:[%s5882 + $0x179] sm:$0x7f] %vm5884, %v4551
    %5930 = vst.msk [vmem:[%s5882 + $0x181] sm:$0xff] %vm3900, %v4552
    %5931 = vst.msk [vmem:[%s5882 + $0x189] sm:$0x7f] %vm5884, %v4553
    %5932 = vst.msk [vmem:[%s5882 + $0x191] sm:$0xff] %vm3900, %v4554
    %5933 = vst.msk [vmem:[%s5882 + $0x199] sm:$0x7f] %vm5884, %v4555
    %5934 = vst.msk [vmem:[%s5882 + $0x1a1] sm:$0xff] %vm3900, %v4556
    %5935 = vst.msk [vmem:[%s5882 + $0x1a9] sm:$0x7f] %vm5884, %v4557
    %5936 = vst.msk [vmem:[%s5882 + $0x1b1] sm:$0xff] %vm3900, %v4558
    %5937 = vst.msk [vmem:[%s5882 + $0x1b9] sm:$0x7f] %vm5884, %v4559
    %5938 = vst.msk [vmem:[%s5882 + $0x1c1] sm:$0xff] %vm3900, %v4560
    %5939 = vst.msk [vmem:[%s5882 + $0x1c9] sm:$0x7f] %vm5884, %v4561
    %5940 = vst.msk [vmem:[%s5882 + $0x1d1] sm:$0xff] %vm3900, %v4562
    %5941 = vst.msk [vmem:[%s5882 + $0x1d9] sm:$0x7f] %vm5884, %v4563
    %5942 = vst.msk [vmem:[%s5882 + $0x1e1] sm:$0xff] %vm3900, %v4564
    %5943 = vst.msk [vmem:[%s5882 + $0x1e9] sm:$0x7f] %vm5884, %v4565
    %6004 = vrot.lane.b32.xlu0 %v4504, 8
    %v6005 = vpop.permute.xlu0 %6004
    %6006 = vrot.lane.b32.xlu0 %v4505, 8
    %v6007 = vpop.permute.xlu0 %6006
    %6008 = vrot.lane.b32.xlu0 %v4506, 8
    %v6009 = vpop.permute.xlu0 %6008
    %6010 = vrot.lane.b32.xlu0 %v4507, 8
    %v6011 = vpop.permute.xlu0 %6010
    %6012 = vrot.lane.b32.xlu0 %v4508, 8
    %v6013 = vpop.permute.xlu0 %6012
    %6014 = vrot.lane.b32.xlu0 %v4509, 8
    %v6015 = vpop.permute.xlu0 %6014
    %6016 = vrot.lane.b32.xlu0 %v4510, 8
    %v6017 = vpop.permute.xlu0 %6016
    %6018 = vrot.lane.b32.xlu0 %v4511, 8
    %v6019 = vpop.permute.xlu0 %6018
    %6020 = vrot.lane.b32.xlu0 %v4512, 8
    %v6021 = vpop.permute.xlu0 %6020
    %6022 = vrot.lane.b32.xlu0 %v4513, 8
    %v6023 = vpop.permute.xlu0 %6022
    %6024 = vrot.lane.b32.xlu0 %v4514, 8
    %v6025 = vpop.permute.xlu0 %6024
    %6026 = vrot.lane.b32.xlu0 %v4515, 8
    %v6027 = vpop.permute.xlu0 %6026
    %6028 = vrot.lane.b32.xlu0 %v4516, 8
    %v6029 = vpop.permute.xlu0 %6028
    %6030 = vrot.lane.b32.xlu0 %v4517, 8
    %v6031 = vpop.permute.xlu0 %6030
    %6032 = vrot.lane.b32.xlu0 %v4518, 8
    %v6033 = vpop.permute.xlu0 %6032
    %6034 = vrot.lane.b32.xlu0 %v4519, 8
    %v6035 = vpop.permute.xlu0 %6034
    %6036 = vrot.lane.b32.xlu0 %v4520, 8
    %v6037 = vpop.permute.xlu0 %6036
    %6038 = vrot.lane.b32.xlu0 %v4521, 8
    %v6039 = vpop.permute.xlu0 %6038
    %6040 = vrot.lane.b32.xlu0 %v4522, 8
    %v6041 = vpop.permute.xlu0 %6040
    %6042 = vrot.lane.b32.xlu0 %v4523, 8
    %v6043 = vpop.permute.xlu0 %6042
    %6044 = vrot.lane.b32.xlu0 %v4524, 8
    %v6045 = vpop.permute.xlu0 %6044
    %6046 = vrot.lane.b32.xlu0 %v4525, 8
    %v6047 = vpop.permute.xlu0 %6046
    %6048 = vrot.lane.b32.xlu0 %v4526, 8
    %v6049 = vpop.permute.xlu0 %6048
    %6050 = vrot.lane.b32.xlu0 %v4527, 8
    %v6051 = vpop.permute.xlu0 %6050
    %6052 = vrot.lane.b32.xlu0 %v4528, 8
    %v6053 = vpop.permute.xlu0 %6052
    %6054 = vrot.lane.b32.xlu0 %v4529, 8
    %v6055 = vpop.permute.xlu0 %6054
    %6056 = vrot.lane.b32.xlu0 %v4530, 8
    %v6057 = vpop.permute.xlu0 %6056
    %6058 = vrot.lane.b32.xlu0 %v4531, 8
    %v6059 = vpop.permute.xlu0 %6058
    %6060 = vrot.lane.b32.xlu0 %v4532, 8
    %v6061 = vpop.permute.xlu0 %6060
    %6062 = vrot.lane.b32.xlu0 %v4533, 8
    %v6063 = vpop.permute.xlu0 %6062
    %6064 = vrot.lane.b32.xlu0 %v4536, 8
    %v6065 = vpop.permute.xlu0 %6064
    %6066 = vrot.lane.b32.xlu0 %v4537, 8
    %v6067 = vpop.permute.xlu0 %6066
    %6068 = vrot.lane.b32.xlu0 %v4538, 8
    %v6069 = vpop.permute.xlu0 %6068
    %6070 = vrot.lane.b32.xlu0 %v4539, 8
    %v6071 = vpop.permute.xlu0 %6070
    %6072 = vrot.lane.b32.xlu0 %v4540, 8
    %v6073 = vpop.permute.xlu0 %6072
    %6074 = vrot.lane.b32.xlu0 %v4541, 8
    %v6075 = vpop.permute.xlu0 %6074
    %6076 = vrot.lane.b32.xlu0 %v4542, 8
    %v6077 = vpop.permute.xlu0 %6076
    %6078 = vrot.lane.b32.xlu0 %v4543, 8
    %v6079 = vpop.permute.xlu0 %6078
    %6080 = vrot.lane.b32.xlu0 %v4544, 8
    %v6081 = vpop.permute.xlu0 %6080
    %6082 = vrot.lane.b32.xlu0 %v4545, 8
    %v6083 = vpop.permute.xlu0 %6082
    %6084 = vrot.lane.b32.xlu0 %v4546, 8
    %v6085 = vpop.permute.xlu0 %6084
    %6086 = vrot.lane.b32.xlu0 %v4547, 8
    %v6087 = vpop.permute.xlu0 %6086
    %6088 = vrot.lane.b32.xlu0 %v4548, 8
    %v6089 = vpop.permute.xlu0 %6088
    %6090 = vrot.lane.b32.xlu0 %v4549, 8
    %v6091 = vpop.permute.xlu0 %6090
    %6092 = vrot.lane.b32.xlu0 %v4550, 8
    %v6093 = vpop.permute.xlu0 %6092
    %6094 = vrot.lane.b32.xlu0 %v4551, 8
    %v6095 = vpop.permute.xlu0 %6094
    %6096 = vrot.lane.b32.xlu0 %v4552, 8
    %v6097 = vpop.permute.xlu0 %6096
    %6098 = vrot.lane.b32.xlu0 %v4553, 8
    %v6099 = vpop.permute.xlu0 %6098
    %6100 = vrot.lane.b32.xlu0 %v4554, 8
    %v6101 = vpop.permute.xlu0 %6100
    %6102 = vrot.lane.b32.xlu0 %v4555, 8
    %v6103 = vpop.permute.xlu0 %6102
    %6104 = vrot.lane.b32.xlu0 %v4556, 8
    %v6105 = vpop.permute.xlu0 %6104
    %6106 = vrot.lane.b32.xlu0 %v4557, 8
    %v6107 = vpop.permute.xlu0 %6106
    %6108 = vrot.lane.b32.xlu0 %v4558, 8
    %v6109 = vpop.permute.xlu0 %6108
    %6110 = vrot.lane.b32.xlu0 %v4559, 8
    %v6111 = vpop.permute.xlu0 %6110
    %6112 = vrot.lane.b32.xlu0 %v4560, 8
    %v6113 = vpop.permute.xlu0 %6112
    %6114 = vrot.lane.b32.xlu0 %v4561, 8
    %v6115 = vpop.permute.xlu0 %6114
    %6116 = vrot.lane.b32.xlu0 %v4562, 8
    %v6117 = vpop.permute.xlu0 %6116
    %6118 = vrot.lane.b32.xlu0 %v4563, 8
    %v6119 = vpop.permute.xlu0 %6118
    %6120 = vrot.lane.b32.xlu0 %v4564, 8
    %v6121 = vpop.permute.xlu0 %6120
    %6122 = vrot.lane.b32.xlu0 %v4565, 8
    %v6123 = vpop.permute.xlu0 %6122
    %vm6184 = vcmask 130112
    %6185 = vst.msk [vmem:[%s5882] sm:$0xff] %vm6184, %v6005
    %6186 = vst.msk [vmem:[%s5882 + $0x8] sm:$0xff] %vm6184, %v6007
    %6187 = vst.msk [vmem:[%s5882 + $0x10] sm:$0xff] %vm6184, %v6009
    %6188 = vst.msk [vmem:[%s5882 + $0x18] sm:$0xff] %vm6184, %v6011
    %6189 = vst.msk [vmem:[%s5882 + $0x20] sm:$0xff] %vm6184, %v6013
    %6190 = vst.msk [vmem:[%s5882 + $0x28] sm:$0xff] %vm6184, %v6015
    %6191 = vst.msk [vmem:[%s5882 + $0x30] sm:$0xff] %vm6184, %v6017
    %6192 = vst.msk [vmem:[%s5882 + $0x38] sm:$0xff] %vm6184, %v6019
    %6193 = vst.msk [vmem:[%s5882 + $0x40] sm:$0xff] %vm6184, %v6021
    %6194 = vst.msk [vmem:[%s5882 + $0x48] sm:$0xff] %vm6184, %v6023
    %6195 = vst.msk [vmem:[%s5882 + $0x50] sm:$0xff] %vm6184, %v6025
    %6196 = vst.msk [vmem:[%s5882 + $0x58] sm:$0xff] %vm6184, %v6027
    %6197 = vst.msk [vmem:[%s5882 + $0x60] sm:$0xff] %vm6184, %v6029
    %6198 = vst.msk [vmem:[%s5882 + $0x68] sm:$0xff] %vm6184, %v6031
    %6199 = vst.msk [vmem:[%s5882 + $0x70] sm:$0xff] %vm6184, %v6033
    %6200 = vst.msk [vmem:[%s5882 + $0x78] sm:$0xff] %vm6184, %v6035
    %6201 = vst.msk [vmem:[%s5882 + $0x80] sm:$0xff] %vm6184, %v6037
    %6202 = vst.msk [vmem:[%s5882 + $0x88] sm:$0xff] %vm6184, %v6039
    %6203 = vst.msk [vmem:[%s5882 + $0x90] sm:$0xff] %vm6184, %v6041
    %6204 = vst.msk [vmem:[%s5882 + $0x98] sm:$0xff] %vm6184, %v6043
    %6205 = vst.msk [vmem:[%s5882 + $0xa0] sm:$0xff] %vm6184, %v6045
    %6206 = vst.msk [vmem:[%s5882 + $0xa8] sm:$0xff] %vm6184, %v6047
    %6207 = vst.msk [vmem:[%s5882 + $0xb0] sm:$0xff] %vm6184, %v6049
    %6208 = vst.msk [vmem:[%s5882 + $0xb8] sm:$0xff] %vm6184, %v6051
    %6209 = vst.msk [vmem:[%s5882 + $0xc0] sm:$0xff] %vm6184, %v6053
    %6210 = vst.msk [vmem:[%s5882 + $0xc8] sm:$0xff] %vm6184, %v6055
    %6211 = vst.msk [vmem:[%s5882 + $0xd0] sm:$0xff] %vm6184, %v6057
    %6212 = vst.msk [vmem:[%s5882 + $0xd8] sm:$0xff] %vm6184, %v6059
    %6213 = vst.msk [vmem:[%s5882 + $0xe0] sm:$0xff] %vm6184, %v6061
    %6214 = vst.msk [vmem:[%s5882 + $0xe8] sm:$0xff] %vm6184, %v6063
    %6215 = vst.msk [vmem:[%s5882 + $0x100] sm:$0xff] %vm6184, %v6065
    %6216 = vst.msk [vmem:[%s5882 + $0x108] sm:$0xff] %vm6184, %v6067
    %6217 = vst.msk [vmem:[%s5882 + $0x110] sm:$0xff] %vm6184, %v6069
    %6218 = vst.msk [vmem:[%s5882 + $0x118] sm:$0xff] %vm6184, %v6071
    %6219 = vst.msk [vmem:[%s5882 + $0x120] sm:$0xff] %vm6184, %v6073
    %6220 = vst.msk [vmem:[%s5882 + $0x128] sm:$0xff] %vm6184, %v6075
    %6221 = vst.msk [vmem:[%s5882 + $0x130] sm:$0xff] %vm6184, %v6077
    %6222 = vst.msk [vmem:[%s5882 + $0x138] sm:$0xff] %vm6184, %v6079
    %6223 = vst.msk [vmem:[%s5882 + $0x140] sm:$0xff] %vm6184, %v6081
    %6224 = vst.msk [vmem:[%s5882 + $0x148] sm:$0xff] %vm6184, %v6083
    %6225 = vst.msk [vmem:[%s5882 + $0x150] sm:$0xff] %vm6184, %v6085
    %6226 = vst.msk [vmem:[%s5882 + $0x158] sm:$0xff] %vm6184, %v6087
    %6227 = vst.msk [vmem:[%s5882 + $0x160] sm:$0xff] %vm6184, %v6089
    %6228 = vst.msk [vmem:[%s5882 + $0x168] sm:$0xff] %vm6184, %v6091
    %6229 = vst.msk [vmem:[%s5882 + $0x170] sm:$0xff] %vm6184, %v6093
    %6230 = vst.msk [vmem:[%s5882 + $0x178] sm:$0xff] %vm6184, %v6095
    %6231 = vst.msk [vmem:[%s5882 + $0x180] sm:$0xff] %vm6184, %v6097
    %6232 = vst.msk [vmem:[%s5882 + $0x188] sm:$0xff] %vm6184, %v6099
    %6233 = vst.msk [vmem:[%s5882 + $0x190] sm:$0xff] %vm6184, %v6101
    %6234 = vst.msk [vmem:[%s5882 + $0x198] sm:$0xff] %vm6184, %v6103
    %6235 = vst.msk [vmem:[%s5882 + $0x1a0] sm:$0xff] %vm6184, %v6105
    %6236 = vst.msk [vmem:[%s5882 + $0x1a8] sm:$0xff] %vm6184, %v6107
    %6237 = vst.msk [vmem:[%s5882 + $0x1b0] sm:$0xff] %vm6184, %v6109
    %6238 = vst.msk [vmem:[%s5882 + $0x1b8] sm:$0xff] %vm6184, %v6111
    %6239 = vst.msk [vmem:[%s5882 + $0x1c0] sm:$0xff] %vm6184, %v6113
    %6240 = vst.msk [vmem:[%s5882 + $0x1c8] sm:$0xff] %vm6184, %v6115
    %6241 = vst.msk [vmem:[%s5882 + $0x1d0] sm:$0xff] %vm6184, %v6117
    %6242 = vst.msk [vmem:[%s5882 + $0x1d8] sm:$0xff] %vm6184, %v6119
    %6243 = vst.msk [vmem:[%s5882 + $0x1e0] sm:$0xff] %vm6184, %v6121
    %6244 = vst.msk [vmem:[%s5882 + $0x1e8] sm:$0xff] %vm6184, %v6123
    %6245 = vrot.lane.b32.xlu0 %v4504, 16
    %v6246 = vpop.permute.xlu0 %6245
    %6247 = vrot.lane.b32.xlu0 %v4505, 16
    %v6248 = vpop.permute.xlu0 %6247
    %6249 = vrot.lane.b32.xlu0 %v4506, 16
    %v6250 = vpop.permute.xlu0 %6249
    %6251 = vrot.lane.b32.xlu0 %v4507, 16
    %v6252 = vpop.permute.xlu0 %6251
    %6253 = vrot.lane.b32.xlu0 %v4508, 16
    %v6254 = vpop.permute.xlu0 %6253
    %6255 = vrot.lane.b32.xlu0 %v4509, 16
    %v6256 = vpop.permute.xlu0 %6255
    %6257 = vrot.lane.b32.xlu0 %v4510, 16
    %v6258 = vpop.permute.xlu0 %6257
    %6259 = vrot.lane.b32.xlu0 %v4511, 16
    %v6260 = vpop.permute.xlu0 %6259
    %6261 = vrot.lane.b32.xlu0 %v4512, 16
    %v6262 = vpop.permute.xlu0 %6261
    %6263 = vrot.lane.b32.xlu0 %v4513, 16
    %v6264 = vpop.permute.xlu0 %6263
    %6265 = vrot.lane.b32.xlu0 %v4514, 16
    %v6266 = vpop.permute.xlu0 %6265
    %6267 = vrot.lane.b32.xlu0 %v4515, 16
    %v6268 = vpop.permute.xlu0 %6267
    %6269 = vrot.lane.b32.xlu0 %v4516, 16
    %v6270 = vpop.permute.xlu0 %6269
    %6271 = vrot.lane.b32.xlu0 %v4517, 16
    %v6272 = vpop.permute.xlu0 %6271
    %6273 = vrot.lane.b32.xlu0 %v4518, 16
    %v6274 = vpop.permute.xlu0 %6273
    %6275 = vrot.lane.b32.xlu0 %v4519, 16
    %v6276 = vpop.permute.xlu0 %6275
    %6277 = vrot.lane.b32.xlu0 %v4520, 16
    %v6278 = vpop.permute.xlu0 %6277
    %6279 = vrot.lane.b32.xlu0 %v4521, 16
    %v6280 = vpop.permute.xlu0 %6279
    %6281 = vrot.lane.b32.xlu0 %v4522, 16
    %v6282 = vpop.permute.xlu0 %6281
    %6283 = vrot.lane.b32.xlu0 %v4523, 16
    %v6284 = vpop.permute.xlu0 %6283
    %6285 = vrot.lane.b32.xlu0 %v4524, 16
    %v6286 = vpop.permute.xlu0 %6285
    %6287 = vrot.lane.b32.xlu0 %v4525, 16
    %v6288 = vpop.permute.xlu0 %6287
    %6289 = vrot.lane.b32.xlu0 %v4526, 16
    %v6290 = vpop.permute.xlu0 %6289
    %6291 = vrot.lane.b32.xlu0 %v4527, 16
    %v6292 = vpop.permute.xlu0 %6291
    %6293 = vrot.lane.b32.xlu0 %v4528, 16
    %v6294 = vpop.permute.xlu0 %6293
    %6295 = vrot.lane.b32.xlu0 %v4529, 16
    %v6296 = vpop.permute.xlu0 %6295
    %6297 = vrot.lane.b32.xlu0 %v4530, 16
    %v6298 = vpop.permute.xlu0 %6297
    %6299 = vrot.lane.b32.xlu0 %v4531, 16
    %v6300 = vpop.permute.xlu0 %6299
    %6301 = vrot.lane.b32.xlu0 %v4532, 16
    %v6302 = vpop.permute.xlu0 %6301
    %6303 = vrot.lane.b32.xlu0 %v4533, 16
    %v6304 = vpop.permute.xlu0 %6303
    %6305 = vrot.lane.b32.xlu0 %v4536, 16
    %v6306 = vpop.permute.xlu0 %6305
    %6307 = vrot.lane.b32.xlu0 %v4537, 16
    %v6308 = vpop.permute.xlu0 %6307
    %6309 = vrot.lane.b32.xlu0 %v4538, 16
    %v6310 = vpop.permute.xlu0 %6309
    %6311 = vrot.lane.b32.xlu0 %v4539, 16
    %v6312 = vpop.permute.xlu0 %6311
    %6313 = vrot.lane.b32.xlu0 %v4540, 16
    %v6314 = vpop.permute.xlu0 %6313
    %6315 = vrot.lane.b32.xlu0 %v4541, 16
    %v6316 = vpop.permute.xlu0 %6315
    %6317 = vrot.lane.b32.xlu0 %v4542, 16
    %v6318 = vpop.permute.xlu0 %6317
    %6319 = vrot.lane.b32.xlu0 %v4543, 16
    %v6320 = vpop.permute.xlu0 %6319
    %6321 = vrot.lane.b32.xlu0 %v4544, 16
    %v6322 = vpop.permute.xlu0 %6321
    %6323 = vrot.lane.b32.xlu0 %v4545, 16
    %v6324 = vpop.permute.xlu0 %6323
    %6325 = vrot.lane.b32.xlu0 %v4546, 16
    %v6326 = vpop.permute.xlu0 %6325
    %6327 = vrot.lane.b32.xlu0 %v4547, 16
    %v6328 = vpop.permute.xlu0 %6327
    %6329 = vrot.lane.b32.xlu0 %v4548, 16
    %v6330 = vpop.permute.xlu0 %6329
    %6331 = vrot.lane.b32.xlu0 %v4549, 16
    %v6332 = vpop.permute.xlu0 %6331
    %6333 = vrot.lane.b32.xlu0 %v4550, 16
    %v6334 = vpop.permute.xlu0 %6333
    %6335 = vrot.lane.b32.xlu0 %v4551, 16
    %v6336 = vpop.permute.xlu0 %6335
    %6337 = vrot.lane.b32.xlu0 %v4552, 16
    %v6338 = vpop.permute.xlu0 %6337
    %6339 = vrot.lane.b32.xlu0 %v4553, 16
    %v6340 = vpop.permute.xlu0 %6339
    %6341 = vrot.lane.b32.xlu0 %v4554, 16
    %v6342 = vpop.permute.xlu0 %6341
    %6343 = vrot.lane.b32.xlu0 %v4555, 16
    %v6344 = vpop.permute.xlu0 %6343
    %6345 = vrot.lane.b32.xlu0 %v4556, 16
    %v6346 = vpop.permute.xlu0 %6345
    %6347 = vrot.lane.b32.xlu0 %v4557, 16
    %v6348 = vpop.permute.xlu0 %6347
    %6349 = vrot.lane.b32.xlu0 %v4558, 16
    %v6350 = vpop.permute.xlu0 %6349
    %6351 = vrot.lane.b32.xlu0 %v4559, 16
    %v6352 = vpop.permute.xlu0 %6351
    %6353 = vrot.lane.b32.xlu0 %v4560, 16
    %v6354 = vpop.permute.xlu0 %6353
    %6355 = vrot.lane.b32.xlu0 %v4561, 16
    %v6356 = vpop.permute.xlu0 %6355
    %6357 = vrot.lane.b32.xlu0 %v4562, 16
    %v6358 = vpop.permute.xlu0 %6357
    %6359 = vrot.lane.b32.xlu0 %v4563, 16
    %v6360 = vpop.permute.xlu0 %6359
    %6361 = vrot.lane.b32.xlu0 %v4564, 16
    %v6362 = vpop.permute.xlu0 %6361
    %6363 = vrot.lane.b32.xlu0 %v4565, 16
    %v6364 = vpop.permute.xlu0 %6363
    %vm6425 = vcmask 195713
    %6426 = vst.msk [vmem:[%s5882 - $0x1] sm:$0xfe] %vm6425, %v6246
    %vm6427 = vcmask 195712
    %6428 = vst.msk [vmem:[%s5882 + $0x7] sm:$0xff] %vm6427, %v6248
    %6429 = vst.msk [vmem:[%s5882 + $0xf] sm:$0xfe] %vm6425, %v6250
    %6430 = vst.msk [vmem:[%s5882 + $0x17] sm:$0xff] %vm6427, %v6252
    %6431 = vst.msk [vmem:[%s5882 + $0x1f] sm:$0xfe] %vm6425, %v6254
    %6432 = vst.msk [vmem:[%s5882 + $0x27] sm:$0xff] %vm6427, %v6256
    %6433 = vst.msk [vmem:[%s5882 + $0x2f] sm:$0xfe] %vm6425, %v6258
    %6434 = vst.msk [vmem:[%s5882 + $0x37] sm:$0xff] %vm6427, %v6260
    %6435 = vst.msk [vmem:[%s5882 + $0x3f] sm:$0xfe] %vm6425, %v6262
    %6436 = vst.msk [vmem:[%s5882 + $0x47] sm:$0xff] %vm6427, %v6264
    %6437 = vst.msk [vmem:[%s5882 + $0x4f] sm:$0xfe] %vm6425, %v6266
    %6438 = vst.msk [vmem:[%s5882 + $0x57] sm:$0xff] %vm6427, %v6268
    %6439 = vst.msk [vmem:[%s5882 + $0x5f] sm:$0xfe] %vm6425, %v6270
    %6440 = vst.msk [vmem:[%s5882 + $0x67] sm:$0xff] %vm6427, %v6272
    %6441 = vst.msk [vmem:[%s5882 + $0x6f] sm:$0xfe] %vm6425, %v6274
    %6442 = vst.msk [vmem:[%s5882 + $0x77] sm:$0xff] %vm6427, %v6276
    %6443 = vst.msk [vmem:[%s5882 + $0x7f] sm:$0xfe] %vm6425, %v6278
    %6444 = vst.msk [vmem:[%s5882 + $0x87] sm:$0xff] %vm6427, %v6280
    %6445 = vst.msk [vmem:[%s5882 + $0x8f] sm:$0xfe] %vm6425, %v6282
    %6446 = vst.msk [vmem:[%s5882 + $0x97] sm:$0xff] %vm6427, %v6284
    %6447 = vst.msk [vmem:[%s5882 + $0x9f] sm:$0xfe] %vm6425, %v6286
    %6448 = vst.msk [vmem:[%s5882 + $0xa7] sm:$0xff] %vm6427, %v6288
    %6449 = vst.msk [vmem:[%s5882 + $0xaf] sm:$0xfe] %vm6425, %v6290
    %6450 = vst.msk [vmem:[%s5882 + $0xb7] sm:$0xff] %vm6427, %v6292
    %6451 = vst.msk [vmem:[%s5882 + $0xbf] sm:$0xfe] %vm6425, %v6294
    %6452 = vst.msk [vmem:[%s5882 + $0xc7] sm:$0xff] %vm6427, %v6296
    %6453 = vst.msk [vmem:[%s5882 + $0xcf] sm:$0xfe] %vm6425, %v6298
    %6454 = vst.msk [vmem:[%s5882 + $0xd7] sm:$0xff] %vm6427, %v6300
    %6455 = vst.msk [vmem:[%s5882 + $0xdf] sm:$0xfe] %vm6425, %v6302
    %6456 = vst.msk [vmem:[%s5882 + $0xe7] sm:$0xff] %vm6427, %v6304
    %6457 = vst.msk [vmem:[%s5882 + $0xff] sm:$0xfe] %vm6425, %v6306
    %6458 = vst.msk [vmem:[%s5882 + $0x107] sm:$0xff] %vm6427, %v6308
    %6459 = vst.msk [vmem:[%s5882 + $0x10f] sm:$0xfe] %vm6425, %v6310
    %6460 = vst.msk [vmem:[%s5882 + $0x117] sm:$0xff] %vm6427, %v6312
    %6461 = vst.msk [vmem:[%s5882 + $0x11f] sm:$0xfe] %vm6425, %v6314
    %6462 = vst.msk [vmem:[%s5882 + $0x127] sm:$0xff] %vm6427, %v6316
    %6463 = vst.msk [vmem:[%s5882 + $0x12f] sm:$0xfe] %vm6425, %v6318
    %6464 = vst.msk [vmem:[%s5882 + $0x137] sm:$0xff] %vm6427, %v6320
    %6465 = vst.msk [vmem:[%s5882 + $0x13f] sm:$0xfe] %vm6425, %v6322
    %6466 = vst.msk [vmem:[%s5882 + $0x147] sm:$0xff] %vm6427, %v6324
    %6467 = vst.msk [vmem:[%s5882 + $0x14f] sm:$0xfe] %vm6425, %v6326
    %6468 = vst.msk [vmem:[%s5882 + $0x157] sm:$0xff] %vm6427, %v6328
    %6469 = vst.msk [vmem:[%s5882 + $0x15f] sm:$0xfe] %vm6425, %v6330
    %6470 = vst.msk [vmem:[%s5882 + $0x167] sm:$0xff] %vm6427, %v6332
    %6471 = vst.msk [vmem:[%s5882 + $0x16f] sm:$0xfe] %vm6425, %v6334
    %6472 = vst.msk [vmem:[%s5882 + $0x177] sm:$0xff] %vm6427, %v6336
    %6473 = vst.msk [vmem:[%s5882 + $0x17f] sm:$0xfe] %vm6425, %v6338
    %6474 = vst.msk [vmem:[%s5882 + $0x187] sm:$0xff] %vm6427, %v6340
    %6475 = vst.msk [vmem:[%s5882 + $0x18f] sm:$0xfe] %vm6425, %v6342
    %6476 = vst.msk [vmem:[%s5882 + $0x197] sm:$0xff] %vm6427, %v6344
    %6477 = vst.msk [vmem:[%s5882 + $0x19f] sm:$0xfe] %vm6425, %v6346
    %6478 = vst.msk [vmem:[%s5882 + $0x1a7] sm:$0xff] %vm6427, %v6348
    %6479 = vst.msk [vmem:[%s5882 + $0x1af] sm:$0xfe] %vm6425, %v6350
    %6480 = vst.msk [vmem:[%s5882 + $0x1b7] sm:$0xff] %vm6427, %v6352
    %6481 = vst.msk [vmem:[%s5882 + $0x1bf] sm:$0xfe] %vm6425, %v6354
    %6482 = vst.msk [vmem:[%s5882 + $0x1c7] sm:$0xff] %vm6427, %v6356
    %6483 = vst.msk [vmem:[%s5882 + $0x1cf] sm:$0xfe] %vm6425, %v6358
    %6484 = vst.msk [vmem:[%s5882 + $0x1d7] sm:$0xff] %vm6427, %v6360
    %6485 = vst.msk [vmem:[%s5882 + $0x1df] sm:$0xfe] %vm6425, %v6362
    %6486 = vst.msk [vmem:[%s5882 + $0x1e7] sm:$0xff] %vm6427, %v6364
    %6491 = vrot.lane.b32.xlu0 %v4504, 24
    %v6492 = vpop.permute.xlu0 %6491
    %6493 = vrot.lane.b32.xlu0 %v4505, 24
    %v6494 = vpop.permute.xlu0 %6493
    %6495 = vrot.lane.b32.xlu0 %v4506, 24
    %v6496 = vpop.permute.xlu0 %6495
    %6497 = vrot.lane.b32.xlu0 %v4507, 24
    %v6498 = vpop.permute.xlu0 %6497
    %6499 = vrot.lane.b32.xlu0 %v4508, 24
    %v6500 = vpop.permute.xlu0 %6499
    %6501 = vrot.lane.b32.xlu0 %v4509, 24
    %v6502 = vpop.permute.xlu0 %6501
    %6503 = vrot.lane.b32.xlu0 %v4510, 24
    %v6504 = vpop.permute.xlu0 %6503
    %6505 = vrot.lane.b32.xlu0 %v4511, 24
    %v6506 = vpop.permute.xlu0 %6505
    %6507 = vrot.lane.b32.xlu0 %v4512, 24
    %v6508 = vpop.permute.xlu0 %6507
    %6509 = vrot.lane.b32.xlu0 %v4513, 24
    %v6510 = vpop.permute.xlu0 %6509
    %6511 = vrot.lane.b32.xlu0 %v4514, 24
    %v6512 = vpop.permute.xlu0 %6511
    %6513 = vrot.lane.b32.xlu0 %v4515, 24
    %v6514 = vpop.permute.xlu0 %6513
    %6515 = vrot.lane.b32.xlu0 %v4516, 24
    %v6516 = vpop.permute.xlu0 %6515
    %6517 = vrot.lane.b32.xlu0 %v4517, 24
    %v6518 = vpop.permute.xlu0 %6517
    %6519 = vrot.lane.b32.xlu0 %v4518, 24
    %v6520 = vpop.permute.xlu0 %6519
    %6521 = vrot.lane.b32.xlu0 %v4519, 24
    %v6522 = vpop.permute.xlu0 %6521
    %6523 = vrot.lane.b32.xlu0 %v4520, 24
    %v6524 = vpop.permute.xlu0 %6523
    %6525 = vrot.lane.b32.xlu0 %v4521, 24
    %v6526 = vpop.permute.xlu0 %6525
    %6527 = vrot.lane.b32.xlu0 %v4522, 24
    %v6528 = vpop.permute.xlu0 %6527
    %6529 = vrot.lane.b32.xlu0 %v4523, 24
    %v6530 = vpop.permute.xlu0 %6529
    %6531 = vrot.lane.b32.xlu0 %v4524, 24
    %v6532 = vpop.permute.xlu0 %6531
    %6533 = vrot.lane.b32.xlu0 %v4525, 24
    %v6534 = vpop.permute.xlu0 %6533
    %6535 = vrot.lane.b32.xlu0 %v4526, 24
    %v6536 = vpop.permute.xlu0 %6535
    %6537 = vrot.lane.b32.xlu0 %v4527, 24
    %v6538 = vpop.permute.xlu0 %6537
    %6539 = vrot.lane.b32.xlu0 %v4528, 24
    %v6540 = vpop.permute.xlu0 %6539
    %6541 = vrot.lane.b32.xlu0 %v4529, 24
    %v6542 = vpop.permute.xlu0 %6541
    %6543 = vrot.lane.b32.xlu0 %v4530, 24
    %v6544 = vpop.permute.xlu0 %6543
    %6545 = vrot.lane.b32.xlu0 %v4531, 24
    %v6546 = vpop.permute.xlu0 %6545
    %6547 = vrot.lane.b32.xlu0 %v4532, 24
    %v6548 = vpop.permute.xlu0 %6547
    %6549 = vrot.lane.b32.xlu0 %v4533, 24
    %v6550 = vpop.permute.xlu0 %6549
    %6551 = vrot.lane.b32.xlu0 %v4534, 24
    %v6552 = vpop.permute.xlu0 %6551
    %6553 = vrot.lane.b32.xlu0 %v4535, 24
    %v6554 = vpop.permute.xlu0 %6553
    %6555 = vrot.lane.b32.xlu0 %v4536, 24
    %v6556 = vpop.permute.xlu0 %6555
    %6557 = vrot.lane.b32.xlu0 %v4537, 24
    %v6558 = vpop.permute.xlu0 %6557
    %6559 = vrot.lane.b32.xlu0 %v4538, 24
    %v6560 = vpop.permute.xlu0 %6559
    %6561 = vrot.lane.b32.xlu0 %v4539, 24
    %v6562 = vpop.permute.xlu0 %6561
    %6563 = vrot.lane.b32.xlu0 %v4540, 24
    %v6564 = vpop.permute.xlu0 %6563
    %6565 = vrot.lane.b32.xlu0 %v4541, 24
    %v6566 = vpop.permute.xlu0 %6565
    %6567 = vrot.lane.b32.xlu0 %v4542, 24
    %v6568 = vpop.permute.xlu0 %6567
    %6569 = vrot.lane.b32.xlu0 %v4543, 24
    %v6570 = vpop.permute.xlu0 %6569
    %6571 = vrot.lane.b32.xlu0 %v4544, 24
    %v6572 = vpop.permute.xlu0 %6571
    %6573 = vrot.lane.b32.xlu0 %v4545, 24
    %v6574 = vpop.permute.xlu0 %6573
    %6575 = vrot.lane.b32.xlu0 %v4546, 24
    %v6576 = vpop.permute.xlu0 %6575
    %6577 = vrot.lane.b32.xlu0 %v4547, 24
    %v6578 = vpop.permute.xlu0 %6577
    %6579 = vrot.lane.b32.xlu0 %v4548, 24
    %v6580 = vpop.permute.xlu0 %6579
    %6581 = vrot.lane.b32.xlu0 %v4549, 24
    %v6582 = vpop.permute.xlu0 %6581
    %6583 = vrot.lane.b32.xlu0 %v4550, 24
    %v6584 = vpop.permute.xlu0 %6583
    %6585 = vrot.lane.b32.xlu0 %v4551, 24
    %v6586 = vpop.permute.xlu0 %6585
    %6587 = vrot.lane.b32.xlu0 %v4552, 24
    %v6588 = vpop.permute.xlu0 %6587
    %6589 = vrot.lane.b32.xlu0 %v4553, 24
    %v6590 = vpop.permute.xlu0 %6589
    %6591 = vrot.lane.b32.xlu0 %v4554, 24
    %v6592 = vpop.permute.xlu0 %6591
    %6593 = vrot.lane.b32.xlu0 %v4555, 24
    %v6594 = vpop.permute.xlu0 %6593
    %6595 = vrot.lane.b32.xlu0 %v4556, 24
    %v6596 = vpop.permute.xlu0 %6595
    %6597 = vrot.lane.b32.xlu0 %v4557, 24
    %v6598 = vpop.permute.xlu0 %6597
    %6599 = vrot.lane.b32.xlu0 %v4558, 24
    %v6600 = vpop.permute.xlu0 %6599
    %6601 = vrot.lane.b32.xlu0 %v4559, 24
    %v6602 = vpop.permute.xlu0 %6601
    %6603 = vrot.lane.b32.xlu0 %v4560, 24
    %v6604 = vpop.permute.xlu0 %6603
    %6605 = vrot.lane.b32.xlu0 %v4561, 24
    %v6606 = vpop.permute.xlu0 %6605
    %6607 = vrot.lane.b32.xlu0 %v4562, 24
    %v6608 = vpop.permute.xlu0 %6607
    %6609 = vrot.lane.b32.xlu0 %v4563, 24
    %v6610 = vpop.permute.xlu0 %6609
    %6611 = vrot.lane.b32.xlu0 %v4564, 24
    %v6612 = vpop.permute.xlu0 %6611
    %6613 = vrot.lane.b32.xlu0 %v4565, 24
    %v6614 = vpop.permute.xlu0 %6613
    %6615 = vrot.lane.b32.xlu0 %v4566, 24
    %v6616 = vpop.permute.xlu0 %6615
    %6617 = vrot.lane.b32.xlu0 %v4567, 24
    %v6618 = vpop.permute.xlu0 %6617
    %vm6683 = vcmask 261312
    %6684 = vst.msk [vmem:[#allocation3 + $0x1] sm:$0xff] %vm6683, %v6492
    %vm6685 = vcmask 260288
    %6686 = vst.msk [vmem:[#allocation3 + $0x9] sm:$0x7f] %vm6685, %v6494
    %6687 = vst.msk [vmem:[#allocation3 + $0x11] sm:$0xff] %vm6683, %v6496
    %6688 = vst.msk [vmem:[#allocation3 + $0x19] sm:$0x7f] %vm6685, %v6498
    %6689 = vst.msk [vmem:[#allocation3 + $0x21] sm:$0xff] %vm6683, %v6500
    %6690 = vst.msk [vmem:[#allocation3 + $0x29] sm:$0x7f] %vm6685, %v6502
    %6691 = vst.msk [vmem:[#allocation3 + $0x31] sm:$0xff] %vm6683, %v6504
    %6692 = vst.msk [vmem:[#allocation3 + $0x39] sm:$0x7f] %vm6685, %v6506
    %6693 = vst.msk [vmem:[#allocation3 + $0x41] sm:$0xff] %vm6683, %v6508
    %6694 = vst.msk [vmem:[#allocation3 + $0x49] sm:$0x7f] %vm6685, %v6510
    %6695 = vst.msk [vmem:[#allocation3 + $0x51] sm:$0xff] %vm6683, %v6512
    %6696 = vst.msk [vmem:[#allocation3 + $0x59] sm:$0x7f] %vm6685, %v6514
    %6697 = vst.msk [vmem:[#allocation3 + $0x61] sm:$0xff] %vm6683, %v6516
    %6698 = vst.msk [vmem:[#allocation3 + $0x69] sm:$0x7f] %vm6685, %v6518
    %6699 = vst.msk [vmem:[#allocation3 + $0x71] sm:$0xff] %vm6683, %v6520
    %6700 = vst.msk [vmem:[#allocation3 + $0x79] sm:$0x7f] %vm6685, %v6522
    %6701 = vst.msk [vmem:[#allocation3 + $0x81] sm:$0xff] %vm6683, %v6524
    %6702 = vst.msk [vmem:[#allocation3 + $0x89] sm:$0x7f] %vm6685, %v6526
    %6703 = vst.msk [vmem:[#allocation3 + $0x91] sm:$0xff] %vm6683, %v6528
    %6704 = vst.msk [vmem:[#allocation3 + $0x99] sm:$0x7f] %vm6685, %v6530
    %6705 = vst.msk [vmem:[#allocation3 + $0xa1] sm:$0xff] %vm6683, %v6532
    %6706 = vst.msk [vmem:[#allocation3 + $0xa9] sm:$0x7f] %vm6685, %v6534
    %6707 = vst.msk [vmem:[#allocation3 + $0xb1] sm:$0xff] %vm6683, %v6536
    %6708 = vst.msk [vmem:[#allocation3 + $0xb9] sm:$0x7f] %vm6685, %v6538
    %6709 = vst.msk [vmem:[#allocation3 + $0xc1] sm:$0xff] %vm6683, %v6540
    %6710 = vst.msk [vmem:[#allocation3 + $0xc9] sm:$0x7f] %vm6685, %v6542
    %6711 = vst.msk [vmem:[#allocation3 + $0xd1] sm:$0xff] %vm6683, %v6544
    %6712 = vst.msk [vmem:[#allocation3 + $0xd9] sm:$0x7f] %vm6685, %v6546
    %6713 = vst.msk [vmem:[#allocation3 + $0xe1] sm:$0xff] %vm6683, %v6548
    %6714 = vst.msk [vmem:[#allocation3 + $0xe9] sm:$0x7f] %vm6685, %v6550
    %6715 = vst.msk [vmem:[#allocation3 + $0xf1] sm:$0xff] %vm6683, %v6552
    %6716 = vst.msk [vmem:[#allocation3 + $0xf9] sm:$0x7f] %vm6685, %v6554
    %6717 = vst.msk [vmem:[#allocation3 + $0x101] sm:$0xff] %vm6683, %v6556
    %6718 = vst.msk [vmem:[#allocation3 + $0x109] sm:$0x7f] %vm6685, %v6558
    %6719 = vst.msk [vmem:[#allocation3 + $0x111] sm:$0xff] %vm6683, %v6560
    %6720 = vst.msk [vmem:[#allocation3 + $0x119] sm:$0x7f] %vm6685, %v6562
    %6721 = vst.msk [vmem:[#allocation3 + $0x121] sm:$0xff] %vm6683, %v6564
    %6722 = vst.msk [vmem:[#allocation3 + $0x129] sm:$0x7f] %vm6685, %v6566
    %6723 = vst.msk [vmem:[#allocation3 + $0x131] sm:$0xff] %vm6683, %v6568
    %6724 = vst.msk [vmem:[#allocation3 + $0x139] sm:$0x7f] %vm6685, %v6570
    %6725 = vst.msk [vmem:[#allocation3 + $0x141] sm:$0xff] %vm6683, %v6572
    %6726 = vst.msk [vmem:[#allocation3 + $0x149] sm:$0x7f] %vm6685, %v6574
    %6727 = vst.msk [vmem:[#allocation3 + $0x151] sm:$0xff] %vm6683, %v6576
    %6728 = vst.msk [vmem:[#allocation3 + $0x159] sm:$0x7f] %vm6685, %v6578
    %6729 = vst.msk [vmem:[#allocation3 + $0x161] sm:$0xff] %vm6683, %v6580
    %6730 = vst.msk [vmem:[#allocation3 + $0x169] sm:$0x7f] %vm6685, %v6582
    %6731 = vst.msk [vmem:[#allocation3 + $0x171] sm:$0xff] %vm6683, %v6584
    %6732 = vst.msk [vmem:[#allocation3 + $0x179] sm:$0x7f] %vm6685, %v6586
    %6733 = vst.msk [vmem:[#allocation3 + $0x181] sm:$0xff] %vm6683, %v6588
    %6734 = vst.msk [vmem:[#allocation3 + $0x189] sm:$0x7f] %vm6685, %v6590
    %6735 = vst.msk [vmem:[#allocation3 + $0x191] sm:$0xff] %vm6683, %v6592
    %6736 = vst.msk [vmem:[#allocation3 + $0x199] sm:$0x7f] %vm6685, %v6594
    %6737 = vst.msk [vmem:[#allocation3 + $0x1a1] sm:$0xff] %vm6683, %v6596
    %6738 = vst.msk [vmem:[#allocation3 + $0x1a9] sm:$0x7f] %vm6685, %v6598
    %6739 = vst.msk [vmem:[#allocation3 + $0x1b1] sm:$0xff] %vm6683, %v6600
    %6740 = vst.msk [vmem:[#allocation3 + $0x1b9] sm:$0x7f] %vm6685, %v6602
    %6741 = vst.msk [vmem:[#allocation3 + $0x1c1] sm:$0xff] %vm6683, %v6604
    %6742 = vst.msk [vmem:[#allocation3 + $0x1c9] sm:$0x7f] %vm6685, %v6606
    %6743 = vst.msk [vmem:[#allocation3 + $0x1d1] sm:$0xff] %vm6683, %v6608
    %6744 = vst.msk [vmem:[#allocation3 + $0x1d9] sm:$0x7f] %vm6685, %v6610
    %6745 = vst.msk [vmem:[#allocation3 + $0x1e1] sm:$0xff] %vm6683, %v6612
    %6746 = vst.msk [vmem:[#allocation3 + $0x1e9] sm:$0x7f] %vm6685, %v6614
    %6747 = vst.msk [vmem:[#allocation3 + $0x1f1] sm:$0xff] %vm6683, %v6616
    %6748 = vst.msk [vmem:[#allocation3 + $0x1f9] sm:$0x7f] %vm6685, %v6618
    %6749 = vrot.lane.b32.xlu0 %v4504, 32
    %v6750 = vpop.permute.xlu0 %6749
    %6751 = vrot.lane.b32.xlu0 %v4505, 32
    %v6752 = vpop.permute.xlu0 %6751
    %6753 = vrot.lane.b32.xlu0 %v4506, 32
    %v6754 = vpop.permute.xlu0 %6753
    %6755 = vrot.lane.b32.xlu0 %v4507, 32
    %v6756 = vpop.permute.xlu0 %6755
    %6757 = vrot.lane.b32.xlu0 %v4508, 32
    %v6758 = vpop.permute.xlu0 %6757
    %6759 = vrot.lane.b32.xlu0 %v4509, 32
    %v6760 = vpop.permute.xlu0 %6759
    %6761 = vrot.lane.b32.xlu0 %v4510, 32
    %v6762 = vpop.permute.xlu0 %6761
    %6763 = vrot.lane.b32.xlu0 %v4511, 32
    %v6764 = vpop.permute.xlu0 %6763
    %6765 = vrot.lane.b32.xlu0 %v4512, 32
    %v6766 = vpop.permute.xlu0 %6765
    %6767 = vrot.lane.b32.xlu0 %v4513, 32
    %v6768 = vpop.permute.xlu0 %6767
    %6769 = vrot.lane.b32.xlu0 %v4514, 32
    %v6770 = vpop.permute.xlu0 %6769
    %6771 = vrot.lane.b32.xlu0 %v4515, 32
    %v6772 = vpop.permute.xlu0 %6771
    %6773 = vrot.lane.b32.xlu0 %v4516, 32
    %v6774 = vpop.permute.xlu0 %6773
    %6775 = vrot.lane.b32.xlu0 %v4517, 32
    %v6776 = vpop.permute.xlu0 %6775
    %6777 = vrot.lane.b32.xlu0 %v4518, 32
    %v6778 = vpop.permute.xlu0 %6777
    %6779 = vrot.lane.b32.xlu0 %v4519, 32
    %v6780 = vpop.permute.xlu0 %6779
    %6781 = vrot.lane.b32.xlu0 %v4520, 32
    %v6782 = vpop.permute.xlu0 %6781
    %6783 = vrot.lane.b32.xlu0 %v4521, 32
    %v6784 = vpop.permute.xlu0 %6783
    %6785 = vrot.lane.b32.xlu0 %v4522, 32
    %v6786 = vpop.permute.xlu0 %6785
    %6787 = vrot.lane.b32.xlu0 %v4523, 32
    %v6788 = vpop.permute.xlu0 %6787
    %6789 = vrot.lane.b32.xlu0 %v4524, 32
    %v6790 = vpop.permute.xlu0 %6789
    %6791 = vrot.lane.b32.xlu0 %v4525, 32
    %v6792 = vpop.permute.xlu0 %6791
    %6793 = vrot.lane.b32.xlu0 %v4526, 32
    %v6794 = vpop.permute.xlu0 %6793
    %6795 = vrot.lane.b32.xlu0 %v4527, 32
    %v6796 = vpop.permute.xlu0 %6795
    %6797 = vrot.lane.b32.xlu0 %v4528, 32
    %v6798 = vpop.permute.xlu0 %6797
    %6799 = vrot.lane.b32.xlu0 %v4529, 32
    %v6800 = vpop.permute.xlu0 %6799
    %6801 = vrot.lane.b32.xlu0 %v4530, 32
    %v6802 = vpop.permute.xlu0 %6801
    %6803 = vrot.lane.b32.xlu0 %v4531, 32
    %v6804 = vpop.permute.xlu0 %6803
    %6805 = vrot.lane.b32.xlu0 %v4532, 32
    %v6806 = vpop.permute.xlu0 %6805
    %6807 = vrot.lane.b32.xlu0 %v4533, 32
    %v6808 = vpop.permute.xlu0 %6807
    %6809 = vrot.lane.b32.xlu0 %v4534, 32
    %v6810 = vpop.permute.xlu0 %6809
    %6811 = vrot.lane.b32.xlu0 %v4535, 32
    %v6812 = vpop.permute.xlu0 %6811
    %6813 = vrot.lane.b32.xlu0 %v4536, 32
    %v6814 = vpop.permute.xlu0 %6813
    %6815 = vrot.lane.b32.xlu0 %v4537, 32
    %v6816 = vpop.permute.xlu0 %6815
    %6817 = vrot.lane.b32.xlu0 %v4538, 32
    %v6818 = vpop.permute.xlu0 %6817
    %6819 = vrot.lane.b32.xlu0 %v4539, 32
    %v6820 = vpop.permute.xlu0 %6819
    %6821 = vrot.lane.b32.xlu0 %v4540, 32
    %v6822 = vpop.permute.xlu0 %6821
    %6823 = vrot.lane.b32.xlu0 %v4541, 32
    %v6824 = vpop.permute.xlu0 %6823
    %6825 = vrot.lane.b32.xlu0 %v4542, 32
    %v6826 = vpop.permute.xlu0 %6825
    %6827 = vrot.lane.b32.xlu0 %v4543, 32
    %v6828 = vpop.permute.xlu0 %6827
    %6829 = vrot.lane.b32.xlu0 %v4544, 32
    %v6830 = vpop.permute.xlu0 %6829
    %6831 = vrot.lane.b32.xlu0 %v4545, 32
    %v6832 = vpop.permute.xlu0 %6831
    %6833 = vrot.lane.b32.xlu0 %v4546, 32
    %v6834 = vpop.permute.xlu0 %6833
    %6835 = vrot.lane.b32.xlu0 %v4547, 32
    %v6836 = vpop.permute.xlu0 %6835
    %6837 = vrot.lane.b32.xlu0 %v4548, 32
    %v6838 = vpop.permute.xlu0 %6837
    %6839 = vrot.lane.b32.xlu0 %v4549, 32
    %v6840 = vpop.permute.xlu0 %6839
    %6841 = vrot.lane.b32.xlu0 %v4550, 32
    %v6842 = vpop.permute.xlu0 %6841
    %6843 = vrot.lane.b32.xlu0 %v4551, 32
    %v6844 = vpop.permute.xlu0 %6843
    %6845 = vrot.lane.b32.xlu0 %v4552, 32
    %v6846 = vpop.permute.xlu0 %6845
    %6847 = vrot.lane.b32.xlu0 %v4553, 32
    %v6848 = vpop.permute.xlu0 %6847
    %6849 = vrot.lane.b32.xlu0 %v4554, 32
    %v6850 = vpop.permute.xlu0 %6849
    %6851 = vrot.lane.b32.xlu0 %v4555, 32
    %v6852 = vpop.permute.xlu0 %6851
    %6853 = vrot.lane.b32.xlu0 %v4556, 32
    %v6854 = vpop.permute.xlu0 %6853
    %6855 = vrot.lane.b32.xlu0 %v4557, 32
    %v6856 = vpop.permute.xlu0 %6855
    %6857 = vrot.lane.b32.xlu0 %v4558, 32
    %v6858 = vpop.permute.xlu0 %6857
    %6859 = vrot.lane.b32.xlu0 %v4559, 32
    %v6860 = vpop.permute.xlu0 %6859
    %6861 = vrot.lane.b32.xlu0 %v4560, 32
    %v6862 = vpop.permute.xlu0 %6861
    %6863 = vrot.lane.b32.xlu0 %v4561, 32
    %v6864 = vpop.permute.xlu0 %6863
    %6865 = vrot.lane.b32.xlu0 %v4562, 32
    %v6866 = vpop.permute.xlu0 %6865
    %6867 = vrot.lane.b32.xlu0 %v4563, 32
    %v6868 = vpop.permute.xlu0 %6867
    %6869 = vrot.lane.b32.xlu0 %v4564, 32
    %v6870 = vpop.permute.xlu0 %6869
    %6871 = vrot.lane.b32.xlu0 %v4565, 32
    %v6872 = vpop.permute.xlu0 %6871
    %6873 = vrot.lane.b32.xlu0 %v4566, 32
    %v6874 = vpop.permute.xlu0 %6873
    %6875 = vrot.lane.b32.xlu0 %v4567, 32
    %v6876 = vpop.permute.xlu0 %6875
    %vm6941 = vcmask 326912
    %6942 = vst.msk [vmem:[#allocation3] sm:$0xff] %vm6941, %v6750
    %6943 = vst.msk [vmem:[#allocation3 + $0x8] sm:$0xff] %vm6941, %v6752
    %6944 = vst.msk [vmem:[#allocation3 + $0x10] sm:$0xff] %vm6941, %v6754
    %6945 = vst.msk [vmem:[#allocation3 + $0x18] sm:$0xff] %vm6941, %v6756
    %6946 = vst.msk [vmem:[#allocation3 + $0x20] sm:$0xff] %vm6941, %v6758
    %6947 = vst.msk [vmem:[#allocation3 + $0x28] sm:$0xff] %vm6941, %v6760
    %6948 = vst.msk [vmem:[#allocation3 + $0x30] sm:$0xff] %vm6941, %v6762
    %6949 = vst.msk [vmem:[#allocation3 + $0x38] sm:$0xff] %vm6941, %v6764
    %6950 = vst.msk [vmem:[#allocation3 + $0x40] sm:$0xff] %vm6941, %v6766
    %6951 = vst.msk [vmem:[#allocation3 + $0x48] sm:$0xff] %vm6941, %v6768
    %6952 = vst.msk [vmem:[#allocation3 + $0x50] sm:$0xff] %vm6941, %v6770
    %6953 = vst.msk [vmem:[#allocation3 + $0x58] sm:$0xff] %vm6941, %v6772
    %6954 = vst.msk [vmem:[#allocation3 + $0x60] sm:$0xff] %vm6941, %v6774
    %6955 = vst.msk [vmem:[#allocation3 + $0x68] sm:$0xff] %vm6941, %v6776
    %6956 = vst.msk [vmem:[#allocation3 + $0x70] sm:$0xff] %vm6941, %v6778
    %6957 = vst.msk [vmem:[#allocation3 + $0x78] sm:$0xff] %vm6941, %v6780
    %6958 = vst.msk [vmem:[#allocation3 + $0x80] sm:$0xff] %vm6941, %v6782
    %6959 = vst.msk [vmem:[#allocation3 + $0x88] sm:$0xff] %vm6941, %v6784
    %6960 = vst.msk [vmem:[#allocation3 + $0x90] sm:$0xff] %vm6941, %v6786
    %6961 = vst.msk [vmem:[#allocation3 + $0x98] sm:$0xff] %vm6941, %v6788
    %6962 = vst.msk [vmem:[#allocation3 + $0xa0] sm:$0xff] %vm6941, %v6790
    %6963 = vst.msk [vmem:[#allocation3 + $0xa8] sm:$0xff] %vm6941, %v6792
    %6964 = vst.msk [vmem:[#allocation3 + $0xb0] sm:$0xff] %vm6941, %v6794
    %6965 = vst.msk [vmem:[#allocation3 + $0xb8] sm:$0xff] %vm6941, %v6796
    %6966 = vst.msk [vmem:[#allocation3 + $0xc0] sm:$0xff] %vm6941, %v6798
    %6967 = vst.msk [vmem:[#allocation3 + $0xc8] sm:$0xff] %vm6941, %v6800
    %6968 = vst.msk [vmem:[#allocation3 + $0xd0] sm:$0xff] %vm6941, %v6802
    %6969 = vst.msk [vmem:[#allocation3 + $0xd8] sm:$0xff] %vm6941, %v6804
    %6970 = vst.msk [vmem:[#allocation3 + $0xe0] sm:$0xff] %vm6941, %v6806
    %6971 = vst.msk [vmem:[#allocation3 + $0xe8] sm:$0xff] %vm6941, %v6808
    %6972 = vst.msk [vmem:[#allocation3 + $0xf0] sm:$0xff] %vm6941, %v6810
    %6973 = vst.msk [vmem:[#allocation3 + $0xf8] sm:$0xff] %vm6941, %v6812
    %6974 = vst.msk [vmem:[#allocation3 + $0x100] sm:$0xff] %vm6941, %v6814
    %6975 = vst.msk [vmem:[#allocation3 + $0x108] sm:$0xff] %vm6941, %v6816
    %6976 = vst.msk [vmem:[#allocation3 + $0x110] sm:$0xff] %vm6941, %v6818
    %6977 = vst.msk [vmem:[#allocation3 + $0x118] sm:$0xff] %vm6941, %v6820
    %6978 = vst.msk [vmem:[#allocation3 + $0x120] sm:$0xff] %vm6941, %v6822
    %6979 = vst.msk [vmem:[#allocation3 + $0x128] sm:$0xff] %vm6941, %v6824
    %6980 = vst.msk [vmem:[#allocation3 + $0x130] sm:$0xff] %vm6941, %v6826
    %6981 = vst.msk [vmem:[#allocation3 + $0x138] sm:$0xff] %vm6941, %v6828
    %6982 = vst.msk [vmem:[#allocation3 + $0x140] sm:$0xff] %vm6941, %v6830
    %6983 = vst.msk [vmem:[#allocation3 + $0x148] sm:$0xff] %vm6941, %v6832
    %6984 = vst.msk [vmem:[#allocation3 + $0x150] sm:$0xff] %vm6941, %v6834
    %6985 = vst.msk [vmem:[#allocation3 + $0x158] sm:$0xff] %vm6941, %v6836
    %6986 = vst.msk [vmem:[#allocation3 + $0x160] sm:$0xff] %vm6941, %v6838
    %6987 = vst.msk [vmem:[#allocation3 + $0x168] sm:$0xff] %vm6941, %v6840
    %6988 = vst.msk [vmem:[#allocation3 + $0x170] sm:$0xff] %vm6941, %v6842
    %6989 = vst.msk [vmem:[#allocation3 + $0x178] sm:$0xff] %vm6941, %v6844
    %6990 = vst.msk [vmem:[#allocation3 + $0x180] sm:$0xff] %vm6941, %v6846
    %6991 = vst.msk [vmem:[#allocation3 + $0x188] sm:$0xff] %vm6941, %v6848
    %6992 = vst.msk [vmem:[#allocation3 + $0x190] sm:$0xff] %vm6941, %v6850
    %6993 = vst.msk [vmem:[#allocation3 + $0x198] sm:$0xff] %vm6941, %v6852
    %6994 = vst.msk [vmem:[#allocation3 + $0x1a0] sm:$0xff] %vm6941, %v6854
    %6995 = vst.msk [vmem:[#allocation3 + $0x1a8] sm:$0xff] %vm6941, %v6856
    %6996 = vst.msk [vmem:[#allocation3 + $0x1b0] sm:$0xff] %vm6941, %v6858
    %6997 = vst.msk [vmem:[#allocation3 + $0x1b8] sm:$0xff] %vm6941, %v6860
    %6998 = vst.msk [vmem:[#allocation3 + $0x1c0] sm:$0xff] %vm6941, %v6862
    %6999 = vst.msk [vmem:[#allocation3 + $0x1c8] sm:$0xff] %vm6941, %v6864
    %7000 = vst.msk [vmem:[#allocation3 + $0x1d0] sm:$0xff] %vm6941, %v6866
    %7001 = vst.msk [vmem:[#allocation3 + $0x1d8] sm:$0xff] %vm6941, %v6868
    %7002 = vst.msk [vmem:[#allocation3 + $0x1e0] sm:$0xff] %vm6941, %v6870
    %7003 = vst.msk [vmem:[#allocation3 + $0x1e8] sm:$0xff] %vm6941, %v6872
    %7004 = vst.msk [vmem:[#allocation3 + $0x1f0] sm:$0xff] %vm6941, %v6874
    %7005 = vst.msk [vmem:[#allocation3 + $0x1f8] sm:$0xff] %vm6941, %v6876
    %7006 = vrot.lane.b32.xlu0 %v4504, 40
    %v7007 = vpop.permute.xlu0 %7006
    %7008 = vrot.lane.b32.xlu0 %v4505, 40
    %v7009 = vpop.permute.xlu0 %7008
    %7010 = vrot.lane.b32.xlu0 %v4506, 40
    %v7011 = vpop.permute.xlu0 %7010
    %7012 = vrot.lane.b32.xlu0 %v4507, 40
    %v7013 = vpop.permute.xlu0 %7012
    %7014 = vrot.lane.b32.xlu0 %v4508, 40
    %v7015 = vpop.permute.xlu0 %7014
    %7016 = vrot.lane.b32.xlu0 %v4509, 40
    %v7017 = vpop.permute.xlu0 %7016
    %7018 = vrot.lane.b32.xlu0 %v4510, 40
    %v7019 = vpop.permute.xlu0 %7018
    %7020 = vrot.lane.b32.xlu0 %v4511, 40
    %v7021 = vpop.permute.xlu0 %7020
    %7022 = vrot.lane.b32.xlu0 %v4512, 40
    %v7023 = vpop.permute.xlu0 %7022
    %7024 = vrot.lane.b32.xlu0 %v4513, 40
    %v7025 = vpop.permute.xlu0 %7024
    %7026 = vrot.lane.b32.xlu0 %v4514, 40
    %v7027 = vpop.permute.xlu0 %7026
    %7028 = vrot.lane.b32.xlu0 %v4515, 40
    %v7029 = vpop.permute.xlu0 %7028
    %7030 = vrot.lane.b32.xlu0 %v4516, 40
    %v7031 = vpop.permute.xlu0 %7030
    %7032 = vrot.lane.b32.xlu0 %v4517, 40
    %v7033 = vpop.permute.xlu0 %7032
    %7034 = vrot.lane.b32.xlu0 %v4518, 40
    %v7035 = vpop.permute.xlu0 %7034
    %7036 = vrot.lane.b32.xlu0 %v4519, 40
    %v7037 = vpop.permute.xlu0 %7036
    %7038 = vrot.lane.b32.xlu0 %v4520, 40
    %v7039 = vpop.permute.xlu0 %7038
    %7040 = vrot.lane.b32.xlu0 %v4521, 40
    %v7041 = vpop.permute.xlu0 %7040
    %7042 = vrot.lane.b32.xlu0 %v4522, 40
    %v7043 = vpop.permute.xlu0 %7042
    %7044 = vrot.lane.b32.xlu0 %v4523, 40
    %v7045 = vpop.permute.xlu0 %7044
    %7046 = vrot.lane.b32.xlu0 %v4524, 40
    %v7047 = vpop.permute.xlu0 %7046
    %7048 = vrot.lane.b32.xlu0 %v4525, 40
    %v7049 = vpop.permute.xlu0 %7048
    %7050 = vrot.lane.b32.xlu0 %v4526, 40
    %v7051 = vpop.permute.xlu0 %7050
    %7052 = vrot.lane.b32.xlu0 %v4527, 40
    %v7053 = vpop.permute.xlu0 %7052
    %7054 = vrot.lane.b32.xlu0 %v4528, 40
    %v7055 = vpop.permute.xlu0 %7054
    %7056 = vrot.lane.b32.xlu0 %v4529, 40
    %v7057 = vpop.permute.xlu0 %7056
    %7058 = vrot.lane.b32.xlu0 %v4530, 40
    %v7059 = vpop.permute.xlu0 %7058
    %7060 = vrot.lane.b32.xlu0 %v4531, 40
    %v7061 = vpop.permute.xlu0 %7060
    %7062 = vrot.lane.b32.xlu0 %v4532, 40
    %v7063 = vpop.permute.xlu0 %7062
    %7064 = vrot.lane.b32.xlu0 %v4533, 40
    %v7065 = vpop.permute.xlu0 %7064
    %7066 = vrot.lane.b32.xlu0 %v4534, 40
    %v7067 = vpop.permute.xlu0 %7066
    %7068 = vrot.lane.b32.xlu0 %v4535, 40
    %v7069 = vpop.permute.xlu0 %7068
    %7070 = vrot.lane.b32.xlu0 %v4536, 40
    %v7071 = vpop.permute.xlu0 %7070
    %7072 = vrot.lane.b32.xlu0 %v4537, 40
    %v7073 = vpop.permute.xlu0 %7072
    %7074 = vrot.lane.b32.xlu0 %v4538, 40
    %v7075 = vpop.permute.xlu0 %7074
    %7076 = vrot.lane.b32.xlu0 %v4539, 40
    %v7077 = vpop.permute.xlu0 %7076
    %7078 = vrot.lane.b32.xlu0 %v4540, 40
    %v7079 = vpop.permute.xlu0 %7078
    %7080 = vrot.lane.b32.xlu0 %v4541, 40
    %v7081 = vpop.permute.xlu0 %7080
    %7082 = vrot.lane.b32.xlu0 %v4542, 40
    %v7083 = vpop.permute.xlu0 %7082
    %7084 = vrot.lane.b32.xlu0 %v4543, 40
    %v7085 = vpop.permute.xlu0 %7084
    %7086 = vrot.lane.b32.xlu0 %v4544, 40
    %v7087 = vpop.permute.xlu0 %7086
    %7088 = vrot.lane.b32.xlu0 %v4545, 40
    %v7089 = vpop.permute.xlu0 %7088
    %7090 = vrot.lane.b32.xlu0 %v4546, 40
    %v7091 = vpop.permute.xlu0 %7090
    %7092 = vrot.lane.b32.xlu0 %v4547, 40
    %v7093 = vpop.permute.xlu0 %7092
    %7094 = vrot.lane.b32.xlu0 %v4548, 40
    %v7095 = vpop.permute.xlu0 %7094
    %7096 = vrot.lane.b32.xlu0 %v4549, 40
    %v7097 = vpop.permute.xlu0 %7096
    %7098 = vrot.lane.b32.xlu0 %v4550, 40
    %v7099 = vpop.permute.xlu0 %7098
    %7100 = vrot.lane.b32.xlu0 %v4551, 40
    %v7101 = vpop.permute.xlu0 %7100
    %7102 = vrot.lane.b32.xlu0 %v4552, 40
    %v7103 = vpop.permute.xlu0 %7102
    %7104 = vrot.lane.b32.xlu0 %v4553, 40
    %v7105 = vpop.permute.xlu0 %7104
    %7106 = vrot.lane.b32.xlu0 %v4554, 40
    %v7107 = vpop.permute.xlu0 %7106
    %7108 = vrot.lane.b32.xlu0 %v4555, 40
    %v7109 = vpop.permute.xlu0 %7108
    %7110 = vrot.lane.b32.xlu0 %v4556, 40
    %v7111 = vpop.permute.xlu0 %7110
    %7112 = vrot.lane.b32.xlu0 %v4557, 40
    %v7113 = vpop.permute.xlu0 %7112
    %7114 = vrot.lane.b32.xlu0 %v4558, 40
    %v7115 = vpop.permute.xlu0 %7114
    %7116 = vrot.lane.b32.xlu0 %v4559, 40
    %v7117 = vpop.permute.xlu0 %7116
    %7118 = vrot.lane.b32.xlu0 %v4560, 40
    %v7119 = vpop.permute.xlu0 %7118
    %7120 = vrot.lane.b32.xlu0 %v4561, 40
    %v7121 = vpop.permute.xlu0 %7120
    %7122 = vrot.lane.b32.xlu0 %v4562, 40
    %v7123 = vpop.permute.xlu0 %7122
    %7124 = vrot.lane.b32.xlu0 %v4563, 40
    %v7125 = vpop.permute.xlu0 %7124
    %7126 = vrot.lane.b32.xlu0 %v4564, 40
    %v7127 = vpop.permute.xlu0 %7126
    %7128 = vrot.lane.b32.xlu0 %v4565, 40
    %v7129 = vpop.permute.xlu0 %7128
    %7130 = vrot.lane.b32.xlu0 %v4566, 40
    %v7131 = vpop.permute.xlu0 %7130
    %7132 = vrot.lane.b32.xlu0 %v4567, 40
    %v7133 = vpop.permute.xlu0 %7132
    %vm7198 = vcmask 392513
    %7199 = vst.msk [vmem:[#allocation3 - $0x1] sm:$0xfe] %vm7198, %v7007
    %vm7200 = vcmask 392512
    %7201 = vst.msk [vmem:[#allocation3 + $0x7] sm:$0xff] %vm7200, %v7009
    %7202 = vst.msk [vmem:[#allocation3 + $0xf] sm:$0xfe] %vm7198, %v7011
    %7203 = vst.msk [vmem:[#allocation3 + $0x17] sm:$0xff] %vm7200, %v7013
    %7204 = vst.msk [vmem:[#allocation3 + $0x1f] sm:$0xfe] %vm7198, %v7015
    %7205 = vst.msk [vmem:[#allocation3 + $0x27] sm:$0xff] %vm7200, %v7017
    %7206 = vst.msk [vmem:[#allocation3 + $0x2f] sm:$0xfe] %vm7198, %v7019
    %7207 = vst.msk [vmem:[#allocation3 + $0x37] sm:$0xff] %vm7200, %v7021
    %7208 = vst.msk [vmem:[#allocation3 + $0x3f] sm:$0xfe] %vm7198, %v7023
    %7209 = vst.msk [vmem:[#allocation3 + $0x47] sm:$0xff] %vm7200, %v7025
    %7210 = vst.msk [vmem:[#allocation3 + $0x4f] sm:$0xfe] %vm7198, %v7027
    %7211 = vst.msk [vmem:[#allocation3 + $0x57] sm:$0xff] %vm7200, %v7029
    %7212 = vst.msk [vmem:[#allocation3 + $0x5f] sm:$0xfe] %vm7198, %v7031
    %7213 = vst.msk [vmem:[#allocation3 + $0x67] sm:$0xff] %vm7200, %v7033
    %7214 = vst.msk [vmem:[#allocation3 + $0x6f] sm:$0xfe] %vm7198, %v7035
    %7215 = vst.msk [vmem:[#allocation3 + $0x77] sm:$0xff] %vm7200, %v7037
    %7216 = vst.msk [vmem:[#allocation3 + $0x7f] sm:$0xfe] %vm7198, %v7039
    %7217 = vst.msk [vmem:[#allocation3 + $0x87] sm:$0xff] %vm7200, %v7041
    %7218 = vst.msk [vmem:[#allocation3 + $0x8f] sm:$0xfe] %vm7198, %v7043
    %7219 = vst.msk [vmem:[#allocation3 + $0x97] sm:$0xff] %vm7200, %v7045
    %7220 = vst.msk [vmem:[#allocation3 + $0x9f] sm:$0xfe] %vm7198, %v7047
    %7221 = vst.msk [vmem:[#allocation3 + $0xa7] sm:$0xff] %vm7200, %v7049
    %7222 = vst.msk [vmem:[#allocation3 + $0xaf] sm:$0xfe] %vm7198, %v7051
    %7223 = vst.msk [vmem:[#allocation3 + $0xb7] sm:$0xff] %vm7200, %v7053
    %7224 = vst.msk [vmem:[#allocation3 + $0xbf] sm:$0xfe] %vm7198, %v7055
    %7225 = vst.msk [vmem:[#allocation3 + $0xc7] sm:$0xff] %vm7200, %v7057
    %7226 = vst.msk [vmem:[#allocation3 + $0xcf] sm:$0xfe] %vm7198, %v7059
    %7227 = vst.msk [vmem:[#allocation3 + $0xd7] sm:$0xff] %vm7200, %v7061
    %7228 = vst.msk [vmem:[#allocation3 + $0xdf] sm:$0xfe] %vm7198, %v7063
    %7229 = vst.msk [vmem:[#allocation3 + $0xe7] sm:$0xff] %vm7200, %v7065
    %7230 = vst.msk [vmem:[#allocation3 + $0xef] sm:$0xfe] %vm7198, %v7067
    %7231 = vst.msk [vmem:[#allocation3 + $0xf7] sm:$0xff] %vm7200, %v7069
    %7232 = vst.msk [vmem:[#allocation3 + $0xff] sm:$0xfe] %vm7198, %v7071
    %7233 = vst.msk [vmem:[#allocation3 + $0x107] sm:$0xff] %vm7200, %v7073
    %7234 = vst.msk [vmem:[#allocation3 + $0x10f] sm:$0xfe] %vm7198, %v7075
    %7235 = vst.msk [vmem:[#allocation3 + $0x117] sm:$0xff] %vm7200, %v7077
    %7236 = vst.msk [vmem:[#allocation3 + $0x11f] sm:$0xfe] %vm7198, %v7079
    %7237 = vst.msk [vmem:[#allocation3 + $0x127] sm:$0xff] %vm7200, %v7081
    %7238 = vst.msk [vmem:[#allocation3 + $0x12f] sm:$0xfe] %vm7198, %v7083
    %7239 = vst.msk [vmem:[#allocation3 + $0x137] sm:$0xff] %vm7200, %v7085
    %7240 = vst.msk [vmem:[#allocation3 + $0x13f] sm:$0xfe] %vm7198, %v7087
    %7241 = vst.msk [vmem:[#allocation3 + $0x147] sm:$0xff] %vm7200, %v7089
    %7242 = vst.msk [vmem:[#allocation3 + $0x14f] sm:$0xfe] %vm7198, %v7091
    %7243 = vst.msk [vmem:[#allocation3 + $0x157] sm:$0xff] %vm7200, %v7093
    %7244 = vst.msk [vmem:[#allocation3 + $0x15f] sm:$0xfe] %vm7198, %v7095
    %7245 = vst.msk [vmem:[#allocation3 + $0x167] sm:$0xff] %vm7200, %v7097
    %7246 = vst.msk [vmem:[#allocation3 + $0x16f] sm:$0xfe] %vm7198, %v7099
    %7247 = vst.msk [vmem:[#allocation3 + $0x177] sm:$0xff] %vm7200, %v7101
    %7248 = vst.msk [vmem:[#allocation3 + $0x17f] sm:$0xfe] %vm7198, %v7103
    %7249 = vst.msk [vmem:[#allocation3 + $0x187] sm:$0xff] %vm7200, %v7105
    %7250 = vst.msk [vmem:[#allocation3 + $0x18f] sm:$0xfe] %vm7198, %v7107
    %7251 = vst.msk [vmem:[#allocation3 + $0x197] sm:$0xff] %vm7200, %v7109
    %7252 = vst.msk [vmem:[#allocation3 + $0x19f] sm:$0xfe] %vm7198, %v7111
    %7253 = vst.msk [vmem:[#allocation3 + $0x1a7] sm:$0xff] %vm7200, %v7113
    %7254 = vst.msk [vmem:[#allocation3 + $0x1af] sm:$0xfe] %vm7198, %v7115
    %7255 = vst.msk [vmem:[#allocation3 + $0x1b7] sm:$0xff] %vm7200, %v7117
    %7256 = vst.msk [vmem:[#allocation3 + $0x1bf] sm:$0xfe] %vm7198, %v7119
    %7257 = vst.msk [vmem:[#allocation3 + $0x1c7] sm:$0xff] %vm7200, %v7121
    %7258 = vst.msk [vmem:[#allocation3 + $0x1cf] sm:$0xfe] %vm7198, %v7123
    %7259 = vst.msk [vmem:[#allocation3 + $0x1d7] sm:$0xff] %vm7200, %v7125
    %7260 = vst.msk [vmem:[#allocation3 + $0x1df] sm:$0xfe] %vm7198, %v7127
    %7261 = vst.msk [vmem:[#allocation3 + $0x1e7] sm:$0xff] %vm7200, %v7129
    %7262 = vst.msk [vmem:[#allocation3 + $0x1ef] sm:$0xfe] %vm7198, %v7131
    %7263 = vst.msk [vmem:[#allocation3 + $0x1f7] sm:$0xff] %vm7200, %v7133
    %7264 = vrot.lane.b32.xlu0 %v4506, 48
    %v7265 = vpop.permute.xlu0 %7264
    %7266 = vrot.lane.b32.xlu0 %v4507, 48
    %v7267 = vpop.permute.xlu0 %7266
    %7268 = vrot.lane.b32.xlu0 %v4508, 48
    %v7269 = vpop.permute.xlu0 %7268
    %7270 = vrot.lane.b32.xlu0 %v4509, 48
    %v7271 = vpop.permute.xlu0 %7270
    %7272 = vrot.lane.b32.xlu0 %v4510, 48
    %v7273 = vpop.permute.xlu0 %7272
    %7274 = vrot.lane.b32.xlu0 %v4511, 48
    %v7275 = vpop.permute.xlu0 %7274
    %7276 = vrot.lane.b32.xlu0 %v4512, 48
    %v7277 = vpop.permute.xlu0 %7276
    %7278 = vrot.lane.b32.xlu0 %v4513, 48
    %v7279 = vpop.permute.xlu0 %7278
    %7280 = vrot.lane.b32.xlu0 %v4514, 48
    %v7281 = vpop.permute.xlu0 %7280
    %7282 = vrot.lane.b32.xlu0 %v4515, 48
    %v7283 = vpop.permute.xlu0 %7282
    %7284 = vrot.lane.b32.xlu0 %v4516, 48
    %v7285 = vpop.permute.xlu0 %7284
    %7286 = vrot.lane.b32.xlu0 %v4517, 48
    %v7287 = vpop.permute.xlu0 %7286
    %7288 = vrot.lane.b32.xlu0 %v4518, 48
    %v7289 = vpop.permute.xlu0 %7288
    %7290 = vrot.lane.b32.xlu0 %v4519, 48
    %v7291 = vpop.permute.xlu0 %7290
    %7292 = vrot.lane.b32.xlu0 %v4520, 48
    %v7293 = vpop.permute.xlu0 %7292
    %7294 = vrot.lane.b32.xlu0 %v4521, 48
    %v7295 = vpop.permute.xlu0 %7294
    %7296 = vrot.lane.b32.xlu0 %v4522, 48
    %v7297 = vpop.permute.xlu0 %7296
    %7298 = vrot.lane.b32.xlu0 %v4523, 48
    %v7299 = vpop.permute.xlu0 %7298
    %7300 = vrot.lane.b32.xlu0 %v4524, 48
    %v7301 = vpop.permute.xlu0 %7300
    %7302 = vrot.lane.b32.xlu0 %v4525, 48
    %v7303 = vpop.permute.xlu0 %7302
    %7304 = vrot.lane.b32.xlu0 %v4526, 48
    %v7305 = vpop.permute.xlu0 %7304
    %7306 = vrot.lane.b32.xlu0 %v4527, 48
    %v7307 = vpop.permute.xlu0 %7306
    %7308 = vrot.lane.b32.xlu0 %v4528, 48
    %v7309 = vpop.permute.xlu0 %7308
    %7310 = vrot.lane.b32.xlu0 %v4529, 48
    %v7311 = vpop.permute.xlu0 %7310
    %7312 = vrot.lane.b32.xlu0 %v4530, 48
    %v7313 = vpop.permute.xlu0 %7312
    %7314 = vrot.lane.b32.xlu0 %v4531, 48
    %v7315 = vpop.permute.xlu0 %7314
    %7316 = vrot.lane.b32.xlu0 %v4532, 48
    %v7317 = vpop.permute.xlu0 %7316
    %7318 = vrot.lane.b32.xlu0 %v4533, 48
    %v7319 = vpop.permute.xlu0 %7318
    %7320 = vrot.lane.b32.xlu0 %v4534, 48
    %v7321 = vpop.permute.xlu0 %7320
    %7322 = vrot.lane.b32.xlu0 %v4535, 48
    %v7323 = vpop.permute.xlu0 %7322
    %7324 = vrot.lane.b32.xlu0 %v4538, 48
    %v7325 = vpop.permute.xlu0 %7324
    %7326 = vrot.lane.b32.xlu0 %v4539, 48
    %v7327 = vpop.permute.xlu0 %7326
    %7328 = vrot.lane.b32.xlu0 %v4540, 48
    %v7329 = vpop.permute.xlu0 %7328
    %7330 = vrot.lane.b32.xlu0 %v4541, 48
    %v7331 = vpop.permute.xlu0 %7330
    %7332 = vrot.lane.b32.xlu0 %v4542, 48
    %v7333 = vpop.permute.xlu0 %7332
    %7334 = vrot.lane.b32.xlu0 %v4543, 48
    %v7335 = vpop.permute.xlu0 %7334
    %7336 = vrot.lane.b32.xlu0 %v4544, 48
    %v7337 = vpop.permute.xlu0 %7336
    %7338 = vrot.lane.b32.xlu0 %v4545, 48
    %v7339 = vpop.permute.xlu0 %7338
    %7340 = vrot.lane.b32.xlu0 %v4546, 48
    %v7341 = vpop.permute.xlu0 %7340
    %7342 = vrot.lane.b32.xlu0 %v4547, 48
    %v7343 = vpop.permute.xlu0 %7342
    %7344 = vrot.lane.b32.xlu0 %v4548, 48
    %v7345 = vpop.permute.xlu0 %7344
    %7346 = vrot.lane.b32.xlu0 %v4549, 48
    %v7347 = vpop.permute.xlu0 %7346
    %7348 = vrot.lane.b32.xlu0 %v4550, 48
    %v7349 = vpop.permute.xlu0 %7348
    %7350 = vrot.lane.b32.xlu0 %v4551, 48
    %v7351 = vpop.permute.xlu0 %7350
    %7352 = vrot.lane.b32.xlu0 %v4552, 48
    %v7353 = vpop.permute.xlu0 %7352
    %7354 = vrot.lane.b32.xlu0 %v4553, 48
    %v7355 = vpop.permute.xlu0 %7354
    %7356 = vrot.lane.b32.xlu0 %v4554, 48
    %v7357 = vpop.permute.xlu0 %7356
    %7358 = vrot.lane.b32.xlu0 %v4555, 48
    %v7359 = vpop.permute.xlu0 %7358
    %7360 = vrot.lane.b32.xlu0 %v4556, 48
    %v7361 = vpop.permute.xlu0 %7360
    %7362 = vrot.lane.b32.xlu0 %v4557, 48
    %v7363 = vpop.permute.xlu0 %7362
    %7364 = vrot.lane.b32.xlu0 %v4558, 48
    %v7365 = vpop.permute.xlu0 %7364
    %7366 = vrot.lane.b32.xlu0 %v4559, 48
    %v7367 = vpop.permute.xlu0 %7366
    %7368 = vrot.lane.b32.xlu0 %v4560, 48
    %v7369 = vpop.permute.xlu0 %7368
    %7370 = vrot.lane.b32.xlu0 %v4561, 48
    %v7371 = vpop.permute.xlu0 %7370
    %7372 = vrot.lane.b32.xlu0 %v4562, 48
    %v7373 = vpop.permute.xlu0 %7372
    %7374 = vrot.lane.b32.xlu0 %v4563, 48
    %v7375 = vpop.permute.xlu0 %7374
    %7376 = vrot.lane.b32.xlu0 %v4564, 48
    %v7377 = vpop.permute.xlu0 %7376
    %7378 = vrot.lane.b32.xlu0 %v4565, 48
    %v7379 = vpop.permute.xlu0 %7378
    %7380 = vrot.lane.b32.xlu0 %v4566, 48
    %v7381 = vpop.permute.xlu0 %7380
    %7382 = vrot.lane.b32.xlu0 %v4567, 48
    %v7383 = vpop.permute.xlu0 %7382
    %vm7444 = vcmask 458112
    %7445 = vst.msk [vmem:[#allocation3 + $0x1] sm:$0xff] %vm7444, %v7265
    %vm7446 = vcmask 457088
    %7447 = vst.msk [vmem:[#allocation3 + $0x9] sm:$0x7f] %vm7446, %v7267
    %7448 = vst.msk [vmem:[#allocation3 + $0x11] sm:$0xff] %vm7444, %v7269
    %7449 = vst.msk [vmem:[#allocation3 + $0x19] sm:$0x7f] %vm7446, %v7271
    %7450 = vst.msk [vmem:[#allocation3 + $0x21] sm:$0xff] %vm7444, %v7273
    %7451 = vst.msk [vmem:[#allocation3 + $0x29] sm:$0x7f] %vm7446, %v7275
    %7452 = vst.msk [vmem:[#allocation3 + $0x31] sm:$0xff] %vm7444, %v7277
    %7453 = vst.msk [vmem:[#allocation3 + $0x39] sm:$0x7f] %vm7446, %v7279
    %7454 = vst.msk [vmem:[#allocation3 + $0x41] sm:$0xff] %vm7444, %v7281
    %7455 = vst.msk [vmem:[#allocation3 + $0x49] sm:$0x7f] %vm7446, %v7283
    %7456 = vst.msk [vmem:[#allocation3 + $0x51] sm:$0xff] %vm7444, %v7285
    %7457 = vst.msk [vmem:[#allocation3 + $0x59] sm:$0x7f] %vm7446, %v7287
    %7458 = vst.msk [vmem:[#allocation3 + $0x61] sm:$0xff] %vm7444, %v7289
    %7459 = vst.msk [vmem:[#allocation3 + $0x69] sm:$0x7f] %vm7446, %v7291
    %7460 = vst.msk [vmem:[#allocation3 + $0x71] sm:$0xff] %vm7444, %v7293
    %7461 = vst.msk [vmem:[#allocation3 + $0x79] sm:$0x7f] %vm7446, %v7295
    %7462 = vst.msk [vmem:[#allocation3 + $0x81] sm:$0xff] %vm7444, %v7297
    %7463 = vst.msk [vmem:[#allocation3 + $0x89] sm:$0x7f] %vm7446, %v7299
    %7464 = vst.msk [vmem:[#allocation3 + $0x91] sm:$0xff] %vm7444, %v7301
    %7465 = vst.msk [vmem:[#allocation3 + $0x99] sm:$0x7f] %vm7446, %v7303
    %7466 = vst.msk [vmem:[#allocation3 + $0xa1] sm:$0xff] %vm7444, %v7305
    %7467 = vst.msk [vmem:[#allocation3 + $0xa9] sm:$0x7f] %vm7446, %v7307
    %7468 = vst.msk [vmem:[#allocation3 + $0xb1] sm:$0xff] %vm7444, %v7309
    %7469 = vst.msk [vmem:[#allocation3 + $0xb9] sm:$0x7f] %vm7446, %v7311
    %7470 = vst.msk [vmem:[#allocation3 + $0xc1] sm:$0xff] %vm7444, %v7313
    %7471 = vst.msk [vmem:[#allocation3 + $0xc9] sm:$0x7f] %vm7446, %v7315
    %7472 = vst.msk [vmem:[#allocation3 + $0xd1] sm:$0xff] %vm7444, %v7317
    %7473 = vst.msk [vmem:[#allocation3 + $0xd9] sm:$0x7f] %vm7446, %v7319
    %7474 = vst.msk [vmem:[#allocation3 + $0xe1] sm:$0xff] %vm7444, %v7321
    %7475 = vst.msk [vmem:[#allocation3 + $0xe9] sm:$0x7f] %vm7446, %v7323
    %7476 = vst.msk [vmem:[#allocation3 + $0x101] sm:$0xff] %vm7444, %v7325
    %7477 = vst.msk [vmem:[#allocation3 + $0x109] sm:$0x7f] %vm7446, %v7327
    %7478 = vst.msk [vmem:[#allocation3 + $0x111] sm:$0xff] %vm7444, %v7329
    %7479 = vst.msk [vmem:[#allocation3 + $0x119] sm:$0x7f] %vm7446, %v7331
    %7480 = vst.msk [vmem:[#allocation3 + $0x121] sm:$0xff] %vm7444, %v7333
    %7481 = vst.msk [vmem:[#allocation3 + $0x129] sm:$0x7f] %vm7446, %v7335
    %7482 = vst.msk [vmem:[#allocation3 + $0x131] sm:$0xff] %vm7444, %v7337
    %7483 = vst.msk [vmem:[#allocation3 + $0x139] sm:$0x7f] %vm7446, %v7339
    %7484 = vst.msk [vmem:[#allocation3 + $0x141] sm:$0xff] %vm7444, %v7341
    %7485 = vst.msk [vmem:[#allocation3 + $0x149] sm:$0x7f] %vm7446, %v7343
    %7486 = vst.msk [vmem:[#allocation3 + $0x151] sm:$0xff] %vm7444, %v7345
    %7487 = vst.msk [vmem:[#allocation3 + $0x159] sm:$0x7f] %vm7446, %v7347
    %7488 = vst.msk [vmem:[#allocation3 + $0x161] sm:$0xff] %vm7444, %v7349
    %7489 = vst.msk [vmem:[#allocation3 + $0x169] sm:$0x7f] %vm7446, %v7351
    %7490 = vst.msk [vmem:[#allocation3 + $0x171] sm:$0xff] %vm7444, %v7353
    %7491 = vst.msk [vmem:[#allocation3 + $0x179] sm:$0x7f] %vm7446, %v7355
    %7492 = vst.msk [vmem:[#allocation3 + $0x181] sm:$0xff] %vm7444, %v7357
    %7493 = vst.msk [vmem:[#allocation3 + $0x189] sm:$0x7f] %vm7446, %v7359
    %7494 = vst.msk [vmem:[#allocation3 + $0x191] sm:$0xff] %vm7444, %v7361
    %7495 = vst.msk [vmem:[#allocation3 + $0x199] sm:$0x7f] %vm7446, %v7363
    %7496 = vst.msk [vmem:[#allocation3 + $0x1a1] sm:$0xff] %vm7444, %v7365
    %7497 = vst.msk [vmem:[#allocation3 + $0x1a9] sm:$0x7f] %vm7446, %v7367
    %7498 = vst.msk [vmem:[#allocation3 + $0x1b1] sm:$0xff] %vm7444, %v7369
    %7499 = vst.msk [vmem:[#allocation3 + $0x1b9] sm:$0x7f] %vm7446, %v7371
    %7500 = vst.msk [vmem:[#allocation3 + $0x1c1] sm:$0xff] %vm7444, %v7373
    %7501 = vst.msk [vmem:[#allocation3 + $0x1c9] sm:$0x7f] %vm7446, %v7375
    %7502 = vst.msk [vmem:[#allocation3 + $0x1d1] sm:$0xff] %vm7444, %v7377
    %7503 = vst.msk [vmem:[#allocation3 + $0x1d9] sm:$0x7f] %vm7446, %v7379
    %7504 = vst.msk [vmem:[#allocation3 + $0x1e1] sm:$0xff] %vm7444, %v7381
    %7505 = vst.msk [vmem:[#allocation3 + $0x1e9] sm:$0x7f] %vm7446, %v7383
    %7506 = vrot.lane.b32.xlu0 %v4506, 56
    %v7507 = vpop.permute.xlu0 %7506
    %7508 = vrot.lane.b32.xlu0 %v4507, 56
    %v7509 = vpop.permute.xlu0 %7508
    %7510 = vrot.lane.b32.xlu0 %v4508, 56
    %v7511 = vpop.permute.xlu0 %7510
    %7512 = vrot.lane.b32.xlu0 %v4509, 56
    %v7513 = vpop.permute.xlu0 %7512
    %7514 = vrot.lane.b32.xlu0 %v4510, 56
    %v7515 = vpop.permute.xlu0 %7514
    %7516 = vrot.lane.b32.xlu0 %v4511, 56
    %v7517 = vpop.permute.xlu0 %7516
    %7518 = vrot.lane.b32.xlu0 %v4512, 56
    %v7519 = vpop.permute.xlu0 %7518
    %7520 = vrot.lane.b32.xlu0 %v4513, 56
    %v7521 = vpop.permute.xlu0 %7520
    %7522 = vrot.lane.b32.xlu0 %v4514, 56
    %v7523 = vpop.permute.xlu0 %7522
    %7524 = vrot.lane.b32.xlu0 %v4515, 56
    %v7525 = vpop.permute.xlu0 %7524
    %7526 = vrot.lane.b32.xlu0 %v4516, 56
    %v7527 = vpop.permute.xlu0 %7526
    %7528 = vrot.lane.b32.xlu0 %v4517, 56
    %v7529 = vpop.permute.xlu0 %7528
    %7530 = vrot.lane.b32.xlu0 %v4518, 56
    %v7531 = vpop.permute.xlu0 %7530
    %7532 = vrot.lane.b32.xlu0 %v4519, 56
    %v7533 = vpop.permute.xlu0 %7532
    %7534 = vrot.lane.b32.xlu0 %v4520, 56
    %v7535 = vpop.permute.xlu0 %7534
    %7536 = vrot.lane.b32.xlu0 %v4521, 56
    %v7537 = vpop.permute.xlu0 %7536
    %7538 = vrot.lane.b32.xlu0 %v4522, 56
    %v7539 = vpop.permute.xlu0 %7538
    %7540 = vrot.lane.b32.xlu0 %v4523, 56
    %v7541 = vpop.permute.xlu0 %7540
    %7542 = vrot.lane.b32.xlu0 %v4524, 56
    %v7543 = vpop.permute.xlu0 %7542
    %7544 = vrot.lane.b32.xlu0 %v4525, 56
    %v7545 = vpop.permute.xlu0 %7544
    %7546 = vrot.lane.b32.xlu0 %v4526, 56
    %v7547 = vpop.permute.xlu0 %7546
    %7548 = vrot.lane.b32.xlu0 %v4527, 56
    %v7549 = vpop.permute.xlu0 %7548
    %7550 = vrot.lane.b32.xlu0 %v4528, 56
    %v7551 = vpop.permute.xlu0 %7550
    %7552 = vrot.lane.b32.xlu0 %v4529, 56
    %v7553 = vpop.permute.xlu0 %7552
    %7554 = vrot.lane.b32.xlu0 %v4530, 56
    %v7555 = vpop.permute.xlu0 %7554
    %7556 = vrot.lane.b32.xlu0 %v4531, 56
    %v7557 = vpop.permute.xlu0 %7556
    %7558 = vrot.lane.b32.xlu0 %v4532, 56
    %v7559 = vpop.permute.xlu0 %7558
    %7560 = vrot.lane.b32.xlu0 %v4533, 56
    %v7561 = vpop.permute.xlu0 %7560
    %7562 = vrot.lane.b32.xlu0 %v4534, 56
    %v7563 = vpop.permute.xlu0 %7562
    %7564 = vrot.lane.b32.xlu0 %v4535, 56
    %v7565 = vpop.permute.xlu0 %7564
    %7566 = vrot.lane.b32.xlu0 %v4538, 56
    %v7567 = vpop.permute.xlu0 %7566
    %7568 = vrot.lane.b32.xlu0 %v4539, 56
    %v7569 = vpop.permute.xlu0 %7568
    %7570 = vrot.lane.b32.xlu0 %v4540, 56
    %v7571 = vpop.permute.xlu0 %7570
    %7572 = vrot.lane.b32.xlu0 %v4541, 56
    %v7573 = vpop.permute.xlu0 %7572
    %7574 = vrot.lane.b32.xlu0 %v4542, 56
    %v7575 = vpop.permute.xlu0 %7574
    %7576 = vrot.lane.b32.xlu0 %v4543, 56
    %v7577 = vpop.permute.xlu0 %7576
    %7578 = vrot.lane.b32.xlu0 %v4544, 56
    %v7579 = vpop.permute.xlu0 %7578
    %7580 = vrot.lane.b32.xlu0 %v4545, 56
    %v7581 = vpop.permute.xlu0 %7580
    %7582 = vrot.lane.b32.xlu0 %v4546, 56
    %v7583 = vpop.permute.xlu0 %7582
    %7584 = vrot.lane.b32.xlu0 %v4547, 56
    %v7585 = vpop.permute.xlu0 %7584
    %7586 = vrot.lane.b32.xlu0 %v4548, 56
    %v7587 = vpop.permute.xlu0 %7586
    %7588 = vrot.lane.b32.xlu0 %v4549, 56
    %v7589 = vpop.permute.xlu0 %7588
    %7590 = vrot.lane.b32.xlu0 %v4550, 56
    %v7591 = vpop.permute.xlu0 %7590
    %7592 = vrot.lane.b32.xlu0 %v4551, 56
    %v7593 = vpop.permute.xlu0 %7592
    %7594 = vrot.lane.b32.xlu0 %v4552, 56
    %v7595 = vpop.permute.xlu0 %7594
    %7596 = vrot.lane.b32.xlu0 %v4553, 56
    %v7597 = vpop.permute.xlu0 %7596
    %7598 = vrot.lane.b32.xlu0 %v4554, 56
    %v7599 = vpop.permute.xlu0 %7598
    %7600 = vrot.lane.b32.xlu0 %v4555, 56
    %v7601 = vpop.permute.xlu0 %7600
    %7602 = vrot.lane.b32.xlu0 %v4556, 56
    %v7603 = vpop.permute.xlu0 %7602
    %7604 = vrot.lane.b32.xlu0 %v4557, 56
    %v7605 = vpop.permute.xlu0 %7604
    %7606 = vrot.lane.b32.xlu0 %v4558, 56
    %v7607 = vpop.permute.xlu0 %7606
    %7608 = vrot.lane.b32.xlu0 %v4559, 56
    %v7609 = vpop.permute.xlu0 %7608
    %7610 = vrot.lane.b32.xlu0 %v4560, 56
    %v7611 = vpop.permute.xlu0 %7610
    %7612 = vrot.lane.b32.xlu0 %v4561, 56
    %v7613 = vpop.permute.xlu0 %7612
    %7614 = vrot.lane.b32.xlu0 %v4562, 56
    %v7615 = vpop.permute.xlu0 %7614
    %7616 = vrot.lane.b32.xlu0 %v4563, 56
    %v7617 = vpop.permute.xlu0 %7616
    %7618 = vrot.lane.b32.xlu0 %v4564, 56
    %v7619 = vpop.permute.xlu0 %7618
    %7620 = vrot.lane.b32.xlu0 %v4565, 56
    %v7621 = vpop.permute.xlu0 %7620
    %7622 = vrot.lane.b32.xlu0 %v4566, 56
    %v7623 = vpop.permute.xlu0 %7622
    %7624 = vrot.lane.b32.xlu0 %v4567, 56
    %v7625 = vpop.permute.xlu0 %7624
    %vm7686 = vcmask 523712
    %7687 = vst.msk [vmem:[#allocation3] sm:$0xff] %vm7686, %v7507
    %7688 = vst.msk [vmem:[#allocation3 + $0x8] sm:$0xff] %vm7686, %v7509
    %7689 = vst.msk [vmem:[#allocation3 + $0x10] sm:$0xff] %vm7686, %v7511
    %7690 = vst.msk [vmem:[#allocation3 + $0x18] sm:$0xff] %vm7686, %v7513
    %7691 = vst.msk [vmem:[#allocation3 + $0x20] sm:$0xff] %vm7686, %v7515
    %7692 = vst.msk [vmem:[#allocation3 + $0x28] sm:$0xff] %vm7686, %v7517
    %7693 = vst.msk [vmem:[#allocation3 + $0x30] sm:$0xff] %vm7686, %v7519
    %7694 = vst.msk [vmem:[#allocation3 + $0x38] sm:$0xff] %vm7686, %v7521
    %7695 = vst.msk [vmem:[#allocation3 + $0x40] sm:$0xff] %vm7686, %v7523
    %7696 = vst.msk [vmem:[#allocation3 + $0x48] sm:$0xff] %vm7686, %v7525
    %7697 = vst.msk [vmem:[#allocation3 + $0x50] sm:$0xff] %vm7686, %v7527
    %7698 = vst.msk [vmem:[#allocation3 + $0x58] sm:$0xff] %vm7686, %v7529
    %7699 = vst.msk [vmem:[#allocation3 + $0x60] sm:$0xff] %vm7686, %v7531
    %7700 = vst.msk [vmem:[#allocation3 + $0x68] sm:$0xff] %vm7686, %v7533
    %7701 = vst.msk [vmem:[#allocation3 + $0x70] sm:$0xff] %vm7686, %v7535
    %7702 = vst.msk [vmem:[#allocation3 + $0x78] sm:$0xff] %vm7686, %v7537
    %7703 = vst.msk [vmem:[#allocation3 + $0x80] sm:$0xff] %vm7686, %v7539
    %7704 = vst.msk [vmem:[#allocation3 + $0x88] sm:$0xff] %vm7686, %v7541
    %7705 = vst.msk [vmem:[#allocation3 + $0x90] sm:$0xff] %vm7686, %v7543
    %7706 = vst.msk [vmem:[#allocation3 + $0x98] sm:$0xff] %vm7686, %v7545
    %7707 = vst.msk [vmem:[#allocation3 + $0xa0] sm:$0xff] %vm7686, %v7547
    %7708 = vst.msk [vmem:[#allocation3 + $0xa8] sm:$0xff] %vm7686, %v7549
    %7709 = vst.msk [vmem:[#allocation3 + $0xb0] sm:$0xff] %vm7686, %v7551
    %7710 = vst.msk [vmem:[#allocation3 + $0xb8] sm:$0xff] %vm7686, %v7553
    %7711 = vst.msk [vmem:[#allocation3 + $0xc0] sm:$0xff] %vm7686, %v7555
    %7712 = vst.msk [vmem:[#allocation3 + $0xc8] sm:$0xff] %vm7686, %v7557
    %7713 = vst.msk [vmem:[#allocation3 + $0xd0] sm:$0xff] %vm7686, %v7559
    %7714 = vst.msk [vmem:[#allocation3 + $0xd8] sm:$0xff] %vm7686, %v7561
    %7715 = vst.msk [vmem:[#allocation3 + $0xe0] sm:$0xff] %vm7686, %v7563
    %7716 = vst.msk [vmem:[#allocation3 + $0xe8] sm:$0xff] %vm7686, %v7565
    %7717 = vst.msk [vmem:[#allocation3 + $0x100] sm:$0xff] %vm7686, %v7567
    %7718 = vst.msk [vmem:[#allocation3 + $0x108] sm:$0xff] %vm7686, %v7569
    %7719 = vst.msk [vmem:[#allocation3 + $0x110] sm:$0xff] %vm7686, %v7571
    %7720 = vst.msk [vmem:[#allocation3 + $0x118] sm:$0xff] %vm7686, %v7573
    %7721 = vst.msk [vmem:[#allocation3 + $0x120] sm:$0xff] %vm7686, %v7575
    %7722 = vst.msk [vmem:[#allocation3 + $0x128] sm:$0xff] %vm7686, %v7577
    %7723 = vst.msk [vmem:[#allocation3 + $0x130] sm:$0xff] %vm7686, %v7579
    %7724 = vst.msk [vmem:[#allocation3 + $0x138] sm:$0xff] %vm7686, %v7581
    %7725 = vst.msk [vmem:[#allocation3 + $0x140] sm:$0xff] %vm7686, %v7583
    %7726 = vst.msk [vmem:[#allocation3 + $0x148] sm:$0xff] %vm7686, %v7585
    %7727 = vst.msk [vmem:[#allocation3 + $0x150] sm:$0xff] %vm7686, %v7587
    %7728 = vst.msk [vmem:[#allocation3 + $0x158] sm:$0xff] %vm7686, %v7589
    %7729 = vst.msk [vmem:[#allocation3 + $0x160] sm:$0xff] %vm7686, %v7591
    %7730 = vst.msk [vmem:[#allocation3 + $0x168] sm:$0xff] %vm7686, %v7593
    %7731 = vst.msk [vmem:[#allocation3 + $0x170] sm:$0xff] %vm7686, %v7595
    %7732 = vst.msk [vmem:[#allocation3 + $0x178] sm:$0xff] %vm7686, %v7597
    %7733 = vst.msk [vmem:[#allocation3 + $0x180] sm:$0xff] %vm7686, %v7599
    %7734 = vst.msk [vmem:[#allocation3 + $0x188] sm:$0xff] %vm7686, %v7601
    %7735 = vst.msk [vmem:[#allocation3 + $0x190] sm:$0xff] %vm7686, %v7603
    %7736 = vst.msk [vmem:[#allocation3 + $0x198] sm:$0xff] %vm7686, %v7605
    %7737 = vst.msk [vmem:[#allocation3 + $0x1a0] sm:$0xff] %vm7686, %v7607
    %7738 = vst.msk [vmem:[#allocation3 + $0x1a8] sm:$0xff] %vm7686, %v7609
    %7739 = vst.msk [vmem:[#allocation3 + $0x1b0] sm:$0xff] %vm7686, %v7611
    %7740 = vst.msk [vmem:[#allocation3 + $0x1b8] sm:$0xff] %vm7686, %v7613
    %7741 = vst.msk [vmem:[#allocation3 + $0x1c0] sm:$0xff] %vm7686, %v7615
    %7742 = vst.msk [vmem:[#allocation3 + $0x1c8] sm:$0xff] %vm7686, %v7617
    %7743 = vst.msk [vmem:[#allocation3 + $0x1d0] sm:$0xff] %vm7686, %v7619
    %7744 = vst.msk [vmem:[#allocation3 + $0x1d8] sm:$0xff] %vm7686, %v7621
    %7745 = vst.msk [vmem:[#allocation3 + $0x1e0] sm:$0xff] %vm7686, %v7623
    %7746 = vst.msk [vmem:[#allocation3 + $0x1e8] sm:$0xff] %vm7686, %v7625
    %7747 = vrot.lane.b32.xlu0 %v4506, 64
    %v7748 = vpop.permute.xlu0 %7747
    %7749 = vrot.lane.b32.xlu0 %v4507, 64
    %v7750 = vpop.permute.xlu0 %7749
    %7751 = vrot.lane.b32.xlu0 %v4508, 64
    %v7752 = vpop.permute.xlu0 %7751
    %7753 = vrot.lane.b32.xlu0 %v4509, 64
    %v7754 = vpop.permute.xlu0 %7753
    %7755 = vrot.lane.b32.xlu0 %v4510, 64
    %v7756 = vpop.permute.xlu0 %7755
    %7757 = vrot.lane.b32.xlu0 %v4511, 64
    %v7758 = vpop.permute.xlu0 %7757
    %7759 = vrot.lane.b32.xlu0 %v4512, 64
    %v7760 = vpop.permute.xlu0 %7759
    %7761 = vrot.lane.b32.xlu0 %v4513, 64
    %v7762 = vpop.permute.xlu0 %7761
    %7763 = vrot.lane.b32.xlu0 %v4514, 64
    %v7764 = vpop.permute.xlu0 %7763
    %7765 = vrot.lane.b32.xlu0 %v4515, 64
    %v7766 = vpop.permute.xlu0 %7765
    %7767 = vrot.lane.b32.xlu0 %v4516, 64
    %v7768 = vpop.permute.xlu0 %7767
    %7769 = vrot.lane.b32.xlu0 %v4517, 64
    %v7770 = vpop.permute.xlu0 %7769
    %7771 = vrot.lane.b32.xlu0 %v4518, 64
    %v7772 = vpop.permute.xlu0 %7771
    %7773 = vrot.lane.b32.xlu0 %v4519, 64
    %v7774 = vpop.permute.xlu0 %7773
    %7775 = vrot.lane.b32.xlu0 %v4520, 64
    %v7776 = vpop.permute.xlu0 %7775
    %7777 = vrot.lane.b32.xlu0 %v4521, 64
    %v7778 = vpop.permute.xlu0 %7777
    %7779 = vrot.lane.b32.xlu0 %v4522, 64
    %v7780 = vpop.permute.xlu0 %7779
    %7781 = vrot.lane.b32.xlu0 %v4523, 64
    %v7782 = vpop.permute.xlu0 %7781
    %7783 = vrot.lane.b32.xlu0 %v4524, 64
    %v7784 = vpop.permute.xlu0 %7783
    %7785 = vrot.lane.b32.xlu0 %v4525, 64
    %v7786 = vpop.permute.xlu0 %7785
    %7787 = vrot.lane.b32.xlu0 %v4526, 64
    %v7788 = vpop.permute.xlu0 %7787
    %7789 = vrot.lane.b32.xlu0 %v4527, 64
    %v7790 = vpop.permute.xlu0 %7789
    %7791 = vrot.lane.b32.xlu0 %v4528, 64
    %v7792 = vpop.permute.xlu0 %7791
    %7793 = vrot.lane.b32.xlu0 %v4529, 64
    %v7794 = vpop.permute.xlu0 %7793
    %7795 = vrot.lane.b32.xlu0 %v4530, 64
    %v7796 = vpop.permute.xlu0 %7795
    %7797 = vrot.lane.b32.xlu0 %v4531, 64
    %v7798 = vpop.permute.xlu0 %7797
    %7799 = vrot.lane.b32.xlu0 %v4532, 64
    %v7800 = vpop.permute.xlu0 %7799
    %7801 = vrot.lane.b32.xlu0 %v4533, 64
    %v7802 = vpop.permute.xlu0 %7801
    %7803 = vrot.lane.b32.xlu0 %v4534, 64
    %v7804 = vpop.permute.xlu0 %7803
    %7805 = vrot.lane.b32.xlu0 %v4535, 64
    %v7806 = vpop.permute.xlu0 %7805
    %7807 = vrot.lane.b32.xlu0 %v4538, 64
    %v7808 = vpop.permute.xlu0 %7807
    %7809 = vrot.lane.b32.xlu0 %v4539, 64
    %v7810 = vpop.permute.xlu0 %7809
    %7811 = vrot.lane.b32.xlu0 %v4540, 64
    %v7812 = vpop.permute.xlu0 %7811
    %7813 = vrot.lane.b32.xlu0 %v4541, 64
    %v7814 = vpop.permute.xlu0 %7813
    %7815 = vrot.lane.b32.xlu0 %v4542, 64
    %v7816 = vpop.permute.xlu0 %7815
    %7817 = vrot.lane.b32.xlu0 %v4543, 64
    %v7818 = vpop.permute.xlu0 %7817
    %7819 = vrot.lane.b32.xlu0 %v4544, 64
    %v7820 = vpop.permute.xlu0 %7819
    %7821 = vrot.lane.b32.xlu0 %v4545, 64
    %v7822 = vpop.permute.xlu0 %7821
    %7823 = vrot.lane.b32.xlu0 %v4546, 64
    %v7824 = vpop.permute.xlu0 %7823
    %7825 = vrot.lane.b32.xlu0 %v4547, 64
    %v7826 = vpop.permute.xlu0 %7825
    %7827 = vrot.lane.b32.xlu0 %v4548, 64
    %v7828 = vpop.permute.xlu0 %7827
    %7829 = vrot.lane.b32.xlu0 %v4549, 64
    %v7830 = vpop.permute.xlu0 %7829
    %7831 = vrot.lane.b32.xlu0 %v4550, 64
    %v7832 = vpop.permute.xlu0 %7831
    %7833 = vrot.lane.b32.xlu0 %v4551, 64
    %v7834 = vpop.permute.xlu0 %7833
    %7835 = vrot.lane.b32.xlu0 %v4552, 64
    %v7836 = vpop.permute.xlu0 %7835
    %7837 = vrot.lane.b32.xlu0 %v4553, 64
    %v7838 = vpop.permute.xlu0 %7837
    %7839 = vrot.lane.b32.xlu0 %v4554, 64
    %v7840 = vpop.permute.xlu0 %7839
    %7841 = vrot.lane.b32.xlu0 %v4555, 64
    %v7842 = vpop.permute.xlu0 %7841
    %7843 = vrot.lane.b32.xlu0 %v4556, 64
    %v7844 = vpop.permute.xlu0 %7843
    %7845 = vrot.lane.b32.xlu0 %v4557, 64
    %v7846 = vpop.permute.xlu0 %7845
    %7847 = vrot.lane.b32.xlu0 %v4558, 64
    %v7848 = vpop.permute.xlu0 %7847
    %7849 = vrot.lane.b32.xlu0 %v4559, 64
    %v7850 = vpop.permute.xlu0 %7849
    %7851 = vrot.lane.b32.xlu0 %v4560, 64
    %v7852 = vpop.permute.xlu0 %7851
    %7853 = vrot.lane.b32.xlu0 %v4561, 64
    %v7854 = vpop.permute.xlu0 %7853
    %7855 = vrot.lane.b32.xlu0 %v4562, 64
    %v7856 = vpop.permute.xlu0 %7855
    %7857 = vrot.lane.b32.xlu0 %v4563, 64
    %v7858 = vpop.permute.xlu0 %7857
    %7859 = vrot.lane.b32.xlu0 %v4564, 64
    %v7860 = vpop.permute.xlu0 %7859
    %7861 = vrot.lane.b32.xlu0 %v4565, 64
    %v7862 = vpop.permute.xlu0 %7861
    %7863 = vrot.lane.b32.xlu0 %v4566, 64
    %v7864 = vpop.permute.xlu0 %7863
    %7865 = vrot.lane.b32.xlu0 %v4567, 64
    %v7866 = vpop.permute.xlu0 %7865
    %vm7927 = vcmask 589313
    %7928 = vst.msk [vmem:[#allocation3 - $0x1] sm:$0xfe] %vm7927, %v7748
    %vm7929 = vcmask 589312
    %7930 = vst.msk [vmem:[#allocation3 + $0x7] sm:$0xff] %vm7929, %v7750
    %7931 = vst.msk [vmem:[#allocation3 + $0xf] sm:$0xfe] %vm7927, %v7752
    %7932 = vst.msk [vmem:[#allocation3 + $0x17] sm:$0xff] %vm7929, %v7754
    %7933 = vst.msk [vmem:[#allocation3 + $0x1f] sm:$0xfe] %vm7927, %v7756
    %7934 = vst.msk [vmem:[#allocation3 + $0x27] sm:$0xff] %vm7929, %v7758
    %7935 = vst.msk [vmem:[#allocation3 + $0x2f] sm:$0xfe] %vm7927, %v7760
    %7936 = vst.msk [vmem:[#allocation3 + $0x37] sm:$0xff] %vm7929, %v7762
    %7937 = vst.msk [vmem:[#allocation3 + $0x3f] sm:$0xfe] %vm7927, %v7764
    %7938 = vst.msk [vmem:[#allocation3 + $0x47] sm:$0xff] %vm7929, %v7766
    %7939 = vst.msk [vmem:[#allocation3 + $0x4f] sm:$0xfe] %vm7927, %v7768
    %7940 = vst.msk [vmem:[#allocation3 + $0x57] sm:$0xff] %vm7929, %v7770
    %7941 = vst.msk [vmem:[#allocation3 + $0x5f] sm:$0xfe] %vm7927, %v7772
    %7942 = vst.msk [vmem:[#allocation3 + $0x67] sm:$0xff] %vm7929, %v7774
    %7943 = vst.msk [vmem:[#allocation3 + $0x6f] sm:$0xfe] %vm7927, %v7776
    %7944 = vst.msk [vmem:[#allocation3 + $0x77] sm:$0xff] %vm7929, %v7778
    %7945 = vst.msk [vmem:[#allocation3 + $0x7f] sm:$0xfe] %vm7927, %v7780
    %7946 = vst.msk [vmem:[#allocation3 + $0x87] sm:$0xff] %vm7929, %v7782
    %7947 = vst.msk [vmem:[#allocation3 + $0x8f] sm:$0xfe] %vm7927, %v7784
    %7948 = vst.msk [vmem:[#allocation3 + $0x97] sm:$0xff] %vm7929, %v7786
    %7949 = vst.msk [vmem:[#allocation3 + $0x9f] sm:$0xfe] %vm7927, %v7788
    %7950 = vst.msk [vmem:[#allocation3 + $0xa7] sm:$0xff] %vm7929, %v7790
    %7951 = vst.msk [vmem:[#allocation3 + $0xaf] sm:$0xfe] %vm7927, %v7792
    %7952 = vst.msk [vmem:[#allocation3 + $0xb7] sm:$0xff] %vm7929, %v7794
    %7953 = vst.msk [vmem:[#allocation3 + $0xbf] sm:$0xfe] %vm7927, %v7796
    %7954 = vst.msk [vmem:[#allocation3 + $0xc7] sm:$0xff] %vm7929, %v7798
    %7955 = vst.msk [vmem:[#allocation3 + $0xcf] sm:$0xfe] %vm7927, %v7800
    %7956 = vst.msk [vmem:[#allocation3 + $0xd7] sm:$0xff] %vm7929, %v7802
    %7957 = vst.msk [vmem:[#allocation3 + $0xdf] sm:$0xfe] %vm7927, %v7804
    %7958 = vst.msk [vmem:[#allocation3 + $0xe7] sm:$0xff] %vm7929, %v7806
    %7959 = vst.msk [vmem:[#allocation3 + $0xff] sm:$0xfe] %vm7927, %v7808
    %7960 = vst.msk [vmem:[#allocation3 + $0x107] sm:$0xff] %vm7929, %v7810
    %7961 = vst.msk [vmem:[#allocation3 + $0x10f] sm:$0xfe] %vm7927, %v7812
    %7962 = vst.msk [vmem:[#allocation3 + $0x117] sm:$0xff] %vm7929, %v7814
    %7963 = vst.msk [vmem:[#allocation3 + $0x11f] sm:$0xfe] %vm7927, %v7816
    %7964 = vst.msk [vmem:[#allocation3 + $0x127] sm:$0xff] %vm7929, %v7818
    %7965 = vst.msk [vmem:[#allocation3 + $0x12f] sm:$0xfe] %vm7927, %v7820
    %7966 = vst.msk [vmem:[#allocation3 + $0x137] sm:$0xff] %vm7929, %v7822
    %7967 = vst.msk [vmem:[#allocation3 + $0x13f] sm:$0xfe] %vm7927, %v7824
    %7968 = vst.msk [vmem:[#allocation3 + $0x147] sm:$0xff] %vm7929, %v7826
    %7969 = vst.msk [vmem:[#allocation3 + $0x14f] sm:$0xfe] %vm7927, %v7828
    %7970 = vst.msk [vmem:[#allocation3 + $0x157] sm:$0xff] %vm7929, %v7830
    %7971 = vst.msk [vmem:[#allocation3 + $0x15f] sm:$0xfe] %vm7927, %v7832
    %7972 = vst.msk [vmem:[#allocation3 + $0x167] sm:$0xff] %vm7929, %v7834
    %7973 = vst.msk [vmem:[#allocation3 + $0x16f] sm:$0xfe] %vm7927, %v7836
    %7974 = vst.msk [vmem:[#allocation3 + $0x177] sm:$0xff] %vm7929, %v7838
    %7975 = vst.msk [vmem:[#allocation3 + $0x17f] sm:$0xfe] %vm7927, %v7840
    %7976 = vst.msk [vmem:[#allocation3 + $0x187] sm:$0xff] %vm7929, %v7842
    %7977 = vst.msk [vmem:[#allocation3 + $0x18f] sm:$0xfe] %vm7927, %v7844
    %7978 = vst.msk [vmem:[#allocation3 + $0x197] sm:$0xff] %vm7929, %v7846
    %7979 = vst.msk [vmem:[#allocation3 + $0x19f] sm:$0xfe] %vm7927, %v7848
    %7980 = vst.msk [vmem:[#allocation3 + $0x1a7] sm:$0xff] %vm7929, %v7850
    %7981 = vst.msk [vmem:[#allocation3 + $0x1af] sm:$0xfe] %vm7927, %v7852
    %7982 = vst.msk [vmem:[#allocation3 + $0x1b7] sm:$0xff] %vm7929, %v7854
    %7983 = vst.msk [vmem:[#allocation3 + $0x1bf] sm:$0xfe] %vm7927, %v7856
    %7984 = vst.msk [vmem:[#allocation3 + $0x1c7] sm:$0xff] %vm7929, %v7858
    %7985 = vst.msk [vmem:[#allocation3 + $0x1cf] sm:$0xfe] %vm7927, %v7860
    %7986 = vst.msk [vmem:[#allocation3 + $0x1d7] sm:$0xff] %vm7929, %v7862
    %7987 = vst.msk [vmem:[#allocation3 + $0x1df] sm:$0xfe] %vm7927, %v7864
    %7988 = vst.msk [vmem:[#allocation3 + $0x1e7] sm:$0xff] %vm7929, %v7866
    %v7989 = vld [vmem:[#allocation3] sm:$0xff]
    %v7990 = vld [vmem:[#allocation3 + $0x8] sm:$0xff]
    %v7991 = vld [vmem:[#allocation3 + $0x10] sm:$0xff]
    %v7992 = vld [vmem:[#allocation3 + $0x18] sm:$0xff]
    %v7993 = vld [vmem:[#allocation3 + $0x20] sm:$0xff]
    %v7994 = vld [vmem:[#allocation3 + $0x28] sm:$0xff]
    %v7995 = vld [vmem:[#allocation3 + $0x30] sm:$0xff]
    %v7996 = vld [vmem:[#allocation3 + $0x38] sm:$0xff]
    %v7997 = vld [vmem:[#allocation3 + $0x40] sm:$0xff]
    %v7998 = vld [vmem:[#allocation3 + $0x48] sm:$0xff]
    %v7999 = vld [vmem:[#allocation3 + $0x50] sm:$0xff]
    %v8000 = vld [vmem:[#allocation3 + $0x58] sm:$0xff]
    %v8001 = vld [vmem:[#allocation3 + $0x60] sm:$0xff]
    %v8002 = vld [vmem:[#allocation3 + $0x68] sm:$0xff]
    %v8003 = vld [vmem:[#allocation3 + $0x70] sm:$0xff]
    %v8004 = vld [vmem:[#allocation3 + $0x78] sm:$0xff]
    %v8005 = vld [vmem:[#allocation3 + $0x80] sm:$0xff]
    %v8006 = vld [vmem:[#allocation3 + $0x88] sm:$0xff]
    %v8007 = vld [vmem:[#allocation3 + $0x90] sm:$0xff]
    %v8008 = vld [vmem:[#allocation3 + $0x98] sm:$0xff]
    %v8009 = vld [vmem:[#allocation3 + $0xa0] sm:$0xff]
    %v8010 = vld [vmem:[#allocation3 + $0xa8] sm:$0xff]
    %v8011 = vld [vmem:[#allocation3 + $0xb0] sm:$0xff]
    %v8012 = vld [vmem:[#allocation3 + $0xb8] sm:$0xff]
    %v8013 = vld [vmem:[#allocation3 + $0xc0] sm:$0xff]
    %v8014 = vld [vmem:[#allocation3 + $0xc8] sm:$0xff]
    %v8015 = vld [vmem:[#allocation3 + $0xd0] sm:$0xff]
    %v8016 = vld [vmem:[#allocation3 + $0xd8] sm:$0xff]
    %v8017 = vld [vmem:[#allocation3 + $0xe0] sm:$0xff]
    %v8018 = vld [vmem:[#allocation3 + $0xe8] sm:$0xff]
    %v8019 = vld [vmem:[#allocation3 + $0xf0] sm:$0xff]
    %v8020 = vld [vmem:[#allocation3 + $0xf8] sm:$0xff]
    %v8021 = vld [vmem:[#allocation3 + $0x100] sm:$0xff]
    %v8022 = vld [vmem:[#allocation3 + $0x108] sm:$0xff]
    %v8023 = vld [vmem:[#allocation3 + $0x110] sm:$0xff]
    %v8024 = vld [vmem:[#allocation3 + $0x118] sm:$0xff]
    %v8025 = vld [vmem:[#allocation3 + $0x120] sm:$0xff]
    %v8026 = vld [vmem:[#allocation3 + $0x128] sm:$0xff]
    %v8027 = vld [vmem:[#allocation3 + $0x130] sm:$0xff]
    %v8028 = vld [vmem:[#allocation3 + $0x138] sm:$0xff]
    %v8029 = vld [vmem:[#allocation3 + $0x140] sm:$0xff]
    %v8030 = vld [vmem:[#allocation3 + $0x148] sm:$0xff]
    %v8031 = vld [vmem:[#allocation3 + $0x150] sm:$0xff]
    %v8032 = vld [vmem:[#allocation3 + $0x158] sm:$0xff]
    %v8033 = vld [vmem:[#allocation3 + $0x160] sm:$0xff]
    %v8034 = vld [vmem:[#allocation3 + $0x168] sm:$0xff]
    %v8035 = vld [vmem:[#allocation3 + $0x170] sm:$0xff]
    %v8036 = vld [vmem:[#allocation3 + $0x178] sm:$0xff]
    %v8037 = vld [vmem:[#allocation3 + $0x180] sm:$0xff]
    %v8038 = vld [vmem:[#allocation3 + $0x188] sm:$0xff]
    %v8039 = vld [vmem:[#allocation3 + $0x190] sm:$0xff]
    %v8040 = vld [vmem:[#allocation3 + $0x198] sm:$0xff]
    %v8041 = vld [vmem:[#allocation3 + $0x1a0] sm:$0xff]
    %v8042 = vld [vmem:[#allocation3 + $0x1a8] sm:$0xff]
    %v8043 = vld [vmem:[#allocation3 + $0x1b0] sm:$0xff]
    %v8044 = vld [vmem:[#allocation3 + $0x1b8] sm:$0xff]
    %v8045 = vld [vmem:[#allocation3 + $0x1c0] sm:$0xff]
    %v8046 = vld [vmem:[#allocation3 + $0x1c8] sm:$0xff]
    %v8047 = vld [vmem:[#allocation3 + $0x1d0] sm:$0xff]
    %v8048 = vld [vmem:[#allocation3 + $0x1d8] sm:$0xff]
    %v8049 = vld [vmem:[#allocation3 + $0x1e0] sm:$0xff]
    %v8050 = vld [vmem:[#allocation3 + $0x1e8] sm:$0xff]
    %v8051 = vld [vmem:[#allocation3 + $0x1f0] sm:$0xff]
    %v8052 = vld [vmem:[#allocation3 + $0x1f8] sm:$0xff]
    %v8053 = vld [vmem:[%s4] sm:$0xff]
    %v8054 = vld [vmem:[%s4 + $0x8] sm:$0xff]
    %v8055 = vld [vmem:[%s4 + $0x10] sm:$0xff]
    %v8056 = vld [vmem:[%s4 + $0x18] sm:$0xff]
    %v8057 = vld [vmem:[%s4 + $0x20] sm:$0xff]
    %v8058 = vld [vmem:[%s4 + $0x28] sm:$0xff]
    %v8059 = vld [vmem:[%s4 + $0x30] sm:$0xff]
    %v8060 = vld [vmem:[%s4 + $0x38] sm:$0xff]
    %v8061 = vld [vmem:[%s4 + $0x40] sm:$0xff]
    %v8063 = vsel %vm5817, %v7989, 0
    %v8066 = vsel %vm5817, %v7990, 0
    %v8069 = vsel %vm5817, %v7991, 0
    %v8072 = vsel %vm5817, %v7992, 0
    %v8075 = vsel %vm5817, %v7993, 0
    %v8078 = vsel %vm5817, %v7994, 0
    %v8081 = vsel %vm5817, %v7995, 0
    %v8084 = vsel %vm5817, %v7996, 0
    %v8087 = vsel %vm5817, %v7997, 0
    %v8090 = vsel %vm5817, %v7998, 0
    %v8093 = vsel %vm5817, %v7999, 0
    %v8096 = vsel %vm5817, %v8000, 0
    %v8099 = vsel %vm5817, %v8001, 0
    %v8102 = vsel %vm5817, %v8002, 0
    %v8105 = vsel %vm5817, %v8003, 0
    %v8108 = vsel %vm5817, %v8004, 0
    %v8111 = vsel %vm5817, %v8005, 0
    %v8114 = vsel %vm5817, %v8006, 0
    %v8117 = vsel %vm5817, %v8007, 0
    %v8120 = vsel %vm5817, %v8008, 0
    %v8123 = vsel %vm5817, %v8009, 0
    %v8126 = vsel %vm5817, %v8010, 0
    %v8129 = vsel %vm5817, %v8011, 0
    %v8132 = vsel %vm5817, %v8012, 0
    %v8135 = vsel %vm5817, %v8013, 0
    %v8138 = vsel %vm5817, %v8014, 0
    %v8141 = vsel %vm5817, %v8015, 0
    %v8144 = vsel %vm5817, %v8016, 0
    %v8147 = vsel %vm5817, %v8017, 0
    %v8150 = vsel %vm5817, %v8018, 0
    %v8153 = vsel %vm5817, %v8019, 0
    %v8156 = vsel %vm5817, %v8020, 0
    %v8159 = vsel %vm5817, %v8021, 0
    %v8162 = vsel %vm5817, %v8022, 0
    %v8165 = vsel %vm5817, %v8023, 0
    %v8168 = vsel %vm5817, %v8024, 0
    %v8171 = vsel %vm5817, %v8025, 0
    %v8174 = vsel %vm5817, %v8026, 0
    %v8177 = vsel %vm5817, %v8027, 0
    %v8180 = vsel %vm5817, %v8028, 0
    %v8183 = vsel %vm5817, %v8029, 0
    %v8186 = vsel %vm5817, %v8030, 0
    %v8189 = vsel %vm5817, %v8031, 0
    %v8192 = vsel %vm5817, %v8032, 0
    %v8195 = vsel %vm5817, %v8033, 0
    %v8198 = vsel %vm5817, %v8034, 0
    %v8201 = vsel %vm5817, %v8035, 0
    %v8204 = vsel %vm5817, %v8036, 0
    %v8207 = vsel %vm5817, %v8037, 0
    %v8210 = vsel %vm5817, %v8038, 0
    %v8213 = vsel %vm5817, %v8039, 0
    %v8216 = vsel %vm5817, %v8040, 0
    %v8219 = vsel %vm5817, %v8041, 0
    %v8222 = vsel %vm5817, %v8042, 0
    %v8225 = vsel %vm5817, %v8043, 0
    %v8228 = vsel %vm5817, %v8044, 0
    %v8231 = vsel %vm5817, %v8045, 0
    %v8234 = vsel %vm5817, %v8046, 0
    %v8237 = vsel %vm5817, %v8047, 0
    %v8240 = vsel %vm5817, %v8048, 0
    %v8243 = vsel %vm5817, %v8049, 0
    %v8246 = vsel %vm5817, %v8050, 0
    %v8249 = vsel %vm5817, %v8051, 0
    %v8252 = vsel %vm5817, %v8052, 0
    %8254 = vmatprep.subr.mxu0 0.0
    %8255 = vmatpush1.msra.mxu0 0.0
    %8256 = vmatprep.subr.mxu0 0.0
    %8257 = vmatpush1.msra.mxu0 0.0
    %8258 = vmatprep.subr.mxu0 0.0
    %8259 = vmatpush1.msra.mxu0 0.0
    %8260 = vmatprep.subr.mxu0 0.0
    %8261 = vmatpush1.msra.mxu0 0.0
    %8262 = vmatprep.subr.mxu0 0.0
    %8263 = vmatpush1.msra.mxu0 0.0
    %8264 = vmatprep.subr.mxu0 0.0
    %8265 = vmatpush1.msra.mxu0 0.0
    %8266 = vmatprep.subr.mxu0 0.0
    %8267 = vmatpush1.msra.mxu0 0.0
    %8268 = vmatprep.subr.mxu0 0.0
    %8269 = vmatpush1.msra.mxu0 %v8061
    %8270 = vmatprep.subr.mxu0 0.0
    %8271 = vmatpush1.msra.mxu0 %v8060
    %8272 = vmatprep.subr.mxu0 0.0
    %8273 = vmatpush1.msra.mxu0 %v8059
    %8274 = vmatprep.subr.mxu0 0.0
    %8275 = vmatpush1.msra.mxu0 %v8058
    %8276 = vmatprep.subr.mxu0 0.0
    %8277 = vmatpush1.msra.mxu0 %v8057
    %8278 = vmatprep.subr.mxu0 0.0
    %8279 = vmatpush1.msra.mxu0 %v8056
    %8280 = vmatprep.subr.mxu0 0.0
    %8281 = vmatpush1.msra.mxu0 %v8055
    %8282 = vmatprep.subr.mxu0 0.0
    %8283 = vmatpush1.msra.mxu0 %v8054
    %8284 = vmatprep.subr.mxu0 0.0
    %8285 = vmatpush1.msra.mxu0 %v8053
    %8286 = vmatprep.subr.mxu0 0.0
    %8287 = vmatpush2.msra.mxu0 0.0
    %8288 = vmatprep.subr.mxu0 0.0
    %8289 = vmatpush2.msra.mxu0 0.0
    %8290 = vmatprep.subr.mxu0 0.0
    %8291 = vmatpush2.msra.mxu0 0.0
    %8292 = vmatprep.subr.mxu0 0.0
    %8293 = vmatpush2.msra.mxu0 0.0
    %8294 = vmatprep.subr.mxu0 0.0
    %8295 = vmatpush2.msra.mxu0 0.0
    %8296 = vmatprep.subr.mxu0 0.0
    %8297 = vmatpush2.msra.mxu0 0.0
    %8298 = vmatprep.subr.mxu0 0.0
    %8299 = vmatpush2.msra.mxu0 0.0
    %8300 = vmatprep.subr.mxu0 0.0
    %8301 = vmatpush2.msra.mxu0 0.0
    %8302 = vmatprep.subr.mxu0 0.0
    %8303 = vmatpush2.msra.mxu0 0.0
    %8304 = vmatprep.subr.mxu0 0.0
    %8305 = vmatpush2.msra.mxu0 0.0
    %8306 = vmatprep.subr.mxu0 0.0
    %8307 = vmatpush2.msra.mxu0 0.0
    %8308 = vmatprep.subr.mxu0 0.0
    %8309 = vmatpush2.msra.mxu0 0.0
    %8310 = vmatprep.subr.mxu0 0.0
    %8311 = vmatpush2.msra.mxu0 0.0
    %8312 = vmatprep.subr.mxu0 0.0
    %8313 = vmatpush2.msra.mxu0 0.0
    %8314 = vmatprep.subr.mxu0 0.0
    %8315 = vmatpush2.msra.mxu0 0.0
    %8316 = vmatprep.subr.mxu0 0.0
    %8317 = vmatpush2.msra.mxu0 0.0
    %8318 = vmatprep.mubr.f32.mxu0 0.0
    %8319 = vmatmul.mubr.f32.gmra.mxu0 %v8063
    %v8320 = vpop.f32.mrf.mxu0
    %v8321 = vadd.f32 0.0, %v8320
    %v8322 = vpop.f32.mrf.mxu0
    %8323 = vmatprep.mubr.f32.mxu0 0.0
    %8324 = vmatmul.mubr.f32.gmra.mxu0 %v8066
    %v8325 = vpop.f32.mrf.mxu0
    %v8326 = vadd.f32 0.0, %v8325
    %v8327 = vpop.f32.mrf.mxu0
    %8328 = vmatprep.mubr.f32.mxu0 0.0
    %8329 = vmatmul.mubr.f32.gmra.mxu0 %v8069
    %v8330 = vpop.f32.mrf.mxu0
    %v8331 = vadd.f32 0.0, %v8330
    %v8332 = vpop.f32.mrf.mxu0
    %8333 = vmatprep.mubr.f32.mxu0 0.0
    %8334 = vmatmul.mubr.f32.gmra.mxu0 %v8072
    %v8335 = vpop.f32.mrf.mxu0
    %v8336 = vadd.f32 0.0, %v8335
    %v8337 = vpop.f32.mrf.mxu0
    %8338 = vmatprep.mubr.f32.mxu0 0.0
    %8339 = vmatmul.mubr.f32.gmra.mxu0 %v8075
    %v8340 = vpop.f32.mrf.mxu0
    %v8341 = vadd.f32 0.0, %v8340
    %v8342 = vpop.f32.mrf.mxu0
    %8343 = vmatprep.mubr.f32.mxu0 0.0
    %8344 = vmatmul.mubr.f32.gmra.mxu0 %v8078
    %v8345 = vpop.f32.mrf.mxu0
    %v8346 = vadd.f32 0.0, %v8345
    %v8347 = vpop.f32.mrf.mxu0
    %8348 = vmatprep.mubr.f32.mxu0 0.0
    %8349 = vmatmul.mubr.f32.gmra.mxu0 %v8081
    %v8350 = vpop.f32.mrf.mxu0
    %v8351 = vadd.f32 0.0, %v8350
    %v8352 = vpop.f32.mrf.mxu0
    %8353 = vmatprep.mubr.f32.mxu0 0.0
    %8354 = vmatmul.mubr.f32.gmra.mxu0 %v8084
    %v8355 = vpop.f32.mrf.mxu0
    %v8356 = vadd.f32 0.0, %v8355
    %v8357 = vpop.f32.mrf.mxu0
    %8358 = vmatprep.mubr.f32.mxu0 0.0
    %8359 = vmatmul.mubr.f32.gmra.mxu0 %v8087
    %v8360 = vpop.f32.mrf.mxu0
    %v8361 = vadd.f32 0.0, %v8360
    %v8362 = vpop.f32.mrf.mxu0
    %8363 = vmatprep.mubr.f32.mxu0 0.0
    %8364 = vmatmul.mubr.f32.gmra.mxu0 %v8090
    %v8365 = vpop.f32.mrf.mxu0
    %v8366 = vadd.f32 0.0, %v8365
    %v8367 = vpop.f32.mrf.mxu0
    %8368 = vmatprep.mubr.f32.mxu0 0.0
    %8369 = vmatmul.mubr.f32.gmra.mxu0 %v8093
    %v8370 = vpop.f32.mrf.mxu0
    %v8371 = vadd.f32 0.0, %v8370
    %v8372 = vpop.f32.mrf.mxu0
    %8373 = vmatprep.mubr.f32.mxu0 0.0
    %8374 = vmatmul.mubr.f32.gmra.mxu0 %v8096
    %v8375 = vpop.f32.mrf.mxu0
    %v8376 = vadd.f32 0.0, %v8375
    %v8377 = vpop.f32.mrf.mxu0
    %8378 = vmatprep.mubr.f32.mxu0 0.0
    %8379 = vmatmul.mubr.f32.gmra.mxu0 %v8099
    %v8380 = vpop.f32.mrf.mxu0
    %v8381 = vadd.f32 0.0, %v8380
    %v8382 = vpop.f32.mrf.mxu0
    %8383 = vmatprep.mubr.f32.mxu0 0.0
    %8384 = vmatmul.mubr.f32.gmra.mxu0 %v8102
    %v8385 = vpop.f32.mrf.mxu0
    %v8386 = vadd.f32 0.0, %v8385
    %v8387 = vpop.f32.mrf.mxu0
    %8388 = vmatprep.mubr.f32.mxu0 0.0
    %8389 = vmatmul.mubr.f32.gmra.mxu0 %v8105
    %v8390 = vpop.f32.mrf.mxu0
    %v8391 = vadd.f32 0.0, %v8390
    %v8392 = vpop.f32.mrf.mxu0
    %8393 = vmatprep.mubr.f32.mxu0 0.0
    %8394 = vmatmul.mubr.f32.gmra.mxu0 %v8108
    %v8395 = vpop.f32.mrf.mxu0
    %v8396 = vadd.f32 0.0, %v8395
    %v8397 = vpop.f32.mrf.mxu0
    %8398 = vmatprep.mubr.f32.mxu0 0.0
    %8399 = vmatmul.mubr.f32.gmra.mxu0 %v8111
    %v8400 = vpop.f32.mrf.mxu0
    %v8401 = vadd.f32 0.0, %v8400
    %v8402 = vpop.f32.mrf.mxu0
    %8403 = vmatprep.mubr.f32.mxu0 0.0
    %8404 = vmatmul.mubr.f32.gmra.mxu0 %v8114
    %v8405 = vpop.f32.mrf.mxu0
    %v8406 = vadd.f32 0.0, %v8405
    %v8407 = vpop.f32.mrf.mxu0
    %8408 = vmatprep.mubr.f32.mxu0 0.0
    %8409 = vmatmul.mubr.f32.gmra.mxu0 %v8117
    %v8410 = vpop.f32.mrf.mxu0
    %v8411 = vadd.f32 0.0, %v8410
    %v8412 = vpop.f32.mrf.mxu0
    %8413 = vmatprep.mubr.f32.mxu0 0.0
    %8414 = vmatmul.mubr.f32.gmra.mxu0 %v8120
    %v8415 = vpop.f32.mrf.mxu0
    %v8416 = vadd.f32 0.0, %v8415
    %v8417 = vpop.f32.mrf.mxu0
    %8418 = vmatprep.mubr.f32.mxu0 0.0
    %8419 = vmatmul.mubr.f32.gmra.mxu0 %v8123
    %v8420 = vpop.f32.mrf.mxu0
    %v8421 = vadd.f32 0.0, %v8420
    %v8422 = vpop.f32.mrf.mxu0
    %8423 = vmatprep.mubr.f32.mxu0 0.0
    %8424 = vmatmul.mubr.f32.gmra.mxu0 %v8126
    %v8425 = vpop.f32.mrf.mxu0
    %v8426 = vadd.f32 0.0, %v8425
    %v8427 = vpop.f32.mrf.mxu0
    %8428 = vmatprep.mubr.f32.mxu0 0.0
    %8429 = vmatmul.mubr.f32.gmra.mxu0 %v8129
    %v8430 = vpop.f32.mrf.mxu0
    %v8431 = vadd.f32 0.0, %v8430
    %v8432 = vpop.f32.mrf.mxu0
    %8433 = vmatprep.mubr.f32.mxu0 0.0
    %8434 = vmatmul.mubr.f32.gmra.mxu0 %v8132
    %v8435 = vpop.f32.mrf.mxu0
    %v8436 = vadd.f32 0.0, %v8435
    %v8437 = vpop.f32.mrf.mxu0
    %8438 = vmatprep.mubr.f32.mxu0 0.0
    %8439 = vmatmul.mubr.f32.gmra.mxu0 %v8135
    %v8440 = vpop.f32.mrf.mxu0
    %v8441 = vadd.f32 0.0, %v8440
    %v8442 = vpop.f32.mrf.mxu0
    %8443 = vmatprep.mubr.f32.mxu0 0.0
    %8444 = vmatmul.mubr.f32.gmra.mxu0 %v8138
    %v8445 = vpop.f32.mrf.mxu0
    %v8446 = vadd.f32 0.0, %v8445
    %v8447 = vpop.f32.mrf.mxu0
    %8448 = vmatprep.mubr.f32.mxu0 0.0
    %8449 = vmatmul.mubr.f32.gmra.mxu0 %v8141
    %v8450 = vpop.f32.mrf.mxu0
    %v8451 = vadd.f32 0.0, %v8450
    %v8452 = vpop.f32.mrf.mxu0
    %8453 = vmatprep.mubr.f32.mxu0 0.0
    %8454 = vmatmul.mubr.f32.gmra.mxu0 %v8144
    %v8455 = vpop.f32.mrf.mxu0
    %v8456 = vadd.f32 0.0, %v8455
    %v8457 = vpop.f32.mrf.mxu0
    %8458 = vmatprep.mubr.f32.mxu0 0.0
    %8459 = vmatmul.mubr.f32.gmra.mxu0 %v8147
    %v8460 = vpop.f32.mrf.mxu0
    %v8461 = vadd.f32 0.0, %v8460
    %v8462 = vpop.f32.mrf.mxu0
    %8463 = vmatprep.mubr.f32.mxu0 0.0
    %8464 = vmatmul.mubr.f32.gmra.mxu0 %v8150
    %v8465 = vpop.f32.mrf.mxu0
    %v8466 = vadd.f32 0.0, %v8465
    %v8467 = vpop.f32.mrf.mxu0
    %8468 = vmatprep.mubr.f32.mxu0 0.0
    %8469 = vmatmul.mubr.f32.gmra.mxu0 %v8153
    %v8470 = vpop.f32.mrf.mxu0
    %v8471 = vadd.f32 0.0, %v8470
    %v8472 = vpop.f32.mrf.mxu0
    %8473 = vmatprep.mubr.f32.mxu0 0.0
    %8474 = vmatmul.mubr.f32.gmra.mxu0 %v8156
    %v8475 = vpop.f32.mrf.mxu0
    %v8476 = vadd.f32 0.0, %v8475
    %v8477 = vpop.f32.mrf.mxu0
    %8478 = vmatprep.mubr.f32.mxu0 0.0
    %8479 = vmatmul.mubr.f32.gmra.mxu0 %v8159
    %v8480 = vpop.f32.mrf.mxu0
    %v8481 = vadd.f32 0.0, %v8480
    %v8482 = vpop.f32.mrf.mxu0
    %8483 = vmatprep.mubr.f32.mxu0 0.0
    %8484 = vmatmul.mubr.f32.gmra.mxu0 %v8162
    %v8485 = vpop.f32.mrf.mxu0
    %v8486 = vadd.f32 0.0, %v8485
    %v8487 = vpop.f32.mrf.mxu0
    %8488 = vmatprep.mubr.f32.mxu0 0.0
    %8489 = vmatmul.mubr.f32.gmra.mxu0 %v8165
    %v8490 = vpop.f32.mrf.mxu0
    %v8491 = vadd.f32 0.0, %v8490
    %v8492 = vpop.f32.mrf.mxu0
    %8493 = vmatprep.mubr.f32.mxu0 0.0
    %8494 = vmatmul.mubr.f32.gmra.mxu0 %v8168
    %v8495 = vpop.f32.mrf.mxu0
    %v8496 = vadd.f32 0.0, %v8495
    %v8497 = vpop.f32.mrf.mxu0
    %8498 = vmatprep.mubr.f32.mxu0 0.0
    %8499 = vmatmul.mubr.f32.gmra.mxu0 %v8171
    %v8500 = vpop.f32.mrf.mxu0
    %v8501 = vadd.f32 0.0, %v8500
    %v8502 = vpop.f32.mrf.mxu0
    %8503 = vmatprep.mubr.f32.mxu0 0.0
    %8504 = vmatmul.mubr.f32.gmra.mxu0 %v8174
    %v8505 = vpop.f32.mrf.mxu0
    %v8506 = vadd.f32 0.0, %v8505
    %v8507 = vpop.f32.mrf.mxu0
    %8508 = vmatprep.mubr.f32.mxu0 0.0
    %8509 = vmatmul.mubr.f32.gmra.mxu0 %v8177
    %v8510 = vpop.f32.mrf.mxu0
    %v8511 = vadd.f32 0.0, %v8510
    %v8512 = vpop.f32.mrf.mxu0
    %8513 = vmatprep.mubr.f32.mxu0 0.0
    %8514 = vmatmul.mubr.f32.gmra.mxu0 %v8180
    %v8515 = vpop.f32.mrf.mxu0
    %v8516 = vadd.f32 0.0, %v8515
    %v8517 = vpop.f32.mrf.mxu0
    %8518 = vmatprep.mubr.f32.mxu0 0.0
    %8519 = vmatmul.mubr.f32.gmra.mxu0 %v8183
    %v8520 = vpop.f32.mrf.mxu0
    %v8521 = vadd.f32 0.0, %v8520
    %v8522 = vpop.f32.mrf.mxu0
    %8523 = vmatprep.mubr.f32.mxu0 0.0
    %8524 = vmatmul.mubr.f32.gmra.mxu0 %v8186
    %v8525 = vpop.f32.mrf.mxu0
    %v8526 = vadd.f32 0.0, %v8525
    %v8527 = vpop.f32.mrf.mxu0
    %8528 = vmatprep.mubr.f32.mxu0 0.0
    %8529 = vmatmul.mubr.f32.gmra.mxu0 %v8189
    %v8530 = vpop.f32.mrf.mxu0
    %v8531 = vadd.f32 0.0, %v8530
    %v8532 = vpop.f32.mrf.mxu0
    %8533 = vmatprep.mubr.f32.mxu0 0.0
    %8534 = vmatmul.mubr.f32.gmra.mxu0 %v8192
    %v8535 = vpop.f32.mrf.mxu0
    %v8536 = vadd.f32 0.0, %v8535
    %v8537 = vpop.f32.mrf.mxu0
    %8538 = vmatprep.mubr.f32.mxu0 0.0
    %8539 = vmatmul.mubr.f32.gmra.mxu0 %v8195
    %v8540 = vpop.f32.mrf.mxu0
    %v8541 = vadd.f32 0.0, %v8540
    %v8542 = vpop.f32.mrf.mxu0
    %8543 = vmatprep.mubr.f32.mxu0 0.0
    %8544 = vmatmul.mubr.f32.gmra.mxu0 %v8198
    %v8545 = vpop.f32.mrf.mxu0
    %v8546 = vadd.f32 0.0, %v8545
    %v8547 = vpop.f32.mrf.mxu0
    %8548 = vmatprep.mubr.f32.mxu0 0.0
    %8549 = vmatmul.mubr.f32.gmra.mxu0 %v8201
    %v8550 = vpop.f32.mrf.mxu0
    %v8551 = vadd.f32 0.0, %v8550
    %v8552 = vpop.f32.mrf.mxu0
    %8553 = vmatprep.mubr.f32.mxu0 0.0
    %8554 = vmatmul.mubr.f32.gmra.mxu0 %v8204
    %v8555 = vpop.f32.mrf.mxu0
    %v8556 = vadd.f32 0.0, %v8555
    %v8557 = vpop.f32.mrf.mxu0
    %8558 = vmatprep.mubr.f32.mxu0 0.0
    %8559 = vmatmul.mubr.f32.gmra.mxu0 %v8207
    %v8560 = vpop.f32.mrf.mxu0
    %v8561 = vadd.f32 0.0, %v8560
    %v8562 = vpop.f32.mrf.mxu0
    %8563 = vmatprep.mubr.f32.mxu0 0.0
    %8564 = vmatmul.mubr.f32.gmra.mxu0 %v8210
    %v8565 = vpop.f32.mrf.mxu0
    %v8566 = vadd.f32 0.0, %v8565
    %v8567 = vpop.f32.mrf.mxu0
    %8568 = vmatprep.mubr.f32.mxu0 0.0
    %8569 = vmatmul.mubr.f32.gmra.mxu0 %v8213
    %v8570 = vpop.f32.mrf.mxu0
    %v8571 = vadd.f32 0.0, %v8570
    %v8572 = vpop.f32.mrf.mxu0
    %8573 = vmatprep.mubr.f32.mxu0 0.0
    %8574 = vmatmul.mubr.f32.gmra.mxu0 %v8216
    %v8575 = vpop.f32.mrf.mxu0
    %v8576 = vadd.f32 0.0, %v8575
    %v8577 = vpop.f32.mrf.mxu0
    %8578 = vmatprep.mubr.f32.mxu0 0.0
    %8579 = vmatmul.mubr.f32.gmra.mxu0 %v8219
    %v8580 = vpop.f32.mrf.mxu0
    %v8581 = vadd.f32 0.0, %v8580
    %v8582 = vpop.f32.mrf.mxu0
    %8583 = vmatprep.mubr.f32.mxu0 0.0
    %8584 = vmatmul.mubr.f32.gmra.mxu0 %v8222
    %v8585 = vpop.f32.mrf.mxu0
    %v8586 = vadd.f32 0.0, %v8585
    %v8587 = vpop.f32.mrf.mxu0
    %8588 = vmatprep.mubr.f32.mxu0 0.0
    %8589 = vmatmul.mubr.f32.gmra.mxu0 %v8225
    %v8590 = vpop.f32.mrf.mxu0
    %v8591 = vadd.f32 0.0, %v8590
    %v8592 = vpop.f32.mrf.mxu0
    %8593 = vmatprep.mubr.f32.mxu0 0.0
    %8594 = vmatmul.mubr.f32.gmra.mxu0 %v8228
    %v8595 = vpop.f32.mrf.mxu0
    %v8596 = vadd.f32 0.0, %v8595
    %v8597 = vpop.f32.mrf.mxu0
    %8598 = vmatprep.mubr.f32.mxu0 0.0
    %8599 = vmatmul.mubr.f32.gmra.mxu0 %v8231
    %v8600 = vpop.f32.mrf.mxu0
    %v8601 = vadd.f32 0.0, %v8600
    %v8602 = vpop.f32.mrf.mxu0
    %8603 = vmatprep.mubr.f32.mxu0 0.0
    %8604 = vmatmul.mubr.f32.gmra.mxu0 %v8234
    %v8605 = vpop.f32.mrf.mxu0
    %v8606 = vadd.f32 0.0, %v8605
    %v8607 = vpop.f32.mrf.mxu0
    %8608 = vmatprep.mubr.f32.mxu0 0.0
    %8609 = vmatmul.mubr.f32.gmra.mxu0 %v8237
    %v8610 = vpop.f32.mrf.mxu0
    %v8611 = vadd.f32 0.0, %v8610
    %v8612 = vpop.f32.mrf.mxu0
    %8613 = vmatprep.mubr.f32.mxu0 0.0
    %8614 = vmatmul.mubr.f32.gmra.mxu0 %v8240
    %v8615 = vpop.f32.mrf.mxu0
    %v8616 = vadd.f32 0.0, %v8615
    %v8617 = vpop.f32.mrf.mxu0
    %8618 = vmatprep.mubr.f32.mxu0 0.0
    %8619 = vmatmul.mubr.f32.gmra.mxu0 %v8243
    %v8620 = vpop.f32.mrf.mxu0
    %v8621 = vadd.f32 0.0, %v8620
    %v8622 = vpop.f32.mrf.mxu0
    %8623 = vmatprep.mubr.f32.mxu0 0.0
    %8624 = vmatmul.mubr.f32.gmra.mxu0 %v8246
    %v8625 = vpop.f32.mrf.mxu0
    %v8626 = vadd.f32 0.0, %v8625
    %v8627 = vpop.f32.mrf.mxu0
    %8628 = vmatprep.mubr.f32.mxu0 0.0
    %8629 = vmatmul.mubr.f32.gmra.mxu0 %v8249
    %v8630 = vpop.f32.mrf.mxu0
    %v8631 = vadd.f32 0.0, %v8630
    %v8632 = vpop.f32.mrf.mxu0
    %8633 = vmatprep.mubr.f32.mxu0 0.0
    %8634 = vmatmul.mubr.f32.gmra.mxu0 %v8252
    %v8635 = vpop.f32.mrf.mxu0
    %v8636 = vadd.f32 0.0, %v8635
    %v8637 = vpop.f32.mrf.mxu0
    %8638 = vdwg.mxu0
    %v8639 = vld [vmem:[%s5] sm:$0x1]
    %v8640 = vld [vmem:[%s6] sm:$0x1]
    %v8641 = vsel %vm3900, %v8321, 0.0
    %v8642 = vsel %vm3900, %v8326, 0.0
    %v8643 = vadd.f32 %v8641, %v8642
    %v8644 = vsel %vm3900, %v8331, 0.0
    %v8645 = vadd.f32 %v8643, %v8644
    %v8646 = vsel %vm3900, %v8336, 0.0
    %v8647 = vadd.f32 %v8645, %v8646
    %v8648 = vsel %vm3900, %v8341, 0.0
    %v8649 = vadd.f32 %v8647, %v8648
    %v8650 = vsel %vm3900, %v8346, 0.0
    %v8651 = vadd.f32 %v8649, %v8650
    %v8652 = vsel %vm3900, %v8351, 0.0
    %v8653 = vadd.f32 %v8651, %v8652
    %v8654 = vsel %vm3900, %v8356, 0.0
    %v8655 = vadd.f32 %v8653, %v8654
    %v8656 = vsel %vm3900, %v8361, 0.0
    %v8657 = vadd.f32 %v8655, %v8656
    %v8658 = vsel %vm3900, %v8366, 0.0
    %v8659 = vadd.f32 %v8657, %v8658
    %v8660 = vsel %vm3900, %v8371, 0.0
    %v8661 = vadd.f32 %v8659, %v8660
    %v8662 = vsel %vm3900, %v8376, 0.0
    %v8663 = vadd.f32 %v8661, %v8662
    %v8664 = vsel %vm3900, %v8381, 0.0
    %v8665 = vadd.f32 %v8663, %v8664
    %v8666 = vsel %vm3900, %v8386, 0.0
    %v8667 = vadd.f32 %v8665, %v8666
    %v8668 = vsel %vm3900, %v8391, 0.0
    %v8669 = vadd.f32 %v8667, %v8668
    %v8670 = vsel %vm3900, %v8396, 0.0
    %v8671 = vadd.f32 %v8669, %v8670
    %v8672 = vsel %vm3900, %v8401, 0.0
    %v8673 = vadd.f32 %v8671, %v8672
    %v8674 = vsel %vm3900, %v8406, 0.0
    %v8675 = vadd.f32 %v8673, %v8674
    %v8676 = vsel %vm3900, %v8411, 0.0
    %v8677 = vadd.f32 %v8675, %v8676
    %v8678 = vsel %vm3900, %v8416, 0.0
    %v8679 = vadd.f32 %v8677, %v8678
    %v8680 = vsel %vm3900, %v8421, 0.0
    %v8681 = vadd.f32 %v8679, %v8680
    %v8682 = vsel %vm3900, %v8426, 0.0
    %v8683 = vadd.f32 %v8681, %v8682
    %v8684 = vsel %vm3900, %v8431, 0.0
    %v8685 = vadd.f32 %v8683, %v8684
    %v8686 = vsel %vm3900, %v8436, 0.0
    %v8687 = vadd.f32 %v8685, %v8686
    %v8688 = vsel %vm3900, %v8441, 0.0
    %v8689 = vadd.f32 %v8687, %v8688
    %v8690 = vsel %vm3900, %v8446, 0.0
    %v8691 = vadd.f32 %v8689, %v8690
    %v8692 = vsel %vm3900, %v8451, 0.0
    %v8693 = vadd.f32 %v8691, %v8692
    %v8694 = vsel %vm3900, %v8456, 0.0
    %v8695 = vadd.f32 %v8693, %v8694
    %v8696 = vsel %vm3900, %v8461, 0.0
    %v8697 = vadd.f32 %v8695, %v8696
    %v8698 = vsel %vm3900, %v8466, 0.0
    %v8699 = vadd.f32 %v8697, %v8698
    %v8700 = vsel %vm3900, %v8471, 0.0
    %v8701 = vadd.f32 %v8699, %v8700
    %v8702 = vsel %vm3900, %v8476, 0.0
    %v8703 = vadd.f32 %v8701, %v8702
    %v8704 = vsel %vm3900, %v8481, 0.0
    %v8705 = vadd.f32 %v8703, %v8704
    %v8706 = vsel %vm3900, %v8486, 0.0
    %v8707 = vadd.f32 %v8705, %v8706
    %v8708 = vsel %vm3900, %v8491, 0.0
    %v8709 = vadd.f32 %v8707, %v8708
    %v8710 = vsel %vm3900, %v8496, 0.0
    %v8711 = vadd.f32 %v8709, %v8710
    %v8712 = vsel %vm3900, %v8501, 0.0
    %v8713 = vadd.f32 %v8711, %v8712
    %v8714 = vsel %vm3900, %v8506, 0.0
    %v8715 = vadd.f32 %v8713, %v8714
    %v8716 = vsel %vm3900, %v8511, 0.0
    %v8717 = vadd.f32 %v8715, %v8716
    %v8718 = vsel %vm3900, %v8516, 0.0
    %v8719 = vadd.f32 %v8717, %v8718
    %v8720 = vsel %vm3900, %v8521, 0.0
    %v8721 = vadd.f32 %v8719, %v8720
    %v8722 = vsel %vm3900, %v8526, 0.0
    %v8723 = vadd.f32 %v8721, %v8722
    %v8724 = vsel %vm3900, %v8531, 0.0
    %v8725 = vadd.f32 %v8723, %v8724
    %v8726 = vsel %vm3900, %v8536, 0.0
    %v8727 = vadd.f32 %v8725, %v8726
    %v8728 = vsel %vm3900, %v8541, 0.0
    %v8729 = vadd.f32 %v8727, %v8728
    %v8730 = vsel %vm3900, %v8546, 0.0
    %v8731 = vadd.f32 %v8729, %v8730
    %v8732 = vsel %vm3900, %v8551, 0.0
    %v8733 = vadd.f32 %v8731, %v8732
    %v8734 = vsel %vm3900, %v8556, 0.0
    %v8735 = vadd.f32 %v8733, %v8734
    %v8736 = vsel %vm3900, %v8561, 0.0
    %v8737 = vadd.f32 %v8735, %v8736
    %v8738 = vsel %vm3900, %v8566, 0.0
    %v8739 = vadd.f32 %v8737, %v8738
    %v8740 = vsel %vm3900, %v8571, 0.0
    %v8741 = vadd.f32 %v8739, %v8740
    %v8742 = vsel %vm3900, %v8576, 0.0
    %v8743 = vadd.f32 %v8741, %v8742
    %v8744 = vsel %vm3900, %v8581, 0.0
    %v8745 = vadd.f32 %v8743, %v8744
    %v8746 = vsel %vm3900, %v8586, 0.0
    %v8747 = vadd.f32 %v8745, %v8746
    %v8748 = vsel %vm3900, %v8591, 0.0
    %v8749 = vadd.f32 %v8747, %v8748
    %v8750 = vsel %vm3900, %v8596, 0.0
    %v8751 = vadd.f32 %v8749, %v8750
    %v8752 = vsel %vm3900, %v8601, 0.0
    %v8753 = vadd.f32 %v8751, %v8752
    %v8754 = vsel %vm3900, %v8606, 0.0
    %v8755 = vadd.f32 %v8753, %v8754
    %v8756 = vsel %vm3900, %v8611, 0.0
    %v8757 = vadd.f32 %v8755, %v8756
    %v8758 = vsel %vm3900, %v8616, 0.0
    %v8759 = vadd.f32 %v8757, %v8758
    %v8760 = vsel %vm3900, %v8621, 0.0
    %v8761 = vadd.f32 %v8759, %v8760
    %v8762 = vsel %vm3900, %v8626, 0.0
    %v8763 = vadd.f32 %v8761, %v8762
    %v8764 = vsel %vm3900, %v8631, 0.0
    %v8765 = vadd.f32 %v8763, %v8764
    %v8766 = vsel %vm3900, %v8636, 0.0
    %v8767 = vadd.f32 %v8765, %v8766
    %v8768 = vrot.slane %v8767, 4
    %v8769 = vadd.f32 %v8767, %v8768
    %v8770 = vrot.slane %v8769, 2
    %v8771 = vadd.f32 %v8769, %v8770
    %v8772 = vrot.slane %v8771, 1
    %v8773 = vadd.f32 %v8771, %v8772
    %v8774 = vmul.f32 %v8773, %v4034
    %v8775 = vsub.f32 %v8321, %v8774
    %v8776 = vsub.f32 %v8326, %v8774
    %v8777 = vsub.f32 %v8331, %v8774
    %v8778 = vsub.f32 %v8336, %v8774
    %v8779 = vsub.f32 %v8341, %v8774
    %v8780 = vsub.f32 %v8346, %v8774
    %v8781 = vsub.f32 %v8351, %v8774
    %v8782 = vsub.f32 %v8356, %v8774
    %v8783 = vsub.f32 %v8361, %v8774
    %v8784 = vsub.f32 %v8366, %v8774
    %v8785 = vsub.f32 %v8371, %v8774
    %v8786 = vsub.f32 %v8376, %v8774
    %v8787 = vsub.f32 %v8381, %v8774
    %v8788 = vsub.f32 %v8386, %v8774
    %v8789 = vsub.f32 %v8391, %v8774
    %v8790 = vsub.f32 %v8396, %v8774
    %v8791 = vsub.f32 %v8401, %v8774
    %v8792 = vsub.f32 %v8406, %v8774
    %v8793 = vsub.f32 %v8411, %v8774
    %v8794 = vsub.f32 %v8416, %v8774
    %v8795 = vsub.f32 %v8421, %v8774
    %v8796 = vsub.f32 %v8426, %v8774
    %v8797 = vsub.f32 %v8431, %v8774
    %v8798 = vsub.f32 %v8436, %v8774
    %v8799 = vsub.f32 %v8441, %v8774
    %v8800 = vsub.f32 %v8446, %v8774
    %v8801 = vsub.f32 %v8451, %v8774
    %v8802 = vsub.f32 %v8456, %v8774
    %v8803 = vsub.f32 %v8461, %v8774
    %v8804 = vsub.f32 %v8466, %v8774
    %v8805 = vsub.f32 %v8471, %v8774
    %v8806 = vsub.f32 %v8476, %v8774
    %v8807 = vsub.f32 %v8481, %v8774
    %v8808 = vsub.f32 %v8486, %v8774
    %v8809 = vsub.f32 %v8491, %v8774
    %v8810 = vsub.f32 %v8496, %v8774
    %v8811 = vsub.f32 %v8501, %v8774
    %v8812 = vsub.f32 %v8506, %v8774
    %v8813 = vsub.f32 %v8511, %v8774
    %v8814 = vsub.f32 %v8516, %v8774
    %v8815 = vsub.f32 %v8521, %v8774
    %v8816 = vsub.f32 %v8526, %v8774
    %v8817 = vsub.f32 %v8531, %v8774
    %v8818 = vsub.f32 %v8536, %v8774
    %v8819 = vsub.f32 %v8541, %v8774
    %v8820 = vsub.f32 %v8546, %v8774
    %v8821 = vsub.f32 %v8551, %v8774
    %v8822 = vsub.f32 %v8556, %v8774
    %v8823 = vsub.f32 %v8561, %v8774
    %v8824 = vsub.f32 %v8566, %v8774
    %v8825 = vsub.f32 %v8571, %v8774
    %v8826 = vsub.f32 %v8576, %v8774
    %v8827 = vsub.f32 %v8581, %v8774
    %v8828 = vsub.f32 %v8586, %v8774
    %v8829 = vsub.f32 %v8591, %v8774
    %v8830 = vsub.f32 %v8596, %v8774
    %v8831 = vsub.f32 %v8601, %v8774
    %v8832 = vsub.f32 %v8606, %v8774
    %v8833 = vsub.f32 %v8611, %v8774
    %v8834 = vsub.f32 %v8616, %v8774
    %v8835 = vsub.f32 %v8621, %v8774
    %v8836 = vsub.f32 %v8626, %v8774
    %v8837 = vsub.f32 %v8631, %v8774
    %v8838 = vsub.f32 %v8636, %v8774
    %v8839 = vmul.f32 %v8775, %v8775
    %v8840 = vmul.f32 %v8776, %v8776
    %v8841 = vmul.f32 %v8777, %v8777
    %v8842 = vmul.f32 %v8778, %v8778
    %v8843 = vmul.f32 %v8779, %v8779
    %v8844 = vmul.f32 %v8780, %v8780
    %v8845 = vmul.f32 %v8781, %v8781
    %v8846 = vmul.f32 %v8782, %v8782
    %v8847 = vmul.f32 %v8783, %v8783
    %v8848 = vmul.f32 %v8784, %v8784
    %v8849 = vmul.f32 %v8785, %v8785
    %v8850 = vmul.f32 %v8786, %v8786
    %v8851 = vmul.f32 %v8787, %v8787
    %v8852 = vmul.f32 %v8788, %v8788
    %v8853 = vmul.f32 %v8789, %v8789
    %v8854 = vmul.f32 %v8790, %v8790
    %v8855 = vmul.f32 %v8791, %v8791
    %v8856 = vmul.f32 %v8792, %v8792
    %v8857 = vmul.f32 %v8793, %v8793
    %v8858 = vmul.f32 %v8794, %v8794
    %v8859 = vmul.f32 %v8795, %v8795
    %v8860 = vmul.f32 %v8796, %v8796
    %v8861 = vmul.f32 %v8797, %v8797
    %v8862 = vmul.f32 %v8798, %v8798
    %v8863 = vmul.f32 %v8799, %v8799
    %v8864 = vmul.f32 %v8800, %v8800
    %v8865 = vmul.f32 %v8801, %v8801
    %v8866 = vmul.f32 %v8802, %v8802
    %v8867 = vmul.f32 %v8803, %v8803
    %v8868 = vmul.f32 %v8804, %v8804
    %v8869 = vmul.f32 %v8805, %v8805
    %v8870 = vmul.f32 %v8806, %v8806
    %v8871 = vmul.f32 %v8807, %v8807
    %v8872 = vmul.f32 %v8808, %v8808
    %v8873 = vmul.f32 %v8809, %v8809
    %v8874 = vmul.f32 %v8810, %v8810
    %v8875 = vmul.f32 %v8811, %v8811
    %v8876 = vmul.f32 %v8812, %v8812
    %v8877 = vmul.f32 %v8813, %v8813
    %v8878 = vmul.f32 %v8814, %v8814
    %v8879 = vmul.f32 %v8815, %v8815
    %v8880 = vmul.f32 %v8816, %v8816
    %v8881 = vmul.f32 %v8817, %v8817
    %v8882 = vmul.f32 %v8818, %v8818
    %v8883 = vmul.f32 %v8819, %v8819
    %v8884 = vmul.f32 %v8820, %v8820
    %v8885 = vmul.f32 %v8821, %v8821
    %v8886 = vmul.f32 %v8822, %v8822
    %v8887 = vmul.f32 %v8823, %v8823
    %v8888 = vmul.f32 %v8824, %v8824
    %v8889 = vmul.f32 %v8825, %v8825
    %v8890 = vmul.f32 %v8826, %v8826
    %v8891 = vmul.f32 %v8827, %v8827
    %v8892 = vmul.f32 %v8828, %v8828
    %v8893 = vmul.f32 %v8829, %v8829
    %v8894 = vmul.f32 %v8830, %v8830
    %v8895 = vmul.f32 %v8831, %v8831
    %v8896 = vmul.f32 %v8832, %v8832
    %v8897 = vmul.f32 %v8833, %v8833
    %v8898 = vmul.f32 %v8834, %v8834
    %v8899 = vmul.f32 %v8835, %v8835
    %v8900 = vmul.f32 %v8836, %v8836
    %v8901 = vmul.f32 %v8837, %v8837
    %v8902 = vmul.f32 %v8838, %v8838
    %v8903 = vsel %vm3900, %v8839, 0.0
    %v8904 = vsel %vm3900, %v8840, 0.0
    %v8905 = vadd.f32 %v8903, %v8904
    %v8906 = vsel %vm3900, %v8841, 0.0
    %v8907 = vadd.f32 %v8905, %v8906
    %v8908 = vsel %vm3900, %v8842, 0.0
    %v8909 = vadd.f32 %v8907, %v8908
    %v8910 = vsel %vm3900, %v8843, 0.0
    %v8911 = vadd.f32 %v8909, %v8910
    %v8912 = vsel %vm3900, %v8844, 0.0
    %v8913 = vadd.f32 %v8911, %v8912
    %v8914 = vsel %vm3900, %v8845, 0.0
    %v8915 = vadd.f32 %v8913, %v8914
    %v8916 = vsel %vm3900, %v8846, 0.0
    %v8917 = vadd.f32 %v8915, %v8916
    %v8918 = vsel %vm3900, %v8847, 0.0
    %v8919 = vadd.f32 %v8917, %v8918
    %v8920 = vsel %vm3900, %v8848, 0.0
    %v8921 = vadd.f32 %v8919, %v8920
    %v8922 = vsel %vm3900, %v8849, 0.0
    %v8923 = vadd.f32 %v8921, %v8922
    %v8924 = vsel %vm3900, %v8850, 0.0
    %v8925 = vadd.f32 %v8923, %v8924
    %v8926 = vsel %vm3900, %v8851, 0.0
    %v8927 = vadd.f32 %v8925, %v8926
    %v8928 = vsel %vm3900, %v8852, 0.0
    %v8929 = vadd.f32 %v8927, %v8928
    %v8930 = vsel %vm3900, %v8853, 0.0
    %v8931 = vadd.f32 %v8929, %v8930
    %v8932 = vsel %vm3900, %v8854, 0.0
    %v8933 = vadd.f32 %v8931, %v8932
    %v8934 = vsel %vm3900, %v8855, 0.0
    %v8935 = vadd.f32 %v8933, %v8934
    %v8936 = vsel %vm3900, %v8856, 0.0
    %v8937 = vadd.f32 %v8935, %v8936
    %v8938 = vsel %vm3900, %v8857, 0.0
    %v8939 = vadd.f32 %v8937, %v8938
    %v8940 = vsel %vm3900, %v8858, 0.0
    %v8941 = vadd.f32 %v8939, %v8940
    %v8942 = vsel %vm3900, %v8859, 0.0
    %v8943 = vadd.f32 %v8941, %v8942
    %v8944 = vsel %vm3900, %v8860, 0.0
    %v8945 = vadd.f32 %v8943, %v8944
    %v8946 = vsel %vm3900, %v8861, 0.0
    %v8947 = vadd.f32 %v8945, %v8946
    %v8948 = vsel %vm3900, %v8862, 0.0
    %v8949 = vadd.f32 %v8947, %v8948
    %v8950 = vsel %vm3900, %v8863, 0.0
    %v8951 = vadd.f32 %v8949, %v8950
    %v8952 = vsel %vm3900, %v8864, 0.0
    %v8953 = vadd.f32 %v8951, %v8952
    %v8954 = vsel %vm3900, %v8865, 0.0
    %v8955 = vadd.f32 %v8953, %v8954
    %v8956 = vsel %vm3900, %v8866, 0.0
    %v8957 = vadd.f32 %v8955, %v8956
    %v8958 = vsel %vm3900, %v8867, 0.0
    %v8959 = vadd.f32 %v8957, %v8958
    %v8960 = vsel %vm3900, %v8868, 0.0
    %v8961 = vadd.f32 %v8959, %v8960
    %v8962 = vsel %vm3900, %v8869, 0.0
    %v8963 = vadd.f32 %v8961, %v8962
    %v8964 = vsel %vm3900, %v8870, 0.0
    %v8965 = vadd.f32 %v8963, %v8964
    %v8966 = vsel %vm3900, %v8871, 0.0
    %v8967 = vadd.f32 %v8965, %v8966
    %v8968 = vsel %vm3900, %v8872, 0.0
    %v8969 = vadd.f32 %v8967, %v8968
    %v8970 = vsel %vm3900, %v8873, 0.0
    %v8971 = vadd.f32 %v8969, %v8970
    %v8972 = vsel %vm3900, %v8874, 0.0
    %v8973 = vadd.f32 %v8971, %v8972
    %v8974 = vsel %vm3900, %v8875, 0.0
    %v8975 = vadd.f32 %v8973, %v8974
    %v8976 = vsel %vm3900, %v8876, 0.0
    %v8977 = vadd.f32 %v8975, %v8976
    %v8978 = vsel %vm3900, %v8877, 0.0
    %v8979 = vadd.f32 %v8977, %v8978
    %v8980 = vsel %vm3900, %v8878, 0.0
    %v8981 = vadd.f32 %v8979, %v8980
    %v8982 = vsel %vm3900, %v8879, 0.0
    %v8983 = vadd.f32 %v8981, %v8982
    %v8984 = vsel %vm3900, %v8880, 0.0
    %v8985 = vadd.f32 %v8983, %v8984
    %v8986 = vsel %vm3900, %v8881, 0.0
    %v8987 = vadd.f32 %v8985, %v8986
    %v8988 = vsel %vm3900, %v8882, 0.0
    %v8989 = vadd.f32 %v8987, %v8988
    %v8990 = vsel %vm3900, %v8883, 0.0
    %v8991 = vadd.f32 %v8989, %v8990
    %v8992 = vsel %vm3900, %v8884, 0.0
    %v8993 = vadd.f32 %v8991, %v8992
    %v8994 = vsel %vm3900, %v8885, 0.0
    %v8995 = vadd.f32 %v8993, %v8994
    %v8996 = vsel %vm3900, %v8886, 0.0
    %v8997 = vadd.f32 %v8995, %v8996
    %v8998 = vsel %vm3900, %v8887, 0.0
    %v8999 = vadd.f32 %v8997, %v8998
    %v9000 = vsel %vm3900, %v8888, 0.0
    %v9001 = vadd.f32 %v8999, %v9000
    %v9002 = vsel %vm3900, %v8889, 0.0
    %v9003 = vadd.f32 %v9001, %v9002
    %v9004 = vsel %vm3900, %v8890, 0.0
    %v9005 = vadd.f32 %v9003, %v9004
    %v9006 = vsel %vm3900, %v8891, 0.0
    %v9007 = vadd.f32 %v9005, %v9006
    %v9008 = vsel %vm3900, %v8892, 0.0
    %v9009 = vadd.f32 %v9007, %v9008
    %v9010 = vsel %vm3900, %v8893, 0.0
    %v9011 = vadd.f32 %v9009, %v9010
    %v9012 = vsel %vm3900, %v8894, 0.0
    %v9013 = vadd.f32 %v9011, %v9012
    %v9014 = vsel %vm3900, %v8895, 0.0
    %v9015 = vadd.f32 %v9013, %v9014
    %v9016 = vsel %vm3900, %v8896, 0.0
    %v9017 = vadd.f32 %v9015, %v9016
    %v9018 = vsel %vm3900, %v8897, 0.0
    %v9019 = vadd.f32 %v9017, %v9018
    %v9020 = vsel %vm3900, %v8898, 0.0
    %v9021 = vadd.f32 %v9019, %v9020
    %v9022 = vsel %vm3900, %v8899, 0.0
    %v9023 = vadd.f32 %v9021, %v9022
    %v9024 = vsel %vm3900, %v8900, 0.0
    %v9025 = vadd.f32 %v9023, %v9024
    %v9026 = vsel %vm3900, %v8901, 0.0
    %v9027 = vadd.f32 %v9025, %v9026
    %v9028 = vsel %vm3900, %v8902, 0.0
    %v9029 = vadd.f32 %v9027, %v9028
    %v9030 = vrot.slane %v9029, 4
    %v9031 = vadd.f32 %v9029, %v9030
    %v9032 = vrot.slane %v9031, 2
    %v9033 = vadd.f32 %v9031, %v9032
    %v9034 = vrot.slane %v9033, 1
    %v9035 = vadd.f32 %v9033, %v9034
    %v9036 = vmul.f32 %v9035, %v4034
    %v9037 = vadd.f32 %v9036, 1e-05
    %v9038 = vrsqrt.pop %v9037
    %v9039 = vmul.f32 %v8775, %v9038
    %v9040 = vmul.f32 %v8776, %v9038
    %v9041 = vmul.f32 %v8777, %v9038
    %v9042 = vmul.f32 %v8778, %v9038
    %v9043 = vmul.f32 %v8779, %v9038
    %v9044 = vmul.f32 %v8780, %v9038
    %v9045 = vmul.f32 %v8781, %v9038
    %v9046 = vmul.f32 %v8782, %v9038
    %v9047 = vmul.f32 %v8783, %v9038
    %v9048 = vmul.f32 %v8784, %v9038
    %v9049 = vmul.f32 %v8785, %v9038
    %v9050 = vmul.f32 %v8786, %v9038
    %v9051 = vmul.f32 %v8787, %v9038
    %v9052 = vmul.f32 %v8788, %v9038
    %v9053 = vmul.f32 %v8789, %v9038
    %v9054 = vmul.f32 %v8790, %v9038
    %v9055 = vmul.f32 %v8791, %v9038
    %v9056 = vmul.f32 %v8792, %v9038
    %v9057 = vmul.f32 %v8793, %v9038
    %v9058 = vmul.f32 %v8794, %v9038
    %v9059 = vmul.f32 %v8795, %v9038
    %v9060 = vmul.f32 %v8796, %v9038
    %v9061 = vmul.f32 %v8797, %v9038
    %v9062 = vmul.f32 %v8798, %v9038
    %v9063 = vmul.f32 %v8799, %v9038
    %v9064 = vmul.f32 %v8800, %v9038
    %v9065 = vmul.f32 %v8801, %v9038
    %v9066 = vmul.f32 %v8802, %v9038
    %v9067 = vmul.f32 %v8803, %v9038
    %v9068 = vmul.f32 %v8804, %v9038
    %v9069 = vmul.f32 %v8805, %v9038
    %v9070 = vmul.f32 %v8806, %v9038
    %v9071 = vmul.f32 %v8807, %v9038
    %v9072 = vmul.f32 %v8808, %v9038
    %v9073 = vmul.f32 %v8809, %v9038
    %v9074 = vmul.f32 %v8810, %v9038
    %v9075 = vmul.f32 %v8811, %v9038
    %v9076 = vmul.f32 %v8812, %v9038
    %v9077 = vmul.f32 %v8813, %v9038
    %v9078 = vmul.f32 %v8814, %v9038
    %v9079 = vmul.f32 %v8815, %v9038
    %v9080 = vmul.f32 %v8816, %v9038
    %v9081 = vmul.f32 %v8817, %v9038
    %v9082 = vmul.f32 %v8818, %v9038
    %v9083 = vmul.f32 %v8819, %v9038
    %v9084 = vmul.f32 %v8820, %v9038
    %v9085 = vmul.f32 %v8821, %v9038
    %v9086 = vmul.f32 %v8822, %v9038
    %v9087 = vmul.f32 %v8823, %v9038
    %v9088 = vmul.f32 %v8824, %v9038
    %v9089 = vmul.f32 %v8825, %v9038
    %v9090 = vmul.f32 %v8826, %v9038
    %v9091 = vmul.f32 %v8827, %v9038
    %v9092 = vmul.f32 %v8828, %v9038
    %v9093 = vmul.f32 %v8829, %v9038
    %v9094 = vmul.f32 %v8830, %v9038
    %v9095 = vmul.f32 %v8831, %v9038
    %v9096 = vmul.f32 %v8832, %v9038
    %v9097 = vmul.f32 %v8833, %v9038
    %v9098 = vmul.f32 %v8834, %v9038
    %v9099 = vmul.f32 %v8835, %v9038
    %v9100 = vmul.f32 %v8836, %v9038
    %v9101 = vmul.f32 %v8837, %v9038
    %v9102 = vmul.f32 %v8838, %v9038
    %v9104 = vlaneseq
    %v9105 = vshrl.u32 %v9104, 7
    %v9106 = vsub.s32 0, %v9105
    %v9107 = vrot.slane %v8639, %v9106
    %v9109 = vmul.f32 %v9039, %v9107
    %v9110 = vmul.f32 %v9040, %v9107
    %v9111 = vmul.f32 %v9041, %v9107
    %v9112 = vmul.f32 %v9042, %v9107
    %v9113 = vmul.f32 %v9043, %v9107
    %v9114 = vmul.f32 %v9044, %v9107
    %v9115 = vmul.f32 %v9045, %v9107
    %v9116 = vmul.f32 %v9046, %v9107
    %v9117 = vmul.f32 %v9047, %v9107
    %v9118 = vmul.f32 %v9048, %v9107
    %v9119 = vmul.f32 %v9049, %v9107
    %v9120 = vmul.f32 %v9050, %v9107
    %v9121 = vmul.f32 %v9051, %v9107
    %v9122 = vmul.f32 %v9052, %v9107
    %v9123 = vmul.f32 %v9053, %v9107
    %v9124 = vmul.f32 %v9054, %v9107
    %v9125 = vmul.f32 %v9055, %v9107
    %v9126 = vmul.f32 %v9056, %v9107
    %v9127 = vmul.f32 %v9057, %v9107
    %v9128 = vmul.f32 %v9058, %v9107
    %v9129 = vmul.f32 %v9059, %v9107
    %v9130 = vmul.f32 %v9060, %v9107
    %v9131 = vmul.f32 %v9061, %v9107
    %v9132 = vmul.f32 %v9062, %v9107
    %v9133 = vmul.f32 %v9063, %v9107
    %v9134 = vmul.f32 %v9064, %v9107
    %v9135 = vmul.f32 %v9065, %v9107
    %v9136 = vmul.f32 %v9066, %v9107
    %v9137 = vmul.f32 %v9067, %v9107
    %v9138 = vmul.f32 %v9068, %v9107
    %v9139 = vmul.f32 %v9069, %v9107
    %v9140 = vmul.f32 %v9070, %v9107
    %v9141 = vmul.f32 %v9071, %v9107
    %v9142 = vmul.f32 %v9072, %v9107
    %v9143 = vmul.f32 %v9073, %v9107
    %v9144 = vmul.f32 %v9074, %v9107
    %v9145 = vmul.f32 %v9075, %v9107
    %v9146 = vmul.f32 %v9076, %v9107
    %v9147 = vmul.f32 %v9077, %v9107
    %v9148 = vmul.f32 %v9078, %v9107
    %v9149 = vmul.f32 %v9079, %v9107
    %v9150 = vmul.f32 %v9080, %v9107
    %v9151 = vmul.f32 %v9081, %v9107
    %v9152 = vmul.f32 %v9082, %v9107
    %v9153 = vmul.f32 %v9083, %v9107
    %v9154 = vmul.f32 %v9084, %v9107
    %v9155 = vmul.f32 %v9085, %v9107
    %v9156 = vmul.f32 %v9086, %v9107
    %v9157 = vmul.f32 %v9087, %v9107
    %v9158 = vmul.f32 %v9088, %v9107
    %v9159 = vmul.f32 %v9089, %v9107
    %v9160 = vmul.f32 %v9090, %v9107
    %v9161 = vmul.f32 %v9091, %v9107
    %v9162 = vmul.f32 %v9092, %v9107
    %v9163 = vmul.f32 %v9093, %v9107
    %v9164 = vmul.f32 %v9094, %v9107
    %v9165 = vmul.f32 %v9095, %v9107
    %v9166 = vmul.f32 %v9096, %v9107
    %v9167 = vmul.f32 %v9097, %v9107
    %v9168 = vmul.f32 %v9098, %v9107
    %v9169 = vmul.f32 %v9099, %v9107
    %v9170 = vmul.f32 %v9100, %v9107
    %v9171 = vmul.f32 %v9101, %v9107
    %v9172 = vmul.f32 %v9102, %v9107
    %v9174 = vlaneseq
    %v9175 = vshrl.u32 %v9174, 7
    %v9176 = vsub.s32 0, %v9175
    %v9177 = vrot.slane %v8640, %v9176
    %v9179 = vadd.f32 %v9109, %v9177
    %v9180 = vadd.f32 %v9110, %v9177
    %v9181 = vadd.f32 %v9111, %v9177
    %v9182 = vadd.f32 %v9112, %v9177
    %v9183 = vadd.f32 %v9113, %v9177
    %v9184 = vadd.f32 %v9114, %v9177
    %v9185 = vadd.f32 %v9115, %v9177
    %v9186 = vadd.f32 %v9116, %v9177
    %v9187 = vadd.f32 %v9117, %v9177
    %v9188 = vadd.f32 %v9118, %v9177
    %v9189 = vadd.f32 %v9119, %v9177
    %v9190 = vadd.f32 %v9120, %v9177
    %v9191 = vadd.f32 %v9121, %v9177
    %v9192 = vadd.f32 %v9122, %v9177
    %v9193 = vadd.f32 %v9123, %v9177
    %v9194 = vadd.f32 %v9124, %v9177
    %v9195 = vadd.f32 %v9125, %v9177
    %v9196 = vadd.f32 %v9126, %v9177
    %v9197 = vadd.f32 %v9127, %v9177
    %v9198 = vadd.f32 %v9128, %v9177
    %v9199 = vadd.f32 %v9129, %v9177
    %v9200 = vadd.f32 %v9130, %v9177
    %v9201 = vadd.f32 %v9131, %v9177
    %v9202 = vadd.f32 %v9132, %v9177
    %v9203 = vadd.f32 %v9133, %v9177
    %v9204 = vadd.f32 %v9134, %v9177
    %v9205 = vadd.f32 %v9135, %v9177
    %v9206 = vadd.f32 %v9136, %v9177
    %v9207 = vadd.f32 %v9137, %v9177
    %v9208 = vadd.f32 %v9138, %v9177
    %v9209 = vadd.f32 %v9139, %v9177
    %v9210 = vadd.f32 %v9140, %v9177
    %v9211 = vadd.f32 %v9141, %v9177
    %v9212 = vadd.f32 %v9142, %v9177
    %v9213 = vadd.f32 %v9143, %v9177
    %v9214 = vadd.f32 %v9144, %v9177
    %v9215 = vadd.f32 %v9145, %v9177
    %v9216 = vadd.f32 %v9146, %v9177
    %v9217 = vadd.f32 %v9147, %v9177
    %v9218 = vadd.f32 %v9148, %v9177
    %v9219 = vadd.f32 %v9149, %v9177
    %v9220 = vadd.f32 %v9150, %v9177
    %v9221 = vadd.f32 %v9151, %v9177
    %v9222 = vadd.f32 %v9152, %v9177
    %v9223 = vadd.f32 %v9153, %v9177
    %v9224 = vadd.f32 %v9154, %v9177
    %v9225 = vadd.f32 %v9155, %v9177
    %v9226 = vadd.f32 %v9156, %v9177
    %v9227 = vadd.f32 %v9157, %v9177
    %v9228 = vadd.f32 %v9158, %v9177
    %v9229 = vadd.f32 %v9159, %v9177
    %v9230 = vadd.f32 %v9160, %v9177
    %v9231 = vadd.f32 %v9161, %v9177
    %v9232 = vadd.f32 %v9162, %v9177
    %v9233 = vadd.f32 %v9163, %v9177
    %v9234 = vadd.f32 %v9164, %v9177
    %v9235 = vadd.f32 %v9165, %v9177
    %v9236 = vadd.f32 %v9166, %v9177
    %v9237 = vadd.f32 %v9167, %v9177
    %v9238 = vadd.f32 %v9168, %v9177
    %v9239 = vadd.f32 %v9169, %v9177
    %v9240 = vadd.f32 %v9170, %v9177
    %v9241 = vadd.f32 %v9171, %v9177
    %v9242 = vadd.f32 %v9172, %v9177
    %v9243 = vadd.f32 %v9179, %v5753
    %v9244 = vadd.f32 %v9180, %v5754
    %v9245 = vadd.f32 %v9181, %v5755
    %v9246 = vadd.f32 %v9182, %v5756
    %v9247 = vadd.f32 %v9183, %v5757
    %v9248 = vadd.f32 %v9184, %v5758
    %v9249 = vadd.f32 %v9185, %v5759
    %v9250 = vadd.f32 %v9186, %v5760
    %v9251 = vadd.f32 %v9187, %v5761
    %v9252 = vadd.f32 %v9188, %v5762
    %v9253 = vadd.f32 %v9189, %v5763
    %v9254 = vadd.f32 %v9190, %v5764
    %v9255 = vadd.f32 %v9191, %v5765
    %v9256 = vadd.f32 %v9192, %v5766
    %v9257 = vadd.f32 %v9193, %v5767
    %v9258 = vadd.f32 %v9194, %v5768
    %v9259 = vadd.f32 %v9195, %v5769
    %v9260 = vadd.f32 %v9196, %v5770
    %v9261 = vadd.f32 %v9197, %v5771
    %v9262 = vadd.f32 %v9198, %v5772
    %v9263 = vadd.f32 %v9199, %v5773
    %v9264 = vadd.f32 %v9200, %v5774
    %v9265 = vadd.f32 %v9201, %v5775
    %v9266 = vadd.f32 %v9202, %v5776
    %v9267 = vadd.f32 %v9203, %v5777
    %v9268 = vadd.f32 %v9204, %v5778
    %v9269 = vadd.f32 %v9205, %v5779
    %v9270 = vadd.f32 %v9206, %v5780
    %v9271 = vadd.f32 %v9207, %v5781
    %v9272 = vadd.f32 %v9208, %v5782
    %v9273 = vadd.f32 %v9209, %v5783
    %v9274 = vadd.f32 %v9210, %v5784
    %v9275 = vadd.f32 %v9211, %v5785
    %v9276 = vadd.f32 %v9212, %v5786
    %v9277 = vadd.f32 %v9213, %v5787
    %v9278 = vadd.f32 %v9214, %v5788
    %v9279 = vadd.f32 %v9215, %v5789
    %v9280 = vadd.f32 %v9216, %v5790
    %v9281 = vadd.f32 %v9217, %v5791
    %v9282 = vadd.f32 %v9218, %v5792
    %v9283 = vadd.f32 %v9219, %v5793
    %v9284 = vadd.f32 %v9220, %v5794
    %v9285 = vadd.f32 %v9221, %v5795
    %v9286 = vadd.f32 %v9222, %v5796
    %v9287 = vadd.f32 %v9223, %v5797
    %v9288 = vadd.f32 %v9224, %v5798
    %v9289 = vadd.f32 %v9225, %v5799
    %v9290 = vadd.f32 %v9226, %v5800
    %v9291 = vadd.f32 %v9227, %v5801
    %v9292 = vadd.f32 %v9228, %v5802
    %v9293 = vadd.f32 %v9229, %v5803
    %v9294 = vadd.f32 %v9230, %v5804
    %v9295 = vadd.f32 %v9231, %v5805
    %v9296 = vadd.f32 %v9232, %v5806
    %v9297 = vadd.f32 %v9233, %v5807
    %v9298 = vadd.f32 %v9234, %v5808
    %v9299 = vadd.f32 %v9235, %v5809
    %v9300 = vadd.f32 %v9236, %v5810
    %v9301 = vadd.f32 %v9237, %v5811
    %v9302 = vadd.f32 %v9238, %v5812
    %v9303 = vadd.f32 %v9239, %v5813
    %v9304 = vadd.f32 %v9240, %v5814
    %v9305 = vadd.f32 %v9241, %v5815
    %v9306 = vadd.f32 %v9242, %v5816
    %v9307 = vmax.f32 %v9243, 0.0
    %v9308 = vmax.f32 %v9244, 0.0
    %v9309 = vmax.f32 %v9245, 0.0
    %v9310 = vmax.f32 %v9246, 0.0
    %v9311 = vmax.f32 %v9247, 0.0
    %v9312 = vmax.f32 %v9248, 0.0
    %v9313 = vmax.f32 %v9249, 0.0
    %v9314 = vmax.f32 %v9250, 0.0
    %v9315 = vmax.f32 %v9251, 0.0
    %v9316 = vmax.f32 %v9252, 0.0
    %v9317 = vmax.f32 %v9253, 0.0
    %v9318 = vmax.f32 %v9254, 0.0
    %v9319 = vmax.f32 %v9255, 0.0
    %v9320 = vmax.f32 %v9256, 0.0
    %v9321 = vmax.f32 %v9257, 0.0
    %v9322 = vmax.f32 %v9258, 0.0
    %v9323 = vmax.f32 %v9259, 0.0
    %v9324 = vmax.f32 %v9260, 0.0
    %v9325 = vmax.f32 %v9261, 0.0
    %v9326 = vmax.f32 %v9262, 0.0
    %v9327 = vmax.f32 %v9263, 0.0
    %v9328 = vmax.f32 %v9264, 0.0
    %v9329 = vmax.f32 %v9265, 0.0
    %v9330 = vmax.f32 %v9266, 0.0
    %v9331 = vmax.f32 %v9267, 0.0
    %v9332 = vmax.f32 %v9268, 0.0
    %v9333 = vmax.f32 %v9269, 0.0
    %v9334 = vmax.f32 %v9270, 0.0
    %v9335 = vmax.f32 %v9271, 0.0
    %v9336 = vmax.f32 %v9272, 0.0
    %v9337 = vmax.f32 %v9273, 0.0
    %v9338 = vmax.f32 %v9274, 0.0
    %v9339 = vmax.f32 %v9275, 0.0
    %v9340 = vmax.f32 %v9276, 0.0
    %v9341 = vmax.f32 %v9277, 0.0
    %v9342 = vmax.f32 %v9278, 0.0
    %v9343 = vmax.f32 %v9279, 0.0
    %v9344 = vmax.f32 %v9280, 0.0
    %v9345 = vmax.f32 %v9281, 0.0
    %v9346 = vmax.f32 %v9282, 0.0
    %v9347 = vmax.f32 %v9283, 0.0
    %v9348 = vmax.f32 %v9284, 0.0
    %v9349 = vmax.f32 %v9285, 0.0
    %v9350 = vmax.f32 %v9286, 0.0
    %v9351 = vmax.f32 %v9287, 0.0
    %v9352 = vmax.f32 %v9288, 0.0
    %v9353 = vmax.f32 %v9289, 0.0
    %v9354 = vmax.f32 %v9290, 0.0
    %v9355 = vmax.f32 %v9291, 0.0
    %v9356 = vmax.f32 %v9292, 0.0
    %v9357 = vmax.f32 %v9293, 0.0
    %v9358 = vmax.f32 %v9294, 0.0
    %v9359 = vmax.f32 %v9295, 0.0
    %v9360 = vmax.f32 %v9296, 0.0
    %v9361 = vmax.f32 %v9297, 0.0
    %v9362 = vmax.f32 %v9298, 0.0
    %v9363 = vmax.f32 %v9299, 0.0
    %v9364 = vmax.f32 %v9300, 0.0
    %v9365 = vmax.f32 %v9301, 0.0
    %v9366 = vmax.f32 %v9302, 0.0
    %v9367 = vmax.f32 %v9303, 0.0
    %v9368 = vmax.f32 %v9304, 0.0
    %v9369 = vmax.f32 %v9305, 0.0
    %v9370 = vmax.f32 %v9306, 0.0
    %v9403 = vrot.slane %v9309, 7
    %vm9404 = vcmask 1041409
    %v9405 = vsel %vm9404, %v9403, %v9307
    %v9406 = vrot.slane %v9311, 6
    %vm9407 = vcmask 1042434
    %v9408 = vsel %vm9407, %v9406, %v9405
    %v9409 = vrot.slane %v9313, 5
    %vm9410 = vcmask 1043459
    %v9411 = vsel %vm9410, %v9409, %v9408
    %v9412 = vrot.slane %v9315, 4
    %vm9413 = vcmask 1044484
    %v9414 = vsel %vm9413, %v9412, %v9411
    %v9415 = vrot.slane %v9317, 3
    %vm9416 = vcmask 1045509
    %v9417 = vsel %vm9416, %v9415, %v9414
    %v9418 = vrot.slane %v9319, 2
    %vm9419 = vcmask 1046534
    %v9420 = vsel %vm9419, %v9418, %v9417
    %v9421 = vrot.slane %v9321, 1
    %vm9422 = vcmask 1047559
    %v9423 = vsel %vm9422, %v9421, %v9420
    %v9424 = vrot.slane %v9325, 7
    %v9425 = vsel %vm9404, %v9424, %v9323
    %v9426 = vrot.slane %v9327, 6
    %v9427 = vsel %vm9407, %v9426, %v9425
    %v9428 = vrot.slane %v9329, 5
    %v9429 = vsel %vm9410, %v9428, %v9427
    %v9430 = vrot.slane %v9331, 4
    %v9431 = vsel %vm9413, %v9430, %v9429
    %v9432 = vrot.slane %v9333, 3
    %v9433 = vsel %vm9416, %v9432, %v9431
    %v9434 = vrot.slane %v9335, 2
    %v9435 = vsel %vm9419, %v9434, %v9433
    %v9436 = vrot.slane %v9337, 1
    %v9437 = vsel %vm9422, %v9436, %v9435
    %v9438 = vrot.slane %v9341, 7
    %v9439 = vsel %vm9404, %v9438, %v9339
    %v9440 = vrot.slane %v9343, 6
    %v9441 = vsel %vm9407, %v9440, %v9439
    %v9442 = vrot.slane %v9345, 5
    %v9443 = vsel %vm9410, %v9442, %v9441
    %v9444 = vrot.slane %v9347, 4
    %v9445 = vsel %vm9413, %v9444, %v9443
    %v9446 = vrot.slane %v9349, 3
    %v9447 = vsel %vm9416, %v9446, %v9445
    %v9448 = vrot.slane %v9351, 2
    %v9449 = vsel %vm9419, %v9448, %v9447
    %v9450 = vrot.slane %v9353, 1
    %v9451 = vsel %vm9422, %v9450, %v9449
    %v9452 = vrot.slane %v9357, 7
    %v9453 = vsel %vm9404, %v9452, %v9355
    %v9454 = vrot.slane %v9359, 6
    %v9455 = vsel %vm9407, %v9454, %v9453
    %v9456 = vrot.slane %v9361, 5
    %v9457 = vsel %vm9410, %v9456, %v9455
    %v9458 = vrot.slane %v9363, 4
    %v9459 = vsel %vm9413, %v9458, %v9457
    %v9460 = vrot.slane %v9365, 3
    %v9461 = vsel %vm9416, %v9460, %v9459
    %v9462 = vrot.slane %v9367, 2
    %v9463 = vsel %vm9419, %v9462, %v9461
    %v9464 = vrot.slane %v9369, 1
    %v9465 = vsel %vm9422, %v9464, %v9463
    %9470 = vst.msk [vmem:[#allocation4] sm:$0xff] %vm3900, %v9423
    %9471 = vst.msk [vmem:[#allocation4 + $0x8] sm:$0xff] %vm3900, %v9437
    %9472 = vst.msk [vmem:[#allocation4 + $0x10] sm:$0xff] %vm3900, %v9451
    %9473 = vst.msk [vmem:[#allocation4 + $0x18] sm:$0xff] %vm3900, %v9465
    %v9474 = vsel %vm9407, %v9403, %v9307
    %v9475 = vsel %vm9410, %v9406, %v9474
    %v9476 = vsel %vm9413, %v9409, %v9475
    %v9477 = vsel %vm9416, %v9412, %v9476
    %v9478 = vsel %vm9419, %v9415, %v9477
    %v9479 = vsel %vm9422, %v9418, %v9478
    %v9480 = vsel %vm9404, %v9323, %v9421
    %v9481 = vsel %vm9407, %v9424, %v9480
    %v9482 = vsel %vm9410, %v9426, %v9481
    %v9483 = vsel %vm9413, %v9428, %v9482
    %v9484 = vsel %vm9416, %v9430, %v9483
    %v9485 = vsel %vm9419, %v9432, %v9484
    %v9486 = vsel %vm9422, %v9434, %v9485
    %v9487 = vsel %vm9404, %v9339, %v9436
    %v9488 = vsel %vm9407, %v9438, %v9487
    %v9489 = vsel %vm9410, %v9440, %v9488
    %v9490 = vsel %vm9413, %v9442, %v9489
    %v9491 = vsel %vm9416, %v9444, %v9490
    %v9492 = vsel %vm9419, %v9446, %v9491
    %v9493 = vsel %vm9422, %v9448, %v9492
    %v9494 = vsel %vm9404, %v9355, %v9450
    %v9495 = vsel %vm9407, %v9452, %v9494
    %v9496 = vsel %vm9410, %v9454, %v9495
    %v9497 = vsel %vm9413, %v9456, %v9496
    %v9498 = vsel %vm9416, %v9458, %v9497
    %v9499 = vsel %vm9419, %v9460, %v9498
    %v9500 = vsel %vm9422, %v9462, %v9499
    %9501 = vrot.lane.b32.xlu0 %v9479, 8
    %v9502 = vpop.permute.xlu0 %9501
    %9503 = vrot.lane.b32.xlu0 %v9486, 8
    %v9504 = vpop.permute.xlu0 %9503
    %9505 = vrot.lane.b32.xlu0 %v9493, 8
    %v9506 = vpop.permute.xlu0 %9505
    %9507 = vrot.lane.b32.xlu0 %v9500, 8
    %v9508 = vpop.permute.xlu0 %9507
    %9509 = vrot.lane.b32.xlu0 %v9464, 8
    %v9510 = vpop.permute.xlu0 %9509
    %vm9516 = vcmask 130113
    %9517 = vst.msk [vmem:[#allocation4 - $0x1] sm:$0xfe] %vm9516, %v9502
    %9518 = vst.msk [vmem:[#allocation4 + $0x7] sm:$0xff] %vm6184, %v9504
    %9519 = vst.msk [vmem:[#allocation4 + $0xf] sm:$0xff] %vm6184, %v9506
    %9520 = vst.msk [vmem:[#allocation4 + $0x17] sm:$0xff] %vm6184, %v9508
    %vm9521 = vcmask 122944
    %9522 = vst.msk [vmem:[#allocation4 + $0x1f] sm:$0x1] %vm9521, %v9510
    %v9523 = vsel %vm9410, %v9403, %v9307
    %v9524 = vsel %vm9413, %v9406, %v9523
    %v9525 = vsel %vm9416, %v9409, %v9524
    %v9526 = vsel %vm9419, %v9412, %v9525
    %v9527 = vsel %vm9422, %v9415, %v9526
    %v9528 = vsel %vm9404, %v9421, %v9418
    %v9529 = vsel %vm9407, %v9323, %v9528
    %v9530 = vsel %vm9410, %v9424, %v9529
    %v9531 = vsel %vm9413, %v9426, %v9530
    %v9532 = vsel %vm9416, %v9428, %v9531
    %v9533 = vsel %vm9419, %v9430, %v9532
    %v9534 = vsel %vm9422, %v9432, %v9533
    %v9535 = vsel %vm9404, %v9436, %v9434
    %v9536 = vsel %vm9407, %v9339, %v9535
    %v9537 = vsel %vm9410, %v9438, %v9536
    %v9538 = vsel %vm9413, %v9440, %v9537
    %v9539 = vsel %vm9416, %v9442, %v9538
    %v9540 = vsel %vm9419, %v9444, %v9539
    %v9541 = vsel %vm9422, %v9446, %v9540
    %v9542 = vsel %vm9404, %v9450, %v9448
    %v9543 = vsel %vm9407, %v9355, %v9542
    %v9544 = vsel %vm9410, %v9452, %v9543
    %v9545 = vsel %vm9413, %v9454, %v9544
    %v9546 = vsel %vm9416, %v9456, %v9545
    %v9547 = vsel %vm9419, %v9458, %v9546
    %v9548 = vsel %vm9422, %v9460, %v9547
    %v9549 = vsel %vm9404, %v9464, %v9462
    %9550 = vrot.lane.b32.xlu0 %v9527, 16
    %v9551 = vpop.permute.xlu0 %9550
    %9552 = vrot.lane.b32.xlu0 %v9534, 16
    %v9553 = vpop.permute.xlu0 %9552
    %9554 = vrot.lane.b32.xlu0 %v9541, 16
    %v9555 = vpop.permute.xlu0 %9554
    %9556 = vrot.lane.b32.xlu0 %v9548, 16
    %v9557 = vpop.permute.xlu0 %9556
    %9558 = vrot.lane.b32.xlu0 %v9549, 16
    %v9559 = vpop.permute.xlu0 %9558
    %vm9565 = vcmask 195714
    %9566 = vst.msk [vmem:[#allocation4 - $0x2] sm:$0xfc] %vm9565, %v9551
    %9567 = vst.msk [vmem:[#allocation4 + $0x6] sm:$0xff] %vm6427, %v9553
    %9568 = vst.msk [vmem:[#allocation4 + $0xe] sm:$0xff] %vm6427, %v9555
    %9569 = vst.msk [vmem:[#allocation4 + $0x16] sm:$0xff] %vm6427, %v9557
    %vm9570 = vcmask 189568
    %9571 = vst.msk [vmem:[#allocation4 + $0x1e] sm:$0x3] %vm9570, %v9559
    %v9572 = vsel %vm9413, %v9403, %v9307
    %v9573 = vsel %vm9416, %v9406, %v9572
    %v9574 = vsel %vm9419, %v9409, %v9573
    %v9575 = vsel %vm9422, %v9412, %v9574
    %v9576 = vsel %vm9404, %v9418, %v9415
    %v9577 = vsel %vm9407, %v9421, %v9576
    %v9578 = vsel %vm9410, %v9323, %v9577
    %v9579 = vsel %vm9413, %v9424, %v9578
    %v9580 = vsel %vm9416, %v9426, %v9579
    %v9581 = vsel %vm9419, %v9428, %v9580
    %v9582 = vsel %vm9422, %v9430, %v9581
    %v9583 = vsel %vm9404, %v9434, %v9432
    %v9584 = vsel %vm9407, %v9436, %v9583
    %v9585 = vsel %vm9410, %v9339, %v9584
    %v9586 = vsel %vm9413, %v9438, %v9585
    %v9587 = vsel %vm9416, %v9440, %v9586
    %v9588 = vsel %vm9419, %v9442, %v9587
    %v9589 = vsel %vm9422, %v9444, %v9588
    %v9590 = vsel %vm9404, %v9448, %v9446
    %v9591 = vsel %vm9407, %v9450, %v9590
    %v9592 = vsel %vm9410, %v9355, %v9591
    %v9593 = vsel %vm9413, %v9452, %v9592
    %v9594 = vsel %vm9416, %v9454, %v9593
    %v9595 = vsel %vm9419, %v9456, %v9594
    %v9596 = vsel %vm9422, %v9458, %v9595
    %v9597 = vsel %vm9404, %v9462, %v9460
    %v9598 = vsel %vm9407, %v9464, %v9597
    %9599 = vrot.lane.b32.xlu0 %v9575, 24
    %v9600 = vpop.permute.xlu0 %9599
    %9601 = vrot.lane.b32.xlu0 %v9582, 24
    %v9602 = vpop.permute.xlu0 %9601
    %9603 = vrot.lane.b32.xlu0 %v9589, 24
    %v9604 = vpop.permute.xlu0 %9603
    %9605 = vrot.lane.b32.xlu0 %v9596, 24
    %v9606 = vpop.permute.xlu0 %9605
    %9607 = vrot.lane.b32.xlu0 %v9598, 24
    %v9608 = vpop.permute.xlu0 %9607
    %vm9614 = vcmask 261315
    %9615 = vst.msk [vmem:[#allocation4 - $0x3] sm:$0xf8] %vm9614, %v9600
    %9616 = vst.msk [vmem:[#allocation4 + $0x5] sm:$0xff] %vm6683, %v9602
    %9617 = vst.msk [vmem:[#allocation4 + $0xd] sm:$0xff] %vm6683, %v9604
    %9618 = vst.msk [vmem:[#allocation4 + $0x15] sm:$0xff] %vm6683, %v9606
    %vm9619 = vcmask 256192
    %9620 = vst.msk [vmem:[#allocation4 + $0x1d] sm:$0x7] %vm9619, %v9608
    %v9621 = vsel %vm9416, %v9403, %v9307
    %v9622 = vsel %vm9419, %v9406, %v9621
    %v9623 = vsel %vm9422, %v9409, %v9622
    %v9624 = vsel %vm9404, %v9415, %v9412
    %v9625 = vsel %vm9407, %v9418, %v9624
    %v9626 = vsel %vm9410, %v9421, %v9625
    %v9627 = vsel %vm9413, %v9323, %v9626
    %v9628 = vsel %vm9416, %v9424, %v9627
    %v9629 = vsel %vm9419, %v9426, %v9628
    %v9630 = vsel %vm9422, %v9428, %v9629
    %v9631 = vsel %vm9404, %v9432, %v9430
    %v9632 = vsel %vm9407, %v9434, %v9631
    %v9633 = vsel %vm9410, %v9436, %v9632
    %v9634 = vsel %vm9413, %v9339, %v9633
    %v9635 = vsel %vm9416, %v9438, %v9634
    %v9636 = vsel %vm9419, %v9440, %v9635
    %v9637 = vsel %vm9422, %v9442, %v9636
    %v9638 = vsel %vm9404, %v9446, %v9444
    %v9639 = vsel %vm9407, %v9448, %v9638
    %v9640 = vsel %vm9410, %v9450, %v9639
    %v9641 = vsel %vm9413, %v9355, %v9640
    %v9642 = vsel %vm9416, %v9452, %v9641
    %v9643 = vsel %vm9419, %v9454, %v9642
    %v9644 = vsel %vm9422, %v9456, %v9643
    %v9645 = vsel %vm9404, %v9460, %v9458
    %v9646 = vsel %vm9407, %v9462, %v9645
    %v9647 = vsel %vm9410, %v9464, %v9646
    %9648 = vrot.lane.b32.xlu0 %v9623, 32
    %v9649 = vpop.permute.xlu0 %9648
    %9650 = vrot.lane.b32.xlu0 %v9630, 32
    %v9651 = vpop.permute.xlu0 %9650
    %9652 = vrot.lane.b32.xlu0 %v9637, 32
    %v9653 = vpop.permute.xlu0 %9652
    %9654 = vrot.lane.b32.xlu0 %v9644, 32
    %v9655 = vpop.permute.xlu0 %9654
    %9656 = vrot.lane.b32.xlu0 %v9647, 32
    %v9657 = vpop.permute.xlu0 %9656
    %vm9663 = vcmask 326916
    %9664 = vst.msk [vmem:[#allocation4 - $0x4] sm:$0xf0] %vm9663, %v9649
    %9665 = vst.msk [vmem:[#allocation4 + $0x4] sm:$0xff] %vm6941, %v9651
    %9666 = vst.msk [vmem:[#allocation4 + $0xc] sm:$0xff] %vm6941, %v9653
    %9667 = vst.msk [vmem:[#allocation4 + $0x14] sm:$0xff] %vm6941, %v9655
    %vm9668 = vcmask 322816
    %9669 = vst.msk [vmem:[#allocation4 + $0x1c] sm:$0xf] %vm9668, %v9657
    %v9670 = vsel %vm9419, %v9403, %v9307
    %v9671 = vsel %vm9422, %v9406, %v9670
    %v9672 = vsel %vm9404, %v9412, %v9409
    %v9673 = vsel %vm9407, %v9415, %v9672
    %v9674 = vsel %vm9410, %v9418, %v9673
    %v9675 = vsel %vm9413, %v9421, %v9674
    %v9676 = vsel %vm9416, %v9323, %v9675
    %v9677 = vsel %vm9419, %v9424, %v9676
    %v9678 = vsel %vm9422, %v9426, %v9677
    %v9679 = vsel %vm9404, %v9430, %v9428
    %v9680 = vsel %vm9407, %v9432, %v9679
    %v9681 = vsel %vm9410, %v9434, %v9680
    %v9682 = vsel %vm9413, %v9436, %v9681
    %v9683 = vsel %vm9416, %v9339, %v9682
    %v9684 = vsel %vm9419, %v9438, %v9683
    %v9685 = vsel %vm9422, %v9440, %v9684
    %v9686 = vsel %vm9404, %v9444, %v9442
    %v9687 = vsel %vm9407, %v9446, %v9686
    %v9688 = vsel %vm9410, %v9448, %v9687
    %v9689 = vsel %vm9413, %v9450, %v9688
    %v9690 = vsel %vm9416, %v9355, %v9689
    %v9691 = vsel %vm9419, %v9452, %v9690
    %v9692 = vsel %vm9422, %v9454, %v9691
    %v9693 = vsel %vm9404, %v9458, %v9456
    %v9694 = vsel %vm9407, %v9460, %v9693
    %v9695 = vsel %vm9410, %v9462, %v9694
    %v9696 = vsel %vm9413, %v9464, %v9695
    %9697 = vrot.lane.b32.xlu0 %v9671, 40
    %v9698 = vpop.permute.xlu0 %9697
    %9699 = vrot.lane.b32.xlu0 %v9678, 40
    %v9700 = vpop.permute.xlu0 %9699
    %9701 = vrot.lane.b32.xlu0 %v9685, 40
    %v9702 = vpop.permute.xlu0 %9701
    %9703 = vrot.lane.b32.xlu0 %v9692, 40
    %v9704 = vpop.permute.xlu0 %9703
    %9705 = vrot.lane.b32.xlu0 %v9696, 40
    %v9706 = vpop.permute.xlu0 %9705
    %vm9712 = vcmask 392517
    %9713 = vst.msk [vmem:[#allocation4 - $0x5] sm:$0xe0] %vm9712, %v9698
    %9714 = vst.msk [vmem:[#allocation4 + $0x3] sm:$0xff] %vm7200, %v9700
    %9715 = vst.msk [vmem:[#allocation4 + $0xb] sm:$0xff] %vm7200, %v9702
    %9716 = vst.msk [vmem:[#allocation4 + $0x13] sm:$0xff] %vm7200, %v9704
    %vm9717 = vcmask 389440
    %9718 = vst.msk [vmem:[#allocation4 + $0x1b] sm:$0x1f] %vm9717, %v9706
    %v9719 = vsel %vm9422, %v9403, %v9307
    %v9720 = vsel %vm9404, %v9409, %v9406
    %v9721 = vsel %vm9407, %v9412, %v9720
    %v9722 = vsel %vm9410, %v9415, %v9721
    %v9723 = vsel %vm9413, %v9418, %v9722
    %v9724 = vsel %vm9416, %v9421, %v9723
    %v9725 = vsel %vm9419, %v9323, %v9724
    %v9726 = vsel %vm9422, %v9424, %v9725
    %v9727 = vsel %vm9404, %v9428, %v9426
    %v9728 = vsel %vm9407, %v9430, %v9727
    %v9729 = vsel %vm9410, %v9432, %v9728
    %v9730 = vsel %vm9413, %v9434, %v9729
    %v9731 = vsel %vm9416, %v9436, %v9730
    %v9732 = vsel %vm9419, %v9339, %v9731
    %v9733 = vsel %vm9422, %v9438, %v9732
    %v9734 = vsel %vm9404, %v9442, %v9440
    %v9735 = vsel %vm9407, %v9444, %v9734
    %v9736 = vsel %vm9410, %v9446, %v9735
    %v9737 = vsel %vm9413, %v9448, %v9736
    %v9738 = vsel %vm9416, %v9450, %v9737
    %v9739 = vsel %vm9419, %v9355, %v9738
    %v9740 = vsel %vm9422, %v9452, %v9739
    %v9741 = vsel %vm9404, %v9456, %v9454
    %v9742 = vsel %vm9407, %v9458, %v9741
    %v9743 = vsel %vm9410, %v9460, %v9742
    %v9744 = vsel %vm9413, %v9462, %v9743
    %v9745 = vsel %vm9416, %v9464, %v9744
    %9746 = vrot.lane.b32.xlu0 %v9719, 48
    %v9747 = vpop.permute.xlu0 %9746
    %9748 = vrot.lane.b32.xlu0 %v9726, 48
    %v9749 = vpop.permute.xlu0 %9748
    %9750 = vrot.lane.b32.xlu0 %v9733, 48
    %v9751 = vpop.permute.xlu0 %9750
    %9752 = vrot.lane.b32.xlu0 %v9740, 48
    %v9753 = vpop.permute.xlu0 %9752
    %9754 = vrot.lane.b32.xlu0 %v9745, 48
    %v9755 = vpop.permute.xlu0 %9754
    %vm9761 = vcmask 458118
    %9762 = vst.msk [vmem:[#allocation4 - $0x6] sm:$0xc0] %vm9761, %v9747
    %9763 = vst.msk [vmem:[#allocation4 + $0x2] sm:$0xff] %vm7444, %v9749
    %9764 = vst.msk [vmem:[#allocation4 + $0xa] sm:$0xff] %vm7444, %v9751
    %9765 = vst.msk [vmem:[#allocation4 + $0x12] sm:$0xff] %vm7444, %v9753
    %vm9766 = vcmask 456064
    %9767 = vst.msk [vmem:[#allocation4 + $0x1a] sm:$0x3f] %vm9766, %v9755
    %v9768 = vsel %vm9404, %v9406, %v9403
    %v9769 = vsel %vm9407, %v9409, %v9768
    %v9770 = vsel %vm9410, %v9412, %v9769
    %v9771 = vsel %vm9413, %v9415, %v9770
    %v9772 = vsel %vm9416, %v9418, %v9771
    %v9773 = vsel %vm9419, %v9421, %v9772
    %v9774 = vsel %vm9422, %v9323, %v9773
    %v9775 = vsel %vm9404, %v9426, %v9424
    %v9776 = vsel %vm9407, %v9428, %v9775
    %v9777 = vsel %vm9410, %v9430, %v9776
    %v9778 = vsel %vm9413, %v9432, %v9777
    %v9779 = vsel %vm9416, %v9434, %v9778
    %v9780 = vsel %vm9419, %v9436, %v9779
    %v9781 = vsel %vm9422, %v9339, %v9780
    %v9782 = vsel %vm9404, %v9440, %v9438
    %v9783 = vsel %vm9407, %v9442, %v9782
    %v9784 = vsel %vm9410, %v9444, %v9783
    %v9785 = vsel %vm9413, %v9446, %v9784
    %v9786 = vsel %vm9416, %v9448, %v9785
    %v9787 = vsel %vm9419, %v9450, %v9786
    %v9788 = vsel %vm9422, %v9355, %v9787
    %v9789 = vsel %vm9404, %v9454, %v9452
    %v9790 = vsel %vm9407, %v9456, %v9789
    %v9791 = vsel %vm9410, %v9458, %v9790
    %v9792 = vsel %vm9413, %v9460, %v9791
    %v9793 = vsel %vm9416, %v9462, %v9792
    %v9794 = vsel %vm9419, %v9464, %v9793
    %9795 = vrot.lane.b32.xlu0 %v9307, 56
    %v9796 = vpop.permute.xlu0 %9795
    %9797 = vrot.lane.b32.xlu0 %v9774, 56
    %v9798 = vpop.permute.xlu0 %9797
    %9799 = vrot.lane.b32.xlu0 %v9781, 56
    %v9800 = vpop.permute.xlu0 %9799
    %9801 = vrot.lane.b32.xlu0 %v9788, 56
    %v9802 = vpop.permute.xlu0 %9801
    %9803 = vrot.lane.b32.xlu0 %v9794, 56
    %v9804 = vpop.permute.xlu0 %9803
    %vm9810 = vcmask 523719
    %9811 = vst.msk [vmem:[#allocation4 - $0x7] sm:$0x80] %vm9810, %v9796
    %9812 = vst.msk [vmem:[#allocation4 + $0x1] sm:$0xff] %vm7686, %v9798
    %9813 = vst.msk [vmem:[#allocation4 + $0x9] sm:$0xff] %vm7686, %v9800
    %9814 = vst.msk [vmem:[#allocation4 + $0x11] sm:$0xff] %vm7686, %v9802
    %vm9815 = vcmask 522688
    %9816 = vst.msk [vmem:[#allocation4 + $0x19] sm:$0x7f] %vm9815, %v9804
    %v9849 = vrot.slane %v9310, 7
    %v9850 = vsel %vm9404, %v9849, %v9308
    %v9851 = vrot.slane %v9312, 6
    %v9852 = vsel %vm9407, %v9851, %v9850
    %v9853 = vrot.slane %v9314, 5
    %v9854 = vsel %vm9410, %v9853, %v9852
    %v9855 = vrot.slane %v9316, 4
    %v9856 = vsel %vm9413, %v9855, %v9854
    %v9857 = vrot.slane %v9318, 3
    %v9858 = vsel %vm9416, %v9857, %v9856
    %v9859 = vrot.slane %v9320, 2
    %v9860 = vsel %vm9419, %v9859, %v9858
    %v9861 = vrot.slane %v9322, 1
    %v9862 = vsel %vm9422, %v9861, %v9860
    %v9863 = vrot.slane %v9326, 7
    %v9864 = vsel %vm9404, %v9863, %v9324
    %v9865 = vrot.slane %v9328, 6
    %v9866 = vsel %vm9407, %v9865, %v9864
    %v9867 = vrot.slane %v9330, 5
    %v9868 = vsel %vm9410, %v9867, %v9866
    %v9869 = vrot.slane %v9332, 4
    %v9870 = vsel %vm9413, %v9869, %v9868
    %v9871 = vrot.slane %v9334, 3
    %v9872 = vsel %vm9416, %v9871, %v9870
    %v9873 = vrot.slane %v9336, 2
    %v9874 = vsel %vm9419, %v9873, %v9872
    %v9875 = vrot.slane %v9338, 1
    %v9876 = vsel %vm9422, %v9875, %v9874
    %v9877 = vrot.slane %v9342, 7
    %v9878 = vsel %vm9404, %v9877, %v9340
    %v9879 = vrot.slane %v9344, 6
    %v9880 = vsel %vm9407, %v9879, %v9878
    %v9881 = vrot.slane %v9346, 5
    %v9882 = vsel %vm9410, %v9881, %v9880
    %v9883 = vrot.slane %v9348, 4
    %v9884 = vsel %vm9413, %v9883, %v9882
    %v9885 = vrot.slane %v9350, 3
    %v9886 = vsel %vm9416, %v9885, %v9884
    %v9887 = vrot.slane %v9352, 2
    %v9888 = vsel %vm9419, %v9887, %v9886
    %v9889 = vrot.slane %v9354, 1
    %v9890 = vsel %vm9422, %v9889, %v9888
    %v9891 = vrot.slane %v9358, 7
    %v9892 = vsel %vm9404, %v9891, %v9356
    %v9893 = vrot.slane %v9360, 6
    %v9894 = vsel %vm9407, %v9893, %v9892
    %v9895 = vrot.slane %v9362, 5
    %v9896 = vsel %vm9410, %v9895, %v9894
    %v9897 = vrot.slane %v9364, 4
    %v9898 = vsel %vm9413, %v9897, %v9896
    %v9899 = vrot.slane %v9366, 3
    %v9900 = vsel %vm9416, %v9899, %v9898
    %v9901 = vrot.slane %v9368, 2
    %v9902 = vsel %vm9419, %v9901, %v9900
    %v9903 = vrot.slane %v9370, 1
    %v9904 = vsel %vm9422, %v9903, %v9902
    %9905 = vrot.lane.b32.xlu0 %v9862, 64
    %v9906 = vpop.permute.xlu0 %9905
    %9907 = vrot.lane.b32.xlu0 %v9876, 64
    %v9908 = vpop.permute.xlu0 %9907
    %9909 = vrot.lane.b32.xlu0 %v9890, 64
    %v9910 = vpop.permute.xlu0 %9909
    %9911 = vrot.lane.b32.xlu0 %v9904, 64
    %v9912 = vpop.permute.xlu0 %9911
    %9917 = vst.msk [vmem:[#allocation4] sm:$0xff] %vm7929, %v9906
    %9918 = vst.msk [vmem:[#allocation4 + $0x8] sm:$0xff] %vm7929, %v9908
    %9919 = vst.msk [vmem:[#allocation4 + $0x10] sm:$0xff] %vm7929, %v9910
    %9920 = vst.msk [vmem:[#allocation4 + $0x18] sm:$0xff] %vm7929, %v9912
    %v9921 = vsel %vm9407, %v9849, %v9308
    %v9922 = vsel %vm9410, %v9851, %v9921
    %v9923 = vsel %vm9413, %v9853, %v9922
    %v9924 = vsel %vm9416, %v9855, %v9923
    %v9925 = vsel %vm9419, %v9857, %v9924
    %v9926 = vsel %vm9422, %v9859, %v9925
    %v9927 = vsel %vm9404, %v9324, %v9861
    %v9928 = vsel %vm9407, %v9863, %v9927
    %v9929 = vsel %vm9410, %v9865, %v9928
    %v9930 = vsel %vm9413, %v9867, %v9929
    %v9931 = vsel %vm9416, %v9869, %v9930
    %v9932 = vsel %vm9419, %v9871, %v9931
    %v9933 = vsel %vm9422, %v9873, %v9932
    %v9934 = vsel %vm9404, %v9340, %v9875
    %v9935 = vsel %vm9407, %v9877, %v9934
    %v9936 = vsel %vm9410, %v9879, %v9935
    %v9937 = vsel %vm9413, %v9881, %v9936
    %v9938 = vsel %vm9416, %v9883, %v9937
    %v9939 = vsel %vm9419, %v9885, %v9938
    %v9940 = vsel %vm9422, %v9887, %v9939
    %v9941 = vsel %vm9404, %v9356, %v9889
    %v9942 = vsel %vm9407, %v9891, %v9941
    %v9943 = vsel %vm9410, %v9893, %v9942
    %v9944 = vsel %vm9413, %v9895, %v9943
    %v9945 = vsel %vm9416, %v9897, %v9944
    %v9946 = vsel %vm9419, %v9899, %v9945
    %v9947 = vsel %vm9422, %v9901, %v9946
    %9948 = vrot.lane.b32.xlu0 %v9926, 72
    %v9949 = vpop.permute.xlu0 %9948
    %9950 = vrot.lane.b32.xlu0 %v9933, 72
    %v9951 = vpop.permute.xlu0 %9950
    %9952 = vrot.lane.b32.xlu0 %v9940, 72
    %v9953 = vpop.permute.xlu0 %9952
    %9954 = vrot.lane.b32.xlu0 %v9947, 72
    %v9955 = vpop.permute.xlu0 %9954
    %9956 = vrot.lane.b32.xlu0 %v9903, 72
    %v9957 = vpop.permute.xlu0 %9956
    %vm9963 = vcmask 654913
    %9964 = vst.msk [vmem:[#allocation4 - $0x1] sm:$0xfe] %vm9963, %v9949
    %vm9965 = vcmask 654912
    %9966 = vst.msk [vmem:[#allocation4 + $0x7] sm:$0xff] %vm9965, %v9951
    %9967 = vst.msk [vmem:[#allocation4 + $0xf] sm:$0xff] %vm9965, %v9953
    %9968 = vst.msk [vmem:[#allocation4 + $0x17] sm:$0xff] %vm9965, %v9955
    %vm9969 = vcmask 647744
    %9970 = vst.msk [vmem:[#allocation4 + $0x1f] sm:$0x1] %vm9969, %v9957
    %v9971 = vsel %vm9410, %v9849, %v9308
    %v9972 = vsel %vm9413, %v9851, %v9971
    %v9973 = vsel %vm9416, %v9853, %v9972
    %v9974 = vsel %vm9419, %v9855, %v9973
    %v9975 = vsel %vm9422, %v9857, %v9974
    %v9976 = vsel %vm9404, %v9861, %v9859
    %v9977 = vsel %vm9407, %v9324, %v9976
    %v9978 = vsel %vm9410, %v9863, %v9977
    %v9979 = vsel %vm9413, %v9865, %v9978
    %v9980 = vsel %vm9416, %v9867, %v9979
    %v9981 = vsel %vm9419, %v9869, %v9980
    %v9982 = vsel %vm9422, %v9871, %v9981
    %v9983 = vsel %vm9404, %v9875, %v9873
    %v9984 = vsel %vm9407, %v9340, %v9983
    %v9985 = vsel %vm9410, %v9877, %v9984
    %v9986 = vsel %vm9413, %v9879, %v9985
    %v9987 = vsel %vm9416, %v9881, %v9986
    %v9988 = vsel %vm9419, %v9883, %v9987
    %v9989 = vsel %vm9422, %v9885, %v9988
    %v9990 = vsel %vm9404, %v9889, %v9887
    %v9991 = vsel %vm9407, %v9356, %v9990
    %v9992 = vsel %vm9410, %v9891, %v9991
    %v9993 = vsel %vm9413, %v9893, %v9992
    %v9994 = vsel %vm9416, %v9895, %v9993
    %v9995 = vsel %vm9419, %v9897, %v9994
    %v9996 = vsel %vm9422, %v9899, %v9995
    %v9997 = vsel %vm9404, %v9903, %v9901
    %9998 = vrot.lane.b32.xlu0 %v9975, 80
    %v9999 = vpop.permute.xlu0 %9998
    %10000 = vrot.lane.b32.xlu0 %v9982, 80
    %v10001 = vpop.permute.xlu0 %10000
    %10002 = vrot.lane.b32.xlu0 %v9989, 80
    %v10003 = vpop.permute.xlu0 %10002
    %10004 = vrot.lane.b32.xlu0 %v9996, 80
    %v10005 = vpop.permute.xlu0 %10004
    %10006 = vrot.lane.b32.xlu0 %v9997, 80
    %v10007 = vpop.permute.xlu0 %10006
    %vm10013 = vcmask 720514
    %10014 = vst.msk [vmem:[#allocation4 - $0x2] sm:$0xfc] %vm10013, %v9999
    %vm10015 = vcmask 720512
    %10016 = vst.msk [vmem:[#allocation4 + $0x6] sm:$0xff] %vm10015, %v10001
    %10017 = vst.msk [vmem:[#allocation4 + $0xe] sm:$0xff] %vm10015, %v10003
    %10018 = vst.msk [vmem:[#allocation4 + $0x16] sm:$0xff] %vm10015, %v10005
    %vm10019 = vcmask 714368
    %10020 = vst.msk [vmem:[#allocation4 + $0x1e] sm:$0x3] %vm10019, %v10007
    %v10021 = vsel %vm9413, %v9849, %v9308
    %v10022 = vsel %vm9416, %v9851, %v10021
    %v10023 = vsel %vm9419, %v9853, %v10022
    %v10024 = vsel %vm9422, %v9855, %v10023
    %v10025 = vsel %vm9404, %v9859, %v9857
    %v10026 = vsel %vm9407, %v9861, %v10025
    %v10027 = vsel %vm9410, %v9324, %v10026
    %v10028 = vsel %vm9413, %v9863, %v10027
    %v10029 = vsel %vm9416, %v9865, %v10028
    %v10030 = vsel %vm9419, %v9867, %v10029
    %v10031 = vsel %vm9422, %v9869, %v10030
    %v10032 = vsel %vm9404, %v9873, %v9871
    %v10033 = vsel %vm9407, %v9875, %v10032
    %v10034 = vsel %vm9410, %v9340, %v10033
    %v10035 = vsel %vm9413, %v9877, %v10034
    %v10036 = vsel %vm9416, %v9879, %v10035
    %v10037 = vsel %vm9419, %v9881, %v10036
    %v10038 = vsel %vm9422, %v9883, %v10037
    %v10039 = vsel %vm9404, %v9887, %v9885
    %v10040 = vsel %vm9407, %v9889, %v10039
    %v10041 = vsel %vm9410, %v9356, %v10040
    %v10042 = vsel %vm9413, %v9891, %v10041
    %v10043 = vsel %vm9416, %v9893, %v10042
    %v10044 = vsel %vm9419, %v9895, %v10043
    %v10045 = vsel %vm9422, %v9897, %v10044
    %v10046 = vsel %vm9404, %v9901, %v9899
    %v10047 = vsel %vm9407, %v9903, %v10046
    %10048 = vrot.lane.b32.xlu0 %v10024, 88
    %v10049 = vpop.permute.xlu0 %10048
    %10050 = vrot.lane.b32.xlu0 %v10031, 88
    %v10051 = vpop.permute.xlu0 %10050
    %10052 = vrot.lane.b32.xlu0 %v10038, 88
    %v10053 = vpop.permute.xlu0 %10052
    %10054 = vrot.lane.b32.xlu0 %v10045, 88
    %v10055 = vpop.permute.xlu0 %10054
    %10056 = vrot.lane.b32.xlu0 %v10047, 88
    %v10057 = vpop.permute.xlu0 %10056
    %vm10063 = vcmask 786115
    %10064 = vst.msk [vmem:[#allocation4 - $0x3] sm:$0xf8] %vm10063, %v10049
    %vm10065 = vcmask 786112
    %10066 = vst.msk [vmem:[#allocation4 + $0x5] sm:$0xff] %vm10065, %v10051
    %10067 = vst.msk [vmem:[#allocation4 + $0xd] sm:$0xff] %vm10065, %v10053
    %10068 = vst.msk [vmem:[#allocation4 + $0x15] sm:$0xff] %vm10065, %v10055
    %vm10069 = vcmask 780992
    %10070 = vst.msk [vmem:[#allocation4 + $0x1d] sm:$0x7] %vm10069, %v10057
    %v10071 = vsel %vm9416, %v9849, %v9308
    %v10072 = vsel %vm9419, %v9851, %v10071
    %v10073 = vsel %vm9422, %v9853, %v10072
    %v10074 = vsel %vm9404, %v9857, %v9855
    %v10075 = vsel %vm9407, %v9859, %v10074
    %v10076 = vsel %vm9410, %v9861, %v10075
    %v10077 = vsel %vm9413, %v9324, %v10076
    %v10078 = vsel %vm9416, %v9863, %v10077
    %v10079 = vsel %vm9419, %v9865, %v10078
    %v10080 = vsel %vm9422, %v9867, %v10079
    %v10081 = vsel %vm9404, %v9871, %v9869
    %v10082 = vsel %vm9407, %v9873, %v10081
    %v10083 = vsel %vm9410, %v9875, %v10082
    %v10084 = vsel %vm9413, %v9340, %v10083
    %v10085 = vsel %vm9416, %v9877, %v10084
    %v10086 = vsel %vm9419, %v9879, %v10085
    %v10087 = vsel %vm9422, %v9881, %v10086
    %v10088 = vsel %vm9404, %v9885, %v9883
    %v10089 = vsel %vm9407, %v9887, %v10088
    %v10090 = vsel %vm9410, %v9889, %v10089
    %v10091 = vsel %vm9413, %v9356, %v10090
    %v10092 = vsel %vm9416, %v9891, %v10091
    %v10093 = vsel %vm9419, %v9893, %v10092
    %v10094 = vsel %vm9422, %v9895, %v10093
    %v10095 = vsel %vm9404, %v9899, %v9897
    %v10096 = vsel %vm9407, %v9901, %v10095
    %v10097 = vsel %vm9410, %v9903, %v10096
    %10098 = vrot.lane.b32.xlu0 %v10073, 96
    %v10099 = vpop.permute.xlu0 %10098
    %10100 = vrot.lane.b32.xlu0 %v10080, 96
    %v10101 = vpop.permute.xlu0 %10100
    %10102 = vrot.lane.b32.xlu0 %v10087, 96
    %v10103 = vpop.permute.xlu0 %10102
    %10104 = vrot.lane.b32.xlu0 %v10094, 96
    %v10105 = vpop.permute.xlu0 %10104
    %10106 = vrot.lane.b32.xlu0 %v10097, 96
    %v10107 = vpop.permute.xlu0 %10106
    %vm10113 = vcmask 851716
    %10114 = vst.msk [vmem:[#allocation4 - $0x4] sm:$0xf0] %vm10113, %v10099
    %vm10115 = vcmask 851712
    %10116 = vst.msk [vmem:[#allocation4 + $0x4] sm:$0xff] %vm10115, %v10101
    %10117 = vst.msk [vmem:[#allocation4 + $0xc] sm:$0xff] %vm10115, %v10103
    %10118 = vst.msk [vmem:[#allocation4 + $0x14] sm:$0xff] %vm10115, %v10105
    %vm10119 = vcmask 847616
    %10120 = vst.msk [vmem:[#allocation4 + $0x1c] sm:$0xf] %vm10119, %v10107
    %v10121 = vsel %vm9419, %v9849, %v9308
    %v10122 = vsel %vm9422, %v9851, %v10121
    %v10123 = vsel %vm9404, %v9855, %v9853
    %v10124 = vsel %vm9407, %v9857, %v10123
    %v10125 = vsel %vm9410, %v9859, %v10124
    %v10126 = vsel %vm9413, %v9861, %v10125
    %v10127 = vsel %vm9416, %v9324, %v10126
    %v10128 = vsel %vm9419, %v9863, %v10127
    %v10129 = vsel %vm9422, %v9865, %v10128
    %v10130 = vsel %vm9404, %v9869, %v9867
    %v10131 = vsel %vm9407, %v9871, %v10130
    %v10132 = vsel %vm9410, %v9873, %v10131
    %v10133 = vsel %vm9413, %v9875, %v10132
    %v10134 = vsel %vm9416, %v9340, %v10133
    %v10135 = vsel %vm9419, %v9877, %v10134
    %v10136 = vsel %vm9422, %v9879, %v10135
    %v10137 = vsel %vm9404, %v9883, %v9881
    %v10138 = vsel %vm9407, %v9885, %v10137
    %v10139 = vsel %vm9410, %v9887, %v10138
    %v10140 = vsel %vm9413, %v9889, %v10139
    %v10141 = vsel %vm9416, %v9356, %v10140
    %v10142 = vsel %vm9419, %v9891, %v10141
    %v10143 = vsel %vm9422, %v9893, %v10142
    %v10144 = vsel %vm9404, %v9897, %v9895
    %v10145 = vsel %vm9407, %v9899, %v10144
    %v10146 = vsel %vm9410, %v9901, %v10145
    %v10147 = vsel %vm9413, %v9903, %v10146
    %10148 = vrot.lane.b32.xlu0 %v10122, 104
    %v10149 = vpop.permute.xlu0 %10148
    %10150 = vrot.lane.b32.xlu0 %v10129, 104
    %v10151 = vpop.permute.xlu0 %10150
    %10152 = vrot.lane.b32.xlu0 %v10136, 104
    %v10153 = vpop.permute.xlu0 %10152
    %10154 = vrot.lane.b32.xlu0 %v10143, 104
    %v10155 = vpop.permute.xlu0 %10154
    %10156 = vrot.lane.b32.xlu0 %v10147, 104
    %v10157 = vpop.permute.xlu0 %10156
    %vm10163 = vcmask 917317
    %10164 = vst.msk [vmem:[#allocation4 - $0x5] sm:$0xe0] %vm10163, %v10149
    %vm10165 = vcmask 917312
    %10166 = vst.msk [vmem:[#allocation4 + $0x3] sm:$0xff] %vm10165, %v10151
    %10167 = vst.msk [vmem:[#allocation4 + $0xb] sm:$0xff] %vm10165, %v10153
    %10168 = vst.msk [vmem:[#allocation4 + $0x13] sm:$0xff] %vm10165, %v10155
    %vm10169 = vcmask 914240
    %10170 = vst.msk [vmem:[#allocation4 + $0x1b] sm:$0x1f] %vm10169, %v10157
    %v10171 = vsel %vm9422, %v9849, %v9308
    %v10172 = vsel %vm9404, %v9853, %v9851
    %v10173 = vsel %vm9407, %v9855, %v10172
    %v10174 = vsel %vm9410, %v9857, %v10173
    %v10175 = vsel %vm9413, %v9859, %v10174
    %v10176 = vsel %vm9416, %v9861, %v10175
    %v10177 = vsel %vm9419, %v9324, %v10176
    %v10178 = vsel %vm9422, %v9863, %v10177
    %v10179 = vsel %vm9404, %v9867, %v9865
    %v10180 = vsel %vm9407, %v9869, %v10179
    %v10181 = vsel %vm9410, %v9871, %v10180
    %v10182 = vsel %vm9413, %v9873, %v10181
    %v10183 = vsel %vm9416, %v9875, %v10182
    %v10184 = vsel %vm9419, %v9340, %v10183
    %v10185 = vsel %vm9422, %v9877, %v10184
    %v10186 = vsel %vm9404, %v9881, %v9879
    %v10187 = vsel %vm9407, %v9883, %v10186
    %v10188 = vsel %vm9410, %v9885, %v10187
    %v10189 = vsel %vm9413, %v9887, %v10188
    %v10190 = vsel %vm9416, %v9889, %v10189
    %v10191 = vsel %vm9419, %v9356, %v10190
    %v10192 = vsel %vm9422, %v9891, %v10191
    %v10193 = vsel %vm9404, %v9895, %v9893
    %v10194 = vsel %vm9407, %v9897, %v10193
    %v10195 = vsel %vm9410, %v9899, %v10194
    %v10196 = vsel %vm9413, %v9901, %v10195
    %v10197 = vsel %vm9416, %v9903, %v10196
    %10198 = vrot.lane.b32.xlu0 %v10171, 112
    %v10199 = vpop.permute.xlu0 %10198
    %10200 = vrot.lane.b32.xlu0 %v10178, 112
    %v10201 = vpop.permute.xlu0 %10200
    %10202 = vrot.lane.b32.xlu0 %v10185, 112
    %v10203 = vpop.permute.xlu0 %10202
    %10204 = vrot.lane.b32.xlu0 %v10192, 112
    %v10205 = vpop.permute.xlu0 %10204
    %10206 = vrot.lane.b32.xlu0 %v10197, 112
    %v10207 = vpop.permute.xlu0 %10206
    %vm10213 = vcmask 982918
    %10214 = vst.msk [vmem:[#allocation4 - $0x6] sm:$0xc0] %vm10213, %v10199
    %vm10215 = vcmask 982912
    %10216 = vst.msk [vmem:[#allocation4 + $0x2] sm:$0xff] %vm10215, %v10201
    %10217 = vst.msk [vmem:[#allocation4 + $0xa] sm:$0xff] %vm10215, %v10203
    %10218 = vst.msk [vmem:[#allocation4 + $0x12] sm:$0xff] %vm10215, %v10205
    %vm10219 = vcmask 980864
    %10220 = vst.msk [vmem:[#allocation4 + $0x1a] sm:$0x3f] %vm10219, %v10207
    %v10221 = vsel %vm9404, %v9851, %v9849
    %v10222 = vsel %vm9407, %v9853, %v10221
    %v10223 = vsel %vm9410, %v9855, %v10222
    %v10224 = vsel %vm9413, %v9857, %v10223
    %v10225 = vsel %vm9416, %v9859, %v10224
    %v10226 = vsel %vm9419, %v9861, %v10225
    %v10227 = vsel %vm9422, %v9324, %v10226
    %v10228 = vsel %vm9404, %v9865, %v9863
    %v10229 = vsel %vm9407, %v9867, %v10228
    %v10230 = vsel %vm9410, %v9869, %v10229
    %v10231 = vsel %vm9413, %v9871, %v10230
    %v10232 = vsel %vm9416, %v9873, %v10231
    %v10233 = vsel %vm9419, %v9875, %v10232
    %v10234 = vsel %vm9422, %v9340, %v10233
    %v10235 = vsel %vm9404, %v9879, %v9877
    %v10236 = vsel %vm9407, %v9881, %v10235
    %v10237 = vsel %vm9410, %v9883, %v10236
    %v10238 = vsel %vm9413, %v9885, %v10237
    %v10239 = vsel %vm9416, %v9887, %v10238
    %v10240 = vsel %vm9419, %v9889, %v10239
    %v10241 = vsel %vm9422, %v9356, %v10240
    %v10242 = vsel %vm9404, %v9893, %v9891
    %v10243 = vsel %vm9407, %v9895, %v10242
    %v10244 = vsel %vm9410, %v9897, %v10243
    %v10245 = vsel %vm9413, %v9899, %v10244
    %v10246 = vsel %vm9416, %v9901, %v10245
    %v10247 = vsel %vm9419, %v9903, %v10246
    %10248 = vrot.lane.b32.xlu0 %v9308, 120
    %v10249 = vpop.permute.xlu0 %10248
    %10250 = vrot.lane.b32.xlu0 %v10227, 120
    %v10251 = vpop.permute.xlu0 %10250
    %10252 = vrot.lane.b32.xlu0 %v10234, 120
    %v10253 = vpop.permute.xlu0 %10252
    %10254 = vrot.lane.b32.xlu0 %v10241, 120
    %v10255 = vpop.permute.xlu0 %10254
    %10256 = vrot.lane.b32.xlu0 %v10247, 120
    %v10257 = vpop.permute.xlu0 %10256
    %vm10263 = vcmask 1048519
    %10264 = vst.msk [vmem:[#allocation4 - $0x7] sm:$0x80] %vm10263, %v10249
    %vm10265 = vcmask 1048512
    %10266 = vst.msk [vmem:[#allocation4 + $0x1] sm:$0xff] %vm10265, %v10251
    %10267 = vst.msk [vmem:[#allocation4 + $0x9] sm:$0xff] %vm10265, %v10253
    %10268 = vst.msk [vmem:[#allocation4 + $0x11] sm:$0xff] %vm10265, %v10255
    %vm10269 = vcmask 1047488
    %10270 = vst.msk [vmem:[#allocation4 + $0x19] sm:$0x7f] %vm10269, %v10257
    // Predicated region
    $region42: #{tpu_custom_call.1} parent=1 // pred_check
      _
    $region43: #{tpu_custom_call.1} parent=1 // pred_check_branch
      %10272 = sbr.rel (0) target = $region45
    $region44: #{tpu_custom_call.1} parent=1 // pred_region
      %s10274 = ssub.s32 512, 512
      %10275 = vsyncadd [#allocation5], %s10274
      %s10276 = sshll.u32 [#allocation4], 4
      %s10277 = int_to_ptr.vmem [resolvable:$true] %s10276
      %10282 = dma.vmem_to_hbm [thread:$0]  %s10277, 512, %s10, [#allocation5], 128, 128, 8
    $region45: #{tpu_custom_call.1} parent=1 // pred_fallthru
      _
    // Predicated region
    $region46: #{tpu_custom_call.1} parent=1 // pred_check
      _
    $region47: #{tpu_custom_call.1} parent=1 // pred_check_branch
      %10284 = sbr.rel (0) target = $region49
    $region48: #{tpu_custom_call.1} parent=1 // pred_region
      %10285 = dma.done [#allocation5], 512
    $region49: #{tpu_custom_call.1} parent=1 // pred_fallthru
      _
    %10286 = vsyncpa [#allocation5], 1

</llo_original>
